<compile_context>
chip_gen: v5e
topology: v5e:2x2
jax: 0.10.0
libtpu: 0.0.40
codegen_flags: <defaults>
</compile_context>

<pallas_src>
import functools
import math

import jax
import jax.numpy as jnp
from jax.experimental import pallas as pl
from jax.experimental.pallas import tpu as pltpu

# ----------------------------- configuration -------------------------------
D_MODEL = 32
D_ADDRESSES = 8
D_DATA = 16
D_MEMORY = D_ADDRESSES * D_DATA      # 128
NUM_READ_HEADS = 2
NUM_WRITE_HEADS = 2
CHUNK_WIDTH = 4
SAFETY_FACTOR = 1000.0
BARRIER_EPSILON = 10.0
MODE = "mean"
ADDRESSING_DROPOUT = 0.1             # TODO(synk): LogitDropout reference not given; eval mode => identity.

BATCH = 2
TIMESTEPS = 8

_ADDRESSER_ORDER = ("read_query", "read_phase_shift", "read_sharpening",
                    "write_update", "write_phase", "write_decay")
_HEAD_COUNTS = (NUM_READ_HEADS, NUM_READ_HEADS, NUM_READ_HEADS,
                NUM_WRITE_HEADS, NUM_WRITE_HEADS, NUM_WRITE_HEADS)

_TINY = float(jnp.finfo(jnp.float32).tiny)
# TODO(synk): Barrier reference not provided; hinge on accumulated decay mass
#             against a dynamic-range barrier derived from float32 tiny.
_BARRIER_THRESH = -math.log(_TINY * SAFETY_FACTOR) - BARRIER_EPSILON


def _chunk_tile(n_chunks, max_tile=128):
    """Full-array block for small chunk counts; else the largest multiple-of-8
    divisor <= max_tile; else a single full-array block (always legal)."""
    if n_chunks <= max_tile:
        return n_chunks
    for cand in range(max_tile, 7, -8):
        if n_chunks % cand == 0:
            return cand
    return n_chunks


# ------------------------------ the mega kernel ------------------------------
def _apdu_kernel(x_ref, st_ref, wh_ref, bh_ref, wp_ref, bp_ref, wr_ref, br_ref,
                 out_ref, mlast_ref, loss_ref,
                 *, head_counts, d_memory, d_data, chunk_width, barrier_thresh):
    total_blocks = sum(head_counts)
    data_off = total_blocks * d_memory

    # initial per-chunk state, split real / imag (packed [re | im] on lanes)
    m_re = st_ref[:, :d_memory]
    m_im = st_ref[:, d_memory:]
    d_mass = jnp.zeros_like(m_re)
    loss_acc = jnp.zeros_like(m_re)
    gated_parts = []

    for w in range(chunk_width):
        # ---- controller: hidden linear + ReLU ----
        # TODO(synk): ReLUPlus reference not provided; ReLU used.
        xw = x_ref[w].astype(jnp.bfloat16)                       # (tc, d_model)
        h = jnp.dot(xw, wh_ref[...], preferred_element_type=jnp.float32) + bh_ref[...]
        h = jnp.maximum(h, 0.0)

        # ---- one wide matmul covers all six addressers (addresses + data,
        #      pre-expanded to the 128-wide memory layout at prepare time) ----
        proj = jnp.dot(h.astype(jnp.bfloat16), wp_ref[...],
                       preferred_element_type=jnp.float32) + bp_ref[...]

        outs = []
        blk = 0
        for nh in head_counts:
            acc = None
            for _ in range(nh):
                lo = blk * d_memory
                lg = proj[:, lo:lo + d_memory]                        # logits, 16x repeated
                dt = proj[:, data_off + lo:data_off + lo + d_memory]  # data, tiled 8x
                mx = jnp.max(lg, axis=-1, keepdims=True)
                e = jnp.exp(lg - mx)
                denom = jnp.sum(e, axis=-1, keepdims=True) * (1.0 / d_data)
                piece = e * pl.reciprocal(denom, approx=True) * dt    # attn(a)*data(d) at lane a*16+d
                acc = piece if acc is None else acc + piece
                blk += 1
            outs.append(acc)

        (read_query, read_phase, read_sharp,
         write_update, write_phase, write_decay) = outs

        # read gate = query * softplus(sharpening)
        sharp = jnp.maximum(read_sharp, 0.0) + jnp.log(1.0 + jnp.exp(-jnp.abs(read_sharp)))
        gate = read_query * sharp

        # write factor = exp(-relu(decay) + i*phase), split re/im
        # TODO(synk): ReLUPlus reference not provided; ReLU used for decay logits.
        decay = jnp.maximum(write_decay, 0.0)
        amp = jnp.exp(-decay)
        f_re = amp * jnp.cos(write_phase)
        f_im = amp * jnp.sin(write_phase)

        # ---- PDU write recurrence (unrolled over static W) ----
        # TODO(synk): PDUMemoryWriter reference not provided; standard PDU
        #             recurrence m_t = exp(-decay + i*phase)*m_{t-1} + update used.
        new_re = f_re * m_re - f_im * m_im + write_update
        new_im = f_re * m_im + f_im * m_re
        m_re, m_im = new_re, new_im

        # ---- barrier excess on accumulated decay mass ----
        d_mass = d_mass + decay
        loss_acc = loss_acc + jnp.maximum(d_mass - barrier_thresh, 0.0)

        # ---- reader gating (projection deferred to one fused matmul) ----
        # TODO(synk): PDUMemoryReader reference not provided; phase-shifted real
        #             read gated by query*softplus(sharpening) is used.
        read_vals = m_re * jnp.cos(read_phase) - m_im * jnp.sin(read_phase)
        gated_parts.append(read_vals * gate)

    # One matmul against the block-diagonal (W*128, W*32) reader weight: the
    # (tc, 128) result packs all W timesteps lane-dense -> single unmasked store.
    gated_all = jnp.concatenate(gated_parts, axis=-1)               # (tc, W*128)
    y = jnp.dot(gated_all.astype(jnp.bfloat16), wr_ref[...],
                preferred_element_type=jnp.float32) + br_ref[...]
    out_ref[...] = y.astype(out_ref.dtype)

    mlast_ref[...] = jnp.concatenate([m_re, m_im], axis=-1)         # (tc, 256)
    loss_ref[...] = loss_acc                                        # (tc, 128)


def _apdu_call(x3, st, wh, bh, wproj, bproj, w_read_blk, b_read_blk):
    w_steps, nchunks, d_model = x3.shape
    p_width = wproj.shape[1]
    tc = _chunk_tile(nchunks)
    kernel = functools.partial(
        _apdu_kernel, head_counts=_HEAD_COUNTS, d_memory=D_MEMORY, d_data=D_DATA,
        chunk_width=CHUNK_WIDTH, barrier_thresh=_BARRIER_THRESH)
    out_shapes = (
        jax.ShapeDtypeStruct((nchunks, CHUNK_WIDTH * D_MODEL), jnp.float32),  # packed outputs
        jax.ShapeDtypeStruct((nchunks, 2 * D_MEMORY), jnp.float32),           # last state [re|im]
        jax.ShapeDtypeStruct((nchunks, D_MEMORY), jnp.float32),               # barrier-excess partials
    )
    return pl.pallas_call(
        kernel,
        out_shape=out_shapes,
        grid_spec=pltpu.PrefetchScalarGridSpec(
            num_scalar_prefetch=0,
            grid=(nchunks // tc,),
            in_specs=[
                pl.BlockSpec((CHUNK_WIDTH, tc, d_model), lambda i: (0, i, 0)),
                pl.BlockSpec((tc, 2 * D_MEMORY), lambda i: (i, 0)),
                pl.BlockSpec((d_model, d_model), lambda i: (0, 0)),
                pl.BlockSpec((1, d_model), lambda i: (0, 0)),
                pl.BlockSpec((d_model, p_width), lambda i: (0, 0)),
                pl.BlockSpec((1, p_width), lambda i: (0, 0)),
                pl.BlockSpec((CHUNK_WIDTH * D_MEMORY, CHUNK_WIDTH * D_MODEL), lambda i: (0, 0)),
                pl.BlockSpec((1, CHUNK_WIDTH * D_MODEL), lambda i: (0, 0)),
            ],
            out_specs=(
                pl.BlockSpec((tc, CHUNK_WIDTH * D_MODEL), lambda i: (i, 0)),
                pl.BlockSpec((tc, 2 * D_MEMORY), lambda i: (i, 0)),
                pl.BlockSpec((tc, D_MEMORY), lambda i: (i, 0)),
            ),
        ),
        compiler_params=pltpu.CompilerParams(
            dimension_semantics=("parallel",),
            vmem_limit_bytes=32 * 1024 * 1024,
        ),
    )(x3, st, wh, bh, wproj, bproj, w_read_blk, b_read_blk)


# ----------------------- fused-weight construction (host) ---------------------
def _expand_addresser_weights(p, num_heads):
    """Expand (d_model, H*A)/(d_model, H*D) projectors to the (H*A*D) memory layout."""
    wa, ba, wd, bd = p["wa"], p["ba"], p["wd"], p["bd"]
    d_model = wa.shape[0]
    wa3 = wa.reshape(d_model, num_heads, D_ADDRESSES)
    wa_exp = jnp.broadcast_to(wa3[:, :, :, None],
                              (d_model, num_heads, D_ADDRESSES, D_DATA)
                              ).reshape(d_model, num_heads * D_MEMORY)
    ba_exp = jnp.broadcast_to(ba.reshape(num_heads, D_ADDRESSES)[:, :, None],
                              (num_heads, D_ADDRESSES, D_DATA)).reshape(-1)
    wd3 = wd.reshape(d_model, num_heads, D_DATA)
    wd_exp = jnp.broadcast_to(wd3[:, :, None, :],
                              (d_model, num_heads, D_ADDRESSES, D_DATA)
                              ).reshape(d_model, num_heads * D_MEMORY)
    bd_exp = jnp.broadcast_to(bd.reshape(num_heads, D_DATA)[:, None, :],
                              (num_heads, D_ADDRESSES, D_DATA)).reshape(-1)
    return wa_exp, ba_exp, wd_exp, bd_exp


def _fuse_controller_weights(params):
    wa_cols, ba_cols, wd_cols, bd_cols = [], [], [], []
    for name, nh in zip(_ADDRESSER_ORDER, _HEAD_COUNTS):
        wa_e, ba_e, wd_e, bd_e = _expand_addresser_weights(params[name], nh)
        wa_cols.append(wa_e); ba_cols.append(ba_e)
        wd_cols.append(wd_e); bd_cols.append(bd_e)
    wproj = jnp.concatenate(wa_cols + wd_cols, axis=1)   # (d_model, 2*sum(heads)*d_memory)
    bproj = jnp.concatenate(ba_cols + bd_cols, axis=0)
    return wproj, bproj


def prepare_params(params):
    """One-time (outside jit) fusion/packing of the weights fed to the kernel."""
    wproj, bproj = _fuse_controller_weights(params)
    # Block-diagonal reader weight: gated step w maps to output lanes [w*32, w*32+32).
    w_blk = jnp.zeros((CHUNK_WIDTH * D_MEMORY, CHUNK_WIDTH * D_MODEL), jnp.float32)
    for w in range(CHUNK_WIDTH):
        w_blk = w_blk.at[w * D_MEMORY:(w + 1) * D_MEMORY,
                         w * D_MODEL:(w + 1) * D_MODEL].set(params["read_w"])
    b_blk = jnp.tile(params["read_b"], (CHUNK_WIDTH,))
    return {
        "wh": params["hidden_w"].astype(jnp.bfloat16),
        "bh": params["hidden_b"].reshape(1, D_MODEL).astype(jnp.float32),
        "wproj": wproj.astype(jnp.bfloat16),
        "bproj": bproj.reshape(1, -1).astype(jnp.float32),
        "w_read_blk": w_blk.astype(jnp.bfloat16),
        "b_read_blk": b_blk.reshape(1, -1).astype(jnp.float32),
        "default_state": params["default_state"],
    }


# -------------------------- parameter construction --------------------------
def _linear_init(key, d_in, d_out):
    kw, kb = jax.random.split(key)
    scale = 1.0 / jnp.sqrt(jnp.float32(d_in))
    w = jax.random.uniform(kw, (d_in, d_out), jnp.float32, -scale, scale)
    b = jax.random.uniform(kb, (d_out,), jnp.float32, -scale, scale)
    return w, b


def init_params(key):
    keys = jax.random.split(key, 16)
    params = {}
    params["hidden_w"], params["hidden_b"] = _linear_init(keys[0], D_MODEL, D_MODEL)

    def addresser(k, num_heads):
        ka, kd = jax.random.split(k)
        wa, ba = _linear_init(ka, D_MODEL, D_ADDRESSES * num_heads)
        wd, bd = _linear_init(kd, D_MODEL, D_DATA * num_heads)
        return {"wa": wa, "ba": ba, "wd": wd, "bd": bd}

    params["read_query"] = addresser(keys[1], NUM_READ_HEADS)
    params["read_phase_shift"] = addresser(keys[2], NUM_READ_HEADS)
    params["read_sharpening"] = addresser(keys[3], NUM_READ_HEADS)
    params["write_update"] = addresser(keys[4], NUM_WRITE_HEADS)
    params["write_phase"] = addresser(keys[5], NUM_WRITE_HEADS)
    params["write_decay"] = addresser(keys[6], NUM_WRITE_HEADS)

    # PDUMemoryReader output projection (d_memory -> d_model)
    params["read_w"], params["read_b"] = _linear_init(keys[7], D_MEMORY, D_MODEL)

    reals = jax.random.normal(keys[8], (D_MEMORY,), jnp.float32)
    imags = jax.random.normal(keys[9], (D_MEMORY,), jnp.float32)
    params["default_state"] = reals + 1j * imags                       # complex64
    return params


# ------------------------------ forward pass --------------------------------
def apdu_memory_cell_forward(fused, tensor, state=None):
    """tensor: (B, T, d_model) float32; state: optional (B, d_memory) complex64."""
    b, t, d_model = tensor.shape
    assert t % CHUNK_WIDTH == 0, "TODO(synk): Chunker padding for ragged T not specified"
    c = t // CHUNK_WIDTH
    nchunks = b * c

    # (B, T, D) -> (W, B*C, D): the four in-chunk timesteps on the leading axis.
    x3 = jnp.transpose(tensor.reshape(b, c, CHUNK_WIDTH, d_model),
                       (2, 0, 1, 3)).reshape(CHUNK_WIDTH, nchunks, d_model)

    # Initial state broadcast per chunk (reference broadcasts the same state to
    # every chunk; no cross-chunk chaining), packed [re | im] on 256 lanes.
    if state is None:
        st = fused["default_state"]
        st_re = jnp.broadcast_to(jnp.real(st), (nchunks, D_MEMORY))
        st_im = jnp.broadcast_to(jnp.imag(st), (nchunks, D_MEMORY))
    else:
        assert state.shape == (b, D_MEMORY)
        st_re = jnp.broadcast_to(jnp.real(state)[:, None, :],
                                 (b, c, D_MEMORY)).reshape(nchunks, D_MEMORY)
        st_im = jnp.broadcast_to(jnp.imag(state)[:, None, :],
                                 (b, c, D_MEMORY)).reshape(nchunks, D_MEMORY)
    st_packed = jnp.concatenate([st_re, st_im], axis=-1).astype(jnp.float32)

    out_packed, m_last, loss_part = _apdu_call(
        x3, st_packed, fused["wh"], fused["bh"], fused["wproj"], fused["bproj"],
        fused["w_read_blk"], fused["b_read_blk"])

    # Unpack: (B*C, W*32) -> (B, T, 32)
    output = out_packed.reshape(b, c, CHUNK_WIDTH, d_model).reshape(b, t, d_model)

    # Last hidden state = memory after the last timestep of the last chunk.
    last = m_last.reshape(b, c, 2 * D_MEMORY)[:, -1, :]
    last_state = (last[:, :D_MEMORY] + 1j * last[:, D_MEMORY:]).astype(jnp.complex64)

    # Barrier loss (kernel emits per-(chunk,lane) sums of the hinge excess).
    if MODE == "mean":
        loss = jnp.sum(loss_part) / float(nchunks * CHUNK_WIDTH * D_MEMORY)
    else:
        # TODO(synk): 'none' mode (unreduced excess) not materialized by the fused path.
        loss = jnp.sum(loss_part)
    return output, last_state, loss.astype(output.dtype)


# ----------------------------------- main ------------------------------------
if __name__ == "__main__":
    key = jax.random.PRNGKey(0)
    kp, kx = jax.random.split(key)
    params = init_params(kp)
    fused = prepare_params(params)          # one-time weight fusion, outside jit
    x = jax.random.normal(kx, (BATCH, TIMESTEPS, D_MODEL), jnp.float32)

    fwd = jax.jit(apdu_memory_cell_forward)
    output, state, loss = fwd(fused, x)
    jax.block_until_ready((output, state, loss))

    assert output.shape == (BATCH, TIMESTEPS, D_MODEL)
    assert state.shape == (BATCH, D_MEMORY)
    assert loss.shape == ()
    print("KERNEL_OK")
</pallas_src>

<mosaic_0001>
module attributes {stable_mosaic.version = 11 : i64} {
  func.func @_apdu_kernel(%arg0: i32, %arg1: memref<4x4x32xf32, #tpu.memory_space<vmem>>, %arg2: memref<4x256xf32, #tpu.memory_space<vmem>>, %arg3: memref<32x32xbf16, #tpu.memory_space<vmem>>, %arg4: memref<1x32xf32, #tpu.memory_space<vmem>>, %arg5: memref<32x3072xbf16, #tpu.memory_space<vmem>>, %arg6: memref<1x3072xf32, #tpu.memory_space<vmem>>, %arg7: memref<512x128xbf16, #tpu.memory_space<vmem>>, %arg8: memref<1x128xf32, #tpu.memory_space<vmem>>, %arg9: memref<4x128xf32, #tpu.memory_space<vmem>>, %arg10: memref<4x256xf32, #tpu.memory_space<vmem>>, %arg11: memref<4x128xf32, #tpu.memory_space<vmem>>) attributes {dimension_semantics = [#tpu.dimension_semantics<parallel>], iteration_bounds = array<i64: 1>, scalar_prefetch = 0 : i64, scratch_operands = 0 : i64, tpu.core_type = #tpu.core_type<tc>, window_params = [{transform_indices = @transform_0, window_bounds = array<i64: 4, 4, 32>}, {transform_indices = @transform_1, window_bounds = array<i64: 4, 256>}, {pipeline_mode = #tpu.pipeline_mode<synchronous>, transform_indices = @transform_2, window_bounds = array<i64: 32, 32>}, {pipeline_mode = #tpu.pipeline_mode<synchronous>, transform_indices = @transform_3, window_bounds = array<i64: 1, 32>}, {pipeline_mode = #tpu.pipeline_mode<synchronous>, transform_indices = @transform_4, window_bounds = array<i64: 32, 3072>}, {pipeline_mode = #tpu.pipeline_mode<synchronous>, transform_indices = @transform_5, window_bounds = array<i64: 1, 3072>}, {pipeline_mode = #tpu.pipeline_mode<synchronous>, transform_indices = @transform_6, window_bounds = array<i64: 512, 128>}, {pipeline_mode = #tpu.pipeline_mode<synchronous>, transform_indices = @transform_7, window_bounds = array<i64: 1, 128>}, {transform_indices = @transform_8, window_bounds = array<i64: 4, 128>}, {transform_indices = @transform_9, window_bounds = array<i64: 4, 256>}, {transform_indices = @transform_10, window_bounds = array<i64: 4, 128>}]} {
    %c0 = arith.constant 0 : index
    %c0_0 = arith.constant 0 : index
    %0 = vector.load %arg2[%c0, %c0_0] : memref<4x256xf32, #tpu.memory_space<vmem>>, vector<4x128xf32>
    %c0_1 = arith.constant 0 : index
    %c128 = arith.constant 128 : index
    %1 = vector.load %arg2[%c0_1, %c128] : memref<4x256xf32, #tpu.memory_space<vmem>>, vector<4x128xf32>
    %cst = arith.constant 0.000000e+00 : f32
    %2 = vector.broadcast %cst : f32 to vector<4x128xf32>
    %cst_2 = arith.constant 0.000000e+00 : f32
    %3 = vector.broadcast %cst_2 : f32 to vector<4x128xf32>
    %c0_3 = arith.constant 0 : index
    %c0_4 = arith.constant 0 : index
    %c0_5 = arith.constant 0 : index
    %4 = vector.load %arg1[%c0_3, %c0_4, %c0_5] : memref<4x4x32xf32, #tpu.memory_space<vmem>>, vector<1x4x32xf32>
    %5 = vector.shape_cast %4 : vector<1x4x32xf32> to vector<4x32xf32>
    %6 = arith.truncf %5 : vector<4x32xf32> to vector<4x32xbf16>
    %c0_6 = arith.constant 0 : index
    %c0_7 = arith.constant 0 : index
    %7 = vector.load %arg3[%c0_6, %c0_7] : memref<32x32xbf16, #tpu.memory_space<vmem>>, vector<32x32xbf16>
    %cst_8 = arith.constant dense<0.000000e+00> : vector<4x32xf32>
    %8 = tpu.matmul %6, %7, %cst_8 {dimension_numbers = #tpu.dot_dimension_numbers<[1], [0], [0], [1], [0, 0, 1, 1], [], []>} : vector<4x32xbf16>, vector<32x32xbf16>, vector<4x32xf32> -> vector<4x32xf32>
    %c0_9 = arith.constant 0 : index
    %c0_10 = arith.constant 0 : index
    %9 = vector.load %arg4[%c0_9, %c0_10] : memref<1x32xf32, #tpu.memory_space<vmem>>, vector<1x32xf32>
    %10 = vector.broadcast %9 : vector<1x32xf32> to vector<4x32xf32>
    %11 = arith.addf %8, %10 : vector<4x32xf32>
    %cst_11 = arith.constant 0.000000e+00 : f32
    %12 = vector.broadcast %cst_11 : f32 to vector<4x32xf32>
    %13 = arith.maximumf %11, %12 : vector<4x32xf32>
    %14 = arith.truncf %13 : vector<4x32xf32> to vector<4x32xbf16>
    %c0_12 = arith.constant 0 : index
    %c0_13 = arith.constant 0 : index
    %15 = vector.load %arg5[%c0_12, %c0_13] : memref<32x3072xbf16, #tpu.memory_space<vmem>>, vector<32x3072xbf16>
    %cst_14 = arith.constant dense<0.000000e+00> : vector<4x3072xf32>
    %16 = tpu.matmul %14, %15, %cst_14 {dimension_numbers = #tpu.dot_dimension_numbers<[1], [0], [0], [1], [0, 0, 1, 1], [], []>} : vector<4x32xbf16>, vector<32x3072xbf16>, vector<4x3072xf32> -> vector<4x3072xf32>
    %c0_15 = arith.constant 0 : index
    %c0_16 = arith.constant 0 : index
    %17 = vector.load %arg6[%c0_15, %c0_16] : memref<1x3072xf32, #tpu.memory_space<vmem>>, vector<1x3072xf32>
    %18 = vector.broadcast %17 : vector<1x3072xf32> to vector<4x3072xf32>
    %19 = arith.addf %16, %18 : vector<4x3072xf32>
    %20 = vector.extract_strided_slice %19 {offsets = [0, 0], sizes = [4, 128], strides = [1, 1]} : vector<4x3072xf32> to vector<4x128xf32>
    %21 = vector.extract_strided_slice %19 {offsets = [0, 1536], sizes = [4, 128], strides = [1, 1]} : vector<4x3072xf32> to vector<4x128xf32>
    %cst_17 = arith.constant dense<0xFF800000> : vector<4xf32>
    %22 = vector.multi_reduction <maximumf>, %20, %cst_17 [1] : vector<4x128xf32> to vector<4xf32>
    %23 = vector.shape_cast %22 : vector<4xf32> to vector<4x1xf32>
    %24 = vector.broadcast %23 : vector<4x1xf32> to vector<4x128xf32>
    %25 = arith.subf %20, %24 : vector<4x128xf32>
    %26 = math.exp %25 : vector<4x128xf32>
    %cst_18 = arith.constant dense<0.000000e+00> : vector<4xf32>
    %27 = vector.multi_reduction <add>, %26, %cst_18 [1] : vector<4x128xf32> to vector<4xf32>
    %28 = vector.shape_cast %27 : vector<4xf32> to vector<4x1xf32>
    %cst_19 = arith.constant 6.250000e-02 : f32
    %29 = vector.broadcast %cst_19 : f32 to vector<4x1xf32>
    %30 = arith.mulf %28, %29 : vector<4x1xf32>
    %31 = tpu.reciprocal %30 {approx = true} : vector<4x1xf32> -> vector<4x1xf32>
    %32 = vector.broadcast %31 : vector<4x1xf32> to vector<4x128xf32>
    %33 = arith.mulf %26, %32 : vector<4x128xf32>
    %34 = arith.mulf %33, %21 : vector<4x128xf32>
    %35 = vector.extract_strided_slice %19 {offsets = [0, 128], sizes = [4, 128], strides = [1, 1]} : vector<4x3072xf32> to vector<4x128xf32>
    %36 = vector.extract_strided_slice %19 {offsets = [0, 1664], sizes = [4, 128], strides = [1, 1]} : vector<4x3072xf32> to vector<4x128xf32>
    %cst_20 = arith.constant dense<0xFF800000> : vector<4xf32>
    %37 = vector.multi_reduction <maximumf>, %35, %cst_20 [1] : vector<4x128xf32> to vector<4xf32>
    %38 = vector.shape_cast %37 : vector<4xf32> to vector<4x1xf32>
    %39 = vector.broadcast %38 : vector<4x1xf32> to vector<4x128xf32>
    %40 = arith.subf %35, %39 : vector<4x128xf32>
    %41 = math.exp %40 : vector<4x128xf32>
    %cst_21 = arith.constant dense<0.000000e+00> : vector<4xf32>
    %42 = vector.multi_reduction <add>, %41, %cst_21 [1] : vector<4x128xf32> to vector<4xf32>
    %43 = vector.shape_cast %42 : vector<4xf32> to vector<4x1xf32>
    %cst_22 = arith.constant 6.250000e-02 : f32
    %44 = vector.broadcast %cst_22 : f32 to vector<4x1xf32>
    %45 = arith.mulf %43, %44 : vector<4x1xf32>
    %46 = tpu.reciprocal %45 {approx = true} : vector<4x1xf32> -> vector<4x1xf32>
    %47 = vector.broadcast %46 : vector<4x1xf32> to vector<4x128xf32>
    %48 = arith.mulf %41, %47 : vector<4x128xf32>
    %49 = arith.mulf %48, %36 : vector<4x128xf32>
    %50 = arith.addf %34, %49 : vector<4x128xf32>
    %51 = vector.extract_strided_slice %19 {offsets = [0, 256], sizes = [4, 128], strides = [1, 1]} : vector<4x3072xf32> to vector<4x128xf32>
    %52 = vector.extract_strided_slice %19 {offsets = [0, 1792], sizes = [4, 128], strides = [1, 1]} : vector<4x3072xf32> to vector<4x128xf32>
    %cst_23 = arith.constant dense<0xFF800000> : vector<4xf32>
    %53 = vector.multi_reduction <maximumf>, %51, %cst_23 [1] : vector<4x128xf32> to vector<4xf32>
    %54 = vector.shape_cast %53 : vector<4xf32> to vector<4x1xf32>
    %55 = vector.broadcast %54 : vector<4x1xf32> to vector<4x128xf32>
    %56 = arith.subf %51, %55 : vector<4x128xf32>
    %57 = math.exp %56 : vector<4x128xf32>
    %cst_24 = arith.constant dense<0.000000e+00> : vector<4xf32>
    %58 = vector.multi_reduction <add>, %57, %cst_24 [1] : vector<4x128xf32> to vector<4xf32>
    %59 = vector.shape_cast %58 : vector<4xf32> to vector<4x1xf32>
    %cst_25 = arith.constant 6.250000e-02 : f32
    %60 = vector.broadcast %cst_25 : f32 to vector<4x1xf32>
    %61 = arith.mulf %59, %60 : vector<4x1xf32>
    %62 = tpu.reciprocal %61 {approx = true} : vector<4x1xf32> -> vector<4x1xf32>
    %63 = vector.broadcast %62 : vector<4x1xf32> to vector<4x128xf32>
    %64 = arith.mulf %57, %63 : vector<4x128xf32>
    %65 = arith.mulf %64, %52 : vector<4x128xf32>
    %66 = vector.extract_strided_slice %19 {offsets = [0, 384], sizes = [4, 128], strides = [1, 1]} : vector<4x3072xf32> to vector<4x128xf32>
    %67 = vector.extract_strided_slice %19 {offsets = [0, 1920], sizes = [4, 128], strides = [1, 1]} : vector<4x3072xf32> to vector<4x128xf32>
    %cst_26 = arith.constant dense<0xFF800000> : vector<4xf32>
    %68 = vector.multi_reduction <maximumf>, %66, %cst_26 [1] : vector<4x128xf32> to vector<4xf32>
    %69 = vector.shape_cast %68 : vector<4xf32> to vector<4x1xf32>
    %70 = vector.broadcast %69 : vector<4x1xf32> to vector<4x128xf32>
    %71 = arith.subf %66, %70 : vector<4x128xf32>
    %72 = math.exp %71 : vector<4x128xf32>
    %cst_27 = arith.constant dense<0.000000e+00> : vector<4xf32>
    %73 = vector.multi_reduction <add>, %72, %cst_27 [1] : vector<4x128xf32> to vector<4xf32>
    %74 = vector.shape_cast %73 : vector<4xf32> to vector<4x1xf32>
    %cst_28 = arith.constant 6.250000e-02 : f32
    %75 = vector.broadcast %cst_28 : f32 to vector<4x1xf32>
    %76 = arith.mulf %74, %75 : vector<4x1xf32>
    %77 = tpu.reciprocal %76 {approx = true} : vector<4x1xf32> -> vector<4x1xf32>
    %78 = vector.broadcast %77 : vector<4x1xf32> to vector<4x128xf32>
    %79 = arith.mulf %72, %78 : vector<4x128xf32>
    %80 = arith.mulf %79, %67 : vector<4x128xf32>
    %81 = arith.addf %65, %80 : vector<4x128xf32>
    %82 = vector.extract_strided_slice %19 {offsets = [0, 512], sizes = [4, 128], strides = [1, 1]} : vector<4x3072xf32> to vector<4x128xf32>
    %83 = vector.extract_strided_slice %19 {offsets = [0, 2048], sizes = [4, 128], strides = [1, 1]} : vector<4x3072xf32> to vector<4x128xf32>
    %cst_29 = arith.constant dense<0xFF800000> : vector<4xf32>
    %84 = vector.multi_reduction <maximumf>, %82, %cst_29 [1] : vector<4x128xf32> to vector<4xf32>
    %85 = vector.shape_cast %84 : vector<4xf32> to vector<4x1xf32>
    %86 = vector.broadcast %85 : vector<4x1xf32> to vector<4x128xf32>
    %87 = arith.subf %82, %86 : vector<4x128xf32>
    %88 = math.exp %87 : vector<4x128xf32>
    %cst_30 = arith.constant dense<0.000000e+00> : vector<4xf32>
    %89 = vector.multi_reduction <add>, %88, %cst_30 [1] : vector<4x128xf32> to vector<4xf32>
    %90 = vector.shape_cast %89 : vector<4xf32> to vector<4x1xf32>
    %cst_31 = arith.constant 6.250000e-02 : f32
    %91 = vector.broadcast %cst_31 : f32 to vector<4x1xf32>
    %92 = arith.mulf %90, %91 : vector<4x1xf32>
    %93 = tpu.reciprocal %92 {approx = true} : vector<4x1xf32> -> vector<4x1xf32>
    %94 = vector.broadcast %93 : vector<4x1xf32> to vector<4x128xf32>
    %95 = arith.mulf %88, %94 : vector<4x128xf32>
    %96 = arith.mulf %95, %83 : vector<4x128xf32>
    %97 = vector.extract_strided_slice %19 {offsets = [0, 640], sizes = [4, 128], strides = [1, 1]} : vector<4x3072xf32> to vector<4x128xf32>
    %98 = vector.extract_strided_slice %19 {offsets = [0, 2176], sizes = [4, 128], strides = [1, 1]} : vector<4x3072xf32> to vector<4x128xf32>
    %cst_32 = arith.constant dense<0xFF800000> : vector<4xf32>
    %99 = vector.multi_reduction <maximumf>, %97, %cst_32 [1] : vector<4x128xf32> to vector<4xf32>
    %100 = vector.shape_cast %99 : vector<4xf32> to vector<4x1xf32>
    %101 = vector.broadcast %100 : vector<4x1xf32> to vector<4x128xf32>
    %102 = arith.subf %97, %101 : vector<4x128xf32>
    %103 = math.exp %102 : vector<4x128xf32>
    %cst_33 = arith.constant dense<0.000000e+00> : vector<4xf32>
    %104 = vector.multi_reduction <add>, %103, %cst_33 [1] : vector<4x128xf32> to vector<4xf32>
    %105 = vector.shape_cast %104 : vector<4xf32> to vector<4x1xf32>
    %cst_34 = arith.constant 6.250000e-02 : f32
    %106 = vector.broadcast %cst_34 : f32 to vector<4x1xf32>
    %107 = arith.mulf %105, %106 : vector<4x1xf32>
    %108 = tpu.reciprocal %107 {approx = true} : vector<4x1xf32> -> vector<4x1xf32>
    %109 = vector.broadcast %108 : vector<4x1xf32> to vector<4x128xf32>
    %110 = arith.mulf %103, %109 : vector<4x128xf32>
    %111 = arith.mulf %110, %98 : vector<4x128xf32>
    %112 = arith.addf %96, %111 : vector<4x128xf32>
    %113 = vector.extract_strided_slice %19 {offsets = [0, 768], sizes = [4, 128], strides = [1, 1]} : vector<4x3072xf32> to vector<4x128xf32>
    %114 = vector.extract_strided_slice %19 {offsets = [0, 2304], sizes = [4, 128], strides = [1, 1]} : vector<4x3072xf32> to vector<4x128xf32>
    %cst_35 = arith.constant dense<0xFF800000> : vector<4xf32>
    %115 = vector.multi_reduction <maximumf>, %113, %cst_35 [1] : vector<4x128xf32> to vector<4xf32>
    %116 = vector.shape_cast %115 : vector<4xf32> to vector<4x1xf32>
    %117 = vector.broadcast %116 : vector<4x1xf32> to vector<4x128xf32>
    %118 = arith.subf %113, %117 : vector<4x128xf32>
    %119 = math.exp %118 : vector<4x128xf32>
    %cst_36 = arith.constant dense<0.000000e+00> : vector<4xf32>
    %120 = vector.multi_reduction <add>, %119, %cst_36 [1] : vector<4x128xf32> to vector<4xf32>
    %121 = vector.shape_cast %120 : vector<4xf32> to vector<4x1xf32>
    %cst_37 = arith.constant 6.250000e-02 : f32
    %122 = vector.broadcast %cst_37 : f32 to vector<4x1xf32>
    %123 = arith.mulf %121, %122 : vector<4x1xf32>
    %124 = tpu.reciprocal %123 {approx = true} : vector<4x1xf32> -> vector<4x1xf32>
    %125 = vector.broadcast %124 : vector<4x1xf32> to vector<4x128xf32>
    %126 = arith.mulf %119, %125 : vector<4x128xf32>
    %127 = arith.mulf %126, %114 : vector<4x128xf32>
    %128 = vector.extract_strided_slice %19 {offsets = [0, 896], sizes = [4, 128], strides = [1, 1]} : vector<4x3072xf32> to vector<4x128xf32>
    %129 = vector.extract_strided_slice %19 {offsets = [0, 2432], sizes = [4, 128], strides = [1, 1]} : vector<4x3072xf32> to vector<4x128xf32>
    %cst_38 = arith.constant dense<0xFF800000> : vector<4xf32>
    %130 = vector.multi_reduction <maximumf>, %128, %cst_38 [1] : vector<4x128xf32> to vector<4xf32>
    %131 = vector.shape_cast %130 : vector<4xf32> to vector<4x1xf32>
    %132 = vector.broadcast %131 : vector<4x1xf32> to vector<4x128xf32>
    %133 = arith.subf %128, %132 : vector<4x128xf32>
    %134 = math.exp %133 : vector<4x128xf32>
    %cst_39 = arith.constant dense<0.000000e+00> : vector<4xf32>
    %135 = vector.multi_reduction <add>, %134, %cst_39 [1] : vector<4x128xf32> to vector<4xf32>
    %136 = vector.shape_cast %135 : vector<4xf32> to vector<4x1xf32>
    %cst_40 = arith.constant 6.250000e-02 : f32
    %137 = vector.broadcast %cst_40 : f32 to vector<4x1xf32>
    %138 = arith.mulf %136, %137 : vector<4x1xf32>
    %139 = tpu.reciprocal %138 {approx = true} : vector<4x1xf32> -> vector<4x1xf32>
    %140 = vector.broadcast %139 : vector<4x1xf32> to vector<4x128xf32>
    %141 = arith.mulf %134, %140 : vector<4x128xf32>
    %142 = arith.mulf %141, %129 : vector<4x128xf32>
    %143 = arith.addf %127, %142 : vector<4x128xf32>
    %144 = vector.extract_strided_slice %19 {offsets = [0, 1024], sizes = [4, 128], strides = [1, 1]} : vector<4x3072xf32> to vector<4x128xf32>
    %145 = vector.extract_strided_slice %19 {offsets = [0, 2560], sizes = [4, 128], strides = [1, 1]} : vector<4x3072xf32> to vector<4x128xf32>
    %cst_41 = arith.constant dense<0xFF800000> : vector<4xf32>
    %146 = vector.multi_reduction <maximumf>, %144, %cst_41 [1] : vector<4x128xf32> to vector<4xf32>
    %147 = vector.shape_cast %146 : vector<4xf32> to vector<4x1xf32>
    %148 = vector.broadcast %147 : vector<4x1xf32> to vector<4x128xf32>
    %149 = arith.subf %144, %148 : vector<4x128xf32>
    %150 = math.exp %149 : vector<4x128xf32>
    %cst_42 = arith.constant dense<0.000000e+00> : vector<4xf32>
    %151 = vector.multi_reduction <add>, %150, %cst_42 [1] : vector<4x128xf32> to vector<4xf32>
    %152 = vector.shape_cast %151 : vector<4xf32> to vector<4x1xf32>
    %cst_43 = arith.constant 6.250000e-02 : f32
    %153 = vector.broadcast %cst_43 : f32 to vector<4x1xf32>
    %154 = arith.mulf %152, %153 : vector<4x1xf32>
    %155 = tpu.reciprocal %154 {approx = true} : vector<4x1xf32> -> vector<4x1xf32>
    %156 = vector.broadcast %155 : vector<4x1xf32> to vector<4x128xf32>
    %157 = arith.mulf %150, %156 : vector<4x128xf32>
    %158 = arith.mulf %157, %145 : vector<4x128xf32>
    %159 = vector.extract_strided_slice %19 {offsets = [0, 1152], sizes = [4, 128], strides = [1, 1]} : vector<4x3072xf32> to vector<4x128xf32>
    %160 = vector.extract_strided_slice %19 {offsets = [0, 2688], sizes = [4, 128], strides = [1, 1]} : vector<4x3072xf32> to vector<4x128xf32>
    %cst_44 = arith.constant dense<0xFF800000> : vector<4xf32>
    %161 = vector.multi_reduction <maximumf>, %159, %cst_44 [1] : vector<4x128xf32> to vector<4xf32>
    %162 = vector.shape_cast %161 : vector<4xf32> to vector<4x1xf32>
    %163 = vector.broadcast %162 : vector<4x1xf32> to vector<4x128xf32>
    %164 = arith.subf %159, %163 : vector<4x128xf32>
    %165 = math.exp %164 : vector<4x128xf32>
    %cst_45 = arith.constant dense<0.000000e+00> : vector<4xf32>
    %166 = vector.multi_reduction <add>, %165, %cst_45 [1] : vector<4x128xf32> to vector<4xf32>
    %167 = vector.shape_cast %166 : vector<4xf32> to vector<4x1xf32>
    %cst_46 = arith.constant 6.250000e-02 : f32
    %168 = vector.broadcast %cst_46 : f32 to vector<4x1xf32>
    %169 = arith.mulf %167, %168 : vector<4x1xf32>
    %170 = tpu.reciprocal %169 {approx = true} : vector<4x1xf32> -> vector<4x1xf32>
    %171 = vector.broadcast %170 : vector<4x1xf32> to vector<4x128xf32>
    %172 = arith.mulf %165, %171 : vector<4x128xf32>
    %173 = arith.mulf %172, %160 : vector<4x128xf32>
    %174 = arith.addf %158, %173 : vector<4x128xf32>
    %175 = vector.extract_strided_slice %19 {offsets = [0, 1280], sizes = [4, 128], strides = [1, 1]} : vector<4x3072xf32> to vector<4x128xf32>
    %176 = vector.extract_strided_slice %19 {offsets = [0, 2816], sizes = [4, 128], strides = [1, 1]} : vector<4x3072xf32> to vector<4x128xf32>
    %cst_47 = arith.constant dense<0xFF800000> : vector<4xf32>
    %177 = vector.multi_reduction <maximumf>, %175, %cst_47 [1] : vector<4x128xf32> to vector<4xf32>
    %178 = vector.shape_cast %177 : vector<4xf32> to vector<4x1xf32>
    %179 = vector.broadcast %178 : vector<4x1xf32> to vector<4x128xf32>
    %180 = arith.subf %175, %179 : vector<4x128xf32>
    %181 = math.exp %180 : vector<4x128xf32>
    %cst_48 = arith.constant dense<0.000000e+00> : vector<4xf32>
    %182 = vector.multi_reduction <add>, %181, %cst_48 [1] : vector<4x128xf32> to vector<4xf32>
    %183 = vector.shape_cast %182 : vector<4xf32> to vector<4x1xf32>
    %cst_49 = arith.constant 6.250000e-02 : f32
    %184 = vector.broadcast %cst_49 : f32 to vector<4x1xf32>
    %185 = arith.mulf %183, %184 : vector<4x1xf32>
    %186 = tpu.reciprocal %185 {approx = true} : vector<4x1xf32> -> vector<4x1xf32>
    %187 = vector.broadcast %186 : vector<4x1xf32> to vector<4x128xf32>
    %188 = arith.mulf %181, %187 : vector<4x128xf32>
    %189 = arith.mulf %188, %176 : vector<4x128xf32>
    %190 = vector.extract_strided_slice %19 {offsets = [0, 1408], sizes = [4, 128], strides = [1, 1]} : vector<4x3072xf32> to vector<4x128xf32>
    %191 = vector.extract_strided_slice %19 {offsets = [0, 2944], sizes = [4, 128], strides = [1, 1]} : vector<4x3072xf32> to vector<4x128xf32>
    %cst_50 = arith.constant dense<0xFF800000> : vector<4xf32>
    %192 = vector.multi_reduction <maximumf>, %190, %cst_50 [1] : vector<4x128xf32> to vector<4xf32>
    %193 = vector.shape_cast %192 : vector<4xf32> to vector<4x1xf32>
    %194 = vector.broadcast %193 : vector<4x1xf32> to vector<4x128xf32>
    %195 = arith.subf %190, %194 : vector<4x128xf32>
    %196 = math.exp %195 : vector<4x128xf32>
    %cst_51 = arith.constant dense<0.000000e+00> : vector<4xf32>
    %197 = vector.multi_reduction <add>, %196, %cst_51 [1] : vector<4x128xf32> to vector<4xf32>
    %198 = vector.shape_cast %197 : vector<4xf32> to vector<4x1xf32>
    %cst_52 = arith.constant 6.250000e-02 : f32
    %199 = vector.broadcast %cst_52 : f32 to vector<4x1xf32>
    %200 = arith.mulf %198, %199 : vector<4x1xf32>
    %201 = tpu.reciprocal %200 {approx = true} : vector<4x1xf32> -> vector<4x1xf32>
    %202 = vector.broadcast %201 : vector<4x1xf32> to vector<4x128xf32>
    %203 = arith.mulf %196, %202 : vector<4x128xf32>
    %204 = arith.mulf %203, %191 : vector<4x128xf32>
    %205 = arith.addf %189, %204 : vector<4x128xf32>
    %cst_53 = arith.constant 0.000000e+00 : f32
    %206 = vector.broadcast %cst_53 : f32 to vector<4x128xf32>
    %207 = arith.maximumf %112, %206 : vector<4x128xf32>
    %208 = math.absf %112 : vector<4x128xf32>
    %cst_54 = arith.constant 0.000000e+00 : f32
    %209 = vector.broadcast %cst_54 : f32 to vector<4x128xf32>
    %210 = arith.subf %209, %208 : vector<4x128xf32>
    %211 = math.exp %210 : vector<4x128xf32>
    %cst_55 = arith.constant 1.000000e+00 : f32
    %212 = vector.broadcast %cst_55 : f32 to vector<4x128xf32>
    %213 = arith.addf %212, %211 : vector<4x128xf32>
    %214 = math.log %213 : vector<4x128xf32>
    %215 = arith.addf %207, %214 : vector<4x128xf32>
    %216 = arith.mulf %50, %215 : vector<4x128xf32>
    %cst_56 = arith.constant 0.000000e+00 : f32
    %217 = vector.broadcast %cst_56 : f32 to vector<4x128xf32>
    %218 = arith.maximumf %205, %217 : vector<4x128xf32>
    %cst_57 = arith.constant 0.000000e+00 : f32
    %219 = vector.broadcast %cst_57 : f32 to vector<4x128xf32>
    %220 = arith.subf %219, %218 : vector<4x128xf32>
    %221 = math.exp %220 : vector<4x128xf32>
    %222 = math.cos %174 : vector<4x128xf32>
    %223 = arith.mulf %221, %222 : vector<4x128xf32>
    %224 = math.sin %174 : vector<4x128xf32>
    %225 = arith.mulf %221, %224 : vector<4x128xf32>
    %226 = arith.mulf %223, %0 : vector<4x128xf32>
    %227 = arith.mulf %225, %1 : vector<4x128xf32>
    %228 = arith.subf %226, %227 : vector<4x128xf32>
    %229 = arith.addf %228, %143 : vector<4x128xf32>
    %230 = arith.mulf %223, %1 : vector<4x128xf32>
    %231 = arith.mulf %225, %0 : vector<4x128xf32>
    %232 = arith.addf %230, %231 : vector<4x128xf32>
    %233 = arith.addf %2, %218 : vector<4x128xf32>
    %cst_58 = arith.constant 70.4287872 : f32
    %234 = vector.broadcast %cst_58 : f32 to vector<4x128xf32>
    %235 = arith.subf %233, %234 : vector<4x128xf32>
    %cst_59 = arith.constant 0.000000e+00 : f32
    %236 = vector.broadcast %cst_59 : f32 to vector<4x128xf32>
    %237 = arith.maximumf %235, %236 : vector<4x128xf32>
    %238 = arith.addf %3, %237 : vector<4x128xf32>
    %239 = math.cos %81 : vector<4x128xf32>
    %240 = arith.mulf %229, %239 : vector<4x128xf32>
    %241 = math.sin %81 : vector<4x128xf32>
    %242 = arith.mulf %232, %241 : vector<4x128xf32>
    %243 = arith.subf %240, %242 : vector<4x128xf32>
    %244 = arith.mulf %243, %216 : vector<4x128xf32>
    %c1 = arith.constant 1 : index
    %c0_60 = arith.constant 0 : index
    %c0_61 = arith.constant 0 : index
    %245 = vector.load %arg1[%c1, %c0_60, %c0_61] : memref<4x4x32xf32, #tpu.memory_space<vmem>>, vector<1x4x32xf32>
    %246 = vector.shape_cast %245 : vector<1x4x32xf32> to vector<4x32xf32>
    %247 = arith.truncf %246 : vector<4x32xf32> to vector<4x32xbf16>
    %c0_62 = arith.constant 0 : index
    %c0_63 = arith.constant 0 : index
    %248 = vector.load %arg3[%c0_62, %c0_63] : memref<32x32xbf16, #tpu.memory_space<vmem>>, vector<32x32xbf16>
    %cst_64 = arith.constant dense<0.000000e+00> : vector<4x32xf32>
    %249 = tpu.matmul %247, %248, %cst_64 {dimension_numbers = #tpu.dot_dimension_numbers<[1], [0], [0], [1], [0, 0, 1, 1], [], []>} : vector<4x32xbf16>, vector<32x32xbf16>, vector<4x32xf32> -> vector<4x32xf32>
    %c0_65 = arith.constant 0 : index
    %c0_66 = arith.constant 0 : index
    %250 = vector.load %arg4[%c0_65, %c0_66] : memref<1x32xf32, #tpu.memory_space<vmem>>, vector<1x32xf32>
    %251 = vector.broadcast %250 : vector<1x32xf32> to vector<4x32xf32>
    %252 = arith.addf %249, %251 : vector<4x32xf32>
    %cst_67 = arith.constant 0.000000e+00 : f32
    %253 = vector.broadcast %cst_67 : f32 to vector<4x32xf32>
    %254 = arith.maximumf %252, %253 : vector<4x32xf32>
    %255 = arith.truncf %254 : vector<4x32xf32> to vector<4x32xbf16>
    %c0_68 = arith.constant 0 : index
    %c0_69 = arith.constant 0 : index
    %256 = vector.load %arg5[%c0_68, %c0_69] : memref<32x3072xbf16, #tpu.memory_space<vmem>>, vector<32x3072xbf16>
    %cst_70 = arith.constant dense<0.000000e+00> : vector<4x3072xf32>
    %257 = tpu.matmul %255, %256, %cst_70 {dimension_numbers = #tpu.dot_dimension_numbers<[1], [0], [0], [1], [0, 0, 1, 1], [], []>} : vector<4x32xbf16>, vector<32x3072xbf16>, vector<4x3072xf32> -> vector<4x3072xf32>
    %c0_71 = arith.constant 0 : index
    %c0_72 = arith.constant 0 : index
    %258 = vector.load %arg6[%c0_71, %c0_72] : memref<1x3072xf32, #tpu.memory_space<vmem>>, vector<1x3072xf32>
    %259 = vector.broadcast %258 : vector<1x3072xf32> to vector<4x3072xf32>
    %260 = arith.addf %257, %259 : vector<4x3072xf32>
    %261 = vector.extract_strided_slice %260 {offsets = [0, 0], sizes = [4, 128], strides = [1, 1]} : vector<4x3072xf32> to vector<4x128xf32>
    %262 = vector.extract_strided_slice %260 {offsets = [0, 1536], sizes = [4, 128], strides = [1, 1]} : vector<4x3072xf32> to vector<4x128xf32>
    %cst_73 = arith.constant dense<0xFF800000> : vector<4xf32>
    %263 = vector.multi_reduction <maximumf>, %261, %cst_73 [1] : vector<4x128xf32> to vector<4xf32>
    %264 = vector.shape_cast %263 : vector<4xf32> to vector<4x1xf32>
    %265 = vector.broadcast %264 : vector<4x1xf32> to vector<4x128xf32>
    %266 = arith.subf %261, %265 : vector<4x128xf32>
    %267 = math.exp %266 : vector<4x128xf32>
    %cst_74 = arith.constant dense<0.000000e+00> : vector<4xf32>
    %268 = vector.multi_reduction <add>, %267, %cst_74 [1] : vector<4x128xf32> to vector<4xf32>
    %269 = vector.shape_cast %268 : vector<4xf32> to vector<4x1xf32>
    %cst_75 = arith.constant 6.250000e-02 : f32
    %270 = vector.broadcast %cst_75 : f32 to vector<4x1xf32>
    %271 = arith.mulf %269, %270 : vector<4x1xf32>
    %272 = tpu.reciprocal %271 {approx = true} : vector<4x1xf32> -> vector<4x1xf32>
    %273 = vector.broadcast %272 : vector<4x1xf32> to vector<4x128xf32>
    %274 = arith.mulf %267, %273 : vector<4x128xf32>
    %275 = arith.mulf %274, %262 : vector<4x128xf32>
    %276 = vector.extract_strided_slice %260 {offsets = [0, 128], sizes = [4, 128], strides = [1, 1]} : vector<4x3072xf32> to vector<4x128xf32>
    %277 = vector.extract_strided_slice %260 {offsets = [0, 1664], sizes = [4, 128], strides = [1, 1]} : vector<4x3072xf32> to vector<4x128xf32>
    %cst_76 = arith.constant dense<0xFF800000> : vector<4xf32>
    %278 = vector.multi_reduction <maximumf>, %276, %cst_76 [1] : vector<4x128xf32> to vector<4xf32>
    %279 = vector.shape_cast %278 : vector<4xf32> to vector<4x1xf32>
    %280 = vector.broadcast %279 : vector<4x1xf32> to vector<4x128xf32>
    %281 = arith.subf %276, %280 : vector<4x128xf32>
    %282 = math.exp %281 : vector<4x128xf32>
    %cst_77 = arith.constant dense<0.000000e+00> : vector<4xf32>
    %283 = vector.multi_reduction <add>, %282, %cst_77 [1] : vector<4x128xf32> to vector<4xf32>
    %284 = vector.shape_cast %283 : vector<4xf32> to vector<4x1xf32>
    %cst_78 = arith.constant 6.250000e-02 : f32
    %285 = vector.broadcast %cst_78 : f32 to vector<4x1xf32>
    %286 = arith.mulf %284, %285 : vector<4x1xf32>
    %287 = tpu.reciprocal %286 {approx = true} : vector<4x1xf32> -> vector<4x1xf32>
    %288 = vector.broadcast %287 : vector<4x1xf32> to vector<4x128xf32>
    %289 = arith.mulf %282, %288 : vector<4x128xf32>
    %290 = arith.mulf %289, %277 : vector<4x128xf32>
    %291 = arith.addf %275, %290 : vector<4x128xf32>
    %292 = vector.extract_strided_slice %260 {offsets = [0, 256], sizes = [4, 128], strides = [1, 1]} : vector<4x3072xf32> to vector<4x128xf32>
    %293 = vector.extract_strided_slice %260 {offsets = [0, 1792], sizes = [4, 128], strides = [1, 1]} : vector<4x3072xf32> to vector<4x128xf32>
    %cst_79 = arith.constant dense<0xFF800000> : vector<4xf32>
    %294 = vector.multi_reduction <maximumf>, %292, %cst_79 [1] : vector<4x128xf32> to vector<4xf32>
    %295 = vector.shape_cast %294 : vector<4xf32> to vector<4x1xf32>
    %296 = vector.broadcast %295 : vector<4x1xf32> to vector<4x128xf32>
    %297 = arith.subf %292, %296 : vector<4x128xf32>
    %298 = math.exp %297 : vector<4x128xf32>
    %cst_80 = arith.constant dense<0.000000e+00> : vector<4xf32>
    %299 = vector.multi_reduction <add>, %298, %cst_80 [1] : vector<4x128xf32> to vector<4xf32>
    %300 = vector.shape_cast %299 : vector<4xf32> to vector<4x1xf32>
    %cst_81 = arith.constant 6.250000e-02 : f32
    %301 = vector.broadcast %cst_81 : f32 to vector<4x1xf32>
    %302 = arith.mulf %300, %301 : vector<4x1xf32>
    %303 = tpu.reciprocal %302 {approx = true} : vector<4x1xf32> -> vector<4x1xf32>
    %304 = vector.broadcast %303 : vector<4x1xf32> to vector<4x128xf32>
    %305 = arith.mulf %298, %304 : vector<4x128xf32>
    %306 = arith.mulf %305, %293 : vector<4x128xf32>
    %307 = vector.extract_strided_slice %260 {offsets = [0, 384], sizes = [4, 128], strides = [1, 1]} : vector<4x3072xf32> to vector<4x128xf32>
    %308 = vector.extract_strided_slice %260 {offsets = [0, 1920], sizes = [4, 128], strides = [1, 1]} : vector<4x3072xf32> to vector<4x128xf32>
    %cst_82 = arith.constant dense<0xFF800000> : vector<4xf32>
    %309 = vector.multi_reduction <maximumf>, %307, %cst_82 [1] : vector<4x128xf32> to vector<4xf32>
    %310 = vector.shape_cast %309 : vector<4xf32> to vector<4x1xf32>
    %311 = vector.broadcast %310 : vector<4x1xf32> to vector<4x128xf32>
    %312 = arith.subf %307, %311 : vector<4x128xf32>
    %313 = math.exp %312 : vector<4x128xf32>
    %cst_83 = arith.constant dense<0.000000e+00> : vector<4xf32>
    %314 = vector.multi_reduction <add>, %313, %cst_83 [1] : vector<4x128xf32> to vector<4xf32>
    %315 = vector.shape_cast %314 : vector<4xf32> to vector<4x1xf32>
    %cst_84 = arith.constant 6.250000e-02 : f32
    %316 = vector.broadcast %cst_84 : f32 to vector<4x1xf32>
    %317 = arith.mulf %315, %316 : vector<4x1xf32>
    %318 = tpu.reciprocal %317 {approx = true} : vector<4x1xf32> -> vector<4x1xf32>
    %319 = vector.broadcast %318 : vector<4x1xf32> to vector<4x128xf32>
    %320 = arith.mulf %313, %319 : vector<4x128xf32>
    %321 = arith.mulf %320, %308 : vector<4x128xf32>
    %322 = arith.addf %306, %321 : vector<4x128xf32>
    %323 = vector.extract_strided_slice %260 {offsets = [0, 512], sizes = [4, 128], strides = [1, 1]} : vector<4x3072xf32> to vector<4x128xf32>
    %324 = vector.extract_strided_slice %260 {offsets = [0, 2048], sizes = [4, 128], strides = [1, 1]} : vector<4x3072xf32> to vector<4x128xf32>
    %cst_85 = arith.constant dense<0xFF800000> : vector<4xf32>
    %325 = vector.multi_reduction <maximumf>, %323, %cst_85 [1] : vector<4x128xf32> to vector<4xf32>
    %326 = vector.shape_cast %325 : vector<4xf32> to vector<4x1xf32>
    %327 = vector.broadcast %326 : vector<4x1xf32> to vector<4x128xf32>
    %328 = arith.subf %323, %327 : vector<4x128xf32>
    %329 = math.exp %328 : vector<4x128xf32>
    %cst_86 = arith.constant dense<0.000000e+00> : vector<4xf32>
    %330 = vector.multi_reduction <add>, %329, %cst_86 [1] : vector<4x128xf32> to vector<4xf32>
    %331 = vector.shape_cast %330 : vector<4xf32> to vector<4x1xf32>
    %cst_87 = arith.constant 6.250000e-02 : f32
    %332 = vector.broadcast %cst_87 : f32 to vector<4x1xf32>
    %333 = arith.mulf %331, %332 : vector<4x1xf32>
    %334 = tpu.reciprocal %333 {approx = true} : vector<4x1xf32> -> vector<4x1xf32>
    %335 = vector.broadcast %334 : vector<4x1xf32> to vector<4x128xf32>
    %336 = arith.mulf %329, %335 : vector<4x128xf32>
    %337 = arith.mulf %336, %324 : vector<4x128xf32>
    %338 = vector.extract_strided_slice %260 {offsets = [0, 640], sizes = [4, 128], strides = [1, 1]} : vector<4x3072xf32> to vector<4x128xf32>
    %339 = vector.extract_strided_slice %260 {offsets = [0, 2176], sizes = [4, 128], strides = [1, 1]} : vector<4x3072xf32> to vector<4x128xf32>
    %cst_88 = arith.constant dense<0xFF800000> : vector<4xf32>
    %340 = vector.multi_reduction <maximumf>, %338, %cst_88 [1] : vector<4x128xf32> to vector<4xf32>
    %341 = vector.shape_cast %340 : vector<4xf32> to vector<4x1xf32>
    %342 = vector.broadcast %341 : vector<4x1xf32> to vector<4x128xf32>
    %343 = arith.subf %338, %342 : vector<4x128xf32>
    %344 = math.exp %343 : vector<4x128xf32>
    %cst_89 = arith.constant dense<0.000000e+00> : vector<4xf32>
    %345 = vector.multi_reduction <add>, %344, %cst_89 [1] : vector<4x128xf32> to vector<4xf32>
    %346 = vector.shape_cast %345 : vector<4xf32> to vector<4x1xf32>
    %cst_90 = arith.constant 6.250000e-02 : f32
    %347 = vector.broadcast %cst_90 : f32 to vector<4x1xf32>
    %348 = arith.mulf %346, %347 : vector<4x1xf32>
    %349 = tpu.reciprocal %348 {approx = true} : vector<4x1xf32> -> vector<4x1xf32>
    %350 = vector.broadcast %349 : vector<4x1xf32> to vector<4x128xf32>
    %351 = arith.mulf %344, %350 : vector<4x128xf32>
    %352 = arith.mulf %351, %339 : vector<4x128xf32>
    %353 = arith.addf %337, %352 : vector<4x128xf32>
    %354 = vector.extract_strided_slice %260 {offsets = [0, 768], sizes = [4, 128], strides = [1, 1]} : vector<4x3072xf32> to vector<4x128xf32>
    %355 = vector.extract_strided_slice %260 {offsets = [0, 2304], sizes = [4, 128], strides = [1, 1]} : vector<4x3072xf32> to vector<4x128xf32>
    %cst_91 = arith.constant dense<0xFF800000> : vector<4xf32>
    %356 = vector.multi_reduction <maximumf>, %354, %cst_91 [1] : vector<4x128xf32> to vector<4xf32>
    %357 = vector.shape_cast %356 : vector<4xf32> to vector<4x1xf32>
    %358 = vector.broadcast %357 : vector<4x1xf32> to vector<4x128xf32>
    %359 = arith.subf %354, %358 : vector<4x128xf32>
    %360 = math.exp %359 : vector<4x128xf32>
    %cst_92 = arith.constant dense<0.000000e+00> : vector<4xf32>
    %361 = vector.multi_reduction <add>, %360, %cst_92 [1] : vector<4x128xf32> to vector<4xf32>
    %362 = vector.shape_cast %361 : vector<4xf32> to vector<4x1xf32>
    %cst_93 = arith.constant 6.250000e-02 : f32
    %363 = vector.broadcast %cst_93 : f32 to vector<4x1xf32>
    %364 = arith.mulf %362, %363 : vector<4x1xf32>
    %365 = tpu.reciprocal %364 {approx = true} : vector<4x1xf32> -> vector<4x1xf32>
    %366 = vector.broadcast %365 : vector<4x1xf32> to vector<4x128xf32>
    %367 = arith.mulf %360, %366 : vector<4x128xf32>
    %368 = arith.mulf %367, %355 : vector<4x128xf32>
    %369 = vector.extract_strided_slice %260 {offsets = [0, 896], sizes = [4, 128], strides = [1, 1]} : vector<4x3072xf32> to vector<4x128xf32>
    %370 = vector.extract_strided_slice %260 {offsets = [0, 2432], sizes = [4, 128], strides = [1, 1]} : vector<4x3072xf32> to vector<4x128xf32>
    %cst_94 = arith.constant dense<0xFF800000> : vector<4xf32>
    %371 = vector.multi_reduction <maximumf>, %369, %cst_94 [1] : vector<4x128xf32> to vector<4xf32>
    %372 = vector.shape_cast %371 : vector<4xf32> to vector<4x1xf32>
    %373 = vector.broadcast %372 : vector<4x1xf32> to vector<4x128xf32>
    %374 = arith.subf %369, %373 : vector<4x128xf32>
    %375 = math.exp %374 : vector<4x128xf32>
    %cst_95 = arith.constant dense<0.000000e+00> : vector<4xf32>
    %376 = vector.multi_reduction <add>, %375, %cst_95 [1] : vector<4x128xf32> to vector<4xf32>
    %377 = vector.shape_cast %376 : vector<4xf32> to vector<4x1xf32>
    %cst_96 = arith.constant 6.250000e-02 : f32
    %378 = vector.broadcast %cst_96 : f32 to vector<4x1xf32>
    %379 = arith.mulf %377, %378 : vector<4x1xf32>
    %380 = tpu.reciprocal %379 {approx = true} : vector<4x1xf32> -> vector<4x1xf32>
    %381 = vector.broadcast %380 : vector<4x1xf32> to vector<4x128xf32>
    %382 = arith.mulf %375, %381 : vector<4x128xf32>
    %383 = arith.mulf %382, %370 : vector<4x128xf32>
    %384 = arith.addf %368, %383 : vector<4x128xf32>
    %385 = vector.extract_strided_slice %260 {offsets = [0, 1024], sizes = [4, 128], strides = [1, 1]} : vector<4x3072xf32> to vector<4x128xf32>
    %386 = vector.extract_strided_slice %260 {offsets = [0, 2560], sizes = [4, 128], strides = [1, 1]} : vector<4x3072xf32> to vector<4x128xf32>
    %cst_97 = arith.constant dense<0xFF800000> : vector<4xf32>
    %387 = vector.multi_reduction <maximumf>, %385, %cst_97 [1] : vector<4x128xf32> to vector<4xf32>
    %388 = vector.shape_cast %387 : vector<4xf32> to vector<4x1xf32>
    %389 = vector.broadcast %388 : vector<4x1xf32> to vector<4x128xf32>
    %390 = arith.subf %385, %389 : vector<4x128xf32>
    %391 = math.exp %390 : vector<4x128xf32>
    %cst_98 = arith.constant dense<0.000000e+00> : vector<4xf32>
    %392 = vector.multi_reduction <add>, %391, %cst_98 [1] : vector<4x128xf32> to vector<4xf32>
    %393 = vector.shape_cast %392 : vector<4xf32> to vector<4x1xf32>
    %cst_99 = arith.constant 6.250000e-02 : f32
    %394 = vector.broadcast %cst_99 : f32 to vector<4x1xf32>
    %395 = arith.mulf %393, %394 : vector<4x1xf32>
    %396 = tpu.reciprocal %395 {approx = true} : vector<4x1xf32> -> vector<4x1xf32>
    %397 = vector.broadcast %396 : vector<4x1xf32> to vector<4x128xf32>
    %398 = arith.mulf %391, %397 : vector<4x128xf32>
    %399 = arith.mulf %398, %386 : vector<4x128xf32>
    %400 = vector.extract_strided_slice %260 {offsets = [0, 1152], sizes = [4, 128], strides = [1, 1]} : vector<4x3072xf32> to vector<4x128xf32>
    %401 = vector.extract_strided_slice %260 {offsets = [0, 2688], sizes = [4, 128], strides = [1, 1]} : vector<4x3072xf32> to vector<4x128xf32>
    %cst_100 = arith.constant dense<0xFF800000> : vector<4xf32>
    %402 = vector.multi_reduction <maximumf>, %400, %cst_100 [1] : vector<4x128xf32> to vector<4xf32>
    %403 = vector.shape_cast %402 : vector<4xf32> to vector<4x1xf32>
    %404 = vector.broadcast %403 : vector<4x1xf32> to vector<4x128xf32>
    %405 = arith.subf %400, %404 : vector<4x128xf32>
    %406 = math.exp %405 : vector<4x128xf32>
    %cst_101 = arith.constant dense<0.000000e+00> : vector<4xf32>
    %407 = vector.multi_reduction <add>, %406, %cst_101 [1] : vector<4x128xf32> to vector<4xf32>
    %408 = vector.shape_cast %407 : vector<4xf32> to vector<4x1xf32>
    %cst_102 = arith.constant 6.250000e-02 : f32
    %409 = vector.broadcast %cst_102 : f32 to vector<4x1xf32>
    %410 = arith.mulf %408, %409 : vector<4x1xf32>
    %411 = tpu.reciprocal %410 {approx = true} : vector<4x1xf32> -> vector<4x1xf32>
    %412 = vector.broadcast %411 : vector<4x1xf32> to vector<4x128xf32>
    %413 = arith.mulf %406, %412 : vector<4x128xf32>
    %414 = arith.mulf %413, %401 : vector<4x128xf32>
    %415 = arith.addf %399, %414 : vector<4x128xf32>
    %416 = vector.extract_strided_slice %260 {offsets = [0, 1280], sizes = [4, 128], strides = [1, 1]} : vector<4x3072xf32> to vector<4x128xf32>
    %417 = vector.extract_strided_slice %260 {offsets = [0, 2816], sizes = [4, 128], strides = [1, 1]} : vector<4x3072xf32> to vector<4x128xf32>
    %cst_103 = arith.constant dense<0xFF800000> : vector<4xf32>
    %418 = vector.multi_reduction <maximumf>, %416, %cst_103 [1] : vector<4x128xf32> to vector<4xf32>
    %419 = vector.shape_cast %418 : vector<4xf32> to vector<4x1xf32>
    %420 = vector.broadcast %419 : vector<4x1xf32> to vector<4x128xf32>
    %421 = arith.subf %416, %420 : vector<4x128xf32>
    %422 = math.exp %421 : vector<4x128xf32>
    %cst_104 = arith.constant dense<0.000000e+00> : vector<4xf32>
    %423 = vector.multi_reduction <add>, %422, %cst_104 [1] : vector<4x128xf32> to vector<4xf32>
    %424 = vector.shape_cast %423 : vector<4xf32> to vector<4x1xf32>
    %cst_105 = arith.constant 6.250000e-02 : f32
    %425 = vector.broadcast %cst_105 : f32 to vector<4x1xf32>
    %426 = arith.mulf %424, %425 : vector<4x1xf32>
    %427 = tpu.reciprocal %426 {approx = true} : vector<4x1xf32> -> vector<4x1xf32>
    %428 = vector.broadcast %427 : vector<4x1xf32> to vector<4x128xf32>
    %429 = arith.mulf %422, %428 : vector<4x128xf32>
    %430 = arith.mulf %429, %417 : vector<4x128xf32>
    %431 = vector.extract_strided_slice %260 {offsets = [0, 1408], sizes = [4, 128], strides = [1, 1]} : vector<4x3072xf32> to vector<4x128xf32>
    %432 = vector.extract_strided_slice %260 {offsets = [0, 2944], sizes = [4, 128], strides = [1, 1]} : vector<4x3072xf32> to vector<4x128xf32>
    %cst_106 = arith.constant dense<0xFF800000> : vector<4xf32>
    %433 = vector.multi_reduction <maximumf>, %431, %cst_106 [1] : vector<4x128xf32> to vector<4xf32>
    %434 = vector.shape_cast %433 : vector<4xf32> to vector<4x1xf32>
    %435 = vector.broadcast %434 : vector<4x1xf32> to vector<4x128xf32>
    %436 = arith.subf %431, %435 : vector<4x128xf32>
    %437 = math.exp %436 : vector<4x128xf32>
    %cst_107 = arith.constant dense<0.000000e+00> : vector<4xf32>
    %438 = vector.multi_reduction <add>, %437, %cst_107 [1] : vector<4x128xf32> to vector<4xf32>
    %439 = vector.shape_cast %438 : vector<4xf32> to vector<4x1xf32>
    %cst_108 = arith.constant 6.250000e-02 : f32
    %440 = vector.broadcast %cst_108 : f32 to vector<4x1xf32>
    %441 = arith.mulf %439, %440 : vector<4x1xf32>
    %442 = tpu.reciprocal %441 {approx = true} : vector<4x1xf32> -> vector<4x1xf32>
    %443 = vector.broadcast %442 : vector<4x1xf32> to vector<4x128xf32>
    %444 = arith.mulf %437, %443 : vector<4x128xf32>
    %445 = arith.mulf %444, %432 : vector<4x128xf32>
    %446 = arith.addf %430, %445 : vector<4x128xf32>
    %cst_109 = arith.constant 0.000000e+00 : f32
    %447 = vector.broadcast %cst_109 : f32 to vector<4x128xf32>
    %448 = arith.maximumf %353, %447 : vector<4x128xf32>
    %449 = math.absf %353 : vector<4x128xf32>
    %cst_110 = arith.constant 0.000000e+00 : f32
    %450 = vector.broadcast %cst_110 : f32 to vector<4x128xf32>
    %451 = arith.subf %450, %449 : vector<4x128xf32>
    %452 = math.exp %451 : vector<4x128xf32>
    %cst_111 = arith.constant 1.000000e+00 : f32
    %453 = vector.broadcast %cst_111 : f32 to vector<4x128xf32>
    %454 = arith.addf %453, %452 : vector<4x128xf32>
    %455 = math.log %454 : vector<4x128xf32>
    %456 = arith.addf %448, %455 : vector<4x128xf32>
    %457 = arith.mulf %291, %456 : vector<4x128xf32>
    %cst_112 = arith.constant 0.000000e+00 : f32
    %458 = vector.broadcast %cst_112 : f32 to vector<4x128xf32>
    %459 = arith.maximumf %446, %458 : vector<4x128xf32>
    %cst_113 = arith.constant 0.000000e+00 : f32
    %460 = vector.broadcast %cst_113 : f32 to vector<4x128xf32>
    %461 = arith.subf %460, %459 : vector<4x128xf32>
    %462 = math.exp %461 : vector<4x128xf32>
    %463 = math.cos %415 : vector<4x128xf32>
    %464 = arith.mulf %462, %463 : vector<4x128xf32>
    %465 = math.sin %415 : vector<4x128xf32>
    %466 = arith.mulf %462, %465 : vector<4x128xf32>
    %467 = arith.mulf %464, %229 : vector<4x128xf32>
    %468 = arith.mulf %466, %232 : vector<4x128xf32>
    %469 = arith.subf %467, %468 : vector<4x128xf32>
    %470 = arith.addf %469, %384 : vector<4x128xf32>
    %471 = arith.mulf %464, %232 : vector<4x128xf32>
    %472 = arith.mulf %466, %229 : vector<4x128xf32>
    %473 = arith.addf %471, %472 : vector<4x128xf32>
    %474 = arith.addf %233, %459 : vector<4x128xf32>
    %cst_114 = arith.constant 70.4287872 : f32
    %475 = vector.broadcast %cst_114 : f32 to vector<4x128xf32>
    %476 = arith.subf %474, %475 : vector<4x128xf32>
    %cst_115 = arith.constant 0.000000e+00 : f32
    %477 = vector.broadcast %cst_115 : f32 to vector<4x128xf32>
    %478 = arith.maximumf %476, %477 : vector<4x128xf32>
    %479 = arith.addf %238, %478 : vector<4x128xf32>
    %480 = math.cos %322 : vector<4x128xf32>
    %481 = arith.mulf %470, %480 : vector<4x128xf32>
    %482 = math.sin %322 : vector<4x128xf32>
    %483 = arith.mulf %473, %482 : vector<4x128xf32>
    %484 = arith.subf %481, %483 : vector<4x128xf32>
    %485 = arith.mulf %484, %457 : vector<4x128xf32>
    %c2 = arith.constant 2 : index
    %c0_116 = arith.constant 0 : index
    %c0_117 = arith.constant 0 : index
    %486 = vector.load %arg1[%c2, %c0_116, %c0_117] : memref<4x4x32xf32, #tpu.memory_space<vmem>>, vector<1x4x32xf32>
    %487 = vector.shape_cast %486 : vector<1x4x32xf32> to vector<4x32xf32>
    %488 = arith.truncf %487 : vector<4x32xf32> to vector<4x32xbf16>
    %c0_118 = arith.constant 0 : index
    %c0_119 = arith.constant 0 : index
    %489 = vector.load %arg3[%c0_118, %c0_119] : memref<32x32xbf16, #tpu.memory_space<vmem>>, vector<32x32xbf16>
    %cst_120 = arith.constant dense<0.000000e+00> : vector<4x32xf32>
    %490 = tpu.matmul %488, %489, %cst_120 {dimension_numbers = #tpu.dot_dimension_numbers<[1], [0], [0], [1], [0, 0, 1, 1], [], []>} : vector<4x32xbf16>, vector<32x32xbf16>, vector<4x32xf32> -> vector<4x32xf32>
    %c0_121 = arith.constant 0 : index
    %c0_122 = arith.constant 0 : index
    %491 = vector.load %arg4[%c0_121, %c0_122] : memref<1x32xf32, #tpu.memory_space<vmem>>, vector<1x32xf32>
    %492 = vector.broadcast %491 : vector<1x32xf32> to vector<4x32xf32>
    %493 = arith.addf %490, %492 : vector<4x32xf32>
    %cst_123 = arith.constant 0.000000e+00 : f32
    %494 = vector.broadcast %cst_123 : f32 to vector<4x32xf32>
    %495 = arith.maximumf %493, %494 : vector<4x32xf32>
    %496 = arith.truncf %495 : vector<4x32xf32> to vector<4x32xbf16>
    %c0_124 = arith.constant 0 : index
    %c0_125 = arith.constant 0 : index
    %497 = vector.load %arg5[%c0_124, %c0_125] : memref<32x3072xbf16, #tpu.memory_space<vmem>>, vector<32x3072xbf16>
    %cst_126 = arith.constant dense<0.000000e+00> : vector<4x3072xf32>
    %498 = tpu.matmul %496, %497, %cst_126 {dimension_numbers = #tpu.dot_dimension_numbers<[1], [0], [0], [1], [0, 0, 1, 1], [], []>} : vector<4x32xbf16>, vector<32x3072xbf16>, vector<4x3072xf32> -> vector<4x3072xf32>
    %c0_127 = arith.constant 0 : index
    %c0_128 = arith.constant 0 : index
    %499 = vector.load %arg6[%c0_127, %c0_128] : memref<1x3072xf32, #tpu.memory_space<vmem>>, vector<1x3072xf32>
    %500 = vector.broadcast %499 : vector<1x3072xf32> to vector<4x3072xf32>
    %501 = arith.addf %498, %500 : vector<4x3072xf32>
    %502 = vector.extract_strided_slice %501 {offsets = [0, 0], sizes = [4, 128], strides = [1, 1]} : vector<4x3072xf32> to vector<4x128xf32>
    %503 = vector.extract_strided_slice %501 {offsets = [0, 1536], sizes = [4, 128], strides = [1, 1]} : vector<4x3072xf32> to vector<4x128xf32>
    %cst_129 = arith.constant dense<0xFF800000> : vector<4xf32>
    %504 = vector.multi_reduction <maximumf>, %502, %cst_129 [1] : vector<4x128xf32> to vector<4xf32>
    %505 = vector.shape_cast %504 : vector<4xf32> to vector<4x1xf32>
    %506 = vector.broadcast %505 : vector<4x1xf32> to vector<4x128xf32>
    %507 = arith.subf %502, %506 : vector<4x128xf32>
    %508 = math.exp %507 : vector<4x128xf32>
    %cst_130 = arith.constant dense<0.000000e+00> : vector<4xf32>
    %509 = vector.multi_reduction <add>, %508, %cst_130 [1] : vector<4x128xf32> to vector<4xf32>
    %510 = vector.shape_cast %509 : vector<4xf32> to vector<4x1xf32>
    %cst_131 = arith.constant 6.250000e-02 : f32
    %511 = vector.broadcast %cst_131 : f32 to vector<4x1xf32>
    %512 = arith.mulf %510, %511 : vector<4x1xf32>
    %513 = tpu.reciprocal %512 {approx = true} : vector<4x1xf32> -> vector<4x1xf32>
    %514 = vector.broadcast %513 : vector<4x1xf32> to vector<4x128xf32>
    %515 = arith.mulf %508, %514 : vector<4x128xf32>
    %516 = arith.mulf %515, %503 : vector<4x128xf32>
    %517 = vector.extract_strided_slice %501 {offsets = [0, 128], sizes = [4, 128], strides = [1, 1]} : vector<4x3072xf32> to vector<4x128xf32>
    %518 = vector.extract_strided_slice %501 {offsets = [0, 1664], sizes = [4, 128], strides = [1, 1]} : vector<4x3072xf32> to vector<4x128xf32>
    %cst_132 = arith.constant dense<0xFF800000> : vector<4xf32>
    %519 = vector.multi_reduction <maximumf>, %517, %cst_132 [1] : vector<4x128xf32> to vector<4xf32>
    %520 = vector.shape_cast %519 : vector<4xf32> to vector<4x1xf32>
    %521 = vector.broadcast %520 : vector<4x1xf32> to vector<4x128xf32>
    %522 = arith.subf %517, %521 : vector<4x128xf32>
    %523 = math.exp %522 : vector<4x128xf32>
    %cst_133 = arith.constant dense<0.000000e+00> : vector<4xf32>
    %524 = vector.multi_reduction <add>, %523, %cst_133 [1] : vector<4x128xf32> to vector<4xf32>
    %525 = vector.shape_cast %524 : vector<4xf32> to vector<4x1xf32>
    %cst_134 = arith.constant 6.250000e-02 : f32
    %526 = vector.broadcast %cst_134 : f32 to vector<4x1xf32>
    %527 = arith.mulf %525, %526 : vector<4x1xf32>
    %528 = tpu.reciprocal %527 {approx = true} : vector<4x1xf32> -> vector<4x1xf32>
    %529 = vector.broadcast %528 : vector<4x1xf32> to vector<4x128xf32>
    %530 = arith.mulf %523, %529 : vector<4x128xf32>
    %531 = arith.mulf %530, %518 : vector<4x128xf32>
    %532 = arith.addf %516, %531 : vector<4x128xf32>
    %533 = vector.extract_strided_slice %501 {offsets = [0, 256], sizes = [4, 128], strides = [1, 1]} : vector<4x3072xf32> to vector<4x128xf32>
    %534 = vector.extract_strided_slice %501 {offsets = [0, 1792], sizes = [4, 128], strides = [1, 1]} : vector<4x3072xf32> to vector<4x128xf32>
    %cst_135 = arith.constant dense<0xFF800000> : vector<4xf32>
    %535 = vector.multi_reduction <maximumf>, %533, %cst_135 [1] : vector<4x128xf32> to vector<4xf32>
    %536 = vector.shape_cast %535 : vector<4xf32> to vector<4x1xf32>
    %537 = vector.broadcast %536 : vector<4x1xf32> to vector<4x128xf32>
    %538 = arith.subf %533, %537 : vector<4x128xf32>
    %539 = math.exp %538 : vector<4x128xf32>
    %cst_136 = arith.constant dense<0.000000e+00> : vector<4xf32>
    %540 = vector.multi_reduction <add>, %539, %cst_136 [1] : vector<4x128xf32> to vector<4xf32>
    %541 = vector.shape_cast %540 : vector<4xf32> to vector<4x1xf32>
    %cst_137 = arith.constant 6.250000e-02 : f32
    %542 = vector.broadcast %cst_137 : f32 to vector<4x1xf32>
    %543 = arith.mulf %541, %542 : vector<4x1xf32>
    %544 = tpu.reciprocal %543 {approx = true} : vector<4x1xf32> -> vector<4x1xf32>
    %545 = vector.broadcast %544 : vector<4x1xf32> to vector<4x128xf32>
    %546 = arith.mulf %539, %545 : vector<4x128xf32>
    %547 = arith.mulf %546, %534 : vector<4x128xf32>
    %548 = vector.extract_strided_slice %501 {offsets = [0, 384], sizes = [4, 128], strides = [1, 1]} : vector<4x3072xf32> to vector<4x128xf32>
    %549 = vector.extract_strided_slice %501 {offsets = [0, 1920], sizes = [4, 128], strides = [1, 1]} : vector<4x3072xf32> to vector<4x128xf32>
    %cst_138 = arith.constant dense<0xFF800000> : vector<4xf32>
    %550 = vector.multi_reduction <maximumf>, %548, %cst_138 [1] : vector<4x128xf32> to vector<4xf32>
    %551 = vector.shape_cast %550 : vector<4xf32> to vector<4x1xf32>
    %552 = vector.broadcast %551 : vector<4x1xf32> to vector<4x128xf32>
    %553 = arith.subf %548, %552 : vector<4x128xf32>
    %554 = math.exp %553 : vector<4x128xf32>
    %cst_139 = arith.constant dense<0.000000e+00> : vector<4xf32>
    %555 = vector.multi_reduction <add>, %554, %cst_139 [1] : vector<4x128xf32> to vector<4xf32>
    %556 = vector.shape_cast %555 : vector<4xf32> to vector<4x1xf32>
    %cst_140 = arith.constant 6.250000e-02 : f32
    %557 = vector.broadcast %cst_140 : f32 to vector<4x1xf32>
    %558 = arith.mulf %556, %557 : vector<4x1xf32>
    %559 = tpu.reciprocal %558 {approx = true} : vector<4x1xf32> -> vector<4x1xf32>
    %560 = vector.broadcast %559 : vector<4x1xf32> to vector<4x128xf32>
    %561 = arith.mulf %554, %560 : vector<4x128xf32>
    %562 = arith.mulf %561, %549 : vector<4x128xf32>
    %563 = arith.addf %547, %562 : vector<4x128xf32>
    %564 = vector.extract_strided_slice %501 {offsets = [0, 512], sizes = [4, 128], strides = [1, 1]} : vector<4x3072xf32> to vector<4x128xf32>
    %565 = vector.extract_strided_slice %501 {offsets = [0, 2048], sizes = [4, 128], strides = [1, 1]} : vector<4x3072xf32> to vector<4x128xf32>
    %cst_141 = arith.constant dense<0xFF800000> : vector<4xf32>
    %566 = vector.multi_reduction <maximumf>, %564, %cst_141 [1] : vector<4x128xf32> to vector<4xf32>
    %567 = vector.shape_cast %566 : vector<4xf32> to vector<4x1xf32>
    %568 = vector.broadcast %567 : vector<4x1xf32> to vector<4x128xf32>
    %569 = arith.subf %564, %568 : vector<4x128xf32>
    %570 = math.exp %569 : vector<4x128xf32>
    %cst_142 = arith.constant dense<0.000000e+00> : vector<4xf32>
    %571 = vector.multi_reduction <add>, %570, %cst_142 [1] : vector<4x128xf32> to vector<4xf32>
    %572 = vector.shape_cast %571 : vector<4xf32> to vector<4x1xf32>
    %cst_143 = arith.constant 6.250000e-02 : f32
    %573 = vector.broadcast %cst_143 : f32 to vector<4x1xf32>
    %574 = arith.mulf %572, %573 : vector<4x1xf32>
    %575 = tpu.reciprocal %574 {approx = true} : vector<4x1xf32> -> vector<4x1xf32>
    %576 = vector.broadcast %575 : vector<4x1xf32> to vector<4x128xf32>
    %577 = arith.mulf %570, %576 : vector<4x128xf32>
    %578 = arith.mulf %577, %565 : vector<4x128xf32>
    %579 = vector.extract_strided_slice %501 {offsets = [0, 640], sizes = [4, 128], strides = [1, 1]} : vector<4x3072xf32> to vector<4x128xf32>
    %580 = vector.extract_strided_slice %501 {offsets = [0, 2176], sizes = [4, 128], strides = [1, 1]} : vector<4x3072xf32> to vector<4x128xf32>
    %cst_144 = arith.constant dense<0xFF800000> : vector<4xf32>
    %581 = vector.multi_reduction <maximumf>, %579, %cst_144 [1] : vector<4x128xf32> to vector<4xf32>
    %582 = vector.shape_cast %581 : vector<4xf32> to vector<4x1xf32>
    %583 = vector.broadcast %582 : vector<4x1xf32> to vector<4x128xf32>
    %584 = arith.subf %579, %583 : vector<4x128xf32>
    %585 = math.exp %584 : vector<4x128xf32>
    %cst_145 = arith.constant dense<0.000000e+00> : vector<4xf32>
    %586 = vector.multi_reduction <add>, %585, %cst_145 [1] : vector<4x128xf32> to vector<4xf32>
    %587 = vector.shape_cast %586 : vector<4xf32> to vector<4x1xf32>
    %cst_146 = arith.constant 6.250000e-02 : f32
    %588 = vector.broadcast %cst_146 : f32 to vector<4x1xf32>
    %589 = arith.mulf %587, %588 : vector<4x1xf32>
    %590 = tpu.reciprocal %589 {approx = true} : vector<4x1xf32> -> vector<4x1xf32>
    %591 = vector.broadcast %590 : vector<4x1xf32> to vector<4x128xf32>
    %592 = arith.mulf %585, %591 : vector<4x128xf32>
    %593 = arith.mulf %592, %580 : vector<4x128xf32>
    %594 = arith.addf %578, %593 : vector<4x128xf32>
    %595 = vector.extract_strided_slice %501 {offsets = [0, 768], sizes = [4, 128], strides = [1, 1]} : vector<4x3072xf32> to vector<4x128xf32>
    %596 = vector.extract_strided_slice %501 {offsets = [0, 2304], sizes = [4, 128], strides = [1, 1]} : vector<4x3072xf32> to vector<4x128xf32>
    %cst_147 = arith.constant dense<0xFF800000> : vector<4xf32>
    %597 = vector.multi_reduction <maximumf>, %595, %cst_147 [1] : vector<4x128xf32> to vector<4xf32>
    %598 = vector.shape_cast %597 : vector<4xf32> to vector<4x1xf32>
    %599 = vector.broadcast %598 : vector<4x1xf32> to vector<4x128xf32>
    %600 = arith.subf %595, %599 : vector<4x128xf32>
    %601 = math.exp %600 : vector<4x128xf32>
    %cst_148 = arith.constant dense<0.000000e+00> : vector<4xf32>
    %602 = vector.multi_reduction <add>, %601, %cst_148 [1] : vector<4x128xf32> to vector<4xf32>
    %603 = vector.shape_cast %602 : vector<4xf32> to vector<4x1xf32>
    %cst_149 = arith.constant 6.250000e-02 : f32
    %604 = vector.broadcast %cst_149 : f32 to vector<4x1xf32>
    %605 = arith.mulf %603, %604 : vector<4x1xf32>
    %606 = tpu.reciprocal %605 {approx = true} : vector<4x1xf32> -> vector<4x1xf32>
    %607 = vector.broadcast %606 : vector<4x1xf32> to vector<4x128xf32>
    %608 = arith.mulf %601, %607 : vector<4x128xf32>
    %609 = arith.mulf %608, %596 : vector<4x128xf32>
    %610 = vector.extract_strided_slice %501 {offsets = [0, 896], sizes = [4, 128], strides = [1, 1]} : vector<4x3072xf32> to vector<4x128xf32>
    %611 = vector.extract_strided_slice %501 {offsets = [0, 2432], sizes = [4, 128], strides = [1, 1]} : vector<4x3072xf32> to vector<4x128xf32>
    %cst_150 = arith.constant dense<0xFF800000> : vector<4xf32>
    %612 = vector.multi_reduction <maximumf>, %610, %cst_150 [1] : vector<4x128xf32> to vector<4xf32>
    %613 = vector.shape_cast %612 : vector<4xf32> to vector<4x1xf32>
    %614 = vector.broadcast %613 : vector<4x1xf32> to vector<4x128xf32>
    %615 = arith.subf %610, %614 : vector<4x128xf32>
    %616 = math.exp %615 : vector<4x128xf32>
    %cst_151 = arith.constant dense<0.000000e+00> : vector<4xf32>
    %617 = vector.multi_reduction <add>, %616, %cst_151 [1] : vector<4x128xf32> to vector<4xf32>
    %618 = vector.shape_cast %617 : vector<4xf32> to vector<4x1xf32>
    %cst_152 = arith.constant 6.250000e-02 : f32
    %619 = vector.broadcast %cst_152 : f32 to vector<4x1xf32>
    %620 = arith.mulf %618, %619 : vector<4x1xf32>
    %621 = tpu.reciprocal %620 {approx = true} : vector<4x1xf32> -> vector<4x1xf32>
    %622 = vector.broadcast %621 : vector<4x1xf32> to vector<4x128xf32>
    %623 = arith.mulf %616, %622 : vector<4x128xf32>
    %624 = arith.mulf %623, %611 : vector<4x128xf32>
    %625 = arith.addf %609, %624 : vector<4x128xf32>
    %626 = vector.extract_strided_slice %501 {offsets = [0, 1024], sizes = [4, 128], strides = [1, 1]} : vector<4x3072xf32> to vector<4x128xf32>
    %627 = vector.extract_strided_slice %501 {offsets = [0, 2560], sizes = [4, 128], strides = [1, 1]} : vector<4x3072xf32> to vector<4x128xf32>
    %cst_153 = arith.constant dense<0xFF800000> : vector<4xf32>
    %628 = vector.multi_reduction <maximumf>, %626, %cst_153 [1] : vector<4x128xf32> to vector<4xf32>
    %629 = vector.shape_cast %628 : vector<4xf32> to vector<4x1xf32>
    %630 = vector.broadcast %629 : vector<4x1xf32> to vector<4x128xf32>
    %631 = arith.subf %626, %630 : vector<4x128xf32>
    %632 = math.exp %631 : vector<4x128xf32>
    %cst_154 = arith.constant dense<0.000000e+00> : vector<4xf32>
    %633 = vector.multi_reduction <add>, %632, %cst_154 [1] : vector<4x128xf32> to vector<4xf32>
    %634 = vector.shape_cast %633 : vector<4xf32> to vector<4x1xf32>
    %cst_155 = arith.constant 6.250000e-02 : f32
    %635 = vector.broadcast %cst_155 : f32 to vector<4x1xf32>
    %636 = arith.mulf %634, %635 : vector<4x1xf32>
    %637 = tpu.reciprocal %636 {approx = true} : vector<4x1xf32> -> vector<4x1xf32>
    %638 = vector.broadcast %637 : vector<4x1xf32> to vector<4x128xf32>
    %639 = arith.mulf %632, %638 : vector<4x128xf32>
    %640 = arith.mulf %639, %627 : vector<4x128xf32>
    %641 = vector.extract_strided_slice %501 {offsets = [0, 1152], sizes = [4, 128], strides = [1, 1]} : vector<4x3072xf32> to vector<4x128xf32>
    %642 = vector.extract_strided_slice %501 {offsets = [0, 2688], sizes = [4, 128], strides = [1, 1]} : vector<4x3072xf32> to vector<4x128xf32>
    %cst_156 = arith.constant dense<0xFF800000> : vector<4xf32>
    %643 = vector.multi_reduction <maximumf>, %641, %cst_156 [1] : vector<4x128xf32> to vector<4xf32>
    %644 = vector.shape_cast %643 : vector<4xf32> to vector<4x1xf32>
    %645 = vector.broadcast %644 : vector<4x1xf32> to vector<4x128xf32>
    %646 = arith.subf %641, %645 : vector<4x128xf32>
    %647 = math.exp %646 : vector<4x128xf32>
    %cst_157 = arith.constant dense<0.000000e+00> : vector<4xf32>
    %648 = vector.multi_reduction <add>, %647, %cst_157 [1] : vector<4x128xf32> to vector<4xf32>
    %649 = vector.shape_cast %648 : vector<4xf32> to vector<4x1xf32>
    %cst_158 = arith.constant 6.250000e-02 : f32
    %650 = vector.broadcast %cst_158 : f32 to vector<4x1xf32>
    %651 = arith.mulf %649, %650 : vector<4x1xf32>
    %652 = tpu.reciprocal %651 {approx = true} : vector<4x1xf32> -> vector<4x1xf32>
    %653 = vector.broadcast %652 : vector<4x1xf32> to vector<4x128xf32>
    %654 = arith.mulf %647, %653 : vector<4x128xf32>
    %655 = arith.mulf %654, %642 : vector<4x128xf32>
    %656 = arith.addf %640, %655 : vector<4x128xf32>
    %657 = vector.extract_strided_slice %501 {offsets = [0, 1280], sizes = [4, 128], strides = [1, 1]} : vector<4x3072xf32> to vector<4x128xf32>
    %658 = vector.extract_strided_slice %501 {offsets = [0, 2816], sizes = [4, 128], strides = [1, 1]} : vector<4x3072xf32> to vector<4x128xf32>
    %cst_159 = arith.constant dense<0xFF800000> : vector<4xf32>
    %659 = vector.multi_reduction <maximumf>, %657, %cst_159 [1] : vector<4x128xf32> to vector<4xf32>
    %660 = vector.shape_cast %659 : vector<4xf32> to vector<4x1xf32>
    %661 = vector.broadcast %660 : vector<4x1xf32> to vector<4x128xf32>
    %662 = arith.subf %657, %661 : vector<4x128xf32>
    %663 = math.exp %662 : vector<4x128xf32>
    %cst_160 = arith.constant dense<0.000000e+00> : vector<4xf32>
    %664 = vector.multi_reduction <add>, %663, %cst_160 [1] : vector<4x128xf32> to vector<4xf32>
    %665 = vector.shape_cast %664 : vector<4xf32> to vector<4x1xf32>
    %cst_161 = arith.constant 6.250000e-02 : f32
    %666 = vector.broadcast %cst_161 : f32 to vector<4x1xf32>
    %667 = arith.mulf %665, %666 : vector<4x1xf32>
    %668 = tpu.reciprocal %667 {approx = true} : vector<4x1xf32> -> vector<4x1xf32>
    %669 = vector.broadcast %668 : vector<4x1xf32> to vector<4x128xf32>
    %670 = arith.mulf %663, %669 : vector<4x128xf32>
    %671 = arith.mulf %670, %658 : vector<4x128xf32>
    %672 = vector.extract_strided_slice %501 {offsets = [0, 1408], sizes = [4, 128], strides = [1, 1]} : vector<4x3072xf32> to vector<4x128xf32>
    %673 = vector.extract_strided_slice %501 {offsets = [0, 2944], sizes = [4, 128], strides = [1, 1]} : vector<4x3072xf32> to vector<4x128xf32>
    %cst_162 = arith.constant dense<0xFF800000> : vector<4xf32>
    %674 = vector.multi_reduction <maximumf>, %672, %cst_162 [1] : vector<4x128xf32> to vector<4xf32>
    %675 = vector.shape_cast %674 : vector<4xf32> to vector<4x1xf32>
    %676 = vector.broadcast %675 : vector<4x1xf32> to vector<4x128xf32>
    %677 = arith.subf %672, %676 : vector<4x128xf32>
    %678 = math.exp %677 : vector<4x128xf32>
    %cst_163 = arith.constant dense<0.000000e+00> : vector<4xf32>
    %679 = vector.multi_reduction <add>, %678, %cst_163 [1] : vector<4x128xf32> to vector<4xf32>
    %680 = vector.shape_cast %679 : vector<4xf32> to vector<4x1xf32>
    %cst_164 = arith.constant 6.250000e-02 : f32
    %681 = vector.broadcast %cst_164 : f32 to vector<4x1xf32>
    %682 = arith.mulf %680, %681 : vector<4x1xf32>
    %683 = tpu.reciprocal %682 {approx = true} : vector<4x1xf32> -> vector<4x1xf32>
    %684 = vector.broadcast %683 : vector<4x1xf32> to vector<4x128xf32>
    %685 = arith.mulf %678, %684 : vector<4x128xf32>
    %686 = arith.mulf %685, %673 : vector<4x128xf32>
    %687 = arith.addf %671, %686 : vector<4x128xf32>
    %cst_165 = arith.constant 0.000000e+00 : f32
    %688 = vector.broadcast %cst_165 : f32 to vector<4x128xf32>
    %689 = arith.maximumf %594, %688 : vector<4x128xf32>
    %690 = math.absf %594 : vector<4x128xf32>
    %cst_166 = arith.constant 0.000000e+00 : f32
    %691 = vector.broadcast %cst_166 : f32 to vector<4x128xf32>
    %692 = arith.subf %691, %690 : vector<4x128xf32>
    %693 = math.exp %692 : vector<4x128xf32>
    %cst_167 = arith.constant 1.000000e+00 : f32
    %694 = vector.broadcast %cst_167 : f32 to vector<4x128xf32>
    %695 = arith.addf %694, %693 : vector<4x128xf32>
    %696 = math.log %695 : vector<4x128xf32>
    %697 = arith.addf %689, %696 : vector<4x128xf32>
    %698 = arith.mulf %532, %697 : vector<4x128xf32>
    %cst_168 = arith.constant 0.000000e+00 : f32
    %699 = vector.broadcast %cst_168 : f32 to vector<4x128xf32>
    %700 = arith.maximumf %687, %699 : vector<4x128xf32>
    %cst_169 = arith.constant 0.000000e+00 : f32
    %701 = vector.broadcast %cst_169 : f32 to vector<4x128xf32>
    %702 = arith.subf %701, %700 : vector<4x128xf32>
    %703 = math.exp %702 : vector<4x128xf32>
    %704 = math.cos %656 : vector<4x128xf32>
    %705 = arith.mulf %703, %704 : vector<4x128xf32>
    %706 = math.sin %656 : vector<4x128xf32>
    %707 = arith.mulf %703, %706 : vector<4x128xf32>
    %708 = arith.mulf %705, %470 : vector<4x128xf32>
    %709 = arith.mulf %707, %473 : vector<4x128xf32>
    %710 = arith.subf %708, %709 : vector<4x128xf32>
    %711 = arith.addf %710, %625 : vector<4x128xf32>
    %712 = arith.mulf %705, %473 : vector<4x128xf32>
    %713 = arith.mulf %707, %470 : vector<4x128xf32>
    %714 = arith.addf %712, %713 : vector<4x128xf32>
    %715 = arith.addf %474, %700 : vector<4x128xf32>
    %cst_170 = arith.constant 70.4287872 : f32
    %716 = vector.broadcast %cst_170 : f32 to vector<4x128xf32>
    %717 = arith.subf %715, %716 : vector<4x128xf32>
    %cst_171 = arith.constant 0.000000e+00 : f32
    %718 = vector.broadcast %cst_171 : f32 to vector<4x128xf32>
    %719 = arith.maximumf %717, %718 : vector<4x128xf32>
    %720 = arith.addf %479, %719 : vector<4x128xf32>
    %721 = math.cos %563 : vector<4x128xf32>
    %722 = arith.mulf %711, %721 : vector<4x128xf32>
    %723 = math.sin %563 : vector<4x128xf32>
    %724 = arith.mulf %714, %723 : vector<4x128xf32>
    %725 = arith.subf %722, %724 : vector<4x128xf32>
    %726 = arith.mulf %725, %698 : vector<4x128xf32>
    %c3 = arith.constant 3 : index
    %c0_172 = arith.constant 0 : index
    %c0_173 = arith.constant 0 : index
    %727 = vector.load %arg1[%c3, %c0_172, %c0_173] : memref<4x4x32xf32, #tpu.memory_space<vmem>>, vector<1x4x32xf32>
    %728 = vector.shape_cast %727 : vector<1x4x32xf32> to vector<4x32xf32>
    %729 = arith.truncf %728 : vector<4x32xf32> to vector<4x32xbf16>
    %c0_174 = arith.constant 0 : index
    %c0_175 = arith.constant 0 : index
    %730 = vector.load %arg3[%c0_174, %c0_175] : memref<32x32xbf16, #tpu.memory_space<vmem>>, vector<32x32xbf16>
    %cst_176 = arith.constant dense<0.000000e+00> : vector<4x32xf32>
    %731 = tpu.matmul %729, %730, %cst_176 {dimension_numbers = #tpu.dot_dimension_numbers<[1], [0], [0], [1], [0, 0, 1, 1], [], []>} : vector<4x32xbf16>, vector<32x32xbf16>, vector<4x32xf32> -> vector<4x32xf32>
    %c0_177 = arith.constant 0 : index
    %c0_178 = arith.constant 0 : index
    %732 = vector.load %arg4[%c0_177, %c0_178] : memref<1x32xf32, #tpu.memory_space<vmem>>, vector<1x32xf32>
    %733 = vector.broadcast %732 : vector<1x32xf32> to vector<4x32xf32>
    %734 = arith.addf %731, %733 : vector<4x32xf32>
    %cst_179 = arith.constant 0.000000e+00 : f32
    %735 = vector.broadcast %cst_179 : f32 to vector<4x32xf32>
    %736 = arith.maximumf %734, %735 : vector<4x32xf32>
    %737 = arith.truncf %736 : vector<4x32xf32> to vector<4x32xbf16>
    %c0_180 = arith.constant 0 : index
    %c0_181 = arith.constant 0 : index
    %738 = vector.load %arg5[%c0_180, %c0_181] : memref<32x3072xbf16, #tpu.memory_space<vmem>>, vector<32x3072xbf16>
    %cst_182 = arith.constant dense<0.000000e+00> : vector<4x3072xf32>
    %739 = tpu.matmul %737, %738, %cst_182 {dimension_numbers = #tpu.dot_dimension_numbers<[1], [0], [0], [1], [0, 0, 1, 1], [], []>} : vector<4x32xbf16>, vector<32x3072xbf16>, vector<4x3072xf32> -> vector<4x3072xf32>
    %c0_183 = arith.constant 0 : index
    %c0_184 = arith.constant 0 : index
    %740 = vector.load %arg6[%c0_183, %c0_184] : memref<1x3072xf32, #tpu.memory_space<vmem>>, vector<1x3072xf32>
    %741 = vector.broadcast %740 : vector<1x3072xf32> to vector<4x3072xf32>
    %742 = arith.addf %739, %741 : vector<4x3072xf32>
    %743 = vector.extract_strided_slice %742 {offsets = [0, 0], sizes = [4, 128], strides = [1, 1]} : vector<4x3072xf32> to vector<4x128xf32>
    %744 = vector.extract_strided_slice %742 {offsets = [0, 1536], sizes = [4, 128], strides = [1, 1]} : vector<4x3072xf32> to vector<4x128xf32>
    %cst_185 = arith.constant dense<0xFF800000> : vector<4xf32>
    %745 = vector.multi_reduction <maximumf>, %743, %cst_185 [1] : vector<4x128xf32> to vector<4xf32>
    %746 = vector.shape_cast %745 : vector<4xf32> to vector<4x1xf32>
    %747 = vector.broadcast %746 : vector<4x1xf32> to vector<4x128xf32>
    %748 = arith.subf %743, %747 : vector<4x128xf32>
    %749 = math.exp %748 : vector<4x128xf32>
    %cst_186 = arith.constant dense<0.000000e+00> : vector<4xf32>
    %750 = vector.multi_reduction <add>, %749, %cst_186 [1] : vector<4x128xf32> to vector<4xf32>
    %751 = vector.shape_cast %750 : vector<4xf32> to vector<4x1xf32>
    %cst_187 = arith.constant 6.250000e-02 : f32
    %752 = vector.broadcast %cst_187 : f32 to vector<4x1xf32>
    %753 = arith.mulf %751, %752 : vector<4x1xf32>
    %754 = tpu.reciprocal %753 {approx = true} : vector<4x1xf32> -> vector<4x1xf32>
    %755 = vector.broadcast %754 : vector<4x1xf32> to vector<4x128xf32>
    %756 = arith.mulf %749, %755 : vector<4x128xf32>
    %757 = arith.mulf %756, %744 : vector<4x128xf32>
    %758 = vector.extract_strided_slice %742 {offsets = [0, 128], sizes = [4, 128], strides = [1, 1]} : vector<4x3072xf32> to vector<4x128xf32>
    %759 = vector.extract_strided_slice %742 {offsets = [0, 1664], sizes = [4, 128], strides = [1, 1]} : vector<4x3072xf32> to vector<4x128xf32>
    %cst_188 = arith.constant dense<0xFF800000> : vector<4xf32>
    %760 = vector.multi_reduction <maximumf>, %758, %cst_188 [1] : vector<4x128xf32> to vector<4xf32>
    %761 = vector.shape_cast %760 : vector<4xf32> to vector<4x1xf32>
    %762 = vector.broadcast %761 : vector<4x1xf32> to vector<4x128xf32>
    %763 = arith.subf %758, %762 : vector<4x128xf32>
    %764 = math.exp %763 : vector<4x128xf32>
    %cst_189 = arith.constant dense<0.000000e+00> : vector<4xf32>
    %765 = vector.multi_reduction <add>, %764, %cst_189 [1] : vector<4x128xf32> to vector<4xf32>
    %766 = vector.shape_cast %765 : vector<4xf32> to vector<4x1xf32>
    %cst_190 = arith.constant 6.250000e-02 : f32
    %767 = vector.broadcast %cst_190 : f32 to vector<4x1xf32>
    %768 = arith.mulf %766, %767 : vector<4x1xf32>
    %769 = tpu.reciprocal %768 {approx = true} : vector<4x1xf32> -> vector<4x1xf32>
    %770 = vector.broadcast %769 : vector<4x1xf32> to vector<4x128xf32>
    %771 = arith.mulf %764, %770 : vector<4x128xf32>
    %772 = arith.mulf %771, %759 : vector<4x128xf32>
    %773 = arith.addf %757, %772 : vector<4x128xf32>
    %774 = vector.extract_strided_slice %742 {offsets = [0, 256], sizes = [4, 128], strides = [1, 1]} : vector<4x3072xf32> to vector<4x128xf32>
    %775 = vector.extract_strided_slice %742 {offsets = [0, 1792], sizes = [4, 128], strides = [1, 1]} : vector<4x3072xf32> to vector<4x128xf32>
    %cst_191 = arith.constant dense<0xFF800000> : vector<4xf32>
    %776 = vector.multi_reduction <maximumf>, %774, %cst_191 [1] : vector<4x128xf32> to vector<4xf32>
    %777 = vector.shape_cast %776 : vector<4xf32> to vector<4x1xf32>
    %778 = vector.broadcast %777 : vector<4x1xf32> to vector<4x128xf32>
    %779 = arith.subf %774, %778 : vector<4x128xf32>
    %780 = math.exp %779 : vector<4x128xf32>
    %cst_192 = arith.constant dense<0.000000e+00> : vector<4xf32>
    %781 = vector.multi_reduction <add>, %780, %cst_192 [1] : vector<4x128xf32> to vector<4xf32>
    %782 = vector.shape_cast %781 : vector<4xf32> to vector<4x1xf32>
    %cst_193 = arith.constant 6.250000e-02 : f32
    %783 = vector.broadcast %cst_193 : f32 to vector<4x1xf32>
    %784 = arith.mulf %782, %783 : vector<4x1xf32>
    %785 = tpu.reciprocal %784 {approx = true} : vector<4x1xf32> -> vector<4x1xf32>
    %786 = vector.broadcast %785 : vector<4x1xf32> to vector<4x128xf32>
    %787 = arith.mulf %780, %786 : vector<4x128xf32>
    %788 = arith.mulf %787, %775 : vector<4x128xf32>
    %789 = vector.extract_strided_slice %742 {offsets = [0, 384], sizes = [4, 128], strides = [1, 1]} : vector<4x3072xf32> to vector<4x128xf32>
    %790 = vector.extract_strided_slice %742 {offsets = [0, 1920], sizes = [4, 128], strides = [1, 1]} : vector<4x3072xf32> to vector<4x128xf32>
    %cst_194 = arith.constant dense<0xFF800000> : vector<4xf32>
    %791 = vector.multi_reduction <maximumf>, %789, %cst_194 [1] : vector<4x128xf32> to vector<4xf32>
    %792 = vector.shape_cast %791 : vector<4xf32> to vector<4x1xf32>
    %793 = vector.broadcast %792 : vector<4x1xf32> to vector<4x128xf32>
    %794 = arith.subf %789, %793 : vector<4x128xf32>
    %795 = math.exp %794 : vector<4x128xf32>
    %cst_195 = arith.constant dense<0.000000e+00> : vector<4xf32>
    %796 = vector.multi_reduction <add>, %795, %cst_195 [1] : vector<4x128xf32> to vector<4xf32>
    %797 = vector.shape_cast %796 : vector<4xf32> to vector<4x1xf32>
    %cst_196 = arith.constant 6.250000e-02 : f32
    %798 = vector.broadcast %cst_196 : f32 to vector<4x1xf32>
    %799 = arith.mulf %797, %798 : vector<4x1xf32>
    %800 = tpu.reciprocal %799 {approx = true} : vector<4x1xf32> -> vector<4x1xf32>
    %801 = vector.broadcast %800 : vector<4x1xf32> to vector<4x128xf32>
    %802 = arith.mulf %795, %801 : vector<4x128xf32>
    %803 = arith.mulf %802, %790 : vector<4x128xf32>
    %804 = arith.addf %788, %803 : vector<4x128xf32>
    %805 = vector.extract_strided_slice %742 {offsets = [0, 512], sizes = [4, 128], strides = [1, 1]} : vector<4x3072xf32> to vector<4x128xf32>
    %806 = vector.extract_strided_slice %742 {offsets = [0, 2048], sizes = [4, 128], strides = [1, 1]} : vector<4x3072xf32> to vector<4x128xf32>
    %cst_197 = arith.constant dense<0xFF800000> : vector<4xf32>
    %807 = vector.multi_reduction <maximumf>, %805, %cst_197 [1] : vector<4x128xf32> to vector<4xf32>
    %808 = vector.shape_cast %807 : vector<4xf32> to vector<4x1xf32>
    %809 = vector.broadcast %808 : vector<4x1xf32> to vector<4x128xf32>
    %810 = arith.subf %805, %809 : vector<4x128xf32>
    %811 = math.exp %810 : vector<4x128xf32>
    %cst_198 = arith.constant dense<0.000000e+00> : vector<4xf32>
    %812 = vector.multi_reduction <add>, %811, %cst_198 [1] : vector<4x128xf32> to vector<4xf32>
    %813 = vector.shape_cast %812 : vector<4xf32> to vector<4x1xf32>
    %cst_199 = arith.constant 6.250000e-02 : f32
    %814 = vector.broadcast %cst_199 : f32 to vector<4x1xf32>
    %815 = arith.mulf %813, %814 : vector<4x1xf32>
    %816 = tpu.reciprocal %815 {approx = true} : vector<4x1xf32> -> vector<4x1xf32>
    %817 = vector.broadcast %816 : vector<4x1xf32> to vector<4x128xf32>
    %818 = arith.mulf %811, %817 : vector<4x128xf32>
    %819 = arith.mulf %818, %806 : vector<4x128xf32>
    %820 = vector.extract_strided_slice %742 {offsets = [0, 640], sizes = [4, 128], strides = [1, 1]} : vector<4x3072xf32> to vector<4x128xf32>
    %821 = vector.extract_strided_slice %742 {offsets = [0, 2176], sizes = [4, 128], strides = [1, 1]} : vector<4x3072xf32> to vector<4x128xf32>
    %cst_200 = arith.constant dense<0xFF800000> : vector<4xf32>
    %822 = vector.multi_reduction <maximumf>, %820, %cst_200 [1] : vector<4x128xf32> to vector<4xf32>
    %823 = vector.shape_cast %822 : vector<4xf32> to vector<4x1xf32>
    %824 = vector.broadcast %823 : vector<4x1xf32> to vector<4x128xf32>
    %825 = arith.subf %820, %824 : vector<4x128xf32>
    %826 = math.exp %825 : vector<4x128xf32>
    %cst_201 = arith.constant dense<0.000000e+00> : vector<4xf32>
    %827 = vector.multi_reduction <add>, %826, %cst_201 [1] : vector<4x128xf32> to vector<4xf32>
    %828 = vector.shape_cast %827 : vector<4xf32> to vector<4x1xf32>
    %cst_202 = arith.constant 6.250000e-02 : f32
    %829 = vector.broadcast %cst_202 : f32 to vector<4x1xf32>
    %830 = arith.mulf %828, %829 : vector<4x1xf32>
    %831 = tpu.reciprocal %830 {approx = true} : vector<4x1xf32> -> vector<4x1xf32>
    %832 = vector.broadcast %831 : vector<4x1xf32> to vector<4x128xf32>
    %833 = arith.mulf %826, %832 : vector<4x128xf32>
    %834 = arith.mulf %833, %821 : vector<4x128xf32>
    %835 = arith.addf %819, %834 : vector<4x128xf32>
    %836 = vector.extract_strided_slice %742 {offsets = [0, 768], sizes = [4, 128], strides = [1, 1]} : vector<4x3072xf32> to vector<4x128xf32>
    %837 = vector.extract_strided_slice %742 {offsets = [0, 2304], sizes = [4, 128], strides = [1, 1]} : vector<4x3072xf32> to vector<4x128xf32>
    %cst_203 = arith.constant dense<0xFF800000> : vector<4xf32>
    %838 = vector.multi_reduction <maximumf>, %836, %cst_203 [1] : vector<4x128xf32> to vector<4xf32>
    %839 = vector.shape_cast %838 : vector<4xf32> to vector<4x1xf32>
    %840 = vector.broadcast %839 : vector<4x1xf32> to vector<4x128xf32>
    %841 = arith.subf %836, %840 : vector<4x128xf32>
    %842 = math.exp %841 : vector<4x128xf32>
    %cst_204 = arith.constant dense<0.000000e+00> : vector<4xf32>
    %843 = vector.multi_reduction <add>, %842, %cst_204 [1] : vector<4x128xf32> to vector<4xf32>
    %844 = vector.shape_cast %843 : vector<4xf32> to vector<4x1xf32>
    %cst_205 = arith.constant 6.250000e-02 : f32
    %845 = vector.broadcast %cst_205 : f32 to vector<4x1xf32>
    %846 = arith.mulf %844, %845 : vector<4x1xf32>
    %847 = tpu.reciprocal %846 {approx = true} : vector<4x1xf32> -> vector<4x1xf32>
    %848 = vector.broadcast %847 : vector<4x1xf32> to vector<4x128xf32>
    %849 = arith.mulf %842, %848 : vector<4x128xf32>
    %850 = arith.mulf %849, %837 : vector<4x128xf32>
    %851 = vector.extract_strided_slice %742 {offsets = [0, 896], sizes = [4, 128], strides = [1, 1]} : vector<4x3072xf32> to vector<4x128xf32>
    %852 = vector.extract_strided_slice %742 {offsets = [0, 2432], sizes = [4, 128], strides = [1, 1]} : vector<4x3072xf32> to vector<4x128xf32>
    %cst_206 = arith.constant dense<0xFF800000> : vector<4xf32>
    %853 = vector.multi_reduction <maximumf>, %851, %cst_206 [1] : vector<4x128xf32> to vector<4xf32>
    %854 = vector.shape_cast %853 : vector<4xf32> to vector<4x1xf32>
    %855 = vector.broadcast %854 : vector<4x1xf32> to vector<4x128xf32>
    %856 = arith.subf %851, %855 : vector<4x128xf32>
    %857 = math.exp %856 : vector<4x128xf32>
    %cst_207 = arith.constant dense<0.000000e+00> : vector<4xf32>
    %858 = vector.multi_reduction <add>, %857, %cst_207 [1] : vector<4x128xf32> to vector<4xf32>
    %859 = vector.shape_cast %858 : vector<4xf32> to vector<4x1xf32>
    %cst_208 = arith.constant 6.250000e-02 : f32
    %860 = vector.broadcast %cst_208 : f32 to vector<4x1xf32>
    %861 = arith.mulf %859, %860 : vector<4x1xf32>
    %862 = tpu.reciprocal %861 {approx = true} : vector<4x1xf32> -> vector<4x1xf32>
    %863 = vector.broadcast %862 : vector<4x1xf32> to vector<4x128xf32>
    %864 = arith.mulf %857, %863 : vector<4x128xf32>
    %865 = arith.mulf %864, %852 : vector<4x128xf32>
    %866 = arith.addf %850, %865 : vector<4x128xf32>
    %867 = vector.extract_strided_slice %742 {offsets = [0, 1024], sizes = [4, 128], strides = [1, 1]} : vector<4x3072xf32> to vector<4x128xf32>
    %868 = vector.extract_strided_slice %742 {offsets = [0, 2560], sizes = [4, 128], strides = [1, 1]} : vector<4x3072xf32> to vector<4x128xf32>
    %cst_209 = arith.constant dense<0xFF800000> : vector<4xf32>
    %869 = vector.multi_reduction <maximumf>, %867, %cst_209 [1] : vector<4x128xf32> to vector<4xf32>
    %870 = vector.shape_cast %869 : vector<4xf32> to vector<4x1xf32>
    %871 = vector.broadcast %870 : vector<4x1xf32> to vector<4x128xf32>
    %872 = arith.subf %867, %871 : vector<4x128xf32>
    %873 = math.exp %872 : vector<4x128xf32>
    %cst_210 = arith.constant dense<0.000000e+00> : vector<4xf32>
    %874 = vector.multi_reduction <add>, %873, %cst_210 [1] : vector<4x128xf32> to vector<4xf32>
    %875 = vector.shape_cast %874 : vector<4xf32> to vector<4x1xf32>
    %cst_211 = arith.constant 6.250000e-02 : f32
    %876 = vector.broadcast %cst_211 : f32 to vector<4x1xf32>
    %877 = arith.mulf %875, %876 : vector<4x1xf32>
    %878 = tpu.reciprocal %877 {approx = true} : vector<4x1xf32> -> vector<4x1xf32>
    %879 = vector.broadcast %878 : vector<4x1xf32> to vector<4x128xf32>
    %880 = arith.mulf %873, %879 : vector<4x128xf32>
    %881 = arith.mulf %880, %868 : vector<4x128xf32>
    %882 = vector.extract_strided_slice %742 {offsets = [0, 1152], sizes = [4, 128], strides = [1, 1]} : vector<4x3072xf32> to vector<4x128xf32>
    %883 = vector.extract_strided_slice %742 {offsets = [0, 2688], sizes = [4, 128], strides = [1, 1]} : vector<4x3072xf32> to vector<4x128xf32>
    %cst_212 = arith.constant dense<0xFF800000> : vector<4xf32>
    %884 = vector.multi_reduction <maximumf>, %882, %cst_212 [1] : vector<4x128xf32> to vector<4xf32>
    %885 = vector.shape_cast %884 : vector<4xf32> to vector<4x1xf32>
    %886 = vector.broadcast %885 : vector<4x1xf32> to vector<4x128xf32>
    %887 = arith.subf %882, %886 : vector<4x128xf32>
    %888 = math.exp %887 : vector<4x128xf32>
    %cst_213 = arith.constant dense<0.000000e+00> : vector<4xf32>
    %889 = vector.multi_reduction <add>, %888, %cst_213 [1] : vector<4x128xf32> to vector<4xf32>
    %890 = vector.shape_cast %889 : vector<4xf32> to vector<4x1xf32>
    %cst_214 = arith.constant 6.250000e-02 : f32
    %891 = vector.broadcast %cst_214 : f32 to vector<4x1xf32>
    %892 = arith.mulf %890, %891 : vector<4x1xf32>
    %893 = tpu.reciprocal %892 {approx = true} : vector<4x1xf32> -> vector<4x1xf32>
    %894 = vector.broadcast %893 : vector<4x1xf32> to vector<4x128xf32>
    %895 = arith.mulf %888, %894 : vector<4x128xf32>
    %896 = arith.mulf %895, %883 : vector<4x128xf32>
    %897 = arith.addf %881, %896 : vector<4x128xf32>
    %898 = vector.extract_strided_slice %742 {offsets = [0, 1280], sizes = [4, 128], strides = [1, 1]} : vector<4x3072xf32> to vector<4x128xf32>
    %899 = vector.extract_strided_slice %742 {offsets = [0, 2816], sizes = [4, 128], strides = [1, 1]} : vector<4x3072xf32> to vector<4x128xf32>
    %cst_215 = arith.constant dense<0xFF800000> : vector<4xf32>
    %900 = vector.multi_reduction <maximumf>, %898, %cst_215 [1] : vector<4x128xf32> to vector<4xf32>
    %901 = vector.shape_cast %900 : vector<4xf32> to vector<4x1xf32>
    %902 = vector.broadcast %901 : vector<4x1xf32> to vector<4x128xf32>
    %903 = arith.subf %898, %902 : vector<4x128xf32>
    %904 = math.exp %903 : vector<4x128xf32>
    %cst_216 = arith.constant dense<0.000000e+00> : vector<4xf32>
    %905 = vector.multi_reduction <add>, %904, %cst_216 [1] : vector<4x128xf32> to vector<4xf32>
    %906 = vector.shape_cast %905 : vector<4xf32> to vector<4x1xf32>
    %cst_217 = arith.constant 6.250000e-02 : f32
    %907 = vector.broadcast %cst_217 : f32 to vector<4x1xf32>
    %908 = arith.mulf %906, %907 : vector<4x1xf32>
    %909 = tpu.reciprocal %908 {approx = true} : vector<4x1xf32> -> vector<4x1xf32>
    %910 = vector.broadcast %909 : vector<4x1xf32> to vector<4x128xf32>
    %911 = arith.mulf %904, %910 : vector<4x128xf32>
    %912 = arith.mulf %911, %899 : vector<4x128xf32>
    %913 = vector.extract_strided_slice %742 {offsets = [0, 1408], sizes = [4, 128], strides = [1, 1]} : vector<4x3072xf32> to vector<4x128xf32>
    %914 = vector.extract_strided_slice %742 {offsets = [0, 2944], sizes = [4, 128], strides = [1, 1]} : vector<4x3072xf32> to vector<4x128xf32>
    %cst_218 = arith.constant dense<0xFF800000> : vector<4xf32>
    %915 = vector.multi_reduction <maximumf>, %913, %cst_218 [1] : vector<4x128xf32> to vector<4xf32>
    %916 = vector.shape_cast %915 : vector<4xf32> to vector<4x1xf32>
    %917 = vector.broadcast %916 : vector<4x1xf32> to vector<4x128xf32>
    %918 = arith.subf %913, %917 : vector<4x128xf32>
    %919 = math.exp %918 : vector<4x128xf32>
    %cst_219 = arith.constant dense<0.000000e+00> : vector<4xf32>
    %920 = vector.multi_reduction <add>, %919, %cst_219 [1] : vector<4x128xf32> to vector<4xf32>
    %921 = vector.shape_cast %920 : vector<4xf32> to vector<4x1xf32>
    %cst_220 = arith.constant 6.250000e-02 : f32
    %922 = vector.broadcast %cst_220 : f32 to vector<4x1xf32>
    %923 = arith.mulf %921, %922 : vector<4x1xf32>
    %924 = tpu.reciprocal %923 {approx = true} : vector<4x1xf32> -> vector<4x1xf32>
    %925 = vector.broadcast %924 : vector<4x1xf32> to vector<4x128xf32>
    %926 = arith.mulf %919, %925 : vector<4x128xf32>
    %927 = arith.mulf %926, %914 : vector<4x128xf32>
    %928 = arith.addf %912, %927 : vector<4x128xf32>
    %cst_221 = arith.constant 0.000000e+00 : f32
    %929 = vector.broadcast %cst_221 : f32 to vector<4x128xf32>
    %930 = arith.maximumf %835, %929 : vector<4x128xf32>
    %931 = math.absf %835 : vector<4x128xf32>
    %cst_222 = arith.constant 0.000000e+00 : f32
    %932 = vector.broadcast %cst_222 : f32 to vector<4x128xf32>
    %933 = arith.subf %932, %931 : vector<4x128xf32>
    %934 = math.exp %933 : vector<4x128xf32>
    %cst_223 = arith.constant 1.000000e+00 : f32
    %935 = vector.broadcast %cst_223 : f32 to vector<4x128xf32>
    %936 = arith.addf %935, %934 : vector<4x128xf32>
    %937 = math.log %936 : vector<4x128xf32>
    %938 = arith.addf %930, %937 : vector<4x128xf32>
    %939 = arith.mulf %773, %938 : vector<4x128xf32>
    %cst_224 = arith.constant 0.000000e+00 : f32
    %940 = vector.broadcast %cst_224 : f32 to vector<4x128xf32>
    %941 = arith.maximumf %928, %940 : vector<4x128xf32>
    %cst_225 = arith.constant 0.000000e+00 : f32
    %942 = vector.broadcast %cst_225 : f32 to vector<4x128xf32>
    %943 = arith.subf %942, %941 : vector<4x128xf32>
    %944 = math.exp %943 : vector<4x128xf32>
    %945 = math.cos %897 : vector<4x128xf32>
    %946 = arith.mulf %944, %945 : vector<4x128xf32>
    %947 = math.sin %897 : vector<4x128xf32>
    %948 = arith.mulf %944, %947 : vector<4x128xf32>
    %949 = arith.mulf %946, %711 : vector<4x128xf32>
    %950 = arith.mulf %948, %714 : vector<4x128xf32>
    %951 = arith.subf %949, %950 : vector<4x128xf32>
    %952 = arith.addf %951, %866 : vector<4x128xf32>
    %953 = arith.mulf %946, %714 : vector<4x128xf32>
    %954 = arith.mulf %948, %711 : vector<4x128xf32>
    %955 = arith.addf %953, %954 : vector<4x128xf32>
    %956 = arith.addf %715, %941 : vector<4x128xf32>
    %cst_226 = arith.constant 70.4287872 : f32
    %957 = vector.broadcast %cst_226 : f32 to vector<4x128xf32>
    %958 = arith.subf %956, %957 : vector<4x128xf32>
    %cst_227 = arith.constant 0.000000e+00 : f32
    %959 = vector.broadcast %cst_227 : f32 to vector<4x128xf32>
    %960 = arith.maximumf %958, %959 : vector<4x128xf32>
    %961 = arith.addf %720, %960 : vector<4x128xf32>
    %962 = math.cos %804 : vector<4x128xf32>
    %963 = arith.mulf %952, %962 : vector<4x128xf32>
    %964 = math.sin %804 : vector<4x128xf32>
    %965 = arith.mulf %955, %964 : vector<4x128xf32>
    %966 = arith.subf %963, %965 : vector<4x128xf32>
    %967 = arith.mulf %966, %939 : vector<4x128xf32>
    %968 = tpu.concatenate %244, %485, %726, %967 in 1 : vector<4x128xf32>, vector<4x128xf32>, vector<4x128xf32>, vector<4x128xf32> -> vector<4x512xf32>
    %969 = arith.truncf %968 : vector<4x512xf32> to vector<4x512xbf16>
    %c0_228 = arith.constant 0 : index
    %c0_229 = arith.constant 0 : index
    %970 = vector.load %arg7[%c0_228, %c0_229] : memref<512x128xbf16, #tpu.memory_space<vmem>>, vector<512x128xbf16>
    %cst_230 = arith.constant dense<0.000000e+00> : vector<4x128xf32>
    %971 = tpu.matmul %969, %970, %cst_230 {dimension_numbers = #tpu.dot_dimension_numbers<[1], [0], [0], [1], [0, 0, 1, 1], [], []>} : vector<4x512xbf16>, vector<512x128xbf16>, vector<4x128xf32> -> vector<4x128xf32>
    %c0_231 = arith.constant 0 : index
    %c0_232 = arith.constant 0 : index
    %972 = vector.load %arg8[%c0_231, %c0_232] : memref<1x128xf32, #tpu.memory_space<vmem>>, vector<1x128xf32>
    %973 = vector.broadcast %972 : vector<1x128xf32> to vector<4x128xf32>
    %974 = arith.addf %971, %973 : vector<4x128xf32>
    %c0_233 = arith.constant 0 : index
    %c0_234 = arith.constant 0 : index
    %975 = vector.load %arg9[%c0_233, %c0_234] : memref<4x128xf32, #tpu.memory_space<vmem>>, vector<4x128xf32>
    tpu.vector_store %arg9[%c0_233, %c0_234], %974 {strides = array<i32>} : memref<4x128xf32, #tpu.memory_space<vmem>>, vector<4x128xf32>,
    %976 = tpu.concatenate %952, %955 in 1 : vector<4x128xf32>, vector<4x128xf32> -> vector<4x256xf32>
    %c0_235 = arith.constant 0 : index
    %c0_236 = arith.constant 0 : index
    %977 = vector.load %arg10[%c0_235, %c0_236] : memref<4x256xf32, #tpu.memory_space<vmem>>, vector<4x256xf32>
    tpu.vector_store %arg10[%c0_235, %c0_236], %976 {strides = array<i32>} : memref<4x256xf32, #tpu.memory_space<vmem>>, vector<4x256xf32>,
    %c0_237 = arith.constant 0 : index
    %c0_238 = arith.constant 0 : index
    %978 = vector.load %arg11[%c0_237, %c0_238] : memref<4x128xf32, #tpu.memory_space<vmem>>, vector<4x128xf32>
    tpu.vector_store %arg11[%c0_237, %c0_238], %961 {strides = array<i32>} : memref<4x128xf32, #tpu.memory_space<vmem>>, vector<4x128xf32>,
    return
  }
  func.func @transform_0(%arg0: i32) -> (i32, i32, i32) {
    %c0_i32 = arith.constant 0 : i32
    %c0_i32_0 = arith.constant 0 : i32
    %c0_i32_1 = arith.constant 0 : i32
    return %c0_i32, %arg0, %c0_i32_0 : i32, i32, i32
  }
  func.func @transform_1(%arg0: i32) -> (i32, i32) {
    %c0_i32 = arith.constant 0 : i32
    %c0_i32_0 = arith.constant 0 : i32
    return %arg0, %c0_i32 : i32, i32
  }
  func.func @transform_2(%arg0: i32) -> (i32, i32) {
    %c0_i32 = arith.constant 0 : i32
    %c0_i32_0 = arith.constant 0 : i32
    %c0_i32_1 = arith.constant 0 : i32
    return %c0_i32, %c0_i32_0 : i32, i32
  }
  func.func @transform_3(%arg0: i32) -> (i32, i32) {
    %c0_i32 = arith.constant 0 : i32
    %c0_i32_0 = arith.constant 0 : i32
    %c0_i32_1 = arith.constant 0 : i32
    return %c0_i32, %c0_i32_0 : i32, i32
  }
  func.func @transform_4(%arg0: i32) -> (i32, i32) {
    %c0_i32 = arith.constant 0 : i32
    %c0_i32_0 = arith.constant 0 : i32
    %c0_i32_1 = arith.constant 0 : i32
    return %c0_i32, %c0_i32_0 : i32, i32
  }
  func.func @transform_5(%arg0: i32) -> (i32, i32) {
    %c0_i32 = arith.constant 0 : i32
    %c0_i32_0 = arith.constant 0 : i32
    %c0_i32_1 = arith.constant 0 : i32
    return %c0_i32, %c0_i32_0 : i32, i32
  }
  func.func @transform_6(%arg0: i32) -> (i32, i32) {
    %c0_i32 = arith.constant 0 : i32
    %c0_i32_0 = arith.constant 0 : i32
    %c0_i32_1 = arith.constant 0 : i32
    return %c0_i32, %c0_i32_0 : i32, i32
  }
  func.func @transform_7(%arg0: i32) -> (i32, i32) {
    %c0_i32 = arith.constant 0 : i32
    %c0_i32_0 = arith.constant 0 : i32
    %c0_i32_1 = arith.constant 0 : i32
    return %c0_i32, %c0_i32_0 : i32, i32
  }
  func.func @transform_8(%arg0: i32) -> (i32, i32) {
    %c0_i32 = arith.constant 0 : i32
    %c0_i32_0 = arith.constant 0 : i32
    return %arg0, %c0_i32 : i32, i32
  }
  func.func @transform_9(%arg0: i32) -> (i32, i32) {
    %c0_i32 = arith.constant 0 : i32
    %c0_i32_0 = arith.constant 0 : i32
    return %arg0, %c0_i32 : i32, i32
  }
  func.func @transform_10(%arg0: i32) -> (i32, i32) {
    %c0_i32 = arith.constant 0 : i32
    %c0_i32_0 = arith.constant 0 : i32
    return %arg0, %c0_i32 : i32, i32
  }
}

</mosaic_0001>

<llo_original>
// kernel: custom-call
$region0: #{custom-call}
  %s0 = inlined_call_operand.hbm [shape: c64[128], index: 0, kind: input, shape index: {}]
  %s1 = inlined_call_operand.vmem [shape: f32[128], index: 1, kind: output, shape index: {}]
  $region1: #{custom-call} parent=0
    #allocation0 [shape = 's32[1]{0}', space=sflag, size = 0x4, scoped, tag = 'scoped memory for custom-call']
    %2 = vsyncpa [#allocation0], 0
    %s4 = sshll.u32 %s0, 4
    %s5 = int_to_ptr.hbm [resolvable:$true] %s4
    %s6 = sshll.u32 %s1, 4
    %s7 = int_to_ptr.vmem [resolvable:$true] %s6
    %9 = dma.hbm_to_vmem [thread:$0]  %s5, 16, %s7, [#allocation0]
    %11 = dma.done [#allocation0], 16
    %12 = vsyncpa [#allocation0], 1

// kernel: custom-call.1
$region0: #{custom-call.1}
  %s0 = inlined_call_operand.hbm [shape: c64[128], index: 0, kind: input, shape index: {}]
  %s1 = inlined_call_operand.vmem [shape: f32[128], index: 1, kind: output, shape index: {}]
  %s2 = scalar_lea.hbm %s0, 1
  $region1: #{custom-call.1} parent=0
    #allocation0 [shape = 's32[1]{0}', space=sflag, size = 0x4, scoped, tag = 'scoped memory for custom-call.1']
    %3 = vsyncpa [#allocation0], 0
    %s5 = sshll.u32 %s2, 4
    %s6 = int_to_ptr.hbm [resolvable:$true] %s5
    %s7 = sshll.u32 %s1, 4
    %s8 = int_to_ptr.vmem [resolvable:$true] %s7
    %10 = dma.hbm_to_vmem [thread:$0]  %s6, 16, %s8, [#allocation0]
    %12 = dma.done [#allocation0], 16
    %13 = vsyncpa [#allocation0], 1

// kernel: custom-call.2
$region0: #{custom-call.2}
  %s0 = inlined_call_operand.vmem [shape: f32[2,128], index: 0, kind: input, shape index: {}]
  %s1 = inlined_call_operand.vmem [shape: f32[2,128], index: 1, kind: input, shape index: {}]
  %s2 = inlined_call_operand.hbm [shape: c64[2,128], index: 2, kind: output, shape index: {}]
  %s3 = scalar_lea.hbm %s2, 2
  $region1: #{custom-call.2} parent=0
    #allocation0 [shape = 's32[1]{0}', space=sflag, size = 0x4, scoped, tag = 'scoped memory for custom-call.2']
    %4 = vsyncpa [#allocation0], 0
    %s6 = sshll.u32 %s0, 4
    %s7 = int_to_ptr.vmem [resolvable:$true] %s6
    %s8 = sshll.u32 %s2, 4
    %s9 = int_to_ptr.hbm [resolvable:$true] %s8
    %11 = dma.vmem_to_hbm [thread:$0]  %s7, 32, %s9, [#allocation0]
    %13 = dma.done [#allocation0], 32
    %14 = vsyncpa [#allocation0], 1
  $region2: #{custom-call.2} parent=0
    #allocation1 [shape = 's32[1]{0}', space=sflag, size = 0x4, scoped, tag = 'scoped memory for custom-call.2']
    %15 = vsyncpa [#allocation1], 0
    %s17 = sshll.u32 %s1, 4
    %s18 = int_to_ptr.vmem [resolvable:$true] %s17
    %s19 = sshll.u32 %s3, 4
    %s20 = int_to_ptr.hbm [resolvable:$true] %s19
    %22 = dma.vmem_to_hbm [thread:$0]  %s18, 32, %s20, [#allocation1]
    %24 = dma.done [#allocation1], 32
    %25 = vsyncpa [#allocation1], 1

// kernel: apdu_memory_cell_forward.1
$region0: #{apdu_memory_cell_forward.1}
  #allocation0 [shape = 'u32[]', space=smem, size = 0x4, offset = 0x4, fixed_abs, tag = 'smem constant byte address 0x4 - core index']
  #allocation1 [shape = 'u32[72,128]{1,0:T(1,128)}', space=vmem, size = 0x9000, scoped, tag = 'internal scratch']
  %s0 = inlined_call_operand.vmem [shape: f32[4,4,32], index: 0, kind: input, shape index: {}]
  %s1 = inlined_call_operand.vmem [shape: f32[4,256], index: 1, kind: input, shape index: {}]
  %s2 = inlined_call_operand.hbm [shape: bf16[32,32], index: 2, kind: input, shape index: {}]
  %s3 = inlined_call_operand.vmem [shape: f32[1,32], index: 3, kind: input, shape index: {}]
  %s4 = inlined_call_operand.hbm [shape: bf16[32,3072], index: 4, kind: input, shape index: {}]
  %s5 = inlined_call_operand.vmem [shape: f32[1,3072], index: 5, kind: input, shape index: {}]
  %s6 = inlined_call_operand.hbm [shape: bf16[512,128], index: 6, kind: input, shape index: {}]
  %s7 = inlined_call_operand.vmem [shape: f32[1,128], index: 7, kind: input, shape index: {}]
  %s8 = inlined_call_operand.vmem [shape: f32[4,128], index: 8, kind: output, shape index: {0}]
  %s9 = inlined_call_operand.vmem [shape: f32[4,256], index: 9, kind: output, shape index: {1}]
  %s10 = inlined_call_operand.vmem [shape: f32[4,128], index: 10, kind: output, shape index: {2}]
  %11 = xla_tuple %s8, %s9, %s10
  %s12 = sld [smem:[#allocation0]]
  $region70: #{apdu_memory_cell_forward.1} parent=0
    _
  %s14 = ssub.s32 1, %s12
  %s15 = scalar_select 0, %s14, %s12
  $region1: #{apdu_memory_cell_forward.1} parent=0
    #allocation2 [shape = 'u8[8192]{0}', space=vmem, size = 0x2000, scoped, tag = 'input window, operand 2, single buffered']
    #allocation3 [shape = 's32[1]{0}', space=sflag, size = 0x4, scoped, tag = 'scoped memory for apdu_memory_cell_forward.1']
    #allocation4 [shape = 'u8[196608]{0}', space=vmem, size = 0x30000, scoped, tag = 'input window, operand 4, single buffered']
    #allocation5 [shape = 's32[1]{0}', space=sflag, size = 0x4, scoped, tag = 'scoped memory for apdu_memory_cell_forward.1']
    #allocation6 [shape = 'u8[131072]{0}', space=vmem, size = 0x20000, scoped, tag = 'input window, operand 6, single buffered']
    %16 = vsyncpa [#allocation3], 0
    %17 = vsyncpa [#allocation5], 0
    // Predicated region
    $region2: #{apdu_memory_cell_forward.1} parent=1 // pred_check
      _
    $region3: #{apdu_memory_cell_forward.1} parent=1 // pred_check_branch
      %19 = sbr.rel (0) target = $region5
    $region4: #{apdu_memory_cell_forward.1} parent=1 // pred_region
      _
    $region5: #{apdu_memory_cell_forward.1} parent=1 // pred_fallthru
      _
    // Predicated region
    $region6: #{apdu_memory_cell_forward.1} parent=1 // pred_check
      _
    $region7: #{apdu_memory_cell_forward.1} parent=1 // pred_check_branch
      %21 = sbr.rel (0) target = $region9
    $region8: #{apdu_memory_cell_forward.1} parent=1 // pred_region
      _
    $region9: #{apdu_memory_cell_forward.1} parent=1 // pred_fallthru
      _
    // Predicated region
    $region10: #{apdu_memory_cell_forward.1} parent=1 // pred_check
      _
    $region11: #{apdu_memory_cell_forward.1} parent=1 // pred_check_branch
      %23 = sbr.rel (0) target = $region13
    $region12: #{apdu_memory_cell_forward.1} parent=1 // pred_region
      %25 = vsyncadd [#allocation3], 0
      %s26 = sshll.u32 %s2, 4
      %s27 = int_to_ptr.hbm [resolvable:$true] %s26
      %s28 = sshll.u32 [#allocation2], 4
      %s29 = int_to_ptr.vmem [resolvable:$true] %s28
      %34 = dma.hbm_to_vmem [thread:$0]  %s27, 256, %s29, [#allocation3], 64, 64, 4
    $region13: #{apdu_memory_cell_forward.1} parent=1 // pred_fallthru
      _
    // Predicated region
    $region14: #{apdu_memory_cell_forward.1} parent=1 // pred_check
      _
    $region15: #{apdu_memory_cell_forward.1} parent=1 // pred_check_branch
      %36 = sbr.rel (0) target = $region17
    $region16: #{apdu_memory_cell_forward.1} parent=1 // pred_region
      _
    $region17: #{apdu_memory_cell_forward.1} parent=1 // pred_fallthru
      _
    // Predicated region
    $region18: #{apdu_memory_cell_forward.1} parent=1 // pred_check
      _
    $region19: #{apdu_memory_cell_forward.1} parent=1 // pred_check_branch
      %38 = sbr.rel (0) target = $region21
    $region20: #{apdu_memory_cell_forward.1} parent=1 // pred_region
      %40 = vsyncadd [#allocation5], 0
      %s41 = sshll.u32 %s4, 4
      %s42 = int_to_ptr.hbm [resolvable:$true] %s41
      %s43 = sshll.u32 [#allocation4], 4
      %s44 = int_to_ptr.vmem [resolvable:$true] %s43
      %49 = dma.hbm_to_vmem [thread:$0]  %s42, 6144, %s44, [#allocation5], 1536, 1536, 96
    $region21: #{apdu_memory_cell_forward.1} parent=1 // pred_fallthru
      _
    // Predicated region
    $region22: #{apdu_memory_cell_forward.1} parent=1 // pred_check
      _
    $region23: #{apdu_memory_cell_forward.1} parent=1 // pred_check_branch
      %51 = sbr.rel (0) target = $region25
    $region24: #{apdu_memory_cell_forward.1} parent=1 // pred_region
      _
    $region25: #{apdu_memory_cell_forward.1} parent=1 // pred_fallthru
      _
    // Predicated region
    $region26: #{apdu_memory_cell_forward.1} parent=1 // pred_check
      _
    $region27: #{apdu_memory_cell_forward.1} parent=1 // pred_check_branch
      %53 = sbr.rel (0) target = $region29
    $region28: #{apdu_memory_cell_forward.1} parent=1 // pred_region
      %55 = vsyncadd [#allocation5], 0
      %s56 = sshll.u32 %s6, 4
      %s57 = int_to_ptr.hbm [resolvable:$true] %s56
      %s58 = sshll.u32 [#allocation6], 4
      %s59 = int_to_ptr.vmem [resolvable:$true] %s58
      %64 = dma.hbm_to_vmem [thread:$0]  %s57, 4096, %s59, [#allocation5], 64, 64, 4
    $region29: #{apdu_memory_cell_forward.1} parent=1 // pred_fallthru
      _
    // Predicated region
    $region30: #{apdu_memory_cell_forward.1} parent=1 // pred_check
      _
    $region31: #{apdu_memory_cell_forward.1} parent=1 // pred_check_branch
      %66 = sbr.rel (0) target = $region33
    $region32: #{apdu_memory_cell_forward.1} parent=1 // pred_region
      _
    $region33: #{apdu_memory_cell_forward.1} parent=1 // pred_fallthru
      _
    // Predicated region
    $region34: #{apdu_memory_cell_forward.1} parent=1 // pred_check
      _
    $region35: #{apdu_memory_cell_forward.1} parent=1 // pred_check_branch
      %68 = sbr.rel (0) target = $region37
    $region36: #{apdu_memory_cell_forward.1} parent=1 // pred_region
      %70 = dma.done [#allocation3], 256
    $region37: #{apdu_memory_cell_forward.1} parent=1 // pred_fallthru
      _
    // Predicated region
    $region38: #{apdu_memory_cell_forward.1} parent=1 // pred_check
      _
    $region39: #{apdu_memory_cell_forward.1} parent=1 // pred_check_branch
      %72 = sbr.rel (0) target = $region41
    $region40: #{apdu_memory_cell_forward.1} parent=1 // pred_region
      %74 = dma.done [#allocation5], 6144
    $region41: #{apdu_memory_cell_forward.1} parent=1 // pred_fallthru
      _
    // Predicated region
    $region42: #{apdu_memory_cell_forward.1} parent=1 // pred_check
      _
    $region43: #{apdu_memory_cell_forward.1} parent=1 // pred_check_branch
      %76 = sbr.rel (0) target = $region45
    $region44: #{apdu_memory_cell_forward.1} parent=1 // pred_region
      %78 = dma.done [#allocation5], 4096
    $region45: #{apdu_memory_cell_forward.1} parent=1 // pred_fallthru
      _
    %v80 = vld [vmem:[%s1] sm:$0xf]
    %v81 = vld [vmem:[%s1 + $0x4] sm:$0xf]
    %v82 = vld [vmem:[%s0] sm:$0xf]
    %v83 = vpack.c.bf16 %v82, %v82
    %v84 = vld [vmem:[#allocation2] sm:$0xf]
    %v85 = vld [vmem:[#allocation2 + $0x4] sm:$0xf]
    %v86 = vld [vmem:[#allocation2 + $0x8] sm:$0xf]
    %v87 = vld [vmem:[#allocation2 + $0xc] sm:$0xf]
    %v88 = vld [vmem:[%s3] sm:$0x1]
    %v90 = vperm.slane %v88, 0
    %v96 = vunpack.c.l.b16 %v84
    %v97 = vunpack.c.l.b16 %v85
    %v98 = vunpack.c.l.b16 %v86
    %v99 = vunpack.c.l.b16 %v87
    %v100 = vpack.c.b16 %v97, %v96
    %v101 = vpack.c.b16 %v99, %v98
    %vm104 = vcmask 261120
    %v106 = vsel %vm104, %v83, 0
    %108 = vmatpush.bf16.msra.mxu0 0
    %109 = vmatpush.bf16.msra.mxu0 0
    %110 = vmatpush.bf16.msra.mxu0 0
    %111 = vmatpush.bf16.msra.mxu0 0
    %112 = vmatpush.bf16.msra.mxu0 0
    %113 = vmatpush.bf16.msra.mxu0 0
    %114 = vmatpush.bf16.msra.mxu0 %v101
    %115 = vmatpush.bf16.msra.mxu0 %v100
    %116 = vmatmul.bf16.gmra.mxu0 %v106
    %v117 = vpop.f32.mrf.mxu0
    %v118 = vadd.f32 %v90, %v117
    %v119 = vpop.f32.mrf.mxu0
    %120 = vdwg.mxu0
    %v121 = vmax.f32 %v118, 0.0
    %v122 = vpack.c.bf16 %v121, %v121
    %v123 = vld [vmem:[#allocation4] sm:$0xff]
    %v124 = vld [vmem:[#allocation4 + $0x8] sm:$0xff]
    %v125 = vld [vmem:[#allocation4 + $0x10] sm:$0xff]
    %v126 = vld [vmem:[#allocation4 + $0x18] sm:$0xff]
    %v127 = vld [vmem:[#allocation4 + $0x20] sm:$0xff]
    %v128 = vld [vmem:[#allocation4 + $0x28] sm:$0xff]
    %v129 = vld [vmem:[#allocation4 + $0x30] sm:$0xff]
    %v130 = vld [vmem:[#allocation4 + $0x38] sm:$0xff]
    %v131 = vld [vmem:[#allocation4 + $0x40] sm:$0xff]
    %v132 = vld [vmem:[#allocation4 + $0x48] sm:$0xff]
    %v133 = vld [vmem:[#allocation4 + $0x50] sm:$0xff]
    %v134 = vld [vmem:[#allocation4 + $0x58] sm:$0xff]
    %v135 = vld [vmem:[#allocation4 + $0x60] sm:$0xff]
    %v136 = vld [vmem:[#allocation4 + $0x68] sm:$0xff]
    %v137 = vld [vmem:[#allocation4 + $0x70] sm:$0xff]
    %v138 = vld [vmem:[#allocation4 + $0x78] sm:$0xff]
    %v139 = vld [vmem:[#allocation4 + $0x80] sm:$0xff]
    %v140 = vld [vmem:[#allocation4 + $0x88] sm:$0xff]
    %v141 = vld [vmem:[#allocation4 + $0x90] sm:$0xff]
    %v142 = vld [vmem:[#allocation4 + $0x98] sm:$0xff]
    %v143 = vld [vmem:[#allocation4 + $0xa0] sm:$0xff]
    %v144 = vld [vmem:[#allocation4 + $0xa8] sm:$0xff]
    %v145 = vld [vmem:[#allocation4 + $0xb0] sm:$0xff]
    %v146 = vld [vmem:[#allocation4 + $0xb8] sm:$0xff]
    %v147 = vld [vmem:[#allocation4 + $0xc0] sm:$0xff]
    %v148 = vld [vmem:[#allocation4 + $0xc8] sm:$0xff]
    %v149 = vld [vmem:[#allocation4 + $0xd0] sm:$0xff]
    %v150 = vld [vmem:[#allocation4 + $0xd8] sm:$0xff]
    %v151 = vld [vmem:[#allocation4 + $0xe0] sm:$0xff]
    %v152 = vld [vmem:[#allocation4 + $0xe8] sm:$0xff]
    %v153 = vld [vmem:[#allocation4 + $0xf0] sm:$0xff]
    %v154 = vld [vmem:[#allocation4 + $0xf8] sm:$0xff]
    %v155 = vld [vmem:[#allocation4 + $0x100] sm:$0xff]
    %v156 = vld [vmem:[#allocation4 + $0x108] sm:$0xff]
    %v157 = vld [vmem:[#allocation4 + $0x110] sm:$0xff]
    %v158 = vld [vmem:[#allocation4 + $0x118] sm:$0xff]
    %v159 = vld [vmem:[#allocation4 + $0x120] sm:$0xff]
    %v160 = vld [vmem:[#allocation4 + $0x128] sm:$0xff]
    %v161 = vld [vmem:[#allocation4 + $0x130] sm:$0xff]
    %v162 = vld [vmem:[#allocation4 + $0x138] sm:$0xff]
    %v163 = vld [vmem:[#allocation4 + $0x140] sm:$0xff]
    %v164 = vld [vmem:[#allocation4 + $0x148] sm:$0xff]
    %v165 = vld [vmem:[#allocation4 + $0x150] sm:$0xff]
    %v166 = vld [vmem:[#allocation4 + $0x158] sm:$0xff]
    %v167 = vld [vmem:[#allocation4 + $0x160] sm:$0xff]
    %v168 = vld [vmem:[#allocation4 + $0x168] sm:$0xff]
    %v169 = vld [vmem:[#allocation4 + $0x170] sm:$0xff]
    %v170 = vld [vmem:[#allocation4 + $0x178] sm:$0xff]
    %v171 = vld [vmem:[%s5] sm:$0xff]
    %v172 = vld [vmem:[%s5 + $0x8] sm:$0xff]
    %v173 = vld [vmem:[%s5 + $0x10] sm:$0xff]
    %v177 = vperm.slane %v171, 0
    %v178 = vperm.slane %v171, 1
    %v179 = vperm.slane %v171, 2
    %v180 = vperm.slane %v171, 3
    %v181 = vperm.slane %v171, 4
    %v182 = vperm.slane %v171, 5
    %v183 = vperm.slane %v171, 6
    %v184 = vperm.slane %v171, 7
    %v185 = vperm.slane %v172, 0
    %v186 = vperm.slane %v172, 1
    %v187 = vperm.slane %v172, 2
    %v188 = vperm.slane %v172, 3
    %v189 = vperm.slane %v172, 4
    %v190 = vperm.slane %v172, 5
    %v191 = vperm.slane %v172, 6
    %v192 = vperm.slane %v172, 7
    %v193 = vperm.slane %v173, 0
    %v194 = vperm.slane %v173, 1
    %v195 = vperm.slane %v173, 2
    %v196 = vperm.slane %v173, 3
    %v197 = vperm.slane %v173, 4
    %v198 = vperm.slane %v173, 5
    %v199 = vperm.slane %v173, 6
    %v200 = vperm.slane %v173, 7
    %v273 = vunpack.c.l.b16 %v123
    %v274 = vunpack.c.h.b16 %v123
    %v275 = vunpack.c.l.b16 %v124
    %v276 = vunpack.c.h.b16 %v124
    %v277 = vunpack.c.l.b16 %v125
    %v278 = vunpack.c.h.b16 %v125
    %v279 = vunpack.c.l.b16 %v126
    %v280 = vunpack.c.h.b16 %v126
    %v281 = vunpack.c.l.b16 %v127
    %v282 = vunpack.c.h.b16 %v127
    %v283 = vunpack.c.l.b16 %v128
    %v284 = vunpack.c.h.b16 %v128
    %v285 = vunpack.c.l.b16 %v129
    %v286 = vunpack.c.h.b16 %v129
    %v287 = vunpack.c.l.b16 %v130
    %v288 = vunpack.c.h.b16 %v130
    %v289 = vunpack.c.l.b16 %v131
    %v290 = vunpack.c.h.b16 %v131
    %v291 = vunpack.c.l.b16 %v132
    %v292 = vunpack.c.h.b16 %v132
    %v293 = vunpack.c.l.b16 %v133
    %v294 = vunpack.c.h.b16 %v133
    %v295 = vunpack.c.l.b16 %v134
    %v296 = vunpack.c.h.b16 %v134
    %v297 = vunpack.c.l.b16 %v135
    %v298 = vunpack.c.h.b16 %v135
    %v299 = vunpack.c.l.b16 %v136
    %v300 = vunpack.c.h.b16 %v136
    %v301 = vunpack.c.l.b16 %v137
    %v302 = vunpack.c.h.b16 %v137
    %v303 = vunpack.c.l.b16 %v138
    %v304 = vunpack.c.h.b16 %v138
    %v305 = vunpack.c.l.b16 %v139
    %v306 = vunpack.c.h.b16 %v139
    %v307 = vunpack.c.l.b16 %v140
    %v308 = vunpack.c.h.b16 %v140
    %v309 = vunpack.c.l.b16 %v141
    %v310 = vunpack.c.h.b16 %v141
    %v311 = vunpack.c.l.b16 %v142
    %v312 = vunpack.c.h.b16 %v142
    %v313 = vunpack.c.l.b16 %v143
    %v314 = vunpack.c.h.b16 %v143
    %v315 = vunpack.c.l.b16 %v144
    %v316 = vunpack.c.h.b16 %v144
    %v317 = vunpack.c.l.b16 %v145
    %v318 = vunpack.c.h.b16 %v145
    %v319 = vunpack.c.l.b16 %v146
    %v320 = vunpack.c.h.b16 %v146
    %v321 = vunpack.c.l.b16 %v147
    %v322 = vunpack.c.h.b16 %v147
    %v323 = vunpack.c.l.b16 %v148
    %v324 = vunpack.c.h.b16 %v148
    %v325 = vunpack.c.l.b16 %v149
    %v326 = vunpack.c.h.b16 %v149
    %v327 = vunpack.c.l.b16 %v150
    %v328 = vunpack.c.h.b16 %v150
    %v329 = vunpack.c.l.b16 %v151
    %v330 = vunpack.c.h.b16 %v151
    %v331 = vunpack.c.l.b16 %v152
    %v332 = vunpack.c.h.b16 %v152
    %v333 = vunpack.c.l.b16 %v153
    %v334 = vunpack.c.h.b16 %v153
    %v335 = vunpack.c.l.b16 %v154
    %v336 = vunpack.c.h.b16 %v154
    %v337 = vunpack.c.l.b16 %v155
    %v338 = vunpack.c.h.b16 %v155
    %v339 = vunpack.c.l.b16 %v156
    %v340 = vunpack.c.h.b16 %v156
    %v341 = vunpack.c.l.b16 %v157
    %v342 = vunpack.c.h.b16 %v157
    %v343 = vunpack.c.l.b16 %v158
    %v344 = vunpack.c.h.b16 %v158
    %v345 = vunpack.c.l.b16 %v159
    %v346 = vunpack.c.h.b16 %v159
    %v347 = vunpack.c.l.b16 %v160
    %v348 = vunpack.c.h.b16 %v160
    %v349 = vunpack.c.l.b16 %v161
    %v350 = vunpack.c.h.b16 %v161
    %v351 = vunpack.c.l.b16 %v162
    %v352 = vunpack.c.h.b16 %v162
    %v353 = vunpack.c.l.b16 %v163
    %v354 = vunpack.c.h.b16 %v163
    %v355 = vunpack.c.l.b16 %v164
    %v356 = vunpack.c.h.b16 %v164
    %v357 = vunpack.c.l.b16 %v165
    %v358 = vunpack.c.h.b16 %v165
    %v359 = vunpack.c.l.b16 %v166
    %v360 = vunpack.c.h.b16 %v166
    %v361 = vunpack.c.l.b16 %v167
    %v362 = vunpack.c.h.b16 %v167
    %v363 = vunpack.c.l.b16 %v168
    %v364 = vunpack.c.h.b16 %v168
    %v365 = vunpack.c.l.b16 %v169
    %v366 = vunpack.c.h.b16 %v169
    %v367 = vunpack.c.l.b16 %v170
    %v368 = vunpack.c.h.b16 %v170
    %v369 = vpack.c.b16 %v297, %v273
    %v370 = vpack.c.b16 %v298, %v274
    %v371 = vpack.c.b16 %v299, %v275
    %v372 = vpack.c.b16 %v300, %v276
    %v373 = vpack.c.b16 %v301, %v277
    %v374 = vpack.c.b16 %v302, %v278
    %v375 = vpack.c.b16 %v303, %v279
    %v376 = vpack.c.b16 %v304, %v280
    %v377 = vpack.c.b16 %v305, %v281
    %v378 = vpack.c.b16 %v306, %v282
    %v379 = vpack.c.b16 %v307, %v283
    %v380 = vpack.c.b16 %v308, %v284
    %v381 = vpack.c.b16 %v309, %v285
    %v382 = vpack.c.b16 %v310, %v286
    %v383 = vpack.c.b16 %v311, %v287
    %v384 = vpack.c.b16 %v312, %v288
    %v385 = vpack.c.b16 %v313, %v289
    %v386 = vpack.c.b16 %v314, %v290
    %v387 = vpack.c.b16 %v315, %v291
    %v388 = vpack.c.b16 %v316, %v292
    %v389 = vpack.c.b16 %v317, %v293
    %v390 = vpack.c.b16 %v318, %v294
    %v391 = vpack.c.b16 %v319, %v295
    %v392 = vpack.c.b16 %v320, %v296
    %v393 = vpack.c.b16 %v345, %v321
    %v394 = vpack.c.b16 %v346, %v322
    %v395 = vpack.c.b16 %v347, %v323
    %v396 = vpack.c.b16 %v348, %v324
    %v397 = vpack.c.b16 %v349, %v325
    %v398 = vpack.c.b16 %v350, %v326
    %v399 = vpack.c.b16 %v351, %v327
    %v400 = vpack.c.b16 %v352, %v328
    %v401 = vpack.c.b16 %v353, %v329
    %v402 = vpack.c.b16 %v354, %v330
    %v403 = vpack.c.b16 %v355, %v331
    %v404 = vpack.c.b16 %v356, %v332
    %v405 = vpack.c.b16 %v357, %v333
    %v406 = vpack.c.b16 %v358, %v334
    %v407 = vpack.c.b16 %v359, %v335
    %v408 = vpack.c.b16 %v360, %v336
    %v409 = vpack.c.b16 %v361, %v337
    %v410 = vpack.c.b16 %v362, %v338
    %v411 = vpack.c.b16 %v363, %v339
    %v412 = vpack.c.b16 %v364, %v340
    %v413 = vpack.c.b16 %v365, %v341
    %v414 = vpack.c.b16 %v366, %v342
    %v415 = vpack.c.b16 %v367, %v343
    %v416 = vpack.c.b16 %v368, %v344
    %v466 = vsel %vm104, %v122, 0
    %468 = vmatpush.bf16.msra.mxu0 0
    %469 = vmatpush.bf16.msra.mxu0 0
    %470 = vmatpush.bf16.msra.mxu0 0
    %471 = vmatpush.bf16.msra.mxu0 0
    %472 = vmatpush.bf16.msra.mxu0 0
    %473 = vmatpush.bf16.msra.mxu0 0
    %474 = vmatpush.bf16.msra.mxu0 %v393
    %475 = vmatpush.bf16.msra.mxu0 %v369
    %476 = vmatmul.bf16.gmra.mxu0 %v466
    %v477 = vpop.f32.mrf.mxu0
    %v478 = vadd.f32 %v177, %v477
    %v479 = vpop.f32.mrf.mxu0
    %480 = vdwg.mxu0
    %481 = vmatpush.bf16.msra.mxu0 0
    %482 = vmatpush.bf16.msra.mxu0 0
    %483 = vmatpush.bf16.msra.mxu0 0
    %484 = vmatpush.bf16.msra.mxu0 0
    %485 = vmatpush.bf16.msra.mxu0 0
    %486 = vmatpush.bf16.msra.mxu0 0
    %487 = vmatpush.bf16.msra.mxu0 %v394
    %488 = vmatpush.bf16.msra.mxu0 %v370
    %489 = vmatmul.bf16.gmra.mxu0 %v466
    %v490 = vpop.f32.mrf.mxu0
    %v491 = vadd.f32 %v178, %v490
    %v492 = vpop.f32.mrf.mxu0
    %493 = vdwg.mxu0
    %494 = vmatpush.bf16.msra.mxu0 0
    %495 = vmatpush.bf16.msra.mxu0 0
    %496 = vmatpush.bf16.msra.mxu0 0
    %497 = vmatpush.bf16.msra.mxu0 0
    %498 = vmatpush.bf16.msra.mxu0 0
    %499 = vmatpush.bf16.msra.mxu0 0
    %500 = vmatpush.bf16.msra.mxu0 %v395
    %501 = vmatpush.bf16.msra.mxu0 %v371
    %502 = vmatmul.bf16.gmra.mxu0 %v466
    %v503 = vpop.f32.mrf.mxu0
    %v504 = vadd.f32 %v179, %v503
    %v505 = vpop.f32.mrf.mxu0
    %506 = vdwg.mxu0
    %507 = vmatpush.bf16.msra.mxu0 0
    %508 = vmatpush.bf16.msra.mxu0 0
    %509 = vmatpush.bf16.msra.mxu0 0
    %510 = vmatpush.bf16.msra.mxu0 0
    %511 = vmatpush.bf16.msra.mxu0 0
    %512 = vmatpush.bf16.msra.mxu0 0
    %513 = vmatpush.bf16.msra.mxu0 %v396
    %514 = vmatpush.bf16.msra.mxu0 %v372
    %515 = vmatmul.bf16.gmra.mxu0 %v466
    %v516 = vpop.f32.mrf.mxu0
    %v517 = vadd.f32 %v180, %v516
    %v518 = vpop.f32.mrf.mxu0
    %519 = vdwg.mxu0
    %520 = vmatpush.bf16.msra.mxu0 0
    %521 = vmatpush.bf16.msra.mxu0 0
    %522 = vmatpush.bf16.msra.mxu0 0
    %523 = vmatpush.bf16.msra.mxu0 0
    %524 = vmatpush.bf16.msra.mxu0 0
    %525 = vmatpush.bf16.msra.mxu0 0
    %526 = vmatpush.bf16.msra.mxu0 %v397
    %527 = vmatpush.bf16.msra.mxu0 %v373
    %528 = vmatmul.bf16.gmra.mxu0 %v466
    %v529 = vpop.f32.mrf.mxu0
    %v530 = vadd.f32 %v181, %v529
    %v531 = vpop.f32.mrf.mxu0
    %532 = vdwg.mxu0
    %533 = vmatpush.bf16.msra.mxu0 0
    %534 = vmatpush.bf16.msra.mxu0 0
    %535 = vmatpush.bf16.msra.mxu0 0
    %536 = vmatpush.bf16.msra.mxu0 0
    %537 = vmatpush.bf16.msra.mxu0 0
    %538 = vmatpush.bf16.msra.mxu0 0
    %539 = vmatpush.bf16.msra.mxu0 %v398
    %540 = vmatpush.bf16.msra.mxu0 %v374
    %541 = vmatmul.bf16.gmra.mxu0 %v466
    %v542 = vpop.f32.mrf.mxu0
    %v543 = vadd.f32 %v182, %v542
    %v544 = vpop.f32.mrf.mxu0
    %545 = vdwg.mxu0
    %546 = vmatpush.bf16.msra.mxu0 0
    %547 = vmatpush.bf16.msra.mxu0 0
    %548 = vmatpush.bf16.msra.mxu0 0
    %549 = vmatpush.bf16.msra.mxu0 0
    %550 = vmatpush.bf16.msra.mxu0 0
    %551 = vmatpush.bf16.msra.mxu0 0
    %552 = vmatpush.bf16.msra.mxu0 %v399
    %553 = vmatpush.bf16.msra.mxu0 %v375
    %554 = vmatmul.bf16.gmra.mxu0 %v466
    %v555 = vpop.f32.mrf.mxu0
    %v556 = vadd.f32 %v183, %v555
    %v557 = vpop.f32.mrf.mxu0
    %558 = vdwg.mxu0
    %559 = vmatpush.bf16.msra.mxu0 0
    %560 = vmatpush.bf16.msra.mxu0 0
    %561 = vmatpush.bf16.msra.mxu0 0
    %562 = vmatpush.bf16.msra.mxu0 0
    %563 = vmatpush.bf16.msra.mxu0 0
    %564 = vmatpush.bf16.msra.mxu0 0
    %565 = vmatpush.bf16.msra.mxu0 %v400
    %566 = vmatpush.bf16.msra.mxu0 %v376
    %567 = vmatmul.bf16.gmra.mxu0 %v466
    %v568 = vpop.f32.mrf.mxu0
    %v569 = vadd.f32 %v184, %v568
    %v570 = vpop.f32.mrf.mxu0
    %571 = vdwg.mxu0
    %572 = vmatpush.bf16.msra.mxu0 0
    %573 = vmatpush.bf16.msra.mxu0 0
    %574 = vmatpush.bf16.msra.mxu0 0
    %575 = vmatpush.bf16.msra.mxu0 0
    %576 = vmatpush.bf16.msra.mxu0 0
    %577 = vmatpush.bf16.msra.mxu0 0
    %578 = vmatpush.bf16.msra.mxu0 %v401
    %579 = vmatpush.bf16.msra.mxu0 %v377
    %580 = vmatmul.bf16.gmra.mxu0 %v466
    %v581 = vpop.f32.mrf.mxu0
    %v582 = vadd.f32 %v185, %v581
    %v583 = vpop.f32.mrf.mxu0
    %584 = vdwg.mxu0
    %585 = vmatpush.bf16.msra.mxu0 0
    %586 = vmatpush.bf16.msra.mxu0 0
    %587 = vmatpush.bf16.msra.mxu0 0
    %588 = vmatpush.bf16.msra.mxu0 0
    %589 = vmatpush.bf16.msra.mxu0 0
    %590 = vmatpush.bf16.msra.mxu0 0
    %591 = vmatpush.bf16.msra.mxu0 %v402
    %592 = vmatpush.bf16.msra.mxu0 %v378
    %593 = vmatmul.bf16.gmra.mxu0 %v466
    %v594 = vpop.f32.mrf.mxu0
    %v595 = vadd.f32 %v186, %v594
    %v596 = vpop.f32.mrf.mxu0
    %597 = vdwg.mxu0
    %598 = vmatpush.bf16.msra.mxu0 0
    %599 = vmatpush.bf16.msra.mxu0 0
    %600 = vmatpush.bf16.msra.mxu0 0
    %601 = vmatpush.bf16.msra.mxu0 0
    %602 = vmatpush.bf16.msra.mxu0 0
    %603 = vmatpush.bf16.msra.mxu0 0
    %604 = vmatpush.bf16.msra.mxu0 %v403
    %605 = vmatpush.bf16.msra.mxu0 %v379
    %606 = vmatmul.bf16.gmra.mxu0 %v466
    %v607 = vpop.f32.mrf.mxu0
    %v608 = vadd.f32 %v187, %v607
    %v609 = vpop.f32.mrf.mxu0
    %610 = vdwg.mxu0
    %611 = vmatpush.bf16.msra.mxu0 0
    %612 = vmatpush.bf16.msra.mxu0 0
    %613 = vmatpush.bf16.msra.mxu0 0
    %614 = vmatpush.bf16.msra.mxu0 0
    %615 = vmatpush.bf16.msra.mxu0 0
    %616 = vmatpush.bf16.msra.mxu0 0
    %617 = vmatpush.bf16.msra.mxu0 %v404
    %618 = vmatpush.bf16.msra.mxu0 %v380
    %619 = vmatmul.bf16.gmra.mxu0 %v466
    %v620 = vpop.f32.mrf.mxu0
    %v621 = vadd.f32 %v188, %v620
    %v622 = vpop.f32.mrf.mxu0
    %623 = vdwg.mxu0
    %624 = vmatpush.bf16.msra.mxu0 0
    %625 = vmatpush.bf16.msra.mxu0 0
    %626 = vmatpush.bf16.msra.mxu0 0
    %627 = vmatpush.bf16.msra.mxu0 0
    %628 = vmatpush.bf16.msra.mxu0 0
    %629 = vmatpush.bf16.msra.mxu0 0
    %630 = vmatpush.bf16.msra.mxu0 %v405
    %631 = vmatpush.bf16.msra.mxu0 %v381
    %632 = vmatmul.bf16.gmra.mxu0 %v466
    %v633 = vpop.f32.mrf.mxu0
    %v634 = vadd.f32 %v189, %v633
    %v635 = vpop.f32.mrf.mxu0
    %636 = vdwg.mxu0
    %637 = vmatpush.bf16.msra.mxu0 0
    %638 = vmatpush.bf16.msra.mxu0 0
    %639 = vmatpush.bf16.msra.mxu0 0
    %640 = vmatpush.bf16.msra.mxu0 0
    %641 = vmatpush.bf16.msra.mxu0 0
    %642 = vmatpush.bf16.msra.mxu0 0
    %643 = vmatpush.bf16.msra.mxu0 %v406
    %644 = vmatpush.bf16.msra.mxu0 %v382
    %645 = vmatmul.bf16.gmra.mxu0 %v466
    %v646 = vpop.f32.mrf.mxu0
    %v647 = vadd.f32 %v190, %v646
    %v648 = vpop.f32.mrf.mxu0
    %649 = vdwg.mxu0
    %650 = vmatpush.bf16.msra.mxu0 0
    %651 = vmatpush.bf16.msra.mxu0 0
    %652 = vmatpush.bf16.msra.mxu0 0
    %653 = vmatpush.bf16.msra.mxu0 0
    %654 = vmatpush.bf16.msra.mxu0 0
    %655 = vmatpush.bf16.msra.mxu0 0
    %656 = vmatpush.bf16.msra.mxu0 %v407
    %657 = vmatpush.bf16.msra.mxu0 %v383
    %658 = vmatmul.bf16.gmra.mxu0 %v466
    %v659 = vpop.f32.mrf.mxu0
    %v660 = vadd.f32 %v191, %v659
    %v661 = vpop.f32.mrf.mxu0
    %662 = vdwg.mxu0
    %663 = vmatpush.bf16.msra.mxu0 0
    %664 = vmatpush.bf16.msra.mxu0 0
    %665 = vmatpush.bf16.msra.mxu0 0
    %666 = vmatpush.bf16.msra.mxu0 0
    %667 = vmatpush.bf16.msra.mxu0 0
    %668 = vmatpush.bf16.msra.mxu0 0
    %669 = vmatpush.bf16.msra.mxu0 %v408
    %670 = vmatpush.bf16.msra.mxu0 %v384
    %671 = vmatmul.bf16.gmra.mxu0 %v466
    %v672 = vpop.f32.mrf.mxu0
    %v673 = vadd.f32 %v192, %v672
    %v674 = vpop.f32.mrf.mxu0
    %675 = vdwg.mxu0
    %676 = vmatpush.bf16.msra.mxu0 0
    %677 = vmatpush.bf16.msra.mxu0 0
    %678 = vmatpush.bf16.msra.mxu0 0
    %679 = vmatpush.bf16.msra.mxu0 0
    %680 = vmatpush.bf16.msra.mxu0 0
    %681 = vmatpush.bf16.msra.mxu0 0
    %682 = vmatpush.bf16.msra.mxu0 %v409
    %683 = vmatpush.bf16.msra.mxu0 %v385
    %684 = vmatmul.bf16.gmra.mxu0 %v466
    %v685 = vpop.f32.mrf.mxu0
    %v686 = vadd.f32 %v193, %v685
    %v687 = vpop.f32.mrf.mxu0
    %688 = vdwg.mxu0
    %689 = vmatpush.bf16.msra.mxu0 0
    %690 = vmatpush.bf16.msra.mxu0 0
    %691 = vmatpush.bf16.msra.mxu0 0
    %692 = vmatpush.bf16.msra.mxu0 0
    %693 = vmatpush.bf16.msra.mxu0 0
    %694 = vmatpush.bf16.msra.mxu0 0
    %695 = vmatpush.bf16.msra.mxu0 %v410
    %696 = vmatpush.bf16.msra.mxu0 %v386
    %697 = vmatmul.bf16.gmra.mxu0 %v466
    %v698 = vpop.f32.mrf.mxu0
    %v699 = vadd.f32 %v194, %v698
    %v700 = vpop.f32.mrf.mxu0
    %701 = vdwg.mxu0
    %702 = vmatpush.bf16.msra.mxu0 0
    %703 = vmatpush.bf16.msra.mxu0 0
    %704 = vmatpush.bf16.msra.mxu0 0
    %705 = vmatpush.bf16.msra.mxu0 0
    %706 = vmatpush.bf16.msra.mxu0 0
    %707 = vmatpush.bf16.msra.mxu0 0
    %708 = vmatpush.bf16.msra.mxu0 %v411
    %709 = vmatpush.bf16.msra.mxu0 %v387
    %710 = vmatmul.bf16.gmra.mxu0 %v466
    %v711 = vpop.f32.mrf.mxu0
    %v712 = vadd.f32 %v195, %v711
    %v713 = vpop.f32.mrf.mxu0
    %714 = vdwg.mxu0
    %715 = vmatpush.bf16.msra.mxu0 0
    %716 = vmatpush.bf16.msra.mxu0 0
    %717 = vmatpush.bf16.msra.mxu0 0
    %718 = vmatpush.bf16.msra.mxu0 0
    %719 = vmatpush.bf16.msra.mxu0 0
    %720 = vmatpush.bf16.msra.mxu0 0
    %721 = vmatpush.bf16.msra.mxu0 %v412
    %722 = vmatpush.bf16.msra.mxu0 %v388
    %723 = vmatmul.bf16.gmra.mxu0 %v466
    %v724 = vpop.f32.mrf.mxu0
    %v725 = vadd.f32 %v196, %v724
    %v726 = vpop.f32.mrf.mxu0
    %727 = vdwg.mxu0
    %728 = vmatpush.bf16.msra.mxu0 0
    %729 = vmatpush.bf16.msra.mxu0 0
    %730 = vmatpush.bf16.msra.mxu0 0
    %731 = vmatpush.bf16.msra.mxu0 0
    %732 = vmatpush.bf16.msra.mxu0 0
    %733 = vmatpush.bf16.msra.mxu0 0
    %734 = vmatpush.bf16.msra.mxu0 %v413
    %735 = vmatpush.bf16.msra.mxu0 %v389
    %736 = vmatmul.bf16.gmra.mxu0 %v466
    %v737 = vpop.f32.mrf.mxu0
    %v738 = vadd.f32 %v197, %v737
    %v739 = vpop.f32.mrf.mxu0
    %740 = vdwg.mxu0
    %741 = vmatpush.bf16.msra.mxu0 0
    %742 = vmatpush.bf16.msra.mxu0 0
    %743 = vmatpush.bf16.msra.mxu0 0
    %744 = vmatpush.bf16.msra.mxu0 0
    %745 = vmatpush.bf16.msra.mxu0 0
    %746 = vmatpush.bf16.msra.mxu0 0
    %747 = vmatpush.bf16.msra.mxu0 %v414
    %748 = vmatpush.bf16.msra.mxu0 %v390
    %749 = vmatmul.bf16.gmra.mxu0 %v466
    %v750 = vpop.f32.mrf.mxu0
    %v751 = vadd.f32 %v198, %v750
    %v752 = vpop.f32.mrf.mxu0
    %753 = vdwg.mxu0
    %754 = vmatpush.bf16.msra.mxu0 0
    %755 = vmatpush.bf16.msra.mxu0 0
    %756 = vmatpush.bf16.msra.mxu0 0
    %757 = vmatpush.bf16.msra.mxu0 0
    %758 = vmatpush.bf16.msra.mxu0 0
    %759 = vmatpush.bf16.msra.mxu0 0
    %760 = vmatpush.bf16.msra.mxu0 %v415
    %761 = vmatpush.bf16.msra.mxu0 %v391
    %762 = vmatmul.bf16.gmra.mxu0 %v466
    %v763 = vpop.f32.mrf.mxu0
    %v764 = vadd.f32 %v199, %v763
    %v765 = vpop.f32.mrf.mxu0
    %766 = vdwg.mxu0
    %767 = vmatpush.bf16.msra.mxu0 0
    %768 = vmatpush.bf16.msra.mxu0 0
    %769 = vmatpush.bf16.msra.mxu0 0
    %770 = vmatpush.bf16.msra.mxu0 0
    %771 = vmatpush.bf16.msra.mxu0 0
    %772 = vmatpush.bf16.msra.mxu0 0
    %773 = vmatpush.bf16.msra.mxu0 %v416
    %774 = vmatpush.bf16.msra.mxu0 %v392
    %775 = vmatmul.bf16.gmra.mxu0 %v466
    %v776 = vpop.f32.mrf.mxu0
    %v777 = vadd.f32 %v200, %v776
    %v778 = vpop.f32.mrf.mxu0
    %779 = vdwg.mxu0
    %vm780 = vcmask 1043456
    %v781 = vsel %vm780, %v478, -inf
    %782 = vmax.xlane.f32.xlu0 %v781
    %v783 = vpop.xlane.xlu0 %782
    %v784 = vsub.f32 %v478, %v783
    %v785 = vmul.f32 %v784, 1.442695
    %v786 = vpow.pop %v785
    %v787 = vsel %vm780, %v786, 0.0
    %788 = vadd.xlane.f32.xlu0 %v787
    %v789 = vpop.xlane.xlu0 %788
    %v790 = vmul.f32 %v789, 0.0625
    %v791 = vrcp.pop %v790
    %v792 = vmul.f32 %v786, %v791
    %v793 = vmul.f32 %v792, %v634
    %v794 = vsel %vm780, %v491, -inf
    %795 = vmax.xlane.f32.xlu0 %v794
    %v796 = vpop.xlane.xlu0 %795
    %v797 = vsub.f32 %v491, %v796
    %v798 = vmul.f32 %v797, 1.442695
    %v799 = vpow.pop %v798
    %v800 = vsel %vm780, %v799, 0.0
    %801 = vadd.xlane.f32.xlu0 %v800
    %v802 = vpop.xlane.xlu0 %801
    %v803 = vmul.f32 %v802, 0.0625
    %v804 = vrcp.pop %v803
    %v805 = vmul.f32 %v799, %v804
    %v806 = vmul.f32 %v805, %v647
    %v807 = vadd.f32 %v793, %v806
    %v808 = vsel %vm780, %v504, -inf
    %809 = vmax.xlane.f32.xlu0 %v808
    %v810 = vpop.xlane.xlu0 %809
    %v811 = vsub.f32 %v504, %v810
    %v812 = vmul.f32 %v811, 1.442695
    %v813 = vpow.pop %v812
    %v814 = vsel %vm780, %v813, 0.0
    %815 = vadd.xlane.f32.xlu0 %v814
    %v816 = vpop.xlane.xlu0 %815
    %v817 = vmul.f32 %v816, 0.0625
    %v818 = vrcp.pop %v817
    %v819 = vmul.f32 %v813, %v818
    %v820 = vmul.f32 %v819, %v660
    %v821 = vsel %vm780, %v517, -inf
    %822 = vmax.xlane.f32.xlu0 %v821
    %v823 = vpop.xlane.xlu0 %822
    %v824 = vsub.f32 %v517, %v823
    %v825 = vmul.f32 %v824, 1.442695
    %v826 = vpow.pop %v825
    %v827 = vsel %vm780, %v826, 0.0
    %828 = vadd.xlane.f32.xlu0 %v827
    %v829 = vpop.xlane.xlu0 %828
    %v830 = vmul.f32 %v829, 0.0625
    %v831 = vrcp.pop %v830
    %v832 = vmul.f32 %v826, %v831
    %v833 = vmul.f32 %v832, %v673
    %v834 = vadd.f32 %v820, %v833
    %v835 = vsel %vm780, %v530, -inf
    %836 = vmax.xlane.f32.xlu0 %v835
    %v837 = vpop.xlane.xlu0 %836
    %v838 = vsub.f32 %v530, %v837
    %v839 = vmul.f32 %v838, 1.442695
    %v840 = vpow.pop %v839
    %v841 = vsel %vm780, %v840, 0.0
    %842 = vadd.xlane.f32.xlu0 %v841
    %v843 = vpop.xlane.xlu0 %842
    %v844 = vmul.f32 %v843, 0.0625
    %v845 = vrcp.pop %v844
    %v846 = vmul.f32 %v840, %v845
    %v847 = vmul.f32 %v846, %v686
    %v848 = vsel %vm780, %v543, -inf
    %849 = vmax.xlane.f32.xlu0 %v848
    %v850 = vpop.xlane.xlu0 %849
    %v851 = vsub.f32 %v543, %v850
    %v852 = vmul.f32 %v851, 1.442695
    %v853 = vpow.pop %v852
    %v854 = vsel %vm780, %v853, 0.0
    %855 = vadd.xlane.f32.xlu0 %v854
    %v856 = vpop.xlane.xlu0 %855
    %v857 = vmul.f32 %v856, 0.0625
    %v858 = vrcp.pop %v857
    %v859 = vmul.f32 %v853, %v858
    %v860 = vmul.f32 %v859, %v699
    %v861 = vadd.f32 %v847, %v860
    %v862 = vsel %vm780, %v556, -inf
    %863 = vmax.xlane.f32.xlu0 %v862
    %v864 = vpop.xlane.xlu0 %863
    %v865 = vsub.f32 %v556, %v864
    %v866 = vmul.f32 %v865, 1.442695
    %v867 = vpow.pop %v866
    %v868 = vsel %vm780, %v867, 0.0
    %869 = vadd.xlane.f32.xlu0 %v868
    %v870 = vpop.xlane.xlu0 %869
    %v871 = vmul.f32 %v870, 0.0625
    %v872 = vrcp.pop %v871
    %v873 = vmul.f32 %v867, %v872
    %v874 = vmul.f32 %v873, %v712
    %v875 = vsel %vm780, %v569, -inf
    %876 = vmax.xlane.f32.xlu0 %v875
    %v877 = vpop.xlane.xlu0 %876
    %v878 = vsub.f32 %v569, %v877
    %v879 = vmul.f32 %v878, 1.442695
    %v880 = vpow.pop %v879
    %v881 = vsel %vm780, %v880, 0.0
    %882 = vadd.xlane.f32.xlu0 %v881
    %v883 = vpop.xlane.xlu0 %882
    %v884 = vmul.f32 %v883, 0.0625
    %v885 = vrcp.pop %v884
    %v886 = vmul.f32 %v880, %v885
    %v887 = vmul.f32 %v886, %v725
    %v888 = vadd.f32 %v874, %v887
    %v889 = vsel %vm780, %v582, -inf
    %890 = vmax.xlane.f32.xlu0 %v889
    %v891 = vpop.xlane.xlu0 %890
    %v892 = vsub.f32 %v582, %v891
    %v893 = vmul.f32 %v892, 1.442695
    %v894 = vpow.pop %v893
    %v895 = vsel %vm780, %v894, 0.0
    %896 = vadd.xlane.f32.xlu0 %v895
    %v897 = vpop.xlane.xlu0 %896
    %v898 = vmul.f32 %v897, 0.0625
    %v899 = vrcp.pop %v898
    %v900 = vmul.f32 %v894, %v899
    %v901 = vmul.f32 %v900, %v738
    %v902 = vsel %vm780, %v595, -inf
    %903 = vmax.xlane.f32.xlu0 %v902
    %v904 = vpop.xlane.xlu0 %903
    %v905 = vsub.f32 %v595, %v904
    %v906 = vmul.f32 %v905, 1.442695
    %v907 = vpow.pop %v906
    %v908 = vsel %vm780, %v907, 0.0
    %909 = vadd.xlane.f32.xlu0 %v908
    %v910 = vpop.xlane.xlu0 %909
    %v911 = vmul.f32 %v910, 0.0625
    %v912 = vrcp.pop %v911
    %v913 = vmul.f32 %v907, %v912
    %v914 = vmul.f32 %v913, %v751
    %v915 = vadd.f32 %v901, %v914
    %v916 = vsel %vm780, %v608, -inf
    %917 = vmax.xlane.f32.xlu0 %v916
    %v918 = vpop.xlane.xlu0 %917
    %v919 = vsub.f32 %v608, %v918
    %v920 = vmul.f32 %v919, 1.442695
    %v921 = vpow.pop %v920
    %v922 = vsel %vm780, %v921, 0.0
    %923 = vadd.xlane.f32.xlu0 %v922
    %v924 = vpop.xlane.xlu0 %923
    %v925 = vmul.f32 %v924, 0.0625
    %v926 = vrcp.pop %v925
    %v927 = vmul.f32 %v921, %v926
    %v928 = vmul.f32 %v927, %v764
    %v929 = vsel %vm780, %v621, -inf
    %930 = vmax.xlane.f32.xlu0 %v929
    %v931 = vpop.xlane.xlu0 %930
    %v932 = vsub.f32 %v621, %v931
    %v933 = vmul.f32 %v932, 1.442695
    %v934 = vpow.pop %v933
    %v935 = vsel %vm780, %v934, 0.0
    %936 = vadd.xlane.f32.xlu0 %v935
    %v937 = vpop.xlane.xlu0 %936
    %v938 = vmul.f32 %v937, 0.0625
    %v939 = vrcp.pop %v938
    %v940 = vmul.f32 %v934, %v939
    %v941 = vmul.f32 %v940, %v777
    %v942 = vadd.f32 %v928, %v941
    %v943 = vmax.f32 %v861, 0.0
    %v944 = vand.u32 2147483647, %v861
    %v945 = vsub.f32 0.0, %v944
    %v946 = vmul.f32 %v945, 1.442695
    %v947 = vpow.pop %v946
    %v948 = vadd.f32 %v947, 1.0
    %v949 = vlog2.pop %v948
    %v950 = vmul.f32 %v949, 0.6931472
    %v951 = vadd.f32 %v943, %v950
    %v952 = vmul.f32 %v807, %v951
    %v953 = vmax.f32 %v942, 0.0
    %v954 = vsub.f32 0.0, %v953
    %v955 = vmul.f32 %v954, 1.442695
    %v956 = vpow.pop %v955
    %v957 = vand.u32 2147483647, %v915
    %vm958 = vcmp.le.f32.partialorder %v957, 0.7853982
    %vm959 = vcmp.lt.s32.totalorder %v915, 0
    %v960 = vand.u32 %v915, 2139095040
    %v961 = vshrl.u32 %v960, 23
    %v962 = vsub.s32 %v961, 127
    %v963 = vand.u32 2147483647, %v915
    %v964 = vand.u32 %v963, 8388607
    %v965 = vor.u32 %v964, 8388608
    %v966 = vsub.s32 0, %v965
    %v967 = vadd.s32 %v962, 1
    %vm968 = vcmp.gt.s32.totalorder %v967, 0
    %v969 = vsel %vm968, %v967, 0
    %v970 = vshrl.u32 %v969, 5
    %v971 = vand.u32 %v969, 31
    %v972 = vsub.s32 32, %v971
    %v973 = vshrl.u32 683565275, %v972
    %v974 = vshll.u32 683565275, %v971
    %v975 = vshrl.u32 2475754826, %v972
    %v976 = vor.u32 %v974, %v975
    %v977 = vshll.u32 2475754826, %v971
    %v978 = vshrl.u32 2131351028, %v972
    %v979 = vor.u32 %v977, %v978
    %v980 = vshll.u32 2131351028, %v971
    %v981 = vshrl.u32 2102212464, %v972
    %v982 = vor.u32 %v980, %v981
    %v983 = vshll.u32 2102212464, %v971
    %v984 = vshrl.u32 920167782, %v972
    %v985 = vor.u32 %v983, %v984
    %v986 = vshll.u32 920167782, %v971
    %v987 = vshrl.u32 1326507024, %v972
    %v988 = vor.u32 %v986, %v987
    %vm989 = vcmp.lt.s32.totalorder %v970, 1
    %vm990 = vcmp.lt.s32.totalorder %v970, 2
    %vm991 = vcmp.lt.s32.totalorder %v970, 3
    %vm992 = vcmp.lt.s32.totalorder %v970, 4
    %v993 = vsel %vm989, %v973, %v976
    %v994 = vsel %vm992, %v982, 2102212464
    %v995 = vsel %vm991, %v979, %v994
    %v996 = vsel %vm990, %v993, %v995
    %v997 = vsel %vm989, %v976, %v979
    %v998 = vsel %vm992, %v985, 920167782
    %v999 = vsel %vm991, %v982, %v998
    %v1000 = vsel %vm990, %v997, %v999
    %v1001 = vsel %vm989, %v979, %v982
    %v1002 = vsel %vm992, %v988, 1326507024
    %v1003 = vsel %vm991, %v985, %v1002
    %v1004 = vsel %vm990, %v1001, %v1003
    %v1005 = vshll.u32 %v965, 8
    %v1006 = vand.u32 %v1005, 65535
    %v1007 = vshrl.u32 %v1005, 16
    %v1008 = vand.u32 %v1004, 65535
    %v1009 = vshrl.u32 %v1004, 16
    %v1010 = vmul.u32 %v1006, %v1008
    %v1011 = vmul.u32 %v1006, %v1009
    %v1012 = vmul.u32 %v1007, %v1008
    %v1013 = vmul.u32 %v1007, %v1009
    %v1014 = vshll.u32 %v1011, 16
    %v1015 = vshrl.u32 %v1011, 16
    %v1016 = vshll.u32 %v1012, 16
    %v1017 = vshrl.u32 %v1012, 16
    %vm1018 = vc.u32 %v1010, %v1014
    %v1019 = vsel %vm1018, 1, 0
    %v1020 = vadd.s32 %v1010, %v1014
    %v1021 = vadd.s32 %v1013, %v1019
    %vm1022 = vc.u32 %v1020, %v1016
    %v1023 = vsel %vm1022, 1, 0
    %v1024 = vadd.s32 %v1020, %v1016
    %v1025 = vadd.s32 %v1021, %v1023
    %v1026 = vadd.s32 %v1025, %v1015
    %v1027 = vadd.s32 %v1026, %v1017
    %v1028 = vand.u32 %v1005, 65535
    %v1029 = vshrl.u32 %v1005, 16
    %v1030 = vand.u32 %v1000, 65535
    %v1031 = vshrl.u32 %v1000, 16
    %v1032 = vmul.u32 %v1028, %v1030
    %v1033 = vmul.u32 %v1028, %v1031
    %v1034 = vmul.u32 %v1029, %v1030
    %v1035 = vmul.u32 %v1029, %v1031
    %v1036 = vshll.u32 %v1033, 16
    %v1037 = vshrl.u32 %v1033, 16
    %v1038 = vshll.u32 %v1034, 16
    %v1039 = vshrl.u32 %v1034, 16
    %vm1040 = vc.u32 %v1032, %v1036
    %v1041 = vsel %vm1040, 1, 0
    %v1042 = vadd.s32 %v1032, %v1036
    %v1043 = vadd.s32 %v1035, %v1041
    %vm1044 = vc.u32 %v1042, %v1038
    %v1045 = vsel %vm1044, 1, 0
    %v1046 = vadd.s32 %v1042, %v1038
    %v1047 = vadd.s32 %v1043, %v1045
    %v1048 = vadd.s32 %v1047, %v1037
    %v1049 = vadd.s32 %v1048, %v1039
    %v1050 = vmul.u32 %v1005, %v996
    %v1051 = vadd.s32 %v1027, %v1046
    %vm1052 = vc.u32 %v1027, %v1046
    %v1053 = vadd.s32 %v1049, 1
    %v1054 = vsel %vm1052, %v1053, %v1049
    %v1055 = vadd.s32 %v1050, %v1054
    %v1056 = vadd.s32 %v1055, 536870912
    %v1057 = vshrl.u32 %v1056, 30
    %v1058 = vshll.u32 %v1057, 30
    %v1059 = vsub.s32 %v1055, %v1058
    %vm1060 = vcmp.lt.s32.totalorder %v1059, 0
    %v1061 = vsub.s32 0, %v1059
    %v1062 = vsel %vm1060, %v1061, %v1059
    %v1063 = vclz %v1062
    %v1064 = vsub.s32 %v1063, 2
    %vm1065 = vcmp.gt.s32.totalorder 0, %v1064
    %v1066 = vsel %vm1065, 0, %v1064
    %v1067 = vsub.s32 32, %v1066
    %v1068 = vshll.u32 %v1059, %v1066
    %v1069 = vshrl.u32 %v1051, %v1067
    %v1070 = vor.u32 %v1068, %v1069
    %v1071 = vsub.s32 4294967266, %v1066
    %v1072 = vadd.s32 %v1071, 127
    %v1073 = vshll.u32 %v1072, 23
    %v1074 = vor.u32 4788187, %v1073
    %v1075 = vand.u32 2147483647, %v1074
    %v1077 = vcvt.s32.f32 %v1070
    %v1078 = vmul.f32 %v1077, %v1075
    %v1079 = vxor.u32 %v1078, 2147483648
    %v1080 = vsel %vm959, %v1079, %v1078
    %v1081 = vsub.s32 4, %v1057
    %v1082 = vsel %vm959, %v1081, %v1057
    %v1083 = vsel %vm958, %v915, %v1080
    %v1084 = vsel %vm958, 0, %v1082
    %v1085 = vmul.f32 %v1083, %v1083
    %v1086 = vmul.f32 %v1085, -0.001358992
    %v1087 = vadd.f32 %v1086, 0.041655596
    %v1088 = vmul.f32 %v1085, %v1087
    %v1089 = vadd.f32 %v1088, -0.4999988
    %v1090 = vmul.f32 %v1085, %v1089
    %v1091 = vadd.f32 1.0, %v1090
    %v1092 = vmul.f32 %v1083, %v1083
    %v1093 = vmul.f32 %v1092, -0.00019511016
    %v1094 = vadd.f32 %v1093, 0.008332121
    %v1095 = vmul.f32 %v1092, %v1094
    %v1096 = vadd.f32 %v1095, -0.16666654
    %v1097 = vmul.f32 %v1092, %v1096
    %v1098 = vadd.f32 %v1097, 1.0
    %v1099 = vmul.f32 %v1098, %v1083
    %vm1100 = vweird.f32 %v915
    %v1101 = vand.u32 %v1084, 3
    %vm1102 = vcmp.lt.s32.totalorder %v1101, 2
    %vm1103 = vcmp.eq.s32.totalorder %v1101, 0
    %v1104 = vxor.u32 %v1099, 2147483648
    %v1105 = vsel %vm1103, %v1091, %v1104
    %vm1106 = vcmp.eq.s32.totalorder %v1101, 2
    %v1107 = vxor.u32 %v1091, 2147483648
    %v1108 = vsel %vm1106, %v1107, %v1099
    %v1109 = vsel %vm1102, %v1105, %v1108
    %v1110 = vsel %vm1100, nan, %v1109
    %v1111 = vmul.f32 %v956, %v1110
    %v1112 = vand.u32 2147483647, %v915
    %vm1113 = vcmp.le.f32.partialorder %v1112, 0.7853982
    %vm1114 = vcmp.lt.s32.totalorder %v915, 0
    %v1115 = vand.u32 %v915, 2139095040
    %v1116 = vshrl.u32 %v1115, 23
    %v1117 = vsub.s32 %v1116, 127
    %v1118 = vand.u32 2147483647, %v915
    %v1119 = vand.u32 %v1118, 8388607
    %v1120 = vor.u32 %v1119, 8388608
    %v1121 = vsub.s32 0, %v1120
    %v1122 = vadd.s32 %v1117, 1
    %vm1123 = vcmp.gt.s32.totalorder %v1122, 0
    %v1124 = vsel %vm1123, %v1122, 0
    %v1125 = vshrl.u32 %v1124, 5
    %v1126 = vand.u32 %v1124, 31
    %v1127 = vsub.s32 32, %v1126
    %v1128 = vshrl.u32 683565275, %v1127
    %v1129 = vshll.u32 683565275, %v1126
    %v1130 = vshrl.u32 2475754826, %v1127
    %v1131 = vor.u32 %v1129, %v1130
    %v1132 = vshll.u32 2475754826, %v1126
    %v1133 = vshrl.u32 2131351028, %v1127
    %v1134 = vor.u32 %v1132, %v1133
    %v1135 = vshll.u32 2131351028, %v1126
    %v1136 = vshrl.u32 2102212464, %v1127
    %v1137 = vor.u32 %v1135, %v1136
    %v1138 = vshll.u32 2102212464, %v1126
    %v1139 = vshrl.u32 920167782, %v1127
    %v1140 = vor.u32 %v1138, %v1139
    %v1141 = vshll.u32 920167782, %v1126
    %v1142 = vshrl.u32 1326507024, %v1127
    %v1143 = vor.u32 %v1141, %v1142
    %vm1144 = vcmp.lt.s32.totalorder %v1125, 1
    %vm1145 = vcmp.lt.s32.totalorder %v1125, 2
    %vm1146 = vcmp.lt.s32.totalorder %v1125, 3
    %vm1147 = vcmp.lt.s32.totalorder %v1125, 4
    %v1148 = vsel %vm1144, %v1128, %v1131
    %v1149 = vsel %vm1147, %v1137, 2102212464
    %v1150 = vsel %vm1146, %v1134, %v1149
    %v1151 = vsel %vm1145, %v1148, %v1150
    %v1152 = vsel %vm1144, %v1131, %v1134
    %v1153 = vsel %vm1147, %v1140, 920167782
    %v1154 = vsel %vm1146, %v1137, %v1153
    %v1155 = vsel %vm1145, %v1152, %v1154
    %v1156 = vsel %vm1144, %v1134, %v1137
    %v1157 = vsel %vm1147, %v1143, 1326507024
    %v1158 = vsel %vm1146, %v1140, %v1157
    %v1159 = vsel %vm1145, %v1156, %v1158
    %v1160 = vshll.u32 %v1120, 8
    %v1161 = vand.u32 %v1160, 65535
    %v1162 = vshrl.u32 %v1160, 16
    %v1163 = vand.u32 %v1159, 65535
    %v1164 = vshrl.u32 %v1159, 16
    %v1165 = vmul.u32 %v1161, %v1163
    %v1166 = vmul.u32 %v1161, %v1164
    %v1167 = vmul.u32 %v1162, %v1163
    %v1168 = vmul.u32 %v1162, %v1164
    %v1169 = vshll.u32 %v1166, 16
    %v1170 = vshrl.u32 %v1166, 16
    %v1171 = vshll.u32 %v1167, 16
    %v1172 = vshrl.u32 %v1167, 16
    %vm1173 = vc.u32 %v1165, %v1169
    %v1174 = vsel %vm1173, 1, 0
    %v1175 = vadd.s32 %v1165, %v1169
    %v1176 = vadd.s32 %v1168, %v1174
    %vm1177 = vc.u32 %v1175, %v1171
    %v1178 = vsel %vm1177, 1, 0
    %v1179 = vadd.s32 %v1175, %v1171
    %v1180 = vadd.s32 %v1176, %v1178
    %v1181 = vadd.s32 %v1180, %v1170
    %v1182 = vadd.s32 %v1181, %v1172
    %v1183 = vand.u32 %v1160, 65535
    %v1184 = vshrl.u32 %v1160, 16
    %v1185 = vand.u32 %v1155, 65535
    %v1186 = vshrl.u32 %v1155, 16
    %v1187 = vmul.u32 %v1183, %v1185
    %v1188 = vmul.u32 %v1183, %v1186
    %v1189 = vmul.u32 %v1184, %v1185
    %v1190 = vmul.u32 %v1184, %v1186
    %v1191 = vshll.u32 %v1188, 16
    %v1192 = vshrl.u32 %v1188, 16
    %v1193 = vshll.u32 %v1189, 16
    %v1194 = vshrl.u32 %v1189, 16
    %vm1195 = vc.u32 %v1187, %v1191
    %v1196 = vsel %vm1195, 1, 0
    %v1197 = vadd.s32 %v1187, %v1191
    %v1198 = vadd.s32 %v1190, %v1196
    %vm1199 = vc.u32 %v1197, %v1193
    %v1200 = vsel %vm1199, 1, 0
    %v1201 = vadd.s32 %v1197, %v1193
    %v1202 = vadd.s32 %v1198, %v1200
    %v1203 = vadd.s32 %v1202, %v1192
    %v1204 = vadd.s32 %v1203, %v1194
    %v1205 = vmul.u32 %v1160, %v1151
    %v1206 = vadd.s32 %v1182, %v1201
    %vm1207 = vc.u32 %v1182, %v1201
    %v1208 = vadd.s32 %v1204, 1
    %v1209 = vsel %vm1207, %v1208, %v1204
    %v1210 = vadd.s32 %v1205, %v1209
    %v1211 = vadd.s32 %v1210, 536870912
    %v1212 = vshrl.u32 %v1211, 30
    %v1213 = vshll.u32 %v1212, 30
    %v1214 = vsub.s32 %v1210, %v1213
    %vm1215 = vcmp.lt.s32.totalorder %v1214, 0
    %v1216 = vsub.s32 0, %v1214
    %v1217 = vsel %vm1215, %v1216, %v1214
    %v1218 = vclz %v1217
    %v1219 = vsub.s32 %v1218, 2
    %vm1220 = vcmp.gt.s32.totalorder 0, %v1219
    %v1221 = vsel %vm1220, 0, %v1219
    %v1222 = vsub.s32 32, %v1221
    %v1223 = vshll.u32 %v1214, %v1221
    %v1224 = vshrl.u32 %v1206, %v1222
    %v1225 = vor.u32 %v1223, %v1224
    %v1226 = vsub.s32 4294967266, %v1221
    %v1227 = vadd.s32 %v1226, 127
    %v1228 = vshll.u32 %v1227, 23
    %v1229 = vor.u32 4788187, %v1228
    %v1230 = vand.u32 2147483647, %v1229
    %v1232 = vcvt.s32.f32 %v1225
    %v1233 = vmul.f32 %v1232, %v1230
    %v1234 = vxor.u32 %v1233, 2147483648
    %v1235 = vsel %vm1114, %v1234, %v1233
    %v1236 = vsub.s32 4, %v1212
    %v1237 = vsel %vm1114, %v1236, %v1212
    %v1238 = vsel %vm1113, %v915, %v1235
    %v1239 = vsel %vm1113, 0, %v1237
    %v1240 = vmul.f32 %v1238, %v1238
    %v1241 = vmul.f32 %v1240, -0.001358992
    %v1242 = vadd.f32 %v1241, 0.041655596
    %v1243 = vmul.f32 %v1240, %v1242
    %v1244 = vadd.f32 %v1243, -0.4999988
    %v1245 = vmul.f32 %v1240, %v1244
    %v1246 = vadd.f32 1.0, %v1245
    %v1247 = vmul.f32 %v1238, %v1238
    %v1248 = vmul.f32 %v1247, -0.00019511016
    %v1249 = vadd.f32 %v1248, 0.008332121
    %v1250 = vmul.f32 %v1247, %v1249
    %v1251 = vadd.f32 %v1250, -0.16666654
    %v1252 = vmul.f32 %v1247, %v1251
    %v1253 = vadd.f32 %v1252, 1.0
    %v1254 = vmul.f32 %v1253, %v1238
    %vm1255 = vweird.f32 %v915
    %v1256 = vadd.s32 %v1239, 3
    %v1257 = vand.u32 %v1256, 3
    %vm1258 = vcmp.lt.s32.totalorder %v1257, 2
    %vm1259 = vcmp.eq.s32.totalorder %v1257, 0
    %v1260 = vxor.u32 %v1254, 2147483648
    %v1261 = vsel %vm1259, %v1246, %v1260
    %vm1262 = vcmp.eq.s32.totalorder %v1257, 2
    %v1263 = vxor.u32 %v1246, 2147483648
    %v1264 = vsel %vm1262, %v1263, %v1254
    %v1265 = vsel %vm1258, %v1261, %v1264
    %v1266 = vsel %vm1255, nan, %v1265
    %v1267 = vmul.f32 %v956, %v1266
    %v1268 = vmul.f32 %v1111, %v80
    %v1269 = vmul.f32 %v1267, %v81
    %v1270 = vsub.f32 %v1268, %v1269
    %v1271 = vadd.f32 %v1270, %v888
    %v1272 = vmul.f32 %v1111, %v81
    %v1273 = vmul.f32 %v1267, %v80
    %v1274 = vadd.f32 %v1272, %v1273
    %v1275 = vadd.f32 %v953, 0.0
    %v1276 = vsub.f32 %v1275, 70.42879
    %v1277 = vmax.f32 %v1276, 0.0
    %v1278 = vadd.f32 %v1277, 0.0
    %v1279 = vand.u32 2147483647, %v834
    %vm1280 = vcmp.le.f32.partialorder %v1279, 0.7853982
    %vm1281 = vcmp.lt.s32.totalorder %v834, 0
    %v1282 = vand.u32 %v834, 2139095040
    %v1283 = vshrl.u32 %v1282, 23
    %v1284 = vsub.s32 %v1283, 127
    %v1285 = vand.u32 2147483647, %v834
    %v1286 = vand.u32 %v1285, 8388607
    %v1287 = vor.u32 %v1286, 8388608
    %v1288 = vsub.s32 0, %v1287
    %v1289 = vadd.s32 %v1284, 1
    %vm1290 = vcmp.gt.s32.totalorder %v1289, 0
    %v1291 = vsel %vm1290, %v1289, 0
    %v1292 = vshrl.u32 %v1291, 5
    %v1293 = vand.u32 %v1291, 31
    %v1294 = vsub.s32 32, %v1293
    %v1295 = vshrl.u32 683565275, %v1294
    %v1296 = vshll.u32 683565275, %v1293
    %v1297 = vshrl.u32 2475754826, %v1294
    %v1298 = vor.u32 %v1296, %v1297
    %v1299 = vshll.u32 2475754826, %v1293
    %v1300 = vshrl.u32 2131351028, %v1294
    %v1301 = vor.u32 %v1299, %v1300
    %v1302 = vshll.u32 2131351028, %v1293
    %v1303 = vshrl.u32 2102212464, %v1294
    %v1304 = vor.u32 %v1302, %v1303
    %v1305 = vshll.u32 2102212464, %v1293
    %v1306 = vshrl.u32 920167782, %v1294
    %v1307 = vor.u32 %v1305, %v1306
    %v1308 = vshll.u32 920167782, %v1293
    %v1309 = vshrl.u32 1326507024, %v1294
    %v1310 = vor.u32 %v1308, %v1309
    %vm1311 = vcmp.lt.s32.totalorder %v1292, 1
    %vm1312 = vcmp.lt.s32.totalorder %v1292, 2
    %vm1313 = vcmp.lt.s32.totalorder %v1292, 3
    %vm1314 = vcmp.lt.s32.totalorder %v1292, 4
    %v1315 = vsel %vm1311, %v1295, %v1298
    %v1316 = vsel %vm1314, %v1304, 2102212464
    %v1317 = vsel %vm1313, %v1301, %v1316
    %v1318 = vsel %vm1312, %v1315, %v1317
    %v1319 = vsel %vm1311, %v1298, %v1301
    %v1320 = vsel %vm1314, %v1307, 920167782
    %v1321 = vsel %vm1313, %v1304, %v1320
    %v1322 = vsel %vm1312, %v1319, %v1321
    %v1323 = vsel %vm1311, %v1301, %v1304
    %v1324 = vsel %vm1314, %v1310, 1326507024
    %v1325 = vsel %vm1313, %v1307, %v1324
    %v1326 = vsel %vm1312, %v1323, %v1325
    %v1327 = vshll.u32 %v1287, 8
    %v1328 = vand.u32 %v1327, 65535
    %v1329 = vshrl.u32 %v1327, 16
    %v1330 = vand.u32 %v1326, 65535
    %v1331 = vshrl.u32 %v1326, 16
    %v1332 = vmul.u32 %v1328, %v1330
    %v1333 = vmul.u32 %v1328, %v1331
    %v1334 = vmul.u32 %v1329, %v1330
    %v1335 = vmul.u32 %v1329, %v1331
    %v1336 = vshll.u32 %v1333, 16
    %v1337 = vshrl.u32 %v1333, 16
    %v1338 = vshll.u32 %v1334, 16
    %v1339 = vshrl.u32 %v1334, 16
    %vm1340 = vc.u32 %v1332, %v1336
    %v1341 = vsel %vm1340, 1, 0
    %v1342 = vadd.s32 %v1332, %v1336
    %v1343 = vadd.s32 %v1335, %v1341
    %vm1344 = vc.u32 %v1342, %v1338
    %v1345 = vsel %vm1344, 1, 0
    %v1346 = vadd.s32 %v1342, %v1338
    %v1347 = vadd.s32 %v1343, %v1345
    %v1348 = vadd.s32 %v1347, %v1337
    %v1349 = vadd.s32 %v1348, %v1339
    %v1350 = vand.u32 %v1327, 65535
    %v1351 = vshrl.u32 %v1327, 16
    %v1352 = vand.u32 %v1322, 65535
    %v1353 = vshrl.u32 %v1322, 16
    %v1354 = vmul.u32 %v1350, %v1352
    %v1355 = vmul.u32 %v1350, %v1353
    %v1356 = vmul.u32 %v1351, %v1352
    %v1357 = vmul.u32 %v1351, %v1353
    %v1358 = vshll.u32 %v1355, 16
    %v1359 = vshrl.u32 %v1355, 16
    %v1360 = vshll.u32 %v1356, 16
    %v1361 = vshrl.u32 %v1356, 16
    %vm1362 = vc.u32 %v1354, %v1358
    %v1363 = vsel %vm1362, 1, 0
    %v1364 = vadd.s32 %v1354, %v1358
    %v1365 = vadd.s32 %v1357, %v1363
    %vm1366 = vc.u32 %v1364, %v1360
    %v1367 = vsel %vm1366, 1, 0
    %v1368 = vadd.s32 %v1364, %v1360
    %v1369 = vadd.s32 %v1365, %v1367
    %v1370 = vadd.s32 %v1369, %v1359
    %v1371 = vadd.s32 %v1370, %v1361
    %v1372 = vmul.u32 %v1327, %v1318
    %v1373 = vadd.s32 %v1349, %v1368
    %vm1374 = vc.u32 %v1349, %v1368
    %v1375 = vadd.s32 %v1371, 1
    %v1376 = vsel %vm1374, %v1375, %v1371
    %v1377 = vadd.s32 %v1372, %v1376
    %v1378 = vadd.s32 %v1377, 536870912
    %v1379 = vshrl.u32 %v1378, 30
    %v1380 = vshll.u32 %v1379, 30
    %v1381 = vsub.s32 %v1377, %v1380
    %vm1382 = vcmp.lt.s32.totalorder %v1381, 0
    %v1383 = vsub.s32 0, %v1381
    %v1384 = vsel %vm1382, %v1383, %v1381
    %v1385 = vclz %v1384
    %v1386 = vsub.s32 %v1385, 2
    %vm1387 = vcmp.gt.s32.totalorder 0, %v1386
    %v1388 = vsel %vm1387, 0, %v1386
    %v1389 = vsub.s32 32, %v1388
    %v1390 = vshll.u32 %v1381, %v1388
    %v1391 = vshrl.u32 %v1373, %v1389
    %v1392 = vor.u32 %v1390, %v1391
    %v1393 = vsub.s32 4294967266, %v1388
    %v1394 = vadd.s32 %v1393, 127
    %v1395 = vshll.u32 %v1394, 23
    %v1396 = vor.u32 4788187, %v1395
    %v1397 = vand.u32 2147483647, %v1396
    %v1399 = vcvt.s32.f32 %v1392
    %v1400 = vmul.f32 %v1399, %v1397
    %v1401 = vxor.u32 %v1400, 2147483648
    %v1402 = vsel %vm1281, %v1401, %v1400
    %v1403 = vsub.s32 4, %v1379
    %v1404 = vsel %vm1281, %v1403, %v1379
    %v1405 = vsel %vm1280, %v834, %v1402
    %v1406 = vsel %vm1280, 0, %v1404
    %v1407 = vmul.f32 %v1405, %v1405
    %v1408 = vmul.f32 %v1407, -0.001358992
    %v1409 = vadd.f32 %v1408, 0.041655596
    %v1410 = vmul.f32 %v1407, %v1409
    %v1411 = vadd.f32 %v1410, -0.4999988
    %v1412 = vmul.f32 %v1407, %v1411
    %v1413 = vadd.f32 1.0, %v1412
    %v1414 = vmul.f32 %v1405, %v1405
    %v1415 = vmul.f32 %v1414, -0.00019511016
    %v1416 = vadd.f32 %v1415, 0.008332121
    %v1417 = vmul.f32 %v1414, %v1416
    %v1418 = vadd.f32 %v1417, -0.16666654
    %v1419 = vmul.f32 %v1414, %v1418
    %v1420 = vadd.f32 %v1419, 1.0
    %v1421 = vmul.f32 %v1420, %v1405
    %vm1422 = vweird.f32 %v834
    %v1423 = vand.u32 %v1406, 3
    %vm1424 = vcmp.lt.s32.totalorder %v1423, 2
    %vm1425 = vcmp.eq.s32.totalorder %v1423, 0
    %v1426 = vxor.u32 %v1421, 2147483648
    %v1427 = vsel %vm1425, %v1413, %v1426
    %vm1428 = vcmp.eq.s32.totalorder %v1423, 2
    %v1429 = vxor.u32 %v1413, 2147483648
    %v1430 = vsel %vm1428, %v1429, %v1421
    %v1431 = vsel %vm1424, %v1427, %v1430
    %v1432 = vsel %vm1422, nan, %v1431
    %v1433 = vmul.f32 %v1271, %v1432
    %v1434 = vand.u32 2147483647, %v834
    %vm1435 = vcmp.le.f32.partialorder %v1434, 0.7853982
    %vm1436 = vcmp.lt.s32.totalorder %v834, 0
    %v1437 = vand.u32 %v834, 2139095040
    %v1438 = vshrl.u32 %v1437, 23
    %v1439 = vsub.s32 %v1438, 127
    %v1440 = vand.u32 2147483647, %v834
    %v1441 = vand.u32 %v1440, 8388607
    %v1442 = vor.u32 %v1441, 8388608
    %v1443 = vsub.s32 0, %v1442
    %v1444 = vadd.s32 %v1439, 1
    %vm1445 = vcmp.gt.s32.totalorder %v1444, 0
    %v1446 = vsel %vm1445, %v1444, 0
    %v1447 = vshrl.u32 %v1446, 5
    %v1448 = vand.u32 %v1446, 31
    %v1449 = vsub.s32 32, %v1448
    %v1450 = vshrl.u32 683565275, %v1449
    %v1451 = vshll.u32 683565275, %v1448
    %v1452 = vshrl.u32 2475754826, %v1449
    %v1453 = vor.u32 %v1451, %v1452
    %v1454 = vshll.u32 2475754826, %v1448
    %v1455 = vshrl.u32 2131351028, %v1449
    %v1456 = vor.u32 %v1454, %v1455
    %v1457 = vshll.u32 2131351028, %v1448
    %v1458 = vshrl.u32 2102212464, %v1449
    %v1459 = vor.u32 %v1457, %v1458
    %v1460 = vshll.u32 2102212464, %v1448
    %v1461 = vshrl.u32 920167782, %v1449
    %v1462 = vor.u32 %v1460, %v1461
    %v1463 = vshll.u32 920167782, %v1448
    %v1464 = vshrl.u32 1326507024, %v1449
    %v1465 = vor.u32 %v1463, %v1464
    %vm1466 = vcmp.lt.s32.totalorder %v1447, 1
    %vm1467 = vcmp.lt.s32.totalorder %v1447, 2
    %vm1468 = vcmp.lt.s32.totalorder %v1447, 3
    %vm1469 = vcmp.lt.s32.totalorder %v1447, 4
    %v1470 = vsel %vm1466, %v1450, %v1453
    %v1471 = vsel %vm1469, %v1459, 2102212464
    %v1472 = vsel %vm1468, %v1456, %v1471
    %v1473 = vsel %vm1467, %v1470, %v1472
    %v1474 = vsel %vm1466, %v1453, %v1456
    %v1475 = vsel %vm1469, %v1462, 920167782
    %v1476 = vsel %vm1468, %v1459, %v1475
    %v1477 = vsel %vm1467, %v1474, %v1476
    %v1478 = vsel %vm1466, %v1456, %v1459
    %v1479 = vsel %vm1469, %v1465, 1326507024
    %v1480 = vsel %vm1468, %v1462, %v1479
    %v1481 = vsel %vm1467, %v1478, %v1480
    %v1482 = vshll.u32 %v1442, 8
    %v1483 = vand.u32 %v1482, 65535
    %v1484 = vshrl.u32 %v1482, 16
    %v1485 = vand.u32 %v1481, 65535
    %v1486 = vshrl.u32 %v1481, 16
    %v1487 = vmul.u32 %v1483, %v1485
    %v1488 = vmul.u32 %v1483, %v1486
    %v1489 = vmul.u32 %v1484, %v1485
    %v1490 = vmul.u32 %v1484, %v1486
    %v1491 = vshll.u32 %v1488, 16
    %v1492 = vshrl.u32 %v1488, 16
    %v1493 = vshll.u32 %v1489, 16
    %v1494 = vshrl.u32 %v1489, 16
    %vm1495 = vc.u32 %v1487, %v1491
    %v1496 = vsel %vm1495, 1, 0
    %v1497 = vadd.s32 %v1487, %v1491
    %v1498 = vadd.s32 %v1490, %v1496
    %vm1499 = vc.u32 %v1497, %v1493
    %v1500 = vsel %vm1499, 1, 0
    %v1501 = vadd.s32 %v1497, %v1493
    %v1502 = vadd.s32 %v1498, %v1500
    %v1503 = vadd.s32 %v1502, %v1492
    %v1504 = vadd.s32 %v1503, %v1494
    %v1505 = vand.u32 %v1482, 65535
    %v1506 = vshrl.u32 %v1482, 16
    %v1507 = vand.u32 %v1477, 65535
    %v1508 = vshrl.u32 %v1477, 16
    %v1509 = vmul.u32 %v1505, %v1507
    %v1510 = vmul.u32 %v1505, %v1508
    %v1511 = vmul.u32 %v1506, %v1507
    %v1512 = vmul.u32 %v1506, %v1508
    %v1513 = vshll.u32 %v1510, 16
    %v1514 = vshrl.u32 %v1510, 16
    %v1515 = vshll.u32 %v1511, 16
    %v1516 = vshrl.u32 %v1511, 16
    %vm1517 = vc.u32 %v1509, %v1513
    %v1518 = vsel %vm1517, 1, 0
    %v1519 = vadd.s32 %v1509, %v1513
    %v1520 = vadd.s32 %v1512, %v1518
    %vm1521 = vc.u32 %v1519, %v1515
    %v1522 = vsel %vm1521, 1, 0
    %v1523 = vadd.s32 %v1519, %v1515
    %v1524 = vadd.s32 %v1520, %v1522
    %v1525 = vadd.s32 %v1524, %v1514
    %v1526 = vadd.s32 %v1525, %v1516
    %v1527 = vmul.u32 %v1482, %v1473
    %v1528 = vadd.s32 %v1504, %v1523
    %vm1529 = vc.u32 %v1504, %v1523
    %v1530 = vadd.s32 %v1526, 1
    %v1531 = vsel %vm1529, %v1530, %v1526
    %v1532 = vadd.s32 %v1527, %v1531
    %v1533 = vadd.s32 %v1532, 536870912
    %v1534 = vshrl.u32 %v1533, 30
    %v1535 = vshll.u32 %v1534, 30
    %v1536 = vsub.s32 %v1532, %v1535
    %vm1537 = vcmp.lt.s32.totalorder %v1536, 0
    %v1538 = vsub.s32 0, %v1536
    %v1539 = vsel %vm1537, %v1538, %v1536
    %v1540 = vclz %v1539
    %v1541 = vsub.s32 %v1540, 2
    %vm1542 = vcmp.gt.s32.totalorder 0, %v1541
    %v1543 = vsel %vm1542, 0, %v1541
    %v1544 = vsub.s32 32, %v1543
    %v1545 = vshll.u32 %v1536, %v1543
    %v1546 = vshrl.u32 %v1528, %v1544
    %v1547 = vor.u32 %v1545, %v1546
    %v1548 = vsub.s32 4294967266, %v1543
    %v1549 = vadd.s32 %v1548, 127
    %v1550 = vshll.u32 %v1549, 23
    %v1551 = vor.u32 4788187, %v1550
    %v1552 = vand.u32 2147483647, %v1551
    %v1554 = vcvt.s32.f32 %v1547
    %v1555 = vmul.f32 %v1554, %v1552
    %v1556 = vxor.u32 %v1555, 2147483648
    %v1557 = vsel %vm1436, %v1556, %v1555
    %v1558 = vsub.s32 4, %v1534
    %v1559 = vsel %vm1436, %v1558, %v1534
    %v1560 = vsel %vm1435, %v834, %v1557
    %v1561 = vsel %vm1435, 0, %v1559
    %v1562 = vmul.f32 %v1560, %v1560
    %v1563 = vmul.f32 %v1562, -0.001358992
    %v1564 = vadd.f32 %v1563, 0.041655596
    %v1565 = vmul.f32 %v1562, %v1564
    %v1566 = vadd.f32 %v1565, -0.4999988
    %v1567 = vmul.f32 %v1562, %v1566
    %v1568 = vadd.f32 1.0, %v1567
    %v1569 = vmul.f32 %v1560, %v1560
    %v1570 = vmul.f32 %v1569, -0.00019511016
    %v1571 = vadd.f32 %v1570, 0.008332121
    %v1572 = vmul.f32 %v1569, %v1571
    %v1573 = vadd.f32 %v1572, -0.16666654
    %v1574 = vmul.f32 %v1569, %v1573
    %v1575 = vadd.f32 %v1574, 1.0
    %v1576 = vmul.f32 %v1575, %v1560
    %vm1577 = vweird.f32 %v834
    %v1578 = vadd.s32 %v1561, 3
    %v1579 = vand.u32 %v1578, 3
    %vm1580 = vcmp.lt.s32.totalorder %v1579, 2
    %vm1581 = vcmp.eq.s32.totalorder %v1579, 0
    %v1582 = vxor.u32 %v1576, 2147483648
    %v1583 = vsel %vm1581, %v1568, %v1582
    %vm1584 = vcmp.eq.s32.totalorder %v1579, 2
    %v1585 = vxor.u32 %v1568, 2147483648
    %v1586 = vsel %vm1584, %v1585, %v1576
    %v1587 = vsel %vm1580, %v1583, %v1586
    %v1588 = vsel %vm1577, nan, %v1587
    %v1589 = vmul.f32 %v1274, %v1588
    %v1590 = vsub.f32 %v1433, %v1589
    %v1591 = vmul.f32 %v1590, %v952
    %s1592 = scalar_lea.vmem %s0, 4
    %v1593 = vld [vmem:[%s1592] sm:$0xf]
    %v1594 = vpack.c.bf16 %v1593, %v1593
    %v1596 = vsel %vm104, %v1594, 0
    %1598 = vmatpush.bf16.msra.mxu0 0
    %1599 = vmatpush.bf16.msra.mxu0 0
    %1600 = vmatpush.bf16.msra.mxu0 0
    %1601 = vmatpush.bf16.msra.mxu0 0
    %1602 = vmatpush.bf16.msra.mxu0 0
    %1603 = vmatpush.bf16.msra.mxu0 0
    %1604 = vmatpush.bf16.msra.mxu0 %v101
    %1605 = vmatpush.bf16.msra.mxu0 %v100
    %1606 = vmatmul.bf16.gmra.mxu0 %v1596
    %v1607 = vpop.f32.mrf.mxu0
    %v1608 = vadd.f32 %v90, %v1607
    %v1609 = vpop.f32.mrf.mxu0
    %1610 = vdwg.mxu0
    %v1611 = vmax.f32 %v1608, 0.0
    %v1612 = vpack.c.bf16 %v1611, %v1611
    %v1614 = vsel %vm104, %v1612, 0
    %1616 = vmatpush.bf16.msra.mxu0 0
    %1617 = vmatpush.bf16.msra.mxu0 0
    %1618 = vmatpush.bf16.msra.mxu0 0
    %1619 = vmatpush.bf16.msra.mxu0 0
    %1620 = vmatpush.bf16.msra.mxu0 0
    %1621 = vmatpush.bf16.msra.mxu0 0
    %1622 = vmatpush.bf16.msra.mxu0 %v393
    %1623 = vmatpush.bf16.msra.mxu0 %v369
    %1624 = vmatmul.bf16.gmra.mxu0 %v1614
    %v1625 = vpop.f32.mrf.mxu0
    %v1626 = vadd.f32 %v177, %v1625
    %v1627 = vpop.f32.mrf.mxu0
    %1628 = vdwg.mxu0
    %1629 = vmatpush.bf16.msra.mxu0 0
    %1630 = vmatpush.bf16.msra.mxu0 0
    %1631 = vmatpush.bf16.msra.mxu0 0
    %1632 = vmatpush.bf16.msra.mxu0 0
    %1633 = vmatpush.bf16.msra.mxu0 0
    %1634 = vmatpush.bf16.msra.mxu0 0
    %1635 = vmatpush.bf16.msra.mxu0 %v394
    %1636 = vmatpush.bf16.msra.mxu0 %v370
    %1637 = vmatmul.bf16.gmra.mxu0 %v1614
    %v1638 = vpop.f32.mrf.mxu0
    %v1639 = vadd.f32 %v178, %v1638
    %v1640 = vpop.f32.mrf.mxu0
    %1641 = vdwg.mxu0
    %1642 = vmatpush.bf16.msra.mxu0 0
    %1643 = vmatpush.bf16.msra.mxu0 0
    %1644 = vmatpush.bf16.msra.mxu0 0
    %1645 = vmatpush.bf16.msra.mxu0 0
    %1646 = vmatpush.bf16.msra.mxu0 0
    %1647 = vmatpush.bf16.msra.mxu0 0
    %1648 = vmatpush.bf16.msra.mxu0 %v395
    %1649 = vmatpush.bf16.msra.mxu0 %v371
    %1650 = vmatmul.bf16.gmra.mxu0 %v1614
    %v1651 = vpop.f32.mrf.mxu0
    %v1652 = vadd.f32 %v179, %v1651
    %v1653 = vpop.f32.mrf.mxu0
    %1654 = vdwg.mxu0
    %1655 = vmatpush.bf16.msra.mxu0 0
    %1656 = vmatpush.bf16.msra.mxu0 0
    %1657 = vmatpush.bf16.msra.mxu0 0
    %1658 = vmatpush.bf16.msra.mxu0 0
    %1659 = vmatpush.bf16.msra.mxu0 0
    %1660 = vmatpush.bf16.msra.mxu0 0
    %1661 = vmatpush.bf16.msra.mxu0 %v396
    %1662 = vmatpush.bf16.msra.mxu0 %v372
    %1663 = vmatmul.bf16.gmra.mxu0 %v1614
    %v1664 = vpop.f32.mrf.mxu0
    %v1665 = vadd.f32 %v180, %v1664
    %v1666 = vpop.f32.mrf.mxu0
    %1667 = vdwg.mxu0
    %1668 = vmatpush.bf16.msra.mxu0 0
    %1669 = vmatpush.bf16.msra.mxu0 0
    %1670 = vmatpush.bf16.msra.mxu0 0
    %1671 = vmatpush.bf16.msra.mxu0 0
    %1672 = vmatpush.bf16.msra.mxu0 0
    %1673 = vmatpush.bf16.msra.mxu0 0
    %1674 = vmatpush.bf16.msra.mxu0 %v397
    %1675 = vmatpush.bf16.msra.mxu0 %v373
    %1676 = vmatmul.bf16.gmra.mxu0 %v1614
    %v1677 = vpop.f32.mrf.mxu0
    %v1678 = vadd.f32 %v181, %v1677
    %v1679 = vpop.f32.mrf.mxu0
    %1680 = vdwg.mxu0
    %1681 = vmatpush.bf16.msra.mxu0 0
    %1682 = vmatpush.bf16.msra.mxu0 0
    %1683 = vmatpush.bf16.msra.mxu0 0
    %1684 = vmatpush.bf16.msra.mxu0 0
    %1685 = vmatpush.bf16.msra.mxu0 0
    %1686 = vmatpush.bf16.msra.mxu0 0
    %1687 = vmatpush.bf16.msra.mxu0 %v398
    %1688 = vmatpush.bf16.msra.mxu0 %v374
    %1689 = vmatmul.bf16.gmra.mxu0 %v1614
    %v1690 = vpop.f32.mrf.mxu0
    %v1691 = vadd.f32 %v182, %v1690
    %v1692 = vpop.f32.mrf.mxu0
    %1693 = vdwg.mxu0
    %1694 = vmatpush.bf16.msra.mxu0 0
    %1695 = vmatpush.bf16.msra.mxu0 0
    %1696 = vmatpush.bf16.msra.mxu0 0
    %1697 = vmatpush.bf16.msra.mxu0 0
    %1698 = vmatpush.bf16.msra.mxu0 0
    %1699 = vmatpush.bf16.msra.mxu0 0
    %1700 = vmatpush.bf16.msra.mxu0 %v399
    %1701 = vmatpush.bf16.msra.mxu0 %v375
    %1702 = vmatmul.bf16.gmra.mxu0 %v1614
    %v1703 = vpop.f32.mrf.mxu0
    %v1704 = vadd.f32 %v183, %v1703
    %v1705 = vpop.f32.mrf.mxu0
    %1706 = vdwg.mxu0
    %1707 = vmatpush.bf16.msra.mxu0 0
    %1708 = vmatpush.bf16.msra.mxu0 0
    %1709 = vmatpush.bf16.msra.mxu0 0
    %1710 = vmatpush.bf16.msra.mxu0 0
    %1711 = vmatpush.bf16.msra.mxu0 0
    %1712 = vmatpush.bf16.msra.mxu0 0
    %1713 = vmatpush.bf16.msra.mxu0 %v400
    %1714 = vmatpush.bf16.msra.mxu0 %v376
    %1715 = vmatmul.bf16.gmra.mxu0 %v1614
    %v1716 = vpop.f32.mrf.mxu0
    %v1717 = vadd.f32 %v184, %v1716
    %v1718 = vpop.f32.mrf.mxu0
    %1719 = vdwg.mxu0
    %1720 = vmatpush.bf16.msra.mxu0 0
    %1721 = vmatpush.bf16.msra.mxu0 0
    %1722 = vmatpush.bf16.msra.mxu0 0
    %1723 = vmatpush.bf16.msra.mxu0 0
    %1724 = vmatpush.bf16.msra.mxu0 0
    %1725 = vmatpush.bf16.msra.mxu0 0
    %1726 = vmatpush.bf16.msra.mxu0 %v401
    %1727 = vmatpush.bf16.msra.mxu0 %v377
    %1728 = vmatmul.bf16.gmra.mxu0 %v1614
    %v1729 = vpop.f32.mrf.mxu0
    %v1730 = vadd.f32 %v185, %v1729
    %v1731 = vpop.f32.mrf.mxu0
    %1732 = vdwg.mxu0
    %1733 = vmatpush.bf16.msra.mxu0 0
    %1734 = vmatpush.bf16.msra.mxu0 0
    %1735 = vmatpush.bf16.msra.mxu0 0
    %1736 = vmatpush.bf16.msra.mxu0 0
    %1737 = vmatpush.bf16.msra.mxu0 0
    %1738 = vmatpush.bf16.msra.mxu0 0
    %1739 = vmatpush.bf16.msra.mxu0 %v402
    %1740 = vmatpush.bf16.msra.mxu0 %v378
    %1741 = vmatmul.bf16.gmra.mxu0 %v1614
    %v1742 = vpop.f32.mrf.mxu0
    %v1743 = vadd.f32 %v186, %v1742
    %v1744 = vpop.f32.mrf.mxu0
    %1745 = vdwg.mxu0
    %1746 = vmatpush.bf16.msra.mxu0 0
    %1747 = vmatpush.bf16.msra.mxu0 0
    %1748 = vmatpush.bf16.msra.mxu0 0
    %1749 = vmatpush.bf16.msra.mxu0 0
    %1750 = vmatpush.bf16.msra.mxu0 0
    %1751 = vmatpush.bf16.msra.mxu0 0
    %1752 = vmatpush.bf16.msra.mxu0 %v403
    %1753 = vmatpush.bf16.msra.mxu0 %v379
    %1754 = vmatmul.bf16.gmra.mxu0 %v1614
    %v1755 = vpop.f32.mrf.mxu0
    %v1756 = vadd.f32 %v187, %v1755
    %v1757 = vpop.f32.mrf.mxu0
    %1758 = vdwg.mxu0
    %1759 = vmatpush.bf16.msra.mxu0 0
    %1760 = vmatpush.bf16.msra.mxu0 0
    %1761 = vmatpush.bf16.msra.mxu0 0
    %1762 = vmatpush.bf16.msra.mxu0 0
    %1763 = vmatpush.bf16.msra.mxu0 0
    %1764 = vmatpush.bf16.msra.mxu0 0
    %1765 = vmatpush.bf16.msra.mxu0 %v404
    %1766 = vmatpush.bf16.msra.mxu0 %v380
    %1767 = vmatmul.bf16.gmra.mxu0 %v1614
    %v1768 = vpop.f32.mrf.mxu0
    %v1769 = vadd.f32 %v188, %v1768
    %v1770 = vpop.f32.mrf.mxu0
    %1771 = vdwg.mxu0
    %1772 = vmatpush.bf16.msra.mxu0 0
    %1773 = vmatpush.bf16.msra.mxu0 0
    %1774 = vmatpush.bf16.msra.mxu0 0
    %1775 = vmatpush.bf16.msra.mxu0 0
    %1776 = vmatpush.bf16.msra.mxu0 0
    %1777 = vmatpush.bf16.msra.mxu0 0
    %1778 = vmatpush.bf16.msra.mxu0 %v405
    %1779 = vmatpush.bf16.msra.mxu0 %v381
    %1780 = vmatmul.bf16.gmra.mxu0 %v1614
    %v1781 = vpop.f32.mrf.mxu0
    %v1782 = vadd.f32 %v189, %v1781
    %v1783 = vpop.f32.mrf.mxu0
    %1784 = vdwg.mxu0
    %1785 = vmatpush.bf16.msra.mxu0 0
    %1786 = vmatpush.bf16.msra.mxu0 0
    %1787 = vmatpush.bf16.msra.mxu0 0
    %1788 = vmatpush.bf16.msra.mxu0 0
    %1789 = vmatpush.bf16.msra.mxu0 0
    %1790 = vmatpush.bf16.msra.mxu0 0
    %1791 = vmatpush.bf16.msra.mxu0 %v406
    %1792 = vmatpush.bf16.msra.mxu0 %v382
    %1793 = vmatmul.bf16.gmra.mxu0 %v1614
    %v1794 = vpop.f32.mrf.mxu0
    %v1795 = vadd.f32 %v190, %v1794
    %v1796 = vpop.f32.mrf.mxu0
    %1797 = vdwg.mxu0
    %1798 = vmatpush.bf16.msra.mxu0 0
    %1799 = vmatpush.bf16.msra.mxu0 0
    %1800 = vmatpush.bf16.msra.mxu0 0
    %1801 = vmatpush.bf16.msra.mxu0 0
    %1802 = vmatpush.bf16.msra.mxu0 0
    %1803 = vmatpush.bf16.msra.mxu0 0
    %1804 = vmatpush.bf16.msra.mxu0 %v407
    %1805 = vmatpush.bf16.msra.mxu0 %v383
    %1806 = vmatmul.bf16.gmra.mxu0 %v1614
    %v1807 = vpop.f32.mrf.mxu0
    %v1808 = vadd.f32 %v191, %v1807
    %v1809 = vpop.f32.mrf.mxu0
    %1810 = vdwg.mxu0
    %1811 = vmatpush.bf16.msra.mxu0 0
    %1812 = vmatpush.bf16.msra.mxu0 0
    %1813 = vmatpush.bf16.msra.mxu0 0
    %1814 = vmatpush.bf16.msra.mxu0 0
    %1815 = vmatpush.bf16.msra.mxu0 0
    %1816 = vmatpush.bf16.msra.mxu0 0
    %1817 = vmatpush.bf16.msra.mxu0 %v408
    %1818 = vmatpush.bf16.msra.mxu0 %v384
    %1819 = vmatmul.bf16.gmra.mxu0 %v1614
    %v1820 = vpop.f32.mrf.mxu0
    %v1821 = vadd.f32 %v192, %v1820
    %v1822 = vpop.f32.mrf.mxu0
    %1823 = vdwg.mxu0
    %1824 = vmatpush.bf16.msra.mxu0 0
    %1825 = vmatpush.bf16.msra.mxu0 0
    %1826 = vmatpush.bf16.msra.mxu0 0
    %1827 = vmatpush.bf16.msra.mxu0 0
    %1828 = vmatpush.bf16.msra.mxu0 0
    %1829 = vmatpush.bf16.msra.mxu0 0
    %1830 = vmatpush.bf16.msra.mxu0 %v409
    %1831 = vmatpush.bf16.msra.mxu0 %v385
    %1832 = vmatmul.bf16.gmra.mxu0 %v1614
    %v1833 = vpop.f32.mrf.mxu0
    %v1834 = vadd.f32 %v193, %v1833
    %v1835 = vpop.f32.mrf.mxu0
    %1836 = vdwg.mxu0
    %1837 = vmatpush.bf16.msra.mxu0 0
    %1838 = vmatpush.bf16.msra.mxu0 0
    %1839 = vmatpush.bf16.msra.mxu0 0
    %1840 = vmatpush.bf16.msra.mxu0 0
    %1841 = vmatpush.bf16.msra.mxu0 0
    %1842 = vmatpush.bf16.msra.mxu0 0
    %1843 = vmatpush.bf16.msra.mxu0 %v410
    %1844 = vmatpush.bf16.msra.mxu0 %v386
    %1845 = vmatmul.bf16.gmra.mxu0 %v1614
    %v1846 = vpop.f32.mrf.mxu0
    %v1847 = vadd.f32 %v194, %v1846
    %v1848 = vpop.f32.mrf.mxu0
    %1849 = vdwg.mxu0
    %1850 = vmatpush.bf16.msra.mxu0 0
    %1851 = vmatpush.bf16.msra.mxu0 0
    %1852 = vmatpush.bf16.msra.mxu0 0
    %1853 = vmatpush.bf16.msra.mxu0 0
    %1854 = vmatpush.bf16.msra.mxu0 0
    %1855 = vmatpush.bf16.msra.mxu0 0
    %1856 = vmatpush.bf16.msra.mxu0 %v411
    %1857 = vmatpush.bf16.msra.mxu0 %v387
    %1858 = vmatmul.bf16.gmra.mxu0 %v1614
    %v1859 = vpop.f32.mrf.mxu0
    %v1860 = vadd.f32 %v195, %v1859
    %v1861 = vpop.f32.mrf.mxu0
    %1862 = vdwg.mxu0
    %1863 = vmatpush.bf16.msra.mxu0 0
    %1864 = vmatpush.bf16.msra.mxu0 0
    %1865 = vmatpush.bf16.msra.mxu0 0
    %1866 = vmatpush.bf16.msra.mxu0 0
    %1867 = vmatpush.bf16.msra.mxu0 0
    %1868 = vmatpush.bf16.msra.mxu0 0
    %1869 = vmatpush.bf16.msra.mxu0 %v412
    %1870 = vmatpush.bf16.msra.mxu0 %v388
    %1871 = vmatmul.bf16.gmra.mxu0 %v1614
    %v1872 = vpop.f32.mrf.mxu0
    %v1873 = vadd.f32 %v196, %v1872
    %v1874 = vpop.f32.mrf.mxu0
    %1875 = vdwg.mxu0
    %1876 = vmatpush.bf16.msra.mxu0 0
    %1877 = vmatpush.bf16.msra.mxu0 0
    %1878 = vmatpush.bf16.msra.mxu0 0
    %1879 = vmatpush.bf16.msra.mxu0 0
    %1880 = vmatpush.bf16.msra.mxu0 0
    %1881 = vmatpush.bf16.msra.mxu0 0
    %1882 = vmatpush.bf16.msra.mxu0 %v413
    %1883 = vmatpush.bf16.msra.mxu0 %v389
    %1884 = vmatmul.bf16.gmra.mxu0 %v1614
    %v1885 = vpop.f32.mrf.mxu0
    %v1886 = vadd.f32 %v197, %v1885
    %v1887 = vpop.f32.mrf.mxu0
    %1888 = vdwg.mxu0
    %1889 = vmatpush.bf16.msra.mxu0 0
    %1890 = vmatpush.bf16.msra.mxu0 0
    %1891 = vmatpush.bf16.msra.mxu0 0
    %1892 = vmatpush.bf16.msra.mxu0 0
    %1893 = vmatpush.bf16.msra.mxu0 0
    %1894 = vmatpush.bf16.msra.mxu0 0
    %1895 = vmatpush.bf16.msra.mxu0 %v414
    %1896 = vmatpush.bf16.msra.mxu0 %v390
    %1897 = vmatmul.bf16.gmra.mxu0 %v1614
    %v1898 = vpop.f32.mrf.mxu0
    %v1899 = vadd.f32 %v198, %v1898
    %v1900 = vpop.f32.mrf.mxu0
    %1901 = vdwg.mxu0
    %1902 = vmatpush.bf16.msra.mxu0 0
    %1903 = vmatpush.bf16.msra.mxu0 0
    %1904 = vmatpush.bf16.msra.mxu0 0
    %1905 = vmatpush.bf16.msra.mxu0 0
    %1906 = vmatpush.bf16.msra.mxu0 0
    %1907 = vmatpush.bf16.msra.mxu0 0
    %1908 = vmatpush.bf16.msra.mxu0 %v415
    %1909 = vmatpush.bf16.msra.mxu0 %v391
    %1910 = vmatmul.bf16.gmra.mxu0 %v1614
    %v1911 = vpop.f32.mrf.mxu0
    %v1912 = vadd.f32 %v199, %v1911
    %v1913 = vpop.f32.mrf.mxu0
    %1914 = vdwg.mxu0
    %1915 = vmatpush.bf16.msra.mxu0 0
    %1916 = vmatpush.bf16.msra.mxu0 0
    %1917 = vmatpush.bf16.msra.mxu0 0
    %1918 = vmatpush.bf16.msra.mxu0 0
    %1919 = vmatpush.bf16.msra.mxu0 0
    %1920 = vmatpush.bf16.msra.mxu0 0
    %1921 = vmatpush.bf16.msra.mxu0 %v416
    %1922 = vmatpush.bf16.msra.mxu0 %v392
    %1923 = vmatmul.bf16.gmra.mxu0 %v1614
    %v1924 = vpop.f32.mrf.mxu0
    %v1925 = vadd.f32 %v200, %v1924
    %v1926 = vpop.f32.mrf.mxu0
    %1927 = vdwg.mxu0
    %v1928 = vsel %vm780, %v1626, -inf
    %1929 = vmax.xlane.f32.xlu0 %v1928
    %v1930 = vpop.xlane.xlu0 %1929
    %v1931 = vsub.f32 %v1626, %v1930
    %v1932 = vmul.f32 %v1931, 1.442695
    %v1933 = vpow.pop %v1932
    %v1934 = vsel %vm780, %v1933, 0.0
    %1935 = vadd.xlane.f32.xlu0 %v1934
    %v1936 = vpop.xlane.xlu0 %1935
    %v1937 = vmul.f32 %v1936, 0.0625
    %v1938 = vrcp.pop %v1937
    %v1939 = vmul.f32 %v1933, %v1938
    %v1940 = vmul.f32 %v1939, %v1782
    %v1941 = vsel %vm780, %v1639, -inf
    %1942 = vmax.xlane.f32.xlu0 %v1941
    %v1943 = vpop.xlane.xlu0 %1942
    %v1944 = vsub.f32 %v1639, %v1943
    %v1945 = vmul.f32 %v1944, 1.442695
    %v1946 = vpow.pop %v1945
    %v1947 = vsel %vm780, %v1946, 0.0
    %1948 = vadd.xlane.f32.xlu0 %v1947
    %v1949 = vpop.xlane.xlu0 %1948
    %v1950 = vmul.f32 %v1949, 0.0625
    %v1951 = vrcp.pop %v1950
    %v1952 = vmul.f32 %v1946, %v1951
    %v1953 = vmul.f32 %v1952, %v1795
    %v1954 = vadd.f32 %v1940, %v1953
    %v1955 = vsel %vm780, %v1652, -inf
    %1956 = vmax.xlane.f32.xlu0 %v1955
    %v1957 = vpop.xlane.xlu0 %1956
    %v1958 = vsub.f32 %v1652, %v1957
    %v1959 = vmul.f32 %v1958, 1.442695
    %v1960 = vpow.pop %v1959
    %v1961 = vsel %vm780, %v1960, 0.0
    %1962 = vadd.xlane.f32.xlu0 %v1961
    %v1963 = vpop.xlane.xlu0 %1962
    %v1964 = vmul.f32 %v1963, 0.0625
    %v1965 = vrcp.pop %v1964
    %v1966 = vmul.f32 %v1960, %v1965
    %v1967 = vmul.f32 %v1966, %v1808
    %v1968 = vsel %vm780, %v1665, -inf
    %1969 = vmax.xlane.f32.xlu0 %v1968
    %v1970 = vpop.xlane.xlu0 %1969
    %v1971 = vsub.f32 %v1665, %v1970
    %v1972 = vmul.f32 %v1971, 1.442695
    %v1973 = vpow.pop %v1972
    %v1974 = vsel %vm780, %v1973, 0.0
    %1975 = vadd.xlane.f32.xlu0 %v1974
    %v1976 = vpop.xlane.xlu0 %1975
    %v1977 = vmul.f32 %v1976, 0.0625
    %v1978 = vrcp.pop %v1977
    %v1979 = vmul.f32 %v1973, %v1978
    %v1980 = vmul.f32 %v1979, %v1821
    %v1981 = vadd.f32 %v1967, %v1980
    %v1982 = vsel %vm780, %v1678, -inf
    %1983 = vmax.xlane.f32.xlu0 %v1982
    %v1984 = vpop.xlane.xlu0 %1983
    %v1985 = vsub.f32 %v1678, %v1984
    %v1986 = vmul.f32 %v1985, 1.442695
    %v1987 = vpow.pop %v1986
    %v1988 = vsel %vm780, %v1987, 0.0
    %1989 = vadd.xlane.f32.xlu0 %v1988
    %v1990 = vpop.xlane.xlu0 %1989
    %v1991 = vmul.f32 %v1990, 0.0625
    %v1992 = vrcp.pop %v1991
    %v1993 = vmul.f32 %v1987, %v1992
    %v1994 = vmul.f32 %v1993, %v1834
    %v1995 = vsel %vm780, %v1691, -inf
    %1996 = vmax.xlane.f32.xlu0 %v1995
    %v1997 = vpop.xlane.xlu0 %1996
    %v1998 = vsub.f32 %v1691, %v1997
    %v1999 = vmul.f32 %v1998, 1.442695
    %v2000 = vpow.pop %v1999
    %v2001 = vsel %vm780, %v2000, 0.0
    %2002 = vadd.xlane.f32.xlu0 %v2001
    %v2003 = vpop.xlane.xlu0 %2002
    %v2004 = vmul.f32 %v2003, 0.0625
    %v2005 = vrcp.pop %v2004
    %v2006 = vmul.f32 %v2000, %v2005
    %v2007 = vmul.f32 %v2006, %v1847
    %v2008 = vadd.f32 %v1994, %v2007
    %v2009 = vsel %vm780, %v1704, -inf
    %2010 = vmax.xlane.f32.xlu0 %v2009
    %v2011 = vpop.xlane.xlu0 %2010
    %v2012 = vsub.f32 %v1704, %v2011
    %v2013 = vmul.f32 %v2012, 1.442695
    %v2014 = vpow.pop %v2013
    %v2015 = vsel %vm780, %v2014, 0.0
    %2016 = vadd.xlane.f32.xlu0 %v2015
    %v2017 = vpop.xlane.xlu0 %2016
    %v2018 = vmul.f32 %v2017, 0.0625
    %v2019 = vrcp.pop %v2018
    %v2020 = vmul.f32 %v2014, %v2019
    %v2021 = vmul.f32 %v2020, %v1860
    %v2022 = vsel %vm780, %v1717, -inf
    %2023 = vmax.xlane.f32.xlu0 %v2022
    %v2024 = vpop.xlane.xlu0 %2023
    %v2025 = vsub.f32 %v1717, %v2024
    %v2026 = vmul.f32 %v2025, 1.442695
    %v2027 = vpow.pop %v2026
    %v2028 = vsel %vm780, %v2027, 0.0
    %2029 = vadd.xlane.f32.xlu0 %v2028
    %v2030 = vpop.xlane.xlu0 %2029
    %v2031 = vmul.f32 %v2030, 0.0625
    %v2032 = vrcp.pop %v2031
    %v2033 = vmul.f32 %v2027, %v2032
    %v2034 = vmul.f32 %v2033, %v1873
    %v2035 = vadd.f32 %v2021, %v2034
    %v2036 = vsel %vm780, %v1730, -inf
    %2037 = vmax.xlane.f32.xlu0 %v2036
    %v2038 = vpop.xlane.xlu0 %2037
    %v2039 = vsub.f32 %v1730, %v2038
    %v2040 = vmul.f32 %v2039, 1.442695
    %v2041 = vpow.pop %v2040
    %v2042 = vsel %vm780, %v2041, 0.0
    %2043 = vadd.xlane.f32.xlu0 %v2042
    %v2044 = vpop.xlane.xlu0 %2043
    %v2045 = vmul.f32 %v2044, 0.0625
    %v2046 = vrcp.pop %v2045
    %v2047 = vmul.f32 %v2041, %v2046
    %v2048 = vmul.f32 %v2047, %v1886
    %v2049 = vsel %vm780, %v1743, -inf
    %2050 = vmax.xlane.f32.xlu0 %v2049
    %v2051 = vpop.xlane.xlu0 %2050
    %v2052 = vsub.f32 %v1743, %v2051
    %v2053 = vmul.f32 %v2052, 1.442695
    %v2054 = vpow.pop %v2053
    %v2055 = vsel %vm780, %v2054, 0.0
    %2056 = vadd.xlane.f32.xlu0 %v2055
    %v2057 = vpop.xlane.xlu0 %2056
    %v2058 = vmul.f32 %v2057, 0.0625
    %v2059 = vrcp.pop %v2058
    %v2060 = vmul.f32 %v2054, %v2059
    %v2061 = vmul.f32 %v2060, %v1899
    %v2062 = vadd.f32 %v2048, %v2061
    %v2063 = vsel %vm780, %v1756, -inf
    %2064 = vmax.xlane.f32.xlu0 %v2063
    %v2065 = vpop.xlane.xlu0 %2064
    %v2066 = vsub.f32 %v1756, %v2065
    %v2067 = vmul.f32 %v2066, 1.442695
    %v2068 = vpow.pop %v2067
    %v2069 = vsel %vm780, %v2068, 0.0
    %2070 = vadd.xlane.f32.xlu0 %v2069
    %v2071 = vpop.xlane.xlu0 %2070
    %v2072 = vmul.f32 %v2071, 0.0625
    %v2073 = vrcp.pop %v2072
    %v2074 = vmul.f32 %v2068, %v2073
    %v2075 = vmul.f32 %v2074, %v1912
    %v2076 = vsel %vm780, %v1769, -inf
    %2077 = vmax.xlane.f32.xlu0 %v2076
    %v2078 = vpop.xlane.xlu0 %2077
    %v2079 = vsub.f32 %v1769, %v2078
    %v2080 = vmul.f32 %v2079, 1.442695
    %v2081 = vpow.pop %v2080
    %v2082 = vsel %vm780, %v2081, 0.0
    %2083 = vadd.xlane.f32.xlu0 %v2082
    %v2084 = vpop.xlane.xlu0 %2083
    %v2085 = vmul.f32 %v2084, 0.0625
    %v2086 = vrcp.pop %v2085
    %v2087 = vmul.f32 %v2081, %v2086
    %v2088 = vmul.f32 %v2087, %v1925
    %v2089 = vadd.f32 %v2075, %v2088
    %v2090 = vmax.f32 %v2008, 0.0
    %v2091 = vand.u32 2147483647, %v2008
    %v2092 = vsub.f32 0.0, %v2091
    %v2093 = vmul.f32 %v2092, 1.442695
    %v2094 = vpow.pop %v2093
    %v2095 = vadd.f32 %v2094, 1.0
    %v2096 = vlog2.pop %v2095
    %v2097 = vmul.f32 %v2096, 0.6931472
    %v2098 = vadd.f32 %v2090, %v2097
    %v2099 = vmul.f32 %v1954, %v2098
    %v2100 = vmax.f32 %v2089, 0.0
    %v2101 = vsub.f32 0.0, %v2100
    %v2102 = vmul.f32 %v2101, 1.442695
    %v2103 = vpow.pop %v2102
    %v2104 = vand.u32 2147483647, %v2062
    %vm2105 = vcmp.le.f32.partialorder %v2104, 0.7853982
    %vm2106 = vcmp.lt.s32.totalorder %v2062, 0
    %v2107 = vand.u32 %v2062, 2139095040
    %v2108 = vshrl.u32 %v2107, 23
    %v2109 = vsub.s32 %v2108, 127
    %v2110 = vand.u32 2147483647, %v2062
    %v2111 = vand.u32 %v2110, 8388607
    %v2112 = vor.u32 %v2111, 8388608
    %v2113 = vsub.s32 0, %v2112
    %v2114 = vadd.s32 %v2109, 1
    %vm2115 = vcmp.gt.s32.totalorder %v2114, 0
    %v2116 = vsel %vm2115, %v2114, 0
    %v2117 = vshrl.u32 %v2116, 5
    %v2118 = vand.u32 %v2116, 31
    %v2119 = vsub.s32 32, %v2118
    %v2120 = vshrl.u32 683565275, %v2119
    %v2121 = vshll.u32 683565275, %v2118
    %v2122 = vshrl.u32 2475754826, %v2119
    %v2123 = vor.u32 %v2121, %v2122
    %v2124 = vshll.u32 2475754826, %v2118
    %v2125 = vshrl.u32 2131351028, %v2119
    %v2126 = vor.u32 %v2124, %v2125
    %v2127 = vshll.u32 2131351028, %v2118
    %v2128 = vshrl.u32 2102212464, %v2119
    %v2129 = vor.u32 %v2127, %v2128
    %v2130 = vshll.u32 2102212464, %v2118
    %v2131 = vshrl.u32 920167782, %v2119
    %v2132 = vor.u32 %v2130, %v2131
    %v2133 = vshll.u32 920167782, %v2118
    %v2134 = vshrl.u32 1326507024, %v2119
    %v2135 = vor.u32 %v2133, %v2134
    %vm2136 = vcmp.lt.s32.totalorder %v2117, 1
    %vm2137 = vcmp.lt.s32.totalorder %v2117, 2
    %vm2138 = vcmp.lt.s32.totalorder %v2117, 3
    %vm2139 = vcmp.lt.s32.totalorder %v2117, 4
    %v2140 = vsel %vm2136, %v2120, %v2123
    %v2141 = vsel %vm2139, %v2129, 2102212464
    %v2142 = vsel %vm2138, %v2126, %v2141
    %v2143 = vsel %vm2137, %v2140, %v2142
    %v2144 = vsel %vm2136, %v2123, %v2126
    %v2145 = vsel %vm2139, %v2132, 920167782
    %v2146 = vsel %vm2138, %v2129, %v2145
    %v2147 = vsel %vm2137, %v2144, %v2146
    %v2148 = vsel %vm2136, %v2126, %v2129
    %v2149 = vsel %vm2139, %v2135, 1326507024
    %v2150 = vsel %vm2138, %v2132, %v2149
    %v2151 = vsel %vm2137, %v2148, %v2150
    %v2152 = vshll.u32 %v2112, 8
    %v2153 = vand.u32 %v2152, 65535
    %v2154 = vshrl.u32 %v2152, 16
    %v2155 = vand.u32 %v2151, 65535
    %v2156 = vshrl.u32 %v2151, 16
    %v2157 = vmul.u32 %v2153, %v2155
    %v2158 = vmul.u32 %v2153, %v2156
    %v2159 = vmul.u32 %v2154, %v2155
    %v2160 = vmul.u32 %v2154, %v2156
    %v2161 = vshll.u32 %v2158, 16
    %v2162 = vshrl.u32 %v2158, 16
    %v2163 = vshll.u32 %v2159, 16
    %v2164 = vshrl.u32 %v2159, 16
    %vm2165 = vc.u32 %v2157, %v2161
    %v2166 = vsel %vm2165, 1, 0
    %v2167 = vadd.s32 %v2157, %v2161
    %v2168 = vadd.s32 %v2160, %v2166
    %vm2169 = vc.u32 %v2167, %v2163
    %v2170 = vsel %vm2169, 1, 0
    %v2171 = vadd.s32 %v2167, %v2163
    %v2172 = vadd.s32 %v2168, %v2170
    %v2173 = vadd.s32 %v2172, %v2162
    %v2174 = vadd.s32 %v2173, %v2164
    %v2175 = vand.u32 %v2152, 65535
    %v2176 = vshrl.u32 %v2152, 16
    %v2177 = vand.u32 %v2147, 65535
    %v2178 = vshrl.u32 %v2147, 16
    %v2179 = vmul.u32 %v2175, %v2177
    %v2180 = vmul.u32 %v2175, %v2178
    %v2181 = vmul.u32 %v2176, %v2177
    %v2182 = vmul.u32 %v2176, %v2178
    %v2183 = vshll.u32 %v2180, 16
    %v2184 = vshrl.u32 %v2180, 16
    %v2185 = vshll.u32 %v2181, 16
    %v2186 = vshrl.u32 %v2181, 16
    %vm2187 = vc.u32 %v2179, %v2183
    %v2188 = vsel %vm2187, 1, 0
    %v2189 = vadd.s32 %v2179, %v2183
    %v2190 = vadd.s32 %v2182, %v2188
    %vm2191 = vc.u32 %v2189, %v2185
    %v2192 = vsel %vm2191, 1, 0
    %v2193 = vadd.s32 %v2189, %v2185
    %v2194 = vadd.s32 %v2190, %v2192
    %v2195 = vadd.s32 %v2194, %v2184
    %v2196 = vadd.s32 %v2195, %v2186
    %v2197 = vmul.u32 %v2152, %v2143
    %v2198 = vadd.s32 %v2174, %v2193
    %vm2199 = vc.u32 %v2174, %v2193
    %v2200 = vadd.s32 %v2196, 1
    %v2201 = vsel %vm2199, %v2200, %v2196
    %v2202 = vadd.s32 %v2197, %v2201
    %v2203 = vadd.s32 %v2202, 536870912
    %v2204 = vshrl.u32 %v2203, 30
    %v2205 = vshll.u32 %v2204, 30
    %v2206 = vsub.s32 %v2202, %v2205
    %vm2207 = vcmp.lt.s32.totalorder %v2206, 0
    %v2208 = vsub.s32 0, %v2206
    %v2209 = vsel %vm2207, %v2208, %v2206
    %v2210 = vclz %v2209
    %v2211 = vsub.s32 %v2210, 2
    %vm2212 = vcmp.gt.s32.totalorder 0, %v2211
    %v2213 = vsel %vm2212, 0, %v2211
    %v2214 = vsub.s32 32, %v2213
    %v2215 = vshll.u32 %v2206, %v2213
    %v2216 = vshrl.u32 %v2198, %v2214
    %v2217 = vor.u32 %v2215, %v2216
    %v2218 = vsub.s32 4294967266, %v2213
    %v2219 = vadd.s32 %v2218, 127
    %v2220 = vshll.u32 %v2219, 23
    %v2221 = vor.u32 4788187, %v2220
    %v2222 = vand.u32 2147483647, %v2221
    %v2224 = vcvt.s32.f32 %v2217
    %v2225 = vmul.f32 %v2224, %v2222
    %v2226 = vxor.u32 %v2225, 2147483648
    %v2227 = vsel %vm2106, %v2226, %v2225
    %v2228 = vsub.s32 4, %v2204
    %v2229 = vsel %vm2106, %v2228, %v2204
    %v2230 = vsel %vm2105, %v2062, %v2227
    %v2231 = vsel %vm2105, 0, %v2229
    %v2232 = vmul.f32 %v2230, %v2230
    %v2233 = vmul.f32 %v2232, -0.001358992
    %v2234 = vadd.f32 %v2233, 0.041655596
    %v2235 = vmul.f32 %v2232, %v2234
    %v2236 = vadd.f32 %v2235, -0.4999988
    %v2237 = vmul.f32 %v2232, %v2236
    %v2238 = vadd.f32 1.0, %v2237
    %v2239 = vmul.f32 %v2230, %v2230
    %v2240 = vmul.f32 %v2239, -0.00019511016
    %v2241 = vadd.f32 %v2240, 0.008332121
    %v2242 = vmul.f32 %v2239, %v2241
    %v2243 = vadd.f32 %v2242, -0.16666654
    %v2244 = vmul.f32 %v2239, %v2243
    %v2245 = vadd.f32 %v2244, 1.0
    %v2246 = vmul.f32 %v2245, %v2230
    %vm2247 = vweird.f32 %v2062
    %v2248 = vand.u32 %v2231, 3
    %vm2249 = vcmp.lt.s32.totalorder %v2248, 2
    %vm2250 = vcmp.eq.s32.totalorder %v2248, 0
    %v2251 = vxor.u32 %v2246, 2147483648
    %v2252 = vsel %vm2250, %v2238, %v2251
    %vm2253 = vcmp.eq.s32.totalorder %v2248, 2
    %v2254 = vxor.u32 %v2238, 2147483648
    %v2255 = vsel %vm2253, %v2254, %v2246
    %v2256 = vsel %vm2249, %v2252, %v2255
    %v2257 = vsel %vm2247, nan, %v2256
    %v2258 = vmul.f32 %v2103, %v2257
    %v2259 = vand.u32 2147483647, %v2062
    %vm2260 = vcmp.le.f32.partialorder %v2259, 0.7853982
    %vm2261 = vcmp.lt.s32.totalorder %v2062, 0
    %v2262 = vand.u32 %v2062, 2139095040
    %v2263 = vshrl.u32 %v2262, 23
    %v2264 = vsub.s32 %v2263, 127
    %v2265 = vand.u32 2147483647, %v2062
    %v2266 = vand.u32 %v2265, 8388607
    %v2267 = vor.u32 %v2266, 8388608
    %v2268 = vsub.s32 0, %v2267
    %v2269 = vadd.s32 %v2264, 1
    %vm2270 = vcmp.gt.s32.totalorder %v2269, 0
    %v2271 = vsel %vm2270, %v2269, 0
    %v2272 = vshrl.u32 %v2271, 5
    %v2273 = vand.u32 %v2271, 31
    %v2274 = vsub.s32 32, %v2273
    %v2275 = vshrl.u32 683565275, %v2274
    %v2276 = vshll.u32 683565275, %v2273
    %v2277 = vshrl.u32 2475754826, %v2274
    %v2278 = vor.u32 %v2276, %v2277
    %v2279 = vshll.u32 2475754826, %v2273
    %v2280 = vshrl.u32 2131351028, %v2274
    %v2281 = vor.u32 %v2279, %v2280
    %v2282 = vshll.u32 2131351028, %v2273
    %v2283 = vshrl.u32 2102212464, %v2274
    %v2284 = vor.u32 %v2282, %v2283
    %v2285 = vshll.u32 2102212464, %v2273
    %v2286 = vshrl.u32 920167782, %v2274
    %v2287 = vor.u32 %v2285, %v2286
    %v2288 = vshll.u32 920167782, %v2273
    %v2289 = vshrl.u32 1326507024, %v2274
    %v2290 = vor.u32 %v2288, %v2289
    %vm2291 = vcmp.lt.s32.totalorder %v2272, 1
    %vm2292 = vcmp.lt.s32.totalorder %v2272, 2
    %vm2293 = vcmp.lt.s32.totalorder %v2272, 3
    %vm2294 = vcmp.lt.s32.totalorder %v2272, 4
    %v2295 = vsel %vm2291, %v2275, %v2278
    %v2296 = vsel %vm2294, %v2284, 2102212464
    %v2297 = vsel %vm2293, %v2281, %v2296
    %v2298 = vsel %vm2292, %v2295, %v2297
    %v2299 = vsel %vm2291, %v2278, %v2281
    %v2300 = vsel %vm2294, %v2287, 920167782
    %v2301 = vsel %vm2293, %v2284, %v2300
    %v2302 = vsel %vm2292, %v2299, %v2301
    %v2303 = vsel %vm2291, %v2281, %v2284
    %v2304 = vsel %vm2294, %v2290, 1326507024
    %v2305 = vsel %vm2293, %v2287, %v2304
    %v2306 = vsel %vm2292, %v2303, %v2305
    %v2307 = vshll.u32 %v2267, 8
    %v2308 = vand.u32 %v2307, 65535
    %v2309 = vshrl.u32 %v2307, 16
    %v2310 = vand.u32 %v2306, 65535
    %v2311 = vshrl.u32 %v2306, 16
    %v2312 = vmul.u32 %v2308, %v2310
    %v2313 = vmul.u32 %v2308, %v2311
    %v2314 = vmul.u32 %v2309, %v2310
    %v2315 = vmul.u32 %v2309, %v2311
    %v2316 = vshll.u32 %v2313, 16
    %v2317 = vshrl.u32 %v2313, 16
    %v2318 = vshll.u32 %v2314, 16
    %v2319 = vshrl.u32 %v2314, 16
    %vm2320 = vc.u32 %v2312, %v2316
    %v2321 = vsel %vm2320, 1, 0
    %v2322 = vadd.s32 %v2312, %v2316
    %v2323 = vadd.s32 %v2315, %v2321
    %vm2324 = vc.u32 %v2322, %v2318
    %v2325 = vsel %vm2324, 1, 0
    %v2326 = vadd.s32 %v2322, %v2318
    %v2327 = vadd.s32 %v2323, %v2325
    %v2328 = vadd.s32 %v2327, %v2317
    %v2329 = vadd.s32 %v2328, %v2319
    %v2330 = vand.u32 %v2307, 65535
    %v2331 = vshrl.u32 %v2307, 16
    %v2332 = vand.u32 %v2302, 65535
    %v2333 = vshrl.u32 %v2302, 16
    %v2334 = vmul.u32 %v2330, %v2332
    %v2335 = vmul.u32 %v2330, %v2333
    %v2336 = vmul.u32 %v2331, %v2332
    %v2337 = vmul.u32 %v2331, %v2333
    %v2338 = vshll.u32 %v2335, 16
    %v2339 = vshrl.u32 %v2335, 16
    %v2340 = vshll.u32 %v2336, 16
    %v2341 = vshrl.u32 %v2336, 16
    %vm2342 = vc.u32 %v2334, %v2338
    %v2343 = vsel %vm2342, 1, 0
    %v2344 = vadd.s32 %v2334, %v2338
    %v2345 = vadd.s32 %v2337, %v2343
    %vm2346 = vc.u32 %v2344, %v2340
    %v2347 = vsel %vm2346, 1, 0
    %v2348 = vadd.s32 %v2344, %v2340
    %v2349 = vadd.s32 %v2345, %v2347
    %v2350 = vadd.s32 %v2349, %v2339
    %v2351 = vadd.s32 %v2350, %v2341
    %v2352 = vmul.u32 %v2307, %v2298
    %v2353 = vadd.s32 %v2329, %v2348
    %vm2354 = vc.u32 %v2329, %v2348
    %v2355 = vadd.s32 %v2351, 1
    %v2356 = vsel %vm2354, %v2355, %v2351
    %v2357 = vadd.s32 %v2352, %v2356
    %v2358 = vadd.s32 %v2357, 536870912
    %v2359 = vshrl.u32 %v2358, 30
    %v2360 = vshll.u32 %v2359, 30
    %v2361 = vsub.s32 %v2357, %v2360
    %vm2362 = vcmp.lt.s32.totalorder %v2361, 0
    %v2363 = vsub.s32 0, %v2361
    %v2364 = vsel %vm2362, %v2363, %v2361
    %v2365 = vclz %v2364
    %v2366 = vsub.s32 %v2365, 2
    %vm2367 = vcmp.gt.s32.totalorder 0, %v2366
    %v2368 = vsel %vm2367, 0, %v2366
    %v2369 = vsub.s32 32, %v2368
    %v2370 = vshll.u32 %v2361, %v2368
    %v2371 = vshrl.u32 %v2353, %v2369
    %v2372 = vor.u32 %v2370, %v2371
    %v2373 = vsub.s32 4294967266, %v2368
    %v2374 = vadd.s32 %v2373, 127
    %v2375 = vshll.u32 %v2374, 23
    %v2376 = vor.u32 4788187, %v2375
    %v2377 = vand.u32 2147483647, %v2376
    %v2379 = vcvt.s32.f32 %v2372
    %v2380 = vmul.f32 %v2379, %v2377
    %v2381 = vxor.u32 %v2380, 2147483648
    %v2382 = vsel %vm2261, %v2381, %v2380
    %v2383 = vsub.s32 4, %v2359
    %v2384 = vsel %vm2261, %v2383, %v2359
    %v2385 = vsel %vm2260, %v2062, %v2382
    %v2386 = vsel %vm2260, 0, %v2384
    %v2387 = vmul.f32 %v2385, %v2385
    %v2388 = vmul.f32 %v2387, -0.001358992
    %v2389 = vadd.f32 %v2388, 0.041655596
    %v2390 = vmul.f32 %v2387, %v2389
    %v2391 = vadd.f32 %v2390, -0.4999988
    %v2392 = vmul.f32 %v2387, %v2391
    %v2393 = vadd.f32 1.0, %v2392
    %v2394 = vmul.f32 %v2385, %v2385
    %v2395 = vmul.f32 %v2394, -0.00019511016
    %v2396 = vadd.f32 %v2395, 0.008332121
    %v2397 = vmul.f32 %v2394, %v2396
    %v2398 = vadd.f32 %v2397, -0.16666654
    %v2399 = vmul.f32 %v2394, %v2398
    %v2400 = vadd.f32 %v2399, 1.0
    %v2401 = vmul.f32 %v2400, %v2385
    %vm2402 = vweird.f32 %v2062
    %v2403 = vadd.s32 %v2386, 3
    %v2404 = vand.u32 %v2403, 3
    %vm2405 = vcmp.lt.s32.totalorder %v2404, 2
    %vm2406 = vcmp.eq.s32.totalorder %v2404, 0
    %v2407 = vxor.u32 %v2401, 2147483648
    %v2408 = vsel %vm2406, %v2393, %v2407
    %vm2409 = vcmp.eq.s32.totalorder %v2404, 2
    %v2410 = vxor.u32 %v2393, 2147483648
    %v2411 = vsel %vm2409, %v2410, %v2401
    %v2412 = vsel %vm2405, %v2408, %v2411
    %v2413 = vsel %vm2402, nan, %v2412
    %v2414 = vmul.f32 %v2103, %v2413
    %v2415 = vmul.f32 %v2258, %v1271
    %v2416 = vmul.f32 %v2414, %v1274
    %v2417 = vsub.f32 %v2415, %v2416
    %v2418 = vadd.f32 %v2417, %v2035
    %v2419 = vmul.f32 %v2258, %v1274
    %v2420 = vmul.f32 %v2414, %v1271
    %v2421 = vadd.f32 %v2419, %v2420
    %v2422 = vadd.f32 %v1275, %v2100
    %v2423 = vsub.f32 %v2422, 70.42879
    %v2424 = vmax.f32 %v2423, 0.0
    %v2425 = vadd.f32 %v1278, %v2424
    %v2426 = vand.u32 2147483647, %v1981
    %vm2427 = vcmp.le.f32.partialorder %v2426, 0.7853982
    %vm2428 = vcmp.lt.s32.totalorder %v1981, 0
    %v2429 = vand.u32 %v1981, 2139095040
    %v2430 = vshrl.u32 %v2429, 23
    %v2431 = vsub.s32 %v2430, 127
    %v2432 = vand.u32 2147483647, %v1981
    %v2433 = vand.u32 %v2432, 8388607
    %v2434 = vor.u32 %v2433, 8388608
    %v2435 = vsub.s32 0, %v2434
    %v2436 = vadd.s32 %v2431, 1
    %vm2437 = vcmp.gt.s32.totalorder %v2436, 0
    %v2438 = vsel %vm2437, %v2436, 0
    %v2439 = vshrl.u32 %v2438, 5
    %v2440 = vand.u32 %v2438, 31
    %v2441 = vsub.s32 32, %v2440
    %v2442 = vshrl.u32 683565275, %v2441
    %v2443 = vshll.u32 683565275, %v2440
    %v2444 = vshrl.u32 2475754826, %v2441
    %v2445 = vor.u32 %v2443, %v2444
    %v2446 = vshll.u32 2475754826, %v2440
    %v2447 = vshrl.u32 2131351028, %v2441
    %v2448 = vor.u32 %v2446, %v2447
    %v2449 = vshll.u32 2131351028, %v2440
    %v2450 = vshrl.u32 2102212464, %v2441
    %v2451 = vor.u32 %v2449, %v2450
    %v2452 = vshll.u32 2102212464, %v2440
    %v2453 = vshrl.u32 920167782, %v2441
    %v2454 = vor.u32 %v2452, %v2453
    %v2455 = vshll.u32 920167782, %v2440
    %v2456 = vshrl.u32 1326507024, %v2441
    %v2457 = vor.u32 %v2455, %v2456
    %vm2458 = vcmp.lt.s32.totalorder %v2439, 1
    %vm2459 = vcmp.lt.s32.totalorder %v2439, 2
    %vm2460 = vcmp.lt.s32.totalorder %v2439, 3
    %vm2461 = vcmp.lt.s32.totalorder %v2439, 4
    %v2462 = vsel %vm2458, %v2442, %v2445
    %v2463 = vsel %vm2461, %v2451, 2102212464
    %v2464 = vsel %vm2460, %v2448, %v2463
    %v2465 = vsel %vm2459, %v2462, %v2464
    %v2466 = vsel %vm2458, %v2445, %v2448
    %v2467 = vsel %vm2461, %v2454, 920167782
    %v2468 = vsel %vm2460, %v2451, %v2467
    %v2469 = vsel %vm2459, %v2466, %v2468
    %v2470 = vsel %vm2458, %v2448, %v2451
    %v2471 = vsel %vm2461, %v2457, 1326507024
    %v2472 = vsel %vm2460, %v2454, %v2471
    %v2473 = vsel %vm2459, %v2470, %v2472
    %v2474 = vshll.u32 %v2434, 8
    %v2475 = vand.u32 %v2474, 65535
    %v2476 = vshrl.u32 %v2474, 16
    %v2477 = vand.u32 %v2473, 65535
    %v2478 = vshrl.u32 %v2473, 16
    %v2479 = vmul.u32 %v2475, %v2477
    %v2480 = vmul.u32 %v2475, %v2478
    %v2481 = vmul.u32 %v2476, %v2477
    %v2482 = vmul.u32 %v2476, %v2478
    %v2483 = vshll.u32 %v2480, 16
    %v2484 = vshrl.u32 %v2480, 16
    %v2485 = vshll.u32 %v2481, 16
    %v2486 = vshrl.u32 %v2481, 16
    %vm2487 = vc.u32 %v2479, %v2483
    %v2488 = vsel %vm2487, 1, 0
    %v2489 = vadd.s32 %v2479, %v2483
    %v2490 = vadd.s32 %v2482, %v2488
    %vm2491 = vc.u32 %v2489, %v2485
    %v2492 = vsel %vm2491, 1, 0
    %v2493 = vadd.s32 %v2489, %v2485
    %v2494 = vadd.s32 %v2490, %v2492
    %v2495 = vadd.s32 %v2494, %v2484
    %v2496 = vadd.s32 %v2495, %v2486
    %v2497 = vand.u32 %v2474, 65535
    %v2498 = vshrl.u32 %v2474, 16
    %v2499 = vand.u32 %v2469, 65535
    %v2500 = vshrl.u32 %v2469, 16
    %v2501 = vmul.u32 %v2497, %v2499
    %v2502 = vmul.u32 %v2497, %v2500
    %v2503 = vmul.u32 %v2498, %v2499
    %v2504 = vmul.u32 %v2498, %v2500
    %v2505 = vshll.u32 %v2502, 16
    %v2506 = vshrl.u32 %v2502, 16
    %v2507 = vshll.u32 %v2503, 16
    %v2508 = vshrl.u32 %v2503, 16
    %vm2509 = vc.u32 %v2501, %v2505
    %v2510 = vsel %vm2509, 1, 0
    %v2511 = vadd.s32 %v2501, %v2505
    %v2512 = vadd.s32 %v2504, %v2510
    %vm2513 = vc.u32 %v2511, %v2507
    %v2514 = vsel %vm2513, 1, 0
    %v2515 = vadd.s32 %v2511, %v2507
    %v2516 = vadd.s32 %v2512, %v2514
    %v2517 = vadd.s32 %v2516, %v2506
    %v2518 = vadd.s32 %v2517, %v2508
    %v2519 = vmul.u32 %v2474, %v2465
    %v2520 = vadd.s32 %v2496, %v2515
    %vm2521 = vc.u32 %v2496, %v2515
    %v2522 = vadd.s32 %v2518, 1
    %v2523 = vsel %vm2521, %v2522, %v2518
    %v2524 = vadd.s32 %v2519, %v2523
    %v2525 = vadd.s32 %v2524, 536870912
    %v2526 = vshrl.u32 %v2525, 30
    %v2527 = vshll.u32 %v2526, 30
    %v2528 = vsub.s32 %v2524, %v2527
    %vm2529 = vcmp.lt.s32.totalorder %v2528, 0
    %v2530 = vsub.s32 0, %v2528
    %v2531 = vsel %vm2529, %v2530, %v2528
    %v2532 = vclz %v2531
    %v2533 = vsub.s32 %v2532, 2
    %vm2534 = vcmp.gt.s32.totalorder 0, %v2533
    %v2535 = vsel %vm2534, 0, %v2533
    %v2536 = vsub.s32 32, %v2535
    %v2537 = vshll.u32 %v2528, %v2535
    %v2538 = vshrl.u32 %v2520, %v2536
    %v2539 = vor.u32 %v2537, %v2538
    %v2540 = vsub.s32 4294967266, %v2535
    %v2541 = vadd.s32 %v2540, 127
    %v2542 = vshll.u32 %v2541, 23
    %v2543 = vor.u32 4788187, %v2542
    %v2544 = vand.u32 2147483647, %v2543
    %v2546 = vcvt.s32.f32 %v2539
    %v2547 = vmul.f32 %v2546, %v2544
    %v2548 = vxor.u32 %v2547, 2147483648
    %v2549 = vsel %vm2428, %v2548, %v2547
    %v2550 = vsub.s32 4, %v2526
    %v2551 = vsel %vm2428, %v2550, %v2526
    %v2552 = vsel %vm2427, %v1981, %v2549
    %v2553 = vsel %vm2427, 0, %v2551
    %v2554 = vmul.f32 %v2552, %v2552
    %v2555 = vmul.f32 %v2554, -0.001358992
    %v2556 = vadd.f32 %v2555, 0.041655596
    %v2557 = vmul.f32 %v2554, %v2556
    %v2558 = vadd.f32 %v2557, -0.4999988
    %v2559 = vmul.f32 %v2554, %v2558
    %v2560 = vadd.f32 1.0, %v2559
    %v2561 = vmul.f32 %v2552, %v2552
    %v2562 = vmul.f32 %v2561, -0.00019511016
    %v2563 = vadd.f32 %v2562, 0.008332121
    %v2564 = vmul.f32 %v2561, %v2563
    %v2565 = vadd.f32 %v2564, -0.16666654
    %v2566 = vmul.f32 %v2561, %v2565
    %v2567 = vadd.f32 %v2566, 1.0
    %v2568 = vmul.f32 %v2567, %v2552
    %vm2569 = vweird.f32 %v1981
    %v2570 = vand.u32 %v2553, 3
    %vm2571 = vcmp.lt.s32.totalorder %v2570, 2
    %vm2572 = vcmp.eq.s32.totalorder %v2570, 0
    %v2573 = vxor.u32 %v2568, 2147483648
    %v2574 = vsel %vm2572, %v2560, %v2573
    %vm2575 = vcmp.eq.s32.totalorder %v2570, 2
    %v2576 = vxor.u32 %v2560, 2147483648
    %v2577 = vsel %vm2575, %v2576, %v2568
    %v2578 = vsel %vm2571, %v2574, %v2577
    %v2579 = vsel %vm2569, nan, %v2578
    %v2580 = vmul.f32 %v2418, %v2579
    %v2581 = vand.u32 2147483647, %v1981
    %vm2582 = vcmp.le.f32.partialorder %v2581, 0.7853982
    %vm2583 = vcmp.lt.s32.totalorder %v1981, 0
    %v2584 = vand.u32 %v1981, 2139095040
    %v2585 = vshrl.u32 %v2584, 23
    %v2586 = vsub.s32 %v2585, 127
    %v2587 = vand.u32 2147483647, %v1981
    %v2588 = vand.u32 %v2587, 8388607
    %v2589 = vor.u32 %v2588, 8388608
    %v2590 = vsub.s32 0, %v2589
    %v2591 = vadd.s32 %v2586, 1
    %vm2592 = vcmp.gt.s32.totalorder %v2591, 0
    %v2593 = vsel %vm2592, %v2591, 0
    %v2594 = vshrl.u32 %v2593, 5
    %v2595 = vand.u32 %v2593, 31
    %v2596 = vsub.s32 32, %v2595
    %v2597 = vshrl.u32 683565275, %v2596
    %v2598 = vshll.u32 683565275, %v2595
    %v2599 = vshrl.u32 2475754826, %v2596
    %v2600 = vor.u32 %v2598, %v2599
    %v2601 = vshll.u32 2475754826, %v2595
    %v2602 = vshrl.u32 2131351028, %v2596
    %v2603 = vor.u32 %v2601, %v2602
    %v2604 = vshll.u32 2131351028, %v2595
    %v2605 = vshrl.u32 2102212464, %v2596
    %v2606 = vor.u32 %v2604, %v2605
    %v2607 = vshll.u32 2102212464, %v2595
    %v2608 = vshrl.u32 920167782, %v2596
    %v2609 = vor.u32 %v2607, %v2608
    %v2610 = vshll.u32 920167782, %v2595
    %v2611 = vshrl.u32 1326507024, %v2596
    %v2612 = vor.u32 %v2610, %v2611
    %vm2613 = vcmp.lt.s32.totalorder %v2594, 1
    %vm2614 = vcmp.lt.s32.totalorder %v2594, 2
    %vm2615 = vcmp.lt.s32.totalorder %v2594, 3
    %vm2616 = vcmp.lt.s32.totalorder %v2594, 4
    %v2617 = vsel %vm2613, %v2597, %v2600
    %v2618 = vsel %vm2616, %v2606, 2102212464
    %v2619 = vsel %vm2615, %v2603, %v2618
    %v2620 = vsel %vm2614, %v2617, %v2619
    %v2621 = vsel %vm2613, %v2600, %v2603
    %v2622 = vsel %vm2616, %v2609, 920167782
    %v2623 = vsel %vm2615, %v2606, %v2622
    %v2624 = vsel %vm2614, %v2621, %v2623
    %v2625 = vsel %vm2613, %v2603, %v2606
    %v2626 = vsel %vm2616, %v2612, 1326507024
    %v2627 = vsel %vm2615, %v2609, %v2626
    %v2628 = vsel %vm2614, %v2625, %v2627
    %v2629 = vshll.u32 %v2589, 8
    %v2630 = vand.u32 %v2629, 65535
    %v2631 = vshrl.u32 %v2629, 16
    %v2632 = vand.u32 %v2628, 65535
    %v2633 = vshrl.u32 %v2628, 16
    %v2634 = vmul.u32 %v2630, %v2632
    %v2635 = vmul.u32 %v2630, %v2633
    %v2636 = vmul.u32 %v2631, %v2632
    %v2637 = vmul.u32 %v2631, %v2633
    %v2638 = vshll.u32 %v2635, 16
    %v2639 = vshrl.u32 %v2635, 16
    %v2640 = vshll.u32 %v2636, 16
    %v2641 = vshrl.u32 %v2636, 16
    %vm2642 = vc.u32 %v2634, %v2638
    %v2643 = vsel %vm2642, 1, 0
    %v2644 = vadd.s32 %v2634, %v2638
    %v2645 = vadd.s32 %v2637, %v2643
    %vm2646 = vc.u32 %v2644, %v2640
    %v2647 = vsel %vm2646, 1, 0
    %v2648 = vadd.s32 %v2644, %v2640
    %v2649 = vadd.s32 %v2645, %v2647
    %v2650 = vadd.s32 %v2649, %v2639
    %v2651 = vadd.s32 %v2650, %v2641
    %v2652 = vand.u32 %v2629, 65535
    %v2653 = vshrl.u32 %v2629, 16
    %v2654 = vand.u32 %v2624, 65535
    %v2655 = vshrl.u32 %v2624, 16
    %v2656 = vmul.u32 %v2652, %v2654
    %v2657 = vmul.u32 %v2652, %v2655
    %v2658 = vmul.u32 %v2653, %v2654
    %v2659 = vmul.u32 %v2653, %v2655
    %v2660 = vshll.u32 %v2657, 16
    %v2661 = vshrl.u32 %v2657, 16
    %v2662 = vshll.u32 %v2658, 16
    %v2663 = vshrl.u32 %v2658, 16
    %vm2664 = vc.u32 %v2656, %v2660
    %v2665 = vsel %vm2664, 1, 0
    %v2666 = vadd.s32 %v2656, %v2660
    %v2667 = vadd.s32 %v2659, %v2665
    %vm2668 = vc.u32 %v2666, %v2662
    %v2669 = vsel %vm2668, 1, 0
    %v2670 = vadd.s32 %v2666, %v2662
    %v2671 = vadd.s32 %v2667, %v2669
    %v2672 = vadd.s32 %v2671, %v2661
    %v2673 = vadd.s32 %v2672, %v2663
    %v2674 = vmul.u32 %v2629, %v2620
    %v2675 = vadd.s32 %v2651, %v2670
    %vm2676 = vc.u32 %v2651, %v2670
    %v2677 = vadd.s32 %v2673, 1
    %v2678 = vsel %vm2676, %v2677, %v2673
    %v2679 = vadd.s32 %v2674, %v2678
    %v2680 = vadd.s32 %v2679, 536870912
    %v2681 = vshrl.u32 %v2680, 30
    %v2682 = vshll.u32 %v2681, 30
    %v2683 = vsub.s32 %v2679, %v2682
    %vm2684 = vcmp.lt.s32.totalorder %v2683, 0
    %v2685 = vsub.s32 0, %v2683
    %v2686 = vsel %vm2684, %v2685, %v2683
    %v2687 = vclz %v2686
    %v2688 = vsub.s32 %v2687, 2
    %vm2689 = vcmp.gt.s32.totalorder 0, %v2688
    %v2690 = vsel %vm2689, 0, %v2688
    %v2691 = vsub.s32 32, %v2690
    %v2692 = vshll.u32 %v2683, %v2690
    %v2693 = vshrl.u32 %v2675, %v2691
    %v2694 = vor.u32 %v2692, %v2693
    %v2695 = vsub.s32 4294967266, %v2690
    %v2696 = vadd.s32 %v2695, 127
    %v2697 = vshll.u32 %v2696, 23
    %v2698 = vor.u32 4788187, %v2697
    %v2699 = vand.u32 2147483647, %v2698
    %v2701 = vcvt.s32.f32 %v2694
    %v2702 = vmul.f32 %v2701, %v2699
    %v2703 = vxor.u32 %v2702, 2147483648
    %v2704 = vsel %vm2583, %v2703, %v2702
    %v2705 = vsub.s32 4, %v2681
    %v2706 = vsel %vm2583, %v2705, %v2681
    %v2707 = vsel %vm2582, %v1981, %v2704
    %v2708 = vsel %vm2582, 0, %v2706
    %v2709 = vmul.f32 %v2707, %v2707
    %v2710 = vmul.f32 %v2709, -0.001358992
    %v2711 = vadd.f32 %v2710, 0.041655596
    %v2712 = vmul.f32 %v2709, %v2711
    %v2713 = vadd.f32 %v2712, -0.4999988
    %v2714 = vmul.f32 %v2709, %v2713
    %v2715 = vadd.f32 1.0, %v2714
    %v2716 = vmul.f32 %v2707, %v2707
    %v2717 = vmul.f32 %v2716, -0.00019511016
    %v2718 = vadd.f32 %v2717, 0.008332121
    %v2719 = vmul.f32 %v2716, %v2718
    %v2720 = vadd.f32 %v2719, -0.16666654
    %v2721 = vmul.f32 %v2716, %v2720
    %v2722 = vadd.f32 %v2721, 1.0
    %v2723 = vmul.f32 %v2722, %v2707
    %vm2724 = vweird.f32 %v1981
    %v2725 = vadd.s32 %v2708, 3
    %v2726 = vand.u32 %v2725, 3
    %vm2727 = vcmp.lt.s32.totalorder %v2726, 2
    %vm2728 = vcmp.eq.s32.totalorder %v2726, 0
    %v2729 = vxor.u32 %v2723, 2147483648
    %v2730 = vsel %vm2728, %v2715, %v2729
    %vm2731 = vcmp.eq.s32.totalorder %v2726, 2
    %v2732 = vxor.u32 %v2715, 2147483648
    %v2733 = vsel %vm2731, %v2732, %v2723
    %v2734 = vsel %vm2727, %v2730, %v2733
    %v2735 = vsel %vm2724, nan, %v2734
    %v2736 = vmul.f32 %v2421, %v2735
    %v2737 = vsub.f32 %v2580, %v2736
    %v2738 = vmul.f32 %v2737, %v2099
    %s2739 = scalar_lea.vmem %s0, 8
    %v2740 = vld [vmem:[%s2739] sm:$0xf]
    %v2741 = vpack.c.bf16 %v2740, %v2740
    %v2743 = vsel %vm104, %v2741, 0
    %2745 = vmatpush.bf16.msra.mxu0 0
    %2746 = vmatpush.bf16.msra.mxu0 0
    %2747 = vmatpush.bf16.msra.mxu0 0
    %2748 = vmatpush.bf16.msra.mxu0 0
    %2749 = vmatpush.bf16.msra.mxu0 0
    %2750 = vmatpush.bf16.msra.mxu0 0
    %2751 = vmatpush.bf16.msra.mxu0 %v101
    %2752 = vmatpush.bf16.msra.mxu0 %v100
    %2753 = vmatmul.bf16.gmra.mxu0 %v2743
    %v2754 = vpop.f32.mrf.mxu0
    %v2755 = vadd.f32 %v90, %v2754
    %v2756 = vpop.f32.mrf.mxu0
    %2757 = vdwg.mxu0
    %v2758 = vmax.f32 %v2755, 0.0
    %v2759 = vpack.c.bf16 %v2758, %v2758
    %v2761 = vsel %vm104, %v2759, 0
    %2763 = vmatpush.bf16.msra.mxu0 0
    %2764 = vmatpush.bf16.msra.mxu0 0
    %2765 = vmatpush.bf16.msra.mxu0 0
    %2766 = vmatpush.bf16.msra.mxu0 0
    %2767 = vmatpush.bf16.msra.mxu0 0
    %2768 = vmatpush.bf16.msra.mxu0 0
    %2769 = vmatpush.bf16.msra.mxu0 %v393
    %2770 = vmatpush.bf16.msra.mxu0 %v369
    %2771 = vmatmul.bf16.gmra.mxu0 %v2761
    %v2772 = vpop.f32.mrf.mxu0
    %v2773 = vadd.f32 %v177, %v2772
    %v2774 = vpop.f32.mrf.mxu0
    %2775 = vdwg.mxu0
    %2776 = vmatpush.bf16.msra.mxu0 0
    %2777 = vmatpush.bf16.msra.mxu0 0
    %2778 = vmatpush.bf16.msra.mxu0 0
    %2779 = vmatpush.bf16.msra.mxu0 0
    %2780 = vmatpush.bf16.msra.mxu0 0
    %2781 = vmatpush.bf16.msra.mxu0 0
    %2782 = vmatpush.bf16.msra.mxu0 %v394
    %2783 = vmatpush.bf16.msra.mxu0 %v370
    %2784 = vmatmul.bf16.gmra.mxu0 %v2761
    %v2785 = vpop.f32.mrf.mxu0
    %v2786 = vadd.f32 %v178, %v2785
    %v2787 = vpop.f32.mrf.mxu0
    %2788 = vdwg.mxu0
    %2789 = vmatpush.bf16.msra.mxu0 0
    %2790 = vmatpush.bf16.msra.mxu0 0
    %2791 = vmatpush.bf16.msra.mxu0 0
    %2792 = vmatpush.bf16.msra.mxu0 0
    %2793 = vmatpush.bf16.msra.mxu0 0
    %2794 = vmatpush.bf16.msra.mxu0 0
    %2795 = vmatpush.bf16.msra.mxu0 %v395
    %2796 = vmatpush.bf16.msra.mxu0 %v371
    %2797 = vmatmul.bf16.gmra.mxu0 %v2761
    %v2798 = vpop.f32.mrf.mxu0
    %v2799 = vadd.f32 %v179, %v2798
    %v2800 = vpop.f32.mrf.mxu0
    %2801 = vdwg.mxu0
    %2802 = vmatpush.bf16.msra.mxu0 0
    %2803 = vmatpush.bf16.msra.mxu0 0
    %2804 = vmatpush.bf16.msra.mxu0 0
    %2805 = vmatpush.bf16.msra.mxu0 0
    %2806 = vmatpush.bf16.msra.mxu0 0
    %2807 = vmatpush.bf16.msra.mxu0 0
    %2808 = vmatpush.bf16.msra.mxu0 %v396
    %2809 = vmatpush.bf16.msra.mxu0 %v372
    %2810 = vmatmul.bf16.gmra.mxu0 %v2761
    %v2811 = vpop.f32.mrf.mxu0
    %v2812 = vadd.f32 %v180, %v2811
    %v2813 = vpop.f32.mrf.mxu0
    %2814 = vdwg.mxu0
    %2815 = vmatpush.bf16.msra.mxu0 0
    %2816 = vmatpush.bf16.msra.mxu0 0
    %2817 = vmatpush.bf16.msra.mxu0 0
    %2818 = vmatpush.bf16.msra.mxu0 0
    %2819 = vmatpush.bf16.msra.mxu0 0
    %2820 = vmatpush.bf16.msra.mxu0 0
    %2821 = vmatpush.bf16.msra.mxu0 %v397
    %2822 = vmatpush.bf16.msra.mxu0 %v373
    %2823 = vmatmul.bf16.gmra.mxu0 %v2761
    %v2824 = vpop.f32.mrf.mxu0
    %v2825 = vadd.f32 %v181, %v2824
    %v2826 = vpop.f32.mrf.mxu0
    %2827 = vdwg.mxu0
    %2828 = vmatpush.bf16.msra.mxu0 0
    %2829 = vmatpush.bf16.msra.mxu0 0
    %2830 = vmatpush.bf16.msra.mxu0 0
    %2831 = vmatpush.bf16.msra.mxu0 0
    %2832 = vmatpush.bf16.msra.mxu0 0
    %2833 = vmatpush.bf16.msra.mxu0 0
    %2834 = vmatpush.bf16.msra.mxu0 %v398
    %2835 = vmatpush.bf16.msra.mxu0 %v374
    %2836 = vmatmul.bf16.gmra.mxu0 %v2761
    %v2837 = vpop.f32.mrf.mxu0
    %v2838 = vadd.f32 %v182, %v2837
    %v2839 = vpop.f32.mrf.mxu0
    %2840 = vdwg.mxu0
    %2841 = vmatpush.bf16.msra.mxu0 0
    %2842 = vmatpush.bf16.msra.mxu0 0
    %2843 = vmatpush.bf16.msra.mxu0 0
    %2844 = vmatpush.bf16.msra.mxu0 0
    %2845 = vmatpush.bf16.msra.mxu0 0
    %2846 = vmatpush.bf16.msra.mxu0 0
    %2847 = vmatpush.bf16.msra.mxu0 %v399
    %2848 = vmatpush.bf16.msra.mxu0 %v375
    %2849 = vmatmul.bf16.gmra.mxu0 %v2761
    %v2850 = vpop.f32.mrf.mxu0
    %v2851 = vadd.f32 %v183, %v2850
    %v2852 = vpop.f32.mrf.mxu0
    %2853 = vdwg.mxu0
    %2854 = vmatpush.bf16.msra.mxu0 0
    %2855 = vmatpush.bf16.msra.mxu0 0
    %2856 = vmatpush.bf16.msra.mxu0 0
    %2857 = vmatpush.bf16.msra.mxu0 0
    %2858 = vmatpush.bf16.msra.mxu0 0
    %2859 = vmatpush.bf16.msra.mxu0 0
    %2860 = vmatpush.bf16.msra.mxu0 %v400
    %2861 = vmatpush.bf16.msra.mxu0 %v376
    %2862 = vmatmul.bf16.gmra.mxu0 %v2761
    %v2863 = vpop.f32.mrf.mxu0
    %v2864 = vadd.f32 %v184, %v2863
    %v2865 = vpop.f32.mrf.mxu0
    %2866 = vdwg.mxu0
    %2867 = vmatpush.bf16.msra.mxu0 0
    %2868 = vmatpush.bf16.msra.mxu0 0
    %2869 = vmatpush.bf16.msra.mxu0 0
    %2870 = vmatpush.bf16.msra.mxu0 0
    %2871 = vmatpush.bf16.msra.mxu0 0
    %2872 = vmatpush.bf16.msra.mxu0 0
    %2873 = vmatpush.bf16.msra.mxu0 %v401
    %2874 = vmatpush.bf16.msra.mxu0 %v377
    %2875 = vmatmul.bf16.gmra.mxu0 %v2761
    %v2876 = vpop.f32.mrf.mxu0
    %v2877 = vadd.f32 %v185, %v2876
    %v2878 = vpop.f32.mrf.mxu0
    %2879 = vdwg.mxu0
    %2880 = vmatpush.bf16.msra.mxu0 0
    %2881 = vmatpush.bf16.msra.mxu0 0
    %2882 = vmatpush.bf16.msra.mxu0 0
    %2883 = vmatpush.bf16.msra.mxu0 0
    %2884 = vmatpush.bf16.msra.mxu0 0
    %2885 = vmatpush.bf16.msra.mxu0 0
    %2886 = vmatpush.bf16.msra.mxu0 %v402
    %2887 = vmatpush.bf16.msra.mxu0 %v378
    %2888 = vmatmul.bf16.gmra.mxu0 %v2761
    %v2889 = vpop.f32.mrf.mxu0
    %v2890 = vadd.f32 %v186, %v2889
    %v2891 = vpop.f32.mrf.mxu0
    %2892 = vdwg.mxu0
    %2893 = vmatpush.bf16.msra.mxu0 0
    %2894 = vmatpush.bf16.msra.mxu0 0
    %2895 = vmatpush.bf16.msra.mxu0 0
    %2896 = vmatpush.bf16.msra.mxu0 0
    %2897 = vmatpush.bf16.msra.mxu0 0
    %2898 = vmatpush.bf16.msra.mxu0 0
    %2899 = vmatpush.bf16.msra.mxu0 %v403
    %2900 = vmatpush.bf16.msra.mxu0 %v379
    %2901 = vmatmul.bf16.gmra.mxu0 %v2761
    %v2902 = vpop.f32.mrf.mxu0
    %v2903 = vadd.f32 %v187, %v2902
    %v2904 = vpop.f32.mrf.mxu0
    %2905 = vdwg.mxu0
    %2906 = vmatpush.bf16.msra.mxu0 0
    %2907 = vmatpush.bf16.msra.mxu0 0
    %2908 = vmatpush.bf16.msra.mxu0 0
    %2909 = vmatpush.bf16.msra.mxu0 0
    %2910 = vmatpush.bf16.msra.mxu0 0
    %2911 = vmatpush.bf16.msra.mxu0 0
    %2912 = vmatpush.bf16.msra.mxu0 %v404
    %2913 = vmatpush.bf16.msra.mxu0 %v380
    %2914 = vmatmul.bf16.gmra.mxu0 %v2761
    %v2915 = vpop.f32.mrf.mxu0
    %v2916 = vadd.f32 %v188, %v2915
    %v2917 = vpop.f32.mrf.mxu0
    %2918 = vdwg.mxu0
    %2919 = vmatpush.bf16.msra.mxu0 0
    %2920 = vmatpush.bf16.msra.mxu0 0
    %2921 = vmatpush.bf16.msra.mxu0 0
    %2922 = vmatpush.bf16.msra.mxu0 0
    %2923 = vmatpush.bf16.msra.mxu0 0
    %2924 = vmatpush.bf16.msra.mxu0 0
    %2925 = vmatpush.bf16.msra.mxu0 %v405
    %2926 = vmatpush.bf16.msra.mxu0 %v381
    %2927 = vmatmul.bf16.gmra.mxu0 %v2761
    %v2928 = vpop.f32.mrf.mxu0
    %v2929 = vadd.f32 %v189, %v2928
    %v2930 = vpop.f32.mrf.mxu0
    %2931 = vdwg.mxu0
    %2932 = vmatpush.bf16.msra.mxu0 0
    %2933 = vmatpush.bf16.msra.mxu0 0
    %2934 = vmatpush.bf16.msra.mxu0 0
    %2935 = vmatpush.bf16.msra.mxu0 0
    %2936 = vmatpush.bf16.msra.mxu0 0
    %2937 = vmatpush.bf16.msra.mxu0 0
    %2938 = vmatpush.bf16.msra.mxu0 %v406
    %2939 = vmatpush.bf16.msra.mxu0 %v382
    %2940 = vmatmul.bf16.gmra.mxu0 %v2761
    %v2941 = vpop.f32.mrf.mxu0
    %v2942 = vadd.f32 %v190, %v2941
    %v2943 = vpop.f32.mrf.mxu0
    %2944 = vdwg.mxu0
    %2945 = vmatpush.bf16.msra.mxu0 0
    %2946 = vmatpush.bf16.msra.mxu0 0
    %2947 = vmatpush.bf16.msra.mxu0 0
    %2948 = vmatpush.bf16.msra.mxu0 0
    %2949 = vmatpush.bf16.msra.mxu0 0
    %2950 = vmatpush.bf16.msra.mxu0 0
    %2951 = vmatpush.bf16.msra.mxu0 %v407
    %2952 = vmatpush.bf16.msra.mxu0 %v383
    %2953 = vmatmul.bf16.gmra.mxu0 %v2761
    %v2954 = vpop.f32.mrf.mxu0
    %v2955 = vadd.f32 %v191, %v2954
    %v2956 = vpop.f32.mrf.mxu0
    %2957 = vdwg.mxu0
    %2958 = vmatpush.bf16.msra.mxu0 0
    %2959 = vmatpush.bf16.msra.mxu0 0
    %2960 = vmatpush.bf16.msra.mxu0 0
    %2961 = vmatpush.bf16.msra.mxu0 0
    %2962 = vmatpush.bf16.msra.mxu0 0
    %2963 = vmatpush.bf16.msra.mxu0 0
    %2964 = vmatpush.bf16.msra.mxu0 %v408
    %2965 = vmatpush.bf16.msra.mxu0 %v384
    %2966 = vmatmul.bf16.gmra.mxu0 %v2761
    %v2967 = vpop.f32.mrf.mxu0
    %v2968 = vadd.f32 %v192, %v2967
    %v2969 = vpop.f32.mrf.mxu0
    %2970 = vdwg.mxu0
    %2971 = vmatpush.bf16.msra.mxu0 0
    %2972 = vmatpush.bf16.msra.mxu0 0
    %2973 = vmatpush.bf16.msra.mxu0 0
    %2974 = vmatpush.bf16.msra.mxu0 0
    %2975 = vmatpush.bf16.msra.mxu0 0
    %2976 = vmatpush.bf16.msra.mxu0 0
    %2977 = vmatpush.bf16.msra.mxu0 %v409
    %2978 = vmatpush.bf16.msra.mxu0 %v385
    %2979 = vmatmul.bf16.gmra.mxu0 %v2761
    %v2980 = vpop.f32.mrf.mxu0
    %v2981 = vadd.f32 %v193, %v2980
    %v2982 = vpop.f32.mrf.mxu0
    %2983 = vdwg.mxu0
    %2984 = vmatpush.bf16.msra.mxu0 0
    %2985 = vmatpush.bf16.msra.mxu0 0
    %2986 = vmatpush.bf16.msra.mxu0 0
    %2987 = vmatpush.bf16.msra.mxu0 0
    %2988 = vmatpush.bf16.msra.mxu0 0
    %2989 = vmatpush.bf16.msra.mxu0 0
    %2990 = vmatpush.bf16.msra.mxu0 %v410
    %2991 = vmatpush.bf16.msra.mxu0 %v386
    %2992 = vmatmul.bf16.gmra.mxu0 %v2761
    %v2993 = vpop.f32.mrf.mxu0
    %v2994 = vadd.f32 %v194, %v2993
    %v2995 = vpop.f32.mrf.mxu0
    %2996 = vdwg.mxu0
    %2997 = vmatpush.bf16.msra.mxu0 0
    %2998 = vmatpush.bf16.msra.mxu0 0
    %2999 = vmatpush.bf16.msra.mxu0 0
    %3000 = vmatpush.bf16.msra.mxu0 0
    %3001 = vmatpush.bf16.msra.mxu0 0
    %3002 = vmatpush.bf16.msra.mxu0 0
    %3003 = vmatpush.bf16.msra.mxu0 %v411
    %3004 = vmatpush.bf16.msra.mxu0 %v387
    %3005 = vmatmul.bf16.gmra.mxu0 %v2761
    %v3006 = vpop.f32.mrf.mxu0
    %v3007 = vadd.f32 %v195, %v3006
    %v3008 = vpop.f32.mrf.mxu0
    %3009 = vdwg.mxu0
    %3010 = vmatpush.bf16.msra.mxu0 0
    %3011 = vmatpush.bf16.msra.mxu0 0
    %3012 = vmatpush.bf16.msra.mxu0 0
    %3013 = vmatpush.bf16.msra.mxu0 0
    %3014 = vmatpush.bf16.msra.mxu0 0
    %3015 = vmatpush.bf16.msra.mxu0 0
    %3016 = vmatpush.bf16.msra.mxu0 %v412
    %3017 = vmatpush.bf16.msra.mxu0 %v388
    %3018 = vmatmul.bf16.gmra.mxu0 %v2761
    %v3019 = vpop.f32.mrf.mxu0
    %v3020 = vadd.f32 %v196, %v3019
    %v3021 = vpop.f32.mrf.mxu0
    %3022 = vdwg.mxu0
    %3023 = vmatpush.bf16.msra.mxu0 0
    %3024 = vmatpush.bf16.msra.mxu0 0
    %3025 = vmatpush.bf16.msra.mxu0 0
    %3026 = vmatpush.bf16.msra.mxu0 0
    %3027 = vmatpush.bf16.msra.mxu0 0
    %3028 = vmatpush.bf16.msra.mxu0 0
    %3029 = vmatpush.bf16.msra.mxu0 %v413
    %3030 = vmatpush.bf16.msra.mxu0 %v389
    %3031 = vmatmul.bf16.gmra.mxu0 %v2761
    %v3032 = vpop.f32.mrf.mxu0
    %v3033 = vadd.f32 %v197, %v3032
    %v3034 = vpop.f32.mrf.mxu0
    %3035 = vdwg.mxu0
    %3036 = vmatpush.bf16.msra.mxu0 0
    %3037 = vmatpush.bf16.msra.mxu0 0
    %3038 = vmatpush.bf16.msra.mxu0 0
    %3039 = vmatpush.bf16.msra.mxu0 0
    %3040 = vmatpush.bf16.msra.mxu0 0
    %3041 = vmatpush.bf16.msra.mxu0 0
    %3042 = vmatpush.bf16.msra.mxu0 %v414
    %3043 = vmatpush.bf16.msra.mxu0 %v390
    %3044 = vmatmul.bf16.gmra.mxu0 %v2761
    %v3045 = vpop.f32.mrf.mxu0
    %v3046 = vadd.f32 %v198, %v3045
    %v3047 = vpop.f32.mrf.mxu0
    %3048 = vdwg.mxu0
    %3049 = vmatpush.bf16.msra.mxu0 0
    %3050 = vmatpush.bf16.msra.mxu0 0
    %3051 = vmatpush.bf16.msra.mxu0 0
    %3052 = vmatpush.bf16.msra.mxu0 0
    %3053 = vmatpush.bf16.msra.mxu0 0
    %3054 = vmatpush.bf16.msra.mxu0 0
    %3055 = vmatpush.bf16.msra.mxu0 %v415
    %3056 = vmatpush.bf16.msra.mxu0 %v391
    %3057 = vmatmul.bf16.gmra.mxu0 %v2761
    %v3058 = vpop.f32.mrf.mxu0
    %v3059 = vadd.f32 %v199, %v3058
    %v3060 = vpop.f32.mrf.mxu0
    %3061 = vdwg.mxu0
    %3062 = vmatpush.bf16.msra.mxu0 0
    %3063 = vmatpush.bf16.msra.mxu0 0
    %3064 = vmatpush.bf16.msra.mxu0 0
    %3065 = vmatpush.bf16.msra.mxu0 0
    %3066 = vmatpush.bf16.msra.mxu0 0
    %3067 = vmatpush.bf16.msra.mxu0 0
    %3068 = vmatpush.bf16.msra.mxu0 %v416
    %3069 = vmatpush.bf16.msra.mxu0 %v392
    %3070 = vmatmul.bf16.gmra.mxu0 %v2761
    %v3071 = vpop.f32.mrf.mxu0
    %v3072 = vadd.f32 %v200, %v3071
    %v3073 = vpop.f32.mrf.mxu0
    %3074 = vdwg.mxu0
    %v3075 = vsel %vm780, %v2773, -inf
    %3076 = vmax.xlane.f32.xlu0 %v3075
    %v3077 = vpop.xlane.xlu0 %3076
    %v3078 = vsub.f32 %v2773, %v3077
    %v3079 = vmul.f32 %v3078, 1.442695
    %v3080 = vpow.pop %v3079
    %v3081 = vsel %vm780, %v3080, 0.0
    %3082 = vadd.xlane.f32.xlu0 %v3081
    %v3083 = vpop.xlane.xlu0 %3082
    %v3084 = vmul.f32 %v3083, 0.0625
    %v3085 = vrcp.pop %v3084
    %v3086 = vmul.f32 %v3080, %v3085
    %v3087 = vmul.f32 %v3086, %v2929
    %v3088 = vsel %vm780, %v2786, -inf
    %3089 = vmax.xlane.f32.xlu0 %v3088
    %v3090 = vpop.xlane.xlu0 %3089
    %v3091 = vsub.f32 %v2786, %v3090
    %v3092 = vmul.f32 %v3091, 1.442695
    %v3093 = vpow.pop %v3092
    %v3094 = vsel %vm780, %v3093, 0.0
    %3095 = vadd.xlane.f32.xlu0 %v3094
    %v3096 = vpop.xlane.xlu0 %3095
    %v3097 = vmul.f32 %v3096, 0.0625
    %v3098 = vrcp.pop %v3097
    %v3099 = vmul.f32 %v3093, %v3098
    %v3100 = vmul.f32 %v3099, %v2942
    %v3101 = vadd.f32 %v3087, %v3100
    %v3102 = vsel %vm780, %v2799, -inf
    %3103 = vmax.xlane.f32.xlu0 %v3102
    %v3104 = vpop.xlane.xlu0 %3103
    %v3105 = vsub.f32 %v2799, %v3104
    %v3106 = vmul.f32 %v3105, 1.442695
    %v3107 = vpow.pop %v3106
    %v3108 = vsel %vm780, %v3107, 0.0
    %3109 = vadd.xlane.f32.xlu0 %v3108
    %v3110 = vpop.xlane.xlu0 %3109
    %v3111 = vmul.f32 %v3110, 0.0625
    %v3112 = vrcp.pop %v3111
    %v3113 = vmul.f32 %v3107, %v3112
    %v3114 = vmul.f32 %v3113, %v2955
    %v3115 = vsel %vm780, %v2812, -inf
    %3116 = vmax.xlane.f32.xlu0 %v3115
    %v3117 = vpop.xlane.xlu0 %3116
    %v3118 = vsub.f32 %v2812, %v3117
    %v3119 = vmul.f32 %v3118, 1.442695
    %v3120 = vpow.pop %v3119
    %v3121 = vsel %vm780, %v3120, 0.0
    %3122 = vadd.xlane.f32.xlu0 %v3121
    %v3123 = vpop.xlane.xlu0 %3122
    %v3124 = vmul.f32 %v3123, 0.0625
    %v3125 = vrcp.pop %v3124
    %v3126 = vmul.f32 %v3120, %v3125
    %v3127 = vmul.f32 %v3126, %v2968
    %v3128 = vadd.f32 %v3114, %v3127
    %v3129 = vsel %vm780, %v2825, -inf
    %3130 = vmax.xlane.f32.xlu0 %v3129
    %v3131 = vpop.xlane.xlu0 %3130
    %v3132 = vsub.f32 %v2825, %v3131
    %v3133 = vmul.f32 %v3132, 1.442695
    %v3134 = vpow.pop %v3133
    %v3135 = vsel %vm780, %v3134, 0.0
    %3136 = vadd.xlane.f32.xlu0 %v3135
    %v3137 = vpop.xlane.xlu0 %3136
    %v3138 = vmul.f32 %v3137, 0.0625
    %v3139 = vrcp.pop %v3138
    %v3140 = vmul.f32 %v3134, %v3139
    %v3141 = vmul.f32 %v3140, %v2981
    %v3142 = vsel %vm780, %v2838, -inf
    %3143 = vmax.xlane.f32.xlu0 %v3142
    %v3144 = vpop.xlane.xlu0 %3143
    %v3145 = vsub.f32 %v2838, %v3144
    %v3146 = vmul.f32 %v3145, 1.442695
    %v3147 = vpow.pop %v3146
    %v3148 = vsel %vm780, %v3147, 0.0
    %3149 = vadd.xlane.f32.xlu0 %v3148
    %v3150 = vpop.xlane.xlu0 %3149
    %v3151 = vmul.f32 %v3150, 0.0625
    %v3152 = vrcp.pop %v3151
    %v3153 = vmul.f32 %v3147, %v3152
    %v3154 = vmul.f32 %v3153, %v2994
    %v3155 = vadd.f32 %v3141, %v3154
    %v3156 = vsel %vm780, %v2851, -inf
    %3157 = vmax.xlane.f32.xlu0 %v3156
    %v3158 = vpop.xlane.xlu0 %3157
    %v3159 = vsub.f32 %v2851, %v3158
    %v3160 = vmul.f32 %v3159, 1.442695
    %v3161 = vpow.pop %v3160
    %v3162 = vsel %vm780, %v3161, 0.0
    %3163 = vadd.xlane.f32.xlu0 %v3162
    %v3164 = vpop.xlane.xlu0 %3163
    %v3165 = vmul.f32 %v3164, 0.0625
    %v3166 = vrcp.pop %v3165
    %v3167 = vmul.f32 %v3161, %v3166
    %v3168 = vmul.f32 %v3167, %v3007
    %v3169 = vsel %vm780, %v2864, -inf
    %3170 = vmax.xlane.f32.xlu0 %v3169
    %v3171 = vpop.xlane.xlu0 %3170
    %v3172 = vsub.f32 %v2864, %v3171
    %v3173 = vmul.f32 %v3172, 1.442695
    %v3174 = vpow.pop %v3173
    %v3175 = vsel %vm780, %v3174, 0.0
    %3176 = vadd.xlane.f32.xlu0 %v3175
    %v3177 = vpop.xlane.xlu0 %3176
    %v3178 = vmul.f32 %v3177, 0.0625
    %v3179 = vrcp.pop %v3178
    %v3180 = vmul.f32 %v3174, %v3179
    %v3181 = vmul.f32 %v3180, %v3020
    %v3182 = vadd.f32 %v3168, %v3181
    %v3183 = vsel %vm780, %v2877, -inf
    %3184 = vmax.xlane.f32.xlu0 %v3183
    %v3185 = vpop.xlane.xlu0 %3184
    %v3186 = vsub.f32 %v2877, %v3185
    %v3187 = vmul.f32 %v3186, 1.442695
    %v3188 = vpow.pop %v3187
    %v3189 = vsel %vm780, %v3188, 0.0
    %3190 = vadd.xlane.f32.xlu0 %v3189
    %v3191 = vpop.xlane.xlu0 %3190
    %v3192 = vmul.f32 %v3191, 0.0625
    %v3193 = vrcp.pop %v3192
    %v3194 = vmul.f32 %v3188, %v3193
    %v3195 = vmul.f32 %v3194, %v3033
    %v3196 = vsel %vm780, %v2890, -inf
    %3197 = vmax.xlane.f32.xlu0 %v3196
    %v3198 = vpop.xlane.xlu0 %3197
    %v3199 = vsub.f32 %v2890, %v3198
    %v3200 = vmul.f32 %v3199, 1.442695
    %v3201 = vpow.pop %v3200
    %v3202 = vsel %vm780, %v3201, 0.0
    %3203 = vadd.xlane.f32.xlu0 %v3202
    %v3204 = vpop.xlane.xlu0 %3203
    %v3205 = vmul.f32 %v3204, 0.0625
    %v3206 = vrcp.pop %v3205
    %v3207 = vmul.f32 %v3201, %v3206
    %v3208 = vmul.f32 %v3207, %v3046
    %v3209 = vadd.f32 %v3195, %v3208
    %v3210 = vsel %vm780, %v2903, -inf
    %3211 = vmax.xlane.f32.xlu0 %v3210
    %v3212 = vpop.xlane.xlu0 %3211
    %v3213 = vsub.f32 %v2903, %v3212
    %v3214 = vmul.f32 %v3213, 1.442695
    %v3215 = vpow.pop %v3214
    %v3216 = vsel %vm780, %v3215, 0.0
    %3217 = vadd.xlane.f32.xlu0 %v3216
    %v3218 = vpop.xlane.xlu0 %3217
    %v3219 = vmul.f32 %v3218, 0.0625
    %v3220 = vrcp.pop %v3219
    %v3221 = vmul.f32 %v3215, %v3220
    %v3222 = vmul.f32 %v3221, %v3059
    %v3223 = vsel %vm780, %v2916, -inf
    %3224 = vmax.xlane.f32.xlu0 %v3223
    %v3225 = vpop.xlane.xlu0 %3224
    %v3226 = vsub.f32 %v2916, %v3225
    %v3227 = vmul.f32 %v3226, 1.442695
    %v3228 = vpow.pop %v3227
    %v3229 = vsel %vm780, %v3228, 0.0
    %3230 = vadd.xlane.f32.xlu0 %v3229
    %v3231 = vpop.xlane.xlu0 %3230
    %v3232 = vmul.f32 %v3231, 0.0625
    %v3233 = vrcp.pop %v3232
    %v3234 = vmul.f32 %v3228, %v3233
    %v3235 = vmul.f32 %v3234, %v3072
    %v3236 = vadd.f32 %v3222, %v3235
    %v3237 = vmax.f32 %v3155, 0.0
    %v3238 = vand.u32 2147483647, %v3155
    %v3239 = vsub.f32 0.0, %v3238
    %v3240 = vmul.f32 %v3239, 1.442695
    %v3241 = vpow.pop %v3240
    %v3242 = vadd.f32 %v3241, 1.0
    %v3243 = vlog2.pop %v3242
    %v3244 = vmul.f32 %v3243, 0.6931472
    %v3245 = vadd.f32 %v3237, %v3244
    %v3246 = vmul.f32 %v3101, %v3245
    %v3247 = vmax.f32 %v3236, 0.0
    %v3248 = vsub.f32 0.0, %v3247
    %v3249 = vmul.f32 %v3248, 1.442695
    %v3250 = vpow.pop %v3249
    %v3251 = vand.u32 2147483647, %v3209
    %vm3252 = vcmp.le.f32.partialorder %v3251, 0.7853982
    %vm3253 = vcmp.lt.s32.totalorder %v3209, 0
    %v3254 = vand.u32 %v3209, 2139095040
    %v3255 = vshrl.u32 %v3254, 23
    %v3256 = vsub.s32 %v3255, 127
    %v3257 = vand.u32 2147483647, %v3209
    %v3258 = vand.u32 %v3257, 8388607
    %v3259 = vor.u32 %v3258, 8388608
    %v3260 = vsub.s32 0, %v3259
    %v3261 = vadd.s32 %v3256, 1
    %vm3262 = vcmp.gt.s32.totalorder %v3261, 0
    %v3263 = vsel %vm3262, %v3261, 0
    %v3264 = vshrl.u32 %v3263, 5
    %v3265 = vand.u32 %v3263, 31
    %v3266 = vsub.s32 32, %v3265
    %v3267 = vshrl.u32 683565275, %v3266
    %v3268 = vshll.u32 683565275, %v3265
    %v3269 = vshrl.u32 2475754826, %v3266
    %v3270 = vor.u32 %v3268, %v3269
    %v3271 = vshll.u32 2475754826, %v3265
    %v3272 = vshrl.u32 2131351028, %v3266
    %v3273 = vor.u32 %v3271, %v3272
    %v3274 = vshll.u32 2131351028, %v3265
    %v3275 = vshrl.u32 2102212464, %v3266
    %v3276 = vor.u32 %v3274, %v3275
    %v3277 = vshll.u32 2102212464, %v3265
    %v3278 = vshrl.u32 920167782, %v3266
    %v3279 = vor.u32 %v3277, %v3278
    %v3280 = vshll.u32 920167782, %v3265
    %v3281 = vshrl.u32 1326507024, %v3266
    %v3282 = vor.u32 %v3280, %v3281
    %vm3283 = vcmp.lt.s32.totalorder %v3264, 1
    %vm3284 = vcmp.lt.s32.totalorder %v3264, 2
    %vm3285 = vcmp.lt.s32.totalorder %v3264, 3
    %vm3286 = vcmp.lt.s32.totalorder %v3264, 4
    %v3287 = vsel %vm3283, %v3267, %v3270
    %v3288 = vsel %vm3286, %v3276, 2102212464
    %v3289 = vsel %vm3285, %v3273, %v3288
    %v3290 = vsel %vm3284, %v3287, %v3289
    %v3291 = vsel %vm3283, %v3270, %v3273
    %v3292 = vsel %vm3286, %v3279, 920167782
    %v3293 = vsel %vm3285, %v3276, %v3292
    %v3294 = vsel %vm3284, %v3291, %v3293
    %v3295 = vsel %vm3283, %v3273, %v3276
    %v3296 = vsel %vm3286, %v3282, 1326507024
    %v3297 = vsel %vm3285, %v3279, %v3296
    %v3298 = vsel %vm3284, %v3295, %v3297
    %v3299 = vshll.u32 %v3259, 8
    %v3300 = vand.u32 %v3299, 65535
    %v3301 = vshrl.u32 %v3299, 16
    %v3302 = vand.u32 %v3298, 65535
    %v3303 = vshrl.u32 %v3298, 16
    %v3304 = vmul.u32 %v3300, %v3302
    %v3305 = vmul.u32 %v3300, %v3303
    %v3306 = vmul.u32 %v3301, %v3302
    %v3307 = vmul.u32 %v3301, %v3303
    %v3308 = vshll.u32 %v3305, 16
    %v3309 = vshrl.u32 %v3305, 16
    %v3310 = vshll.u32 %v3306, 16
    %v3311 = vshrl.u32 %v3306, 16
    %vm3312 = vc.u32 %v3304, %v3308
    %v3313 = vsel %vm3312, 1, 0
    %v3314 = vadd.s32 %v3304, %v3308
    %v3315 = vadd.s32 %v3307, %v3313
    %vm3316 = vc.u32 %v3314, %v3310
    %v3317 = vsel %vm3316, 1, 0
    %v3318 = vadd.s32 %v3314, %v3310
    %v3319 = vadd.s32 %v3315, %v3317
    %v3320 = vadd.s32 %v3319, %v3309
    %v3321 = vadd.s32 %v3320, %v3311
    %v3322 = vand.u32 %v3299, 65535
    %v3323 = vshrl.u32 %v3299, 16
    %v3324 = vand.u32 %v3294, 65535
    %v3325 = vshrl.u32 %v3294, 16
    %v3326 = vmul.u32 %v3322, %v3324
    %v3327 = vmul.u32 %v3322, %v3325
    %v3328 = vmul.u32 %v3323, %v3324
    %v3329 = vmul.u32 %v3323, %v3325
    %v3330 = vshll.u32 %v3327, 16
    %v3331 = vshrl.u32 %v3327, 16
    %v3332 = vshll.u32 %v3328, 16
    %v3333 = vshrl.u32 %v3328, 16
    %vm3334 = vc.u32 %v3326, %v3330
    %v3335 = vsel %vm3334, 1, 0
    %v3336 = vadd.s32 %v3326, %v3330
    %v3337 = vadd.s32 %v3329, %v3335
    %vm3338 = vc.u32 %v3336, %v3332
    %v3339 = vsel %vm3338, 1, 0
    %v3340 = vadd.s32 %v3336, %v3332
    %v3341 = vadd.s32 %v3337, %v3339
    %v3342 = vadd.s32 %v3341, %v3331
    %v3343 = vadd.s32 %v3342, %v3333
    %v3344 = vmul.u32 %v3299, %v3290
    %v3345 = vadd.s32 %v3321, %v3340
    %vm3346 = vc.u32 %v3321, %v3340
    %v3347 = vadd.s32 %v3343, 1
    %v3348 = vsel %vm3346, %v3347, %v3343
    %v3349 = vadd.s32 %v3344, %v3348
    %v3350 = vadd.s32 %v3349, 536870912
    %v3351 = vshrl.u32 %v3350, 30
    %v3352 = vshll.u32 %v3351, 30
    %v3353 = vsub.s32 %v3349, %v3352
    %vm3354 = vcmp.lt.s32.totalorder %v3353, 0
    %v3355 = vsub.s32 0, %v3353
    %v3356 = vsel %vm3354, %v3355, %v3353
    %v3357 = vclz %v3356
    %v3358 = vsub.s32 %v3357, 2
    %vm3359 = vcmp.gt.s32.totalorder 0, %v3358
    %v3360 = vsel %vm3359, 0, %v3358
    %v3361 = vsub.s32 32, %v3360
    %v3362 = vshll.u32 %v3353, %v3360
    %v3363 = vshrl.u32 %v3345, %v3361
    %v3364 = vor.u32 %v3362, %v3363
    %v3365 = vsub.s32 4294967266, %v3360
    %v3366 = vadd.s32 %v3365, 127
    %v3367 = vshll.u32 %v3366, 23
    %v3368 = vor.u32 4788187, %v3367
    %v3369 = vand.u32 2147483647, %v3368
    %v3371 = vcvt.s32.f32 %v3364
    %v3372 = vmul.f32 %v3371, %v3369
    %v3373 = vxor.u32 %v3372, 2147483648
    %v3374 = vsel %vm3253, %v3373, %v3372
    %v3375 = vsub.s32 4, %v3351
    %v3376 = vsel %vm3253, %v3375, %v3351
    %v3377 = vsel %vm3252, %v3209, %v3374
    %v3378 = vsel %vm3252, 0, %v3376
    %v3379 = vmul.f32 %v3377, %v3377
    %v3380 = vmul.f32 %v3379, -0.001358992
    %v3381 = vadd.f32 %v3380, 0.041655596
    %v3382 = vmul.f32 %v3379, %v3381
    %v3383 = vadd.f32 %v3382, -0.4999988
    %v3384 = vmul.f32 %v3379, %v3383
    %v3385 = vadd.f32 1.0, %v3384
    %v3386 = vmul.f32 %v3377, %v3377
    %v3387 = vmul.f32 %v3386, -0.00019511016
    %v3388 = vadd.f32 %v3387, 0.008332121
    %v3389 = vmul.f32 %v3386, %v3388
    %v3390 = vadd.f32 %v3389, -0.16666654
    %v3391 = vmul.f32 %v3386, %v3390
    %v3392 = vadd.f32 %v3391, 1.0
    %v3393 = vmul.f32 %v3392, %v3377
    %vm3394 = vweird.f32 %v3209
    %v3395 = vand.u32 %v3378, 3
    %vm3396 = vcmp.lt.s32.totalorder %v3395, 2
    %vm3397 = vcmp.eq.s32.totalorder %v3395, 0
    %v3398 = vxor.u32 %v3393, 2147483648
    %v3399 = vsel %vm3397, %v3385, %v3398
    %vm3400 = vcmp.eq.s32.totalorder %v3395, 2
    %v3401 = vxor.u32 %v3385, 2147483648
    %v3402 = vsel %vm3400, %v3401, %v3393
    %v3403 = vsel %vm3396, %v3399, %v3402
    %v3404 = vsel %vm3394, nan, %v3403
    %v3405 = vmul.f32 %v3250, %v3404
    %v3406 = vand.u32 2147483647, %v3209
    %vm3407 = vcmp.le.f32.partialorder %v3406, 0.7853982
    %vm3408 = vcmp.lt.s32.totalorder %v3209, 0
    %v3409 = vand.u32 %v3209, 2139095040
    %v3410 = vshrl.u32 %v3409, 23
    %v3411 = vsub.s32 %v3410, 127
    %v3412 = vand.u32 2147483647, %v3209
    %v3413 = vand.u32 %v3412, 8388607
    %v3414 = vor.u32 %v3413, 8388608
    %v3415 = vsub.s32 0, %v3414
    %v3416 = vadd.s32 %v3411, 1
    %vm3417 = vcmp.gt.s32.totalorder %v3416, 0
    %v3418 = vsel %vm3417, %v3416, 0
    %v3419 = vshrl.u32 %v3418, 5
    %v3420 = vand.u32 %v3418, 31
    %v3421 = vsub.s32 32, %v3420
    %v3422 = vshrl.u32 683565275, %v3421
    %v3423 = vshll.u32 683565275, %v3420
    %v3424 = vshrl.u32 2475754826, %v3421
    %v3425 = vor.u32 %v3423, %v3424
    %v3426 = vshll.u32 2475754826, %v3420
    %v3427 = vshrl.u32 2131351028, %v3421
    %v3428 = vor.u32 %v3426, %v3427
    %v3429 = vshll.u32 2131351028, %v3420
    %v3430 = vshrl.u32 2102212464, %v3421
    %v3431 = vor.u32 %v3429, %v3430
    %v3432 = vshll.u32 2102212464, %v3420
    %v3433 = vshrl.u32 920167782, %v3421
    %v3434 = vor.u32 %v3432, %v3433
    %v3435 = vshll.u32 920167782, %v3420
    %v3436 = vshrl.u32 1326507024, %v3421
    %v3437 = vor.u32 %v3435, %v3436
    %vm3438 = vcmp.lt.s32.totalorder %v3419, 1
    %vm3439 = vcmp.lt.s32.totalorder %v3419, 2
    %vm3440 = vcmp.lt.s32.totalorder %v3419, 3
    %vm3441 = vcmp.lt.s32.totalorder %v3419, 4
    %v3442 = vsel %vm3438, %v3422, %v3425
    %v3443 = vsel %vm3441, %v3431, 2102212464
    %v3444 = vsel %vm3440, %v3428, %v3443
    %v3445 = vsel %vm3439, %v3442, %v3444
    %v3446 = vsel %vm3438, %v3425, %v3428
    %v3447 = vsel %vm3441, %v3434, 920167782
    %v3448 = vsel %vm3440, %v3431, %v3447
    %v3449 = vsel %vm3439, %v3446, %v3448
    %v3450 = vsel %vm3438, %v3428, %v3431
    %v3451 = vsel %vm3441, %v3437, 1326507024
    %v3452 = vsel %vm3440, %v3434, %v3451
    %v3453 = vsel %vm3439, %v3450, %v3452
    %v3454 = vshll.u32 %v3414, 8
    %v3455 = vand.u32 %v3454, 65535
    %v3456 = vshrl.u32 %v3454, 16
    %v3457 = vand.u32 %v3453, 65535
    %v3458 = vshrl.u32 %v3453, 16
    %v3459 = vmul.u32 %v3455, %v3457
    %v3460 = vmul.u32 %v3455, %v3458
    %v3461 = vmul.u32 %v3456, %v3457
    %v3462 = vmul.u32 %v3456, %v3458
    %v3463 = vshll.u32 %v3460, 16
    %v3464 = vshrl.u32 %v3460, 16
    %v3465 = vshll.u32 %v3461, 16
    %v3466 = vshrl.u32 %v3461, 16
    %vm3467 = vc.u32 %v3459, %v3463
    %v3468 = vsel %vm3467, 1, 0
    %v3469 = vadd.s32 %v3459, %v3463
    %v3470 = vadd.s32 %v3462, %v3468
    %vm3471 = vc.u32 %v3469, %v3465
    %v3472 = vsel %vm3471, 1, 0
    %v3473 = vadd.s32 %v3469, %v3465
    %v3474 = vadd.s32 %v3470, %v3472
    %v3475 = vadd.s32 %v3474, %v3464
    %v3476 = vadd.s32 %v3475, %v3466
    %v3477 = vand.u32 %v3454, 65535
    %v3478 = vshrl.u32 %v3454, 16
    %v3479 = vand.u32 %v3449, 65535
    %v3480 = vshrl.u32 %v3449, 16
    %v3481 = vmul.u32 %v3477, %v3479
    %v3482 = vmul.u32 %v3477, %v3480
    %v3483 = vmul.u32 %v3478, %v3479
    %v3484 = vmul.u32 %v3478, %v3480
    %v3485 = vshll.u32 %v3482, 16
    %v3486 = vshrl.u32 %v3482, 16
    %v3487 = vshll.u32 %v3483, 16
    %v3488 = vshrl.u32 %v3483, 16
    %vm3489 = vc.u32 %v3481, %v3485
    %v3490 = vsel %vm3489, 1, 0
    %v3491 = vadd.s32 %v3481, %v3485
    %v3492 = vadd.s32 %v3484, %v3490
    %vm3493 = vc.u32 %v3491, %v3487
    %v3494 = vsel %vm3493, 1, 0
    %v3495 = vadd.s32 %v3491, %v3487
    %v3496 = vadd.s32 %v3492, %v3494
    %v3497 = vadd.s32 %v3496, %v3486
    %v3498 = vadd.s32 %v3497, %v3488
    %v3499 = vmul.u32 %v3454, %v3445
    %v3500 = vadd.s32 %v3476, %v3495
    %vm3501 = vc.u32 %v3476, %v3495
    %v3502 = vadd.s32 %v3498, 1
    %v3503 = vsel %vm3501, %v3502, %v3498
    %v3504 = vadd.s32 %v3499, %v3503
    %v3505 = vadd.s32 %v3504, 536870912
    %v3506 = vshrl.u32 %v3505, 30
    %v3507 = vshll.u32 %v3506, 30
    %v3508 = vsub.s32 %v3504, %v3507
    %vm3509 = vcmp.lt.s32.totalorder %v3508, 0
    %v3510 = vsub.s32 0, %v3508
    %v3511 = vsel %vm3509, %v3510, %v3508
    %v3512 = vclz %v3511
    %v3513 = vsub.s32 %v3512, 2
    %vm3514 = vcmp.gt.s32.totalorder 0, %v3513
    %v3515 = vsel %vm3514, 0, %v3513
    %v3516 = vsub.s32 32, %v3515
    %v3517 = vshll.u32 %v3508, %v3515
    %v3518 = vshrl.u32 %v3500, %v3516
    %v3519 = vor.u32 %v3517, %v3518
    %v3520 = vsub.s32 4294967266, %v3515
    %v3521 = vadd.s32 %v3520, 127
    %v3522 = vshll.u32 %v3521, 23
    %v3523 = vor.u32 4788187, %v3522
    %v3524 = vand.u32 2147483647, %v3523
    %v3526 = vcvt.s32.f32 %v3519
    %v3527 = vmul.f32 %v3526, %v3524
    %v3528 = vxor.u32 %v3527, 2147483648
    %v3529 = vsel %vm3408, %v3528, %v3527
    %v3530 = vsub.s32 4, %v3506
    %v3531 = vsel %vm3408, %v3530, %v3506
    %v3532 = vsel %vm3407, %v3209, %v3529
    %v3533 = vsel %vm3407, 0, %v3531
    %v3534 = vmul.f32 %v3532, %v3532
    %v3535 = vmul.f32 %v3534, -0.001358992
    %v3536 = vadd.f32 %v3535, 0.041655596
    %v3537 = vmul.f32 %v3534, %v3536
    %v3538 = vadd.f32 %v3537, -0.4999988
    %v3539 = vmul.f32 %v3534, %v3538
    %v3540 = vadd.f32 1.0, %v3539
    %v3541 = vmul.f32 %v3532, %v3532
    %v3542 = vmul.f32 %v3541, -0.00019511016
    %v3543 = vadd.f32 %v3542, 0.008332121
    %v3544 = vmul.f32 %v3541, %v3543
    %v3545 = vadd.f32 %v3544, -0.16666654
    %v3546 = vmul.f32 %v3541, %v3545
    %v3547 = vadd.f32 %v3546, 1.0
    %v3548 = vmul.f32 %v3547, %v3532
    %vm3549 = vweird.f32 %v3209
    %v3550 = vadd.s32 %v3533, 3
    %v3551 = vand.u32 %v3550, 3
    %vm3552 = vcmp.lt.s32.totalorder %v3551, 2
    %vm3553 = vcmp.eq.s32.totalorder %v3551, 0
    %v3554 = vxor.u32 %v3548, 2147483648
    %v3555 = vsel %vm3553, %v3540, %v3554
    %vm3556 = vcmp.eq.s32.totalorder %v3551, 2
    %v3557 = vxor.u32 %v3540, 2147483648
    %v3558 = vsel %vm3556, %v3557, %v3548
    %v3559 = vsel %vm3552, %v3555, %v3558
    %v3560 = vsel %vm3549, nan, %v3559
    %v3561 = vmul.f32 %v3250, %v3560
    %v3562 = vmul.f32 %v3405, %v2418
    %v3563 = vmul.f32 %v3561, %v2421
    %v3564 = vsub.f32 %v3562, %v3563
    %v3565 = vadd.f32 %v3564, %v3182
    %v3566 = vmul.f32 %v3405, %v2421
    %v3567 = vmul.f32 %v3561, %v2418
    %v3568 = vadd.f32 %v3566, %v3567
    %v3569 = vadd.f32 %v2422, %v3247
    %v3570 = vsub.f32 %v3569, 70.42879
    %v3571 = vmax.f32 %v3570, 0.0
    %v3572 = vadd.f32 %v2425, %v3571
    %v3573 = vand.u32 2147483647, %v3128
    %vm3574 = vcmp.le.f32.partialorder %v3573, 0.7853982
    %vm3575 = vcmp.lt.s32.totalorder %v3128, 0
    %v3576 = vand.u32 %v3128, 2139095040
    %v3577 = vshrl.u32 %v3576, 23
    %v3578 = vsub.s32 %v3577, 127
    %v3579 = vand.u32 2147483647, %v3128
    %v3580 = vand.u32 %v3579, 8388607
    %v3581 = vor.u32 %v3580, 8388608
    %v3582 = vsub.s32 0, %v3581
    %v3583 = vadd.s32 %v3578, 1
    %vm3584 = vcmp.gt.s32.totalorder %v3583, 0
    %v3585 = vsel %vm3584, %v3583, 0
    %v3586 = vshrl.u32 %v3585, 5
    %v3587 = vand.u32 %v3585, 31
    %v3588 = vsub.s32 32, %v3587
    %v3589 = vshrl.u32 683565275, %v3588
    %v3590 = vshll.u32 683565275, %v3587
    %v3591 = vshrl.u32 2475754826, %v3588
    %v3592 = vor.u32 %v3590, %v3591
    %v3593 = vshll.u32 2475754826, %v3587
    %v3594 = vshrl.u32 2131351028, %v3588
    %v3595 = vor.u32 %v3593, %v3594
    %v3596 = vshll.u32 2131351028, %v3587
    %v3597 = vshrl.u32 2102212464, %v3588
    %v3598 = vor.u32 %v3596, %v3597
    %v3599 = vshll.u32 2102212464, %v3587
    %v3600 = vshrl.u32 920167782, %v3588
    %v3601 = vor.u32 %v3599, %v3600
    %v3602 = vshll.u32 920167782, %v3587
    %v3603 = vshrl.u32 1326507024, %v3588
    %v3604 = vor.u32 %v3602, %v3603
    %vm3605 = vcmp.lt.s32.totalorder %v3586, 1
    %vm3606 = vcmp.lt.s32.totalorder %v3586, 2
    %vm3607 = vcmp.lt.s32.totalorder %v3586, 3
    %vm3608 = vcmp.lt.s32.totalorder %v3586, 4
    %v3609 = vsel %vm3605, %v3589, %v3592
    %v3610 = vsel %vm3608, %v3598, 2102212464
    %v3611 = vsel %vm3607, %v3595, %v3610
    %v3612 = vsel %vm3606, %v3609, %v3611
    %v3613 = vsel %vm3605, %v3592, %v3595
    %v3614 = vsel %vm3608, %v3601, 920167782
    %v3615 = vsel %vm3607, %v3598, %v3614
    %v3616 = vsel %vm3606, %v3613, %v3615
    %v3617 = vsel %vm3605, %v3595, %v3598
    %v3618 = vsel %vm3608, %v3604, 1326507024
    %v3619 = vsel %vm3607, %v3601, %v3618
    %v3620 = vsel %vm3606, %v3617, %v3619
    %v3621 = vshll.u32 %v3581, 8
    %v3622 = vand.u32 %v3621, 65535
    %v3623 = vshrl.u32 %v3621, 16
    %v3624 = vand.u32 %v3620, 65535
    %v3625 = vshrl.u32 %v3620, 16
    %v3626 = vmul.u32 %v3622, %v3624
    %v3627 = vmul.u32 %v3622, %v3625
    %v3628 = vmul.u32 %v3623, %v3624
    %v3629 = vmul.u32 %v3623, %v3625
    %v3630 = vshll.u32 %v3627, 16
    %v3631 = vshrl.u32 %v3627, 16
    %v3632 = vshll.u32 %v3628, 16
    %v3633 = vshrl.u32 %v3628, 16
    %vm3634 = vc.u32 %v3626, %v3630
    %v3635 = vsel %vm3634, 1, 0
    %v3636 = vadd.s32 %v3626, %v3630
    %v3637 = vadd.s32 %v3629, %v3635
    %vm3638 = vc.u32 %v3636, %v3632
    %v3639 = vsel %vm3638, 1, 0
    %v3640 = vadd.s32 %v3636, %v3632
    %v3641 = vadd.s32 %v3637, %v3639
    %v3642 = vadd.s32 %v3641, %v3631
    %v3643 = vadd.s32 %v3642, %v3633
    %v3644 = vand.u32 %v3621, 65535
    %v3645 = vshrl.u32 %v3621, 16
    %v3646 = vand.u32 %v3616, 65535
    %v3647 = vshrl.u32 %v3616, 16
    %v3648 = vmul.u32 %v3644, %v3646
    %v3649 = vmul.u32 %v3644, %v3647
    %v3650 = vmul.u32 %v3645, %v3646
    %v3651 = vmul.u32 %v3645, %v3647
    %v3652 = vshll.u32 %v3649, 16
    %v3653 = vshrl.u32 %v3649, 16
    %v3654 = vshll.u32 %v3650, 16
    %v3655 = vshrl.u32 %v3650, 16
    %vm3656 = vc.u32 %v3648, %v3652
    %v3657 = vsel %vm3656, 1, 0
    %v3658 = vadd.s32 %v3648, %v3652
    %v3659 = vadd.s32 %v3651, %v3657
    %vm3660 = vc.u32 %v3658, %v3654
    %v3661 = vsel %vm3660, 1, 0
    %v3662 = vadd.s32 %v3658, %v3654
    %v3663 = vadd.s32 %v3659, %v3661
    %v3664 = vadd.s32 %v3663, %v3653
    %v3665 = vadd.s32 %v3664, %v3655
    %v3666 = vmul.u32 %v3621, %v3612
    %v3667 = vadd.s32 %v3643, %v3662
    %vm3668 = vc.u32 %v3643, %v3662
    %v3669 = vadd.s32 %v3665, 1
    %v3670 = vsel %vm3668, %v3669, %v3665
    %v3671 = vadd.s32 %v3666, %v3670
    %v3672 = vadd.s32 %v3671, 536870912
    %v3673 = vshrl.u32 %v3672, 30
    %v3674 = vshll.u32 %v3673, 30
    %v3675 = vsub.s32 %v3671, %v3674
    %vm3676 = vcmp.lt.s32.totalorder %v3675, 0
    %v3677 = vsub.s32 0, %v3675
    %v3678 = vsel %vm3676, %v3677, %v3675
    %v3679 = vclz %v3678
    %v3680 = vsub.s32 %v3679, 2
    %vm3681 = vcmp.gt.s32.totalorder 0, %v3680
    %v3682 = vsel %vm3681, 0, %v3680
    %v3683 = vsub.s32 32, %v3682
    %v3684 = vshll.u32 %v3675, %v3682
    %v3685 = vshrl.u32 %v3667, %v3683
    %v3686 = vor.u32 %v3684, %v3685
    %v3687 = vsub.s32 4294967266, %v3682
    %v3688 = vadd.s32 %v3687, 127
    %v3689 = vshll.u32 %v3688, 23
    %v3690 = vor.u32 4788187, %v3689
    %v3691 = vand.u32 2147483647, %v3690
    %v3693 = vcvt.s32.f32 %v3686
    %v3694 = vmul.f32 %v3693, %v3691
    %v3695 = vxor.u32 %v3694, 2147483648
    %v3696 = vsel %vm3575, %v3695, %v3694
    %v3697 = vsub.s32 4, %v3673
    %v3698 = vsel %vm3575, %v3697, %v3673
    %v3699 = vsel %vm3574, %v3128, %v3696
    %v3700 = vsel %vm3574, 0, %v3698
    %v3701 = vmul.f32 %v3699, %v3699
    %v3702 = vmul.f32 %v3701, -0.001358992
    %v3703 = vadd.f32 %v3702, 0.041655596
    %v3704 = vmul.f32 %v3701, %v3703
    %v3705 = vadd.f32 %v3704, -0.4999988
    %v3706 = vmul.f32 %v3701, %v3705
    %v3707 = vadd.f32 1.0, %v3706
    %v3708 = vmul.f32 %v3699, %v3699
    %v3709 = vmul.f32 %v3708, -0.00019511016
    %v3710 = vadd.f32 %v3709, 0.008332121
    %v3711 = vmul.f32 %v3708, %v3710
    %v3712 = vadd.f32 %v3711, -0.16666654
    %v3713 = vmul.f32 %v3708, %v3712
    %v3714 = vadd.f32 %v3713, 1.0
    %v3715 = vmul.f32 %v3714, %v3699
    %vm3716 = vweird.f32 %v3128
    %v3717 = vand.u32 %v3700, 3
    %vm3718 = vcmp.lt.s32.totalorder %v3717, 2
    %vm3719 = vcmp.eq.s32.totalorder %v3717, 0
    %v3720 = vxor.u32 %v3715, 2147483648
    %v3721 = vsel %vm3719, %v3707, %v3720
    %vm3722 = vcmp.eq.s32.totalorder %v3717, 2
    %v3723 = vxor.u32 %v3707, 2147483648
    %v3724 = vsel %vm3722, %v3723, %v3715
    %v3725 = vsel %vm3718, %v3721, %v3724
    %v3726 = vsel %vm3716, nan, %v3725
    %v3727 = vmul.f32 %v3565, %v3726
    %v3728 = vand.u32 2147483647, %v3128
    %vm3729 = vcmp.le.f32.partialorder %v3728, 0.7853982
    %vm3730 = vcmp.lt.s32.totalorder %v3128, 0
    %v3731 = vand.u32 %v3128, 2139095040
    %v3732 = vshrl.u32 %v3731, 23
    %v3733 = vsub.s32 %v3732, 127
    %v3734 = vand.u32 2147483647, %v3128
    %v3735 = vand.u32 %v3734, 8388607
    %v3736 = vor.u32 %v3735, 8388608
    %v3737 = vsub.s32 0, %v3736
    %v3738 = vadd.s32 %v3733, 1
    %vm3739 = vcmp.gt.s32.totalorder %v3738, 0
    %v3740 = vsel %vm3739, %v3738, 0
    %v3741 = vshrl.u32 %v3740, 5
    %v3742 = vand.u32 %v3740, 31
    %v3743 = vsub.s32 32, %v3742
    %v3744 = vshrl.u32 683565275, %v3743
    %v3745 = vshll.u32 683565275, %v3742
    %v3746 = vshrl.u32 2475754826, %v3743
    %v3747 = vor.u32 %v3745, %v3746
    %v3748 = vshll.u32 2475754826, %v3742
    %v3749 = vshrl.u32 2131351028, %v3743
    %v3750 = vor.u32 %v3748, %v3749
    %v3751 = vshll.u32 2131351028, %v3742
    %v3752 = vshrl.u32 2102212464, %v3743
    %v3753 = vor.u32 %v3751, %v3752
    %v3754 = vshll.u32 2102212464, %v3742
    %v3755 = vshrl.u32 920167782, %v3743
    %v3756 = vor.u32 %v3754, %v3755
    %v3757 = vshll.u32 920167782, %v3742
    %v3758 = vshrl.u32 1326507024, %v3743
    %v3759 = vor.u32 %v3757, %v3758
    %vm3760 = vcmp.lt.s32.totalorder %v3741, 1
    %vm3761 = vcmp.lt.s32.totalorder %v3741, 2
    %vm3762 = vcmp.lt.s32.totalorder %v3741, 3
    %vm3763 = vcmp.lt.s32.totalorder %v3741, 4
    %v3764 = vsel %vm3760, %v3744, %v3747
    %v3765 = vsel %vm3763, %v3753, 2102212464
    %v3766 = vsel %vm3762, %v3750, %v3765
    %v3767 = vsel %vm3761, %v3764, %v3766
    %v3768 = vsel %vm3760, %v3747, %v3750
    %v3769 = vsel %vm3763, %v3756, 920167782
    %v3770 = vsel %vm3762, %v3753, %v3769
    %v3771 = vsel %vm3761, %v3768, %v3770
    %v3772 = vsel %vm3760, %v3750, %v3753
    %v3773 = vsel %vm3763, %v3759, 1326507024
    %v3774 = vsel %vm3762, %v3756, %v3773
    %v3775 = vsel %vm3761, %v3772, %v3774
    %v3776 = vshll.u32 %v3736, 8
    %v3777 = vand.u32 %v3776, 65535
    %v3778 = vshrl.u32 %v3776, 16
    %v3779 = vand.u32 %v3775, 65535
    %v3780 = vshrl.u32 %v3775, 16
    %v3781 = vmul.u32 %v3777, %v3779
    %v3782 = vmul.u32 %v3777, %v3780
    %v3783 = vmul.u32 %v3778, %v3779
    %v3784 = vmul.u32 %v3778, %v3780
    %v3785 = vshll.u32 %v3782, 16
    %v3786 = vshrl.u32 %v3782, 16
    %v3787 = vshll.u32 %v3783, 16
    %v3788 = vshrl.u32 %v3783, 16
    %vm3789 = vc.u32 %v3781, %v3785
    %v3790 = vsel %vm3789, 1, 0
    %v3791 = vadd.s32 %v3781, %v3785
    %v3792 = vadd.s32 %v3784, %v3790
    %vm3793 = vc.u32 %v3791, %v3787
    %v3794 = vsel %vm3793, 1, 0
    %v3795 = vadd.s32 %v3791, %v3787
    %v3796 = vadd.s32 %v3792, %v3794
    %v3797 = vadd.s32 %v3796, %v3786
    %v3798 = vadd.s32 %v3797, %v3788
    %v3799 = vand.u32 %v3776, 65535
    %v3800 = vshrl.u32 %v3776, 16
    %v3801 = vand.u32 %v3771, 65535
    %v3802 = vshrl.u32 %v3771, 16
    %v3803 = vmul.u32 %v3799, %v3801
    %v3804 = vmul.u32 %v3799, %v3802
    %v3805 = vmul.u32 %v3800, %v3801
    %v3806 = vmul.u32 %v3800, %v3802
    %v3807 = vshll.u32 %v3804, 16
    %v3808 = vshrl.u32 %v3804, 16
    %v3809 = vshll.u32 %v3805, 16
    %v3810 = vshrl.u32 %v3805, 16
    %vm3811 = vc.u32 %v3803, %v3807
    %v3812 = vsel %vm3811, 1, 0
    %v3813 = vadd.s32 %v3803, %v3807
    %v3814 = vadd.s32 %v3806, %v3812
    %vm3815 = vc.u32 %v3813, %v3809
    %v3816 = vsel %vm3815, 1, 0
    %v3817 = vadd.s32 %v3813, %v3809
    %v3818 = vadd.s32 %v3814, %v3816
    %v3819 = vadd.s32 %v3818, %v3808
    %v3820 = vadd.s32 %v3819, %v3810
    %v3821 = vmul.u32 %v3776, %v3767
    %v3822 = vadd.s32 %v3798, %v3817
    %vm3823 = vc.u32 %v3798, %v3817
    %v3824 = vadd.s32 %v3820, 1
    %v3825 = vsel %vm3823, %v3824, %v3820
    %v3826 = vadd.s32 %v3821, %v3825
    %v3827 = vadd.s32 %v3826, 536870912
    %v3828 = vshrl.u32 %v3827, 30
    %v3829 = vshll.u32 %v3828, 30
    %v3830 = vsub.s32 %v3826, %v3829
    %vm3831 = vcmp.lt.s32.totalorder %v3830, 0
    %v3832 = vsub.s32 0, %v3830
    %v3833 = vsel %vm3831, %v3832, %v3830
    %v3834 = vclz %v3833
    %v3835 = vsub.s32 %v3834, 2
    %vm3836 = vcmp.gt.s32.totalorder 0, %v3835
    %v3837 = vsel %vm3836, 0, %v3835
    %v3838 = vsub.s32 32, %v3837
    %v3839 = vshll.u32 %v3830, %v3837
    %v3840 = vshrl.u32 %v3822, %v3838
    %v3841 = vor.u32 %v3839, %v3840
    %v3842 = vsub.s32 4294967266, %v3837
    %v3843 = vadd.s32 %v3842, 127
    %v3844 = vshll.u32 %v3843, 23
    %v3845 = vor.u32 4788187, %v3844
    %v3846 = vand.u32 2147483647, %v3845
    %v3848 = vcvt.s32.f32 %v3841
    %v3849 = vmul.f32 %v3848, %v3846
    %v3850 = vxor.u32 %v3849, 2147483648
    %v3851 = vsel %vm3730, %v3850, %v3849
    %v3852 = vsub.s32 4, %v3828
    %v3853 = vsel %vm3730, %v3852, %v3828
    %v3854 = vsel %vm3729, %v3128, %v3851
    %v3855 = vsel %vm3729, 0, %v3853
    %v3856 = vmul.f32 %v3854, %v3854
    %v3857 = vmul.f32 %v3856, -0.001358992
    %v3858 = vadd.f32 %v3857, 0.041655596
    %v3859 = vmul.f32 %v3856, %v3858
    %v3860 = vadd.f32 %v3859, -0.4999988
    %v3861 = vmul.f32 %v3856, %v3860
    %v3862 = vadd.f32 1.0, %v3861
    %v3863 = vmul.f32 %v3854, %v3854
    %v3864 = vmul.f32 %v3863, -0.00019511016
    %v3865 = vadd.f32 %v3864, 0.008332121
    %v3866 = vmul.f32 %v3863, %v3865
    %v3867 = vadd.f32 %v3866, -0.16666654
    %v3868 = vmul.f32 %v3863, %v3867
    %v3869 = vadd.f32 %v3868, 1.0
    %v3870 = vmul.f32 %v3869, %v3854
    %vm3871 = vweird.f32 %v3128
    %v3872 = vadd.s32 %v3855, 3
    %v3873 = vand.u32 %v3872, 3
    %vm3874 = vcmp.lt.s32.totalorder %v3873, 2
    %vm3875 = vcmp.eq.s32.totalorder %v3873, 0
    %v3876 = vxor.u32 %v3870, 2147483648
    %v3877 = vsel %vm3875, %v3862, %v3876
    %vm3878 = vcmp.eq.s32.totalorder %v3873, 2
    %v3879 = vxor.u32 %v3862, 2147483648
    %v3880 = vsel %vm3878, %v3879, %v3870
    %v3881 = vsel %vm3874, %v3877, %v3880
    %v3882 = vsel %vm3871, nan, %v3881
    %v3883 = vmul.f32 %v3568, %v3882
    %v3884 = vsub.f32 %v3727, %v3883
    %v3885 = vmul.f32 %v3884, %v3246
    %s3886 = scalar_lea.vmem %s0, 12
    %v3887 = vld [vmem:[%s3886] sm:$0xf]
    %v3888 = vpack.c.bf16 %v3887, %v3887
    %v3890 = vsel %vm104, %v3888, 0
    %3892 = vmatpush.bf16.msra.mxu0 0
    %3893 = vmatpush.bf16.msra.mxu0 0
    %3894 = vmatpush.bf16.msra.mxu0 0
    %3895 = vmatpush.bf16.msra.mxu0 0
    %3896 = vmatpush.bf16.msra.mxu0 0
    %3897 = vmatpush.bf16.msra.mxu0 0
    %3898 = vmatpush.bf16.msra.mxu0 %v101
    %3899 = vmatpush.bf16.msra.mxu0 %v100
    %3900 = vmatmul.bf16.gmra.mxu0 %v3890
    %v3901 = vpop.f32.mrf.mxu0
    %v3902 = vadd.f32 %v90, %v3901
    %v3903 = vpop.f32.mrf.mxu0
    %3904 = vdwg.mxu0
    %v3905 = vmax.f32 %v3902, 0.0
    %v3906 = vpack.c.bf16 %v3905, %v3905
    %v3908 = vsel %vm104, %v3906, 0
    %3910 = vmatpush.bf16.msra.mxu0 0
    %3911 = vmatpush.bf16.msra.mxu0 0
    %3912 = vmatpush.bf16.msra.mxu0 0
    %3913 = vmatpush.bf16.msra.mxu0 0
    %3914 = vmatpush.bf16.msra.mxu0 0
    %3915 = vmatpush.bf16.msra.mxu0 0
    %3916 = vmatpush.bf16.msra.mxu0 %v393
    %3917 = vmatpush.bf16.msra.mxu0 %v369
    %3918 = vmatmul.bf16.gmra.mxu0 %v3908
    %v3919 = vpop.f32.mrf.mxu0
    %v3920 = vadd.f32 %v177, %v3919
    %v3921 = vpop.f32.mrf.mxu0
    %3922 = vdwg.mxu0
    %3923 = vmatpush.bf16.msra.mxu0 0
    %3924 = vmatpush.bf16.msra.mxu0 0
    %3925 = vmatpush.bf16.msra.mxu0 0
    %3926 = vmatpush.bf16.msra.mxu0 0
    %3927 = vmatpush.bf16.msra.mxu0 0
    %3928 = vmatpush.bf16.msra.mxu0 0
    %3929 = vmatpush.bf16.msra.mxu0 %v394
    %3930 = vmatpush.bf16.msra.mxu0 %v370
    %3931 = vmatmul.bf16.gmra.mxu0 %v3908
    %v3932 = vpop.f32.mrf.mxu0
    %v3933 = vadd.f32 %v178, %v3932
    %v3934 = vpop.f32.mrf.mxu0
    %3935 = vdwg.mxu0
    %3936 = vmatpush.bf16.msra.mxu0 0
    %3937 = vmatpush.bf16.msra.mxu0 0
    %3938 = vmatpush.bf16.msra.mxu0 0
    %3939 = vmatpush.bf16.msra.mxu0 0
    %3940 = vmatpush.bf16.msra.mxu0 0
    %3941 = vmatpush.bf16.msra.mxu0 0
    %3942 = vmatpush.bf16.msra.mxu0 %v395
    %3943 = vmatpush.bf16.msra.mxu0 %v371
    %3944 = vmatmul.bf16.gmra.mxu0 %v3908
    %v3945 = vpop.f32.mrf.mxu0
    %v3946 = vadd.f32 %v179, %v3945
    %v3947 = vpop.f32.mrf.mxu0
    %3948 = vdwg.mxu0
    %3949 = vmatpush.bf16.msra.mxu0 0
    %3950 = vmatpush.bf16.msra.mxu0 0
    %3951 = vmatpush.bf16.msra.mxu0 0
    %3952 = vmatpush.bf16.msra.mxu0 0
    %3953 = vmatpush.bf16.msra.mxu0 0
    %3954 = vmatpush.bf16.msra.mxu0 0
    %3955 = vmatpush.bf16.msra.mxu0 %v396
    %3956 = vmatpush.bf16.msra.mxu0 %v372
    %3957 = vmatmul.bf16.gmra.mxu0 %v3908
    %v3958 = vpop.f32.mrf.mxu0
    %v3959 = vadd.f32 %v180, %v3958
    %v3960 = vpop.f32.mrf.mxu0
    %3961 = vdwg.mxu0
    %3962 = vmatpush.bf16.msra.mxu0 0
    %3963 = vmatpush.bf16.msra.mxu0 0
    %3964 = vmatpush.bf16.msra.mxu0 0
    %3965 = vmatpush.bf16.msra.mxu0 0
    %3966 = vmatpush.bf16.msra.mxu0 0
    %3967 = vmatpush.bf16.msra.mxu0 0
    %3968 = vmatpush.bf16.msra.mxu0 %v397
    %3969 = vmatpush.bf16.msra.mxu0 %v373
    %3970 = vmatmul.bf16.gmra.mxu0 %v3908
    %v3971 = vpop.f32.mrf.mxu0
    %v3972 = vadd.f32 %v181, %v3971
    %v3973 = vpop.f32.mrf.mxu0
    %3974 = vdwg.mxu0
    %3975 = vmatpush.bf16.msra.mxu0 0
    %3976 = vmatpush.bf16.msra.mxu0 0
    %3977 = vmatpush.bf16.msra.mxu0 0
    %3978 = vmatpush.bf16.msra.mxu0 0
    %3979 = vmatpush.bf16.msra.mxu0 0
    %3980 = vmatpush.bf16.msra.mxu0 0
    %3981 = vmatpush.bf16.msra.mxu0 %v398
    %3982 = vmatpush.bf16.msra.mxu0 %v374
    %3983 = vmatmul.bf16.gmra.mxu0 %v3908
    %v3984 = vpop.f32.mrf.mxu0
    %v3985 = vadd.f32 %v182, %v3984
    %v3986 = vpop.f32.mrf.mxu0
    %3987 = vdwg.mxu0
    %3988 = vmatpush.bf16.msra.mxu0 0
    %3989 = vmatpush.bf16.msra.mxu0 0
    %3990 = vmatpush.bf16.msra.mxu0 0
    %3991 = vmatpush.bf16.msra.mxu0 0
    %3992 = vmatpush.bf16.msra.mxu0 0
    %3993 = vmatpush.bf16.msra.mxu0 0
    %3994 = vmatpush.bf16.msra.mxu0 %v399
    %3995 = vmatpush.bf16.msra.mxu0 %v375
    %3996 = vmatmul.bf16.gmra.mxu0 %v3908
    %v3997 = vpop.f32.mrf.mxu0
    %v3998 = vadd.f32 %v183, %v3997
    %v3999 = vpop.f32.mrf.mxu0
    %4000 = vdwg.mxu0
    %4001 = vmatpush.bf16.msra.mxu0 0
    %4002 = vmatpush.bf16.msra.mxu0 0
    %4003 = vmatpush.bf16.msra.mxu0 0
    %4004 = vmatpush.bf16.msra.mxu0 0
    %4005 = vmatpush.bf16.msra.mxu0 0
    %4006 = vmatpush.bf16.msra.mxu0 0
    %4007 = vmatpush.bf16.msra.mxu0 %v400
    %4008 = vmatpush.bf16.msra.mxu0 %v376
    %4009 = vmatmul.bf16.gmra.mxu0 %v3908
    %v4010 = vpop.f32.mrf.mxu0
    %v4011 = vadd.f32 %v184, %v4010
    %v4012 = vpop.f32.mrf.mxu0
    %4013 = vdwg.mxu0
    %4014 = vmatpush.bf16.msra.mxu0 0
    %4015 = vmatpush.bf16.msra.mxu0 0
    %4016 = vmatpush.bf16.msra.mxu0 0
    %4017 = vmatpush.bf16.msra.mxu0 0
    %4018 = vmatpush.bf16.msra.mxu0 0
    %4019 = vmatpush.bf16.msra.mxu0 0
    %4020 = vmatpush.bf16.msra.mxu0 %v401
    %4021 = vmatpush.bf16.msra.mxu0 %v377
    %4022 = vmatmul.bf16.gmra.mxu0 %v3908
    %v4023 = vpop.f32.mrf.mxu0
    %v4024 = vadd.f32 %v185, %v4023
    %v4025 = vpop.f32.mrf.mxu0
    %4026 = vdwg.mxu0
    %4027 = vmatpush.bf16.msra.mxu0 0
    %4028 = vmatpush.bf16.msra.mxu0 0
    %4029 = vmatpush.bf16.msra.mxu0 0
    %4030 = vmatpush.bf16.msra.mxu0 0
    %4031 = vmatpush.bf16.msra.mxu0 0
    %4032 = vmatpush.bf16.msra.mxu0 0
    %4033 = vmatpush.bf16.msra.mxu0 %v402
    %4034 = vmatpush.bf16.msra.mxu0 %v378
    %4035 = vmatmul.bf16.gmra.mxu0 %v3908
    %v4036 = vpop.f32.mrf.mxu0
    %v4037 = vadd.f32 %v186, %v4036
    %v4038 = vpop.f32.mrf.mxu0
    %4039 = vdwg.mxu0
    %4040 = vmatpush.bf16.msra.mxu0 0
    %4041 = vmatpush.bf16.msra.mxu0 0
    %4042 = vmatpush.bf16.msra.mxu0 0
    %4043 = vmatpush.bf16.msra.mxu0 0
    %4044 = vmatpush.bf16.msra.mxu0 0
    %4045 = vmatpush.bf16.msra.mxu0 0
    %4046 = vmatpush.bf16.msra.mxu0 %v403
    %4047 = vmatpush.bf16.msra.mxu0 %v379
    %4048 = vmatmul.bf16.gmra.mxu0 %v3908
    %v4049 = vpop.f32.mrf.mxu0
    %v4050 = vadd.f32 %v187, %v4049
    %v4051 = vpop.f32.mrf.mxu0
    %4052 = vdwg.mxu0
    %4053 = vmatpush.bf16.msra.mxu0 0
    %4054 = vmatpush.bf16.msra.mxu0 0
    %4055 = vmatpush.bf16.msra.mxu0 0
    %4056 = vmatpush.bf16.msra.mxu0 0
    %4057 = vmatpush.bf16.msra.mxu0 0
    %4058 = vmatpush.bf16.msra.mxu0 0
    %4059 = vmatpush.bf16.msra.mxu0 %v404
    %4060 = vmatpush.bf16.msra.mxu0 %v380
    %4061 = vmatmul.bf16.gmra.mxu0 %v3908
    %v4062 = vpop.f32.mrf.mxu0
    %v4063 = vadd.f32 %v188, %v4062
    %v4064 = vpop.f32.mrf.mxu0
    %4065 = vdwg.mxu0
    %4066 = vmatpush.bf16.msra.mxu0 0
    %4067 = vmatpush.bf16.msra.mxu0 0
    %4068 = vmatpush.bf16.msra.mxu0 0
    %4069 = vmatpush.bf16.msra.mxu0 0
    %4070 = vmatpush.bf16.msra.mxu0 0
    %4071 = vmatpush.bf16.msra.mxu0 0
    %4072 = vmatpush.bf16.msra.mxu0 %v405
    %4073 = vmatpush.bf16.msra.mxu0 %v381
    %4074 = vmatmul.bf16.gmra.mxu0 %v3908
    %v4075 = vpop.f32.mrf.mxu0
    %v4076 = vadd.f32 %v189, %v4075
    %v4077 = vpop.f32.mrf.mxu0
    %4078 = vdwg.mxu0
    %4079 = vmatpush.bf16.msra.mxu0 0
    %4080 = vmatpush.bf16.msra.mxu0 0
    %4081 = vmatpush.bf16.msra.mxu0 0
    %4082 = vmatpush.bf16.msra.mxu0 0
    %4083 = vmatpush.bf16.msra.mxu0 0
    %4084 = vmatpush.bf16.msra.mxu0 0
    %4085 = vmatpush.bf16.msra.mxu0 %v406
    %4086 = vmatpush.bf16.msra.mxu0 %v382
    %4087 = vmatmul.bf16.gmra.mxu0 %v3908
    %v4088 = vpop.f32.mrf.mxu0
    %v4089 = vadd.f32 %v190, %v4088
    %v4090 = vpop.f32.mrf.mxu0
    %4091 = vdwg.mxu0
    %4092 = vmatpush.bf16.msra.mxu0 0
    %4093 = vmatpush.bf16.msra.mxu0 0
    %4094 = vmatpush.bf16.msra.mxu0 0
    %4095 = vmatpush.bf16.msra.mxu0 0
    %4096 = vmatpush.bf16.msra.mxu0 0
    %4097 = vmatpush.bf16.msra.mxu0 0
    %4098 = vmatpush.bf16.msra.mxu0 %v407
    %4099 = vmatpush.bf16.msra.mxu0 %v383
    %4100 = vmatmul.bf16.gmra.mxu0 %v3908
    %v4101 = vpop.f32.mrf.mxu0
    %v4102 = vadd.f32 %v191, %v4101
    %v4103 = vpop.f32.mrf.mxu0
    %4104 = vdwg.mxu0
    %4105 = vmatpush.bf16.msra.mxu0 0
    %4106 = vmatpush.bf16.msra.mxu0 0
    %4107 = vmatpush.bf16.msra.mxu0 0
    %4108 = vmatpush.bf16.msra.mxu0 0
    %4109 = vmatpush.bf16.msra.mxu0 0
    %4110 = vmatpush.bf16.msra.mxu0 0
    %4111 = vmatpush.bf16.msra.mxu0 %v408
    %4112 = vmatpush.bf16.msra.mxu0 %v384
    %4113 = vmatmul.bf16.gmra.mxu0 %v3908
    %v4114 = vpop.f32.mrf.mxu0
    %v4115 = vadd.f32 %v192, %v4114
    %v4116 = vpop.f32.mrf.mxu0
    %4117 = vdwg.mxu0
    %4118 = vmatpush.bf16.msra.mxu0 0
    %4119 = vmatpush.bf16.msra.mxu0 0
    %4120 = vmatpush.bf16.msra.mxu0 0
    %4121 = vmatpush.bf16.msra.mxu0 0
    %4122 = vmatpush.bf16.msra.mxu0 0
    %4123 = vmatpush.bf16.msra.mxu0 0
    %4124 = vmatpush.bf16.msra.mxu0 %v409
    %4125 = vmatpush.bf16.msra.mxu0 %v385
    %4126 = vmatmul.bf16.gmra.mxu0 %v3908
    %v4127 = vpop.f32.mrf.mxu0
    %v4128 = vadd.f32 %v193, %v4127
    %v4129 = vpop.f32.mrf.mxu0
    %4130 = vdwg.mxu0
    %4131 = vmatpush.bf16.msra.mxu0 0
    %4132 = vmatpush.bf16.msra.mxu0 0
    %4133 = vmatpush.bf16.msra.mxu0 0
    %4134 = vmatpush.bf16.msra.mxu0 0
    %4135 = vmatpush.bf16.msra.mxu0 0
    %4136 = vmatpush.bf16.msra.mxu0 0
    %4137 = vmatpush.bf16.msra.mxu0 %v410
    %4138 = vmatpush.bf16.msra.mxu0 %v386
    %4139 = vmatmul.bf16.gmra.mxu0 %v3908
    %v4140 = vpop.f32.mrf.mxu0
    %v4141 = vadd.f32 %v194, %v4140
    %v4142 = vpop.f32.mrf.mxu0
    %4143 = vdwg.mxu0
    %4144 = vmatpush.bf16.msra.mxu0 0
    %4145 = vmatpush.bf16.msra.mxu0 0
    %4146 = vmatpush.bf16.msra.mxu0 0
    %4147 = vmatpush.bf16.msra.mxu0 0
    %4148 = vmatpush.bf16.msra.mxu0 0
    %4149 = vmatpush.bf16.msra.mxu0 0
    %4150 = vmatpush.bf16.msra.mxu0 %v411
    %4151 = vmatpush.bf16.msra.mxu0 %v387
    %4152 = vmatmul.bf16.gmra.mxu0 %v3908
    %v4153 = vpop.f32.mrf.mxu0
    %v4154 = vadd.f32 %v195, %v4153
    %v4155 = vpop.f32.mrf.mxu0
    %4156 = vdwg.mxu0
    %4157 = vmatpush.bf16.msra.mxu0 0
    %4158 = vmatpush.bf16.msra.mxu0 0
    %4159 = vmatpush.bf16.msra.mxu0 0
    %4160 = vmatpush.bf16.msra.mxu0 0
    %4161 = vmatpush.bf16.msra.mxu0 0
    %4162 = vmatpush.bf16.msra.mxu0 0
    %4163 = vmatpush.bf16.msra.mxu0 %v412
    %4164 = vmatpush.bf16.msra.mxu0 %v388
    %4165 = vmatmul.bf16.gmra.mxu0 %v3908
    %v4166 = vpop.f32.mrf.mxu0
    %v4167 = vadd.f32 %v196, %v4166
    %v4168 = vpop.f32.mrf.mxu0
    %4169 = vdwg.mxu0
    %4170 = vmatpush.bf16.msra.mxu0 0
    %4171 = vmatpush.bf16.msra.mxu0 0
    %4172 = vmatpush.bf16.msra.mxu0 0
    %4173 = vmatpush.bf16.msra.mxu0 0
    %4174 = vmatpush.bf16.msra.mxu0 0
    %4175 = vmatpush.bf16.msra.mxu0 0
    %4176 = vmatpush.bf16.msra.mxu0 %v413
    %4177 = vmatpush.bf16.msra.mxu0 %v389
    %4178 = vmatmul.bf16.gmra.mxu0 %v3908
    %v4179 = vpop.f32.mrf.mxu0
    %v4180 = vadd.f32 %v197, %v4179
    %v4181 = vpop.f32.mrf.mxu0
    %4182 = vdwg.mxu0
    %4183 = vmatpush.bf16.msra.mxu0 0
    %4184 = vmatpush.bf16.msra.mxu0 0
    %4185 = vmatpush.bf16.msra.mxu0 0
    %4186 = vmatpush.bf16.msra.mxu0 0
    %4187 = vmatpush.bf16.msra.mxu0 0
    %4188 = vmatpush.bf16.msra.mxu0 0
    %4189 = vmatpush.bf16.msra.mxu0 %v414
    %4190 = vmatpush.bf16.msra.mxu0 %v390
    %4191 = vmatmul.bf16.gmra.mxu0 %v3908
    %v4192 = vpop.f32.mrf.mxu0
    %v4193 = vadd.f32 %v198, %v4192
    %v4194 = vpop.f32.mrf.mxu0
    %4195 = vdwg.mxu0
    %4196 = vmatpush.bf16.msra.mxu0 0
    %4197 = vmatpush.bf16.msra.mxu0 0
    %4198 = vmatpush.bf16.msra.mxu0 0
    %4199 = vmatpush.bf16.msra.mxu0 0
    %4200 = vmatpush.bf16.msra.mxu0 0
    %4201 = vmatpush.bf16.msra.mxu0 0
    %4202 = vmatpush.bf16.msra.mxu0 %v415
    %4203 = vmatpush.bf16.msra.mxu0 %v391
    %4204 = vmatmul.bf16.gmra.mxu0 %v3908
    %v4205 = vpop.f32.mrf.mxu0
    %v4206 = vadd.f32 %v199, %v4205
    %v4207 = vpop.f32.mrf.mxu0
    %4208 = vdwg.mxu0
    %4209 = vmatpush.bf16.msra.mxu0 0
    %4210 = vmatpush.bf16.msra.mxu0 0
    %4211 = vmatpush.bf16.msra.mxu0 0
    %4212 = vmatpush.bf16.msra.mxu0 0
    %4213 = vmatpush.bf16.msra.mxu0 0
    %4214 = vmatpush.bf16.msra.mxu0 0
    %4215 = vmatpush.bf16.msra.mxu0 %v416
    %4216 = vmatpush.bf16.msra.mxu0 %v392
    %4217 = vmatmul.bf16.gmra.mxu0 %v3908
    %v4218 = vpop.f32.mrf.mxu0
    %v4219 = vadd.f32 %v200, %v4218
    %v4220 = vpop.f32.mrf.mxu0
    %4221 = vdwg.mxu0
    %v4222 = vsel %vm780, %v3920, -inf
    %4223 = vmax.xlane.f32.xlu0 %v4222
    %v4224 = vpop.xlane.xlu0 %4223
    %v4225 = vsub.f32 %v3920, %v4224
    %v4226 = vmul.f32 %v4225, 1.442695
    %v4227 = vpow.pop %v4226
    %v4228 = vsel %vm780, %v4227, 0.0
    %4229 = vadd.xlane.f32.xlu0 %v4228
    %v4230 = vpop.xlane.xlu0 %4229
    %v4231 = vmul.f32 %v4230, 0.0625
    %v4232 = vrcp.pop %v4231
    %v4233 = vmul.f32 %v4227, %v4232
    %v4234 = vmul.f32 %v4233, %v4076
    %v4235 = vsel %vm780, %v3933, -inf
    %4236 = vmax.xlane.f32.xlu0 %v4235
    %v4237 = vpop.xlane.xlu0 %4236
    %v4238 = vsub.f32 %v3933, %v4237
    %v4239 = vmul.f32 %v4238, 1.442695
    %v4240 = vpow.pop %v4239
    %v4241 = vsel %vm780, %v4240, 0.0
    %4242 = vadd.xlane.f32.xlu0 %v4241
    %v4243 = vpop.xlane.xlu0 %4242
    %v4244 = vmul.f32 %v4243, 0.0625
    %v4245 = vrcp.pop %v4244
    %v4246 = vmul.f32 %v4240, %v4245
    %v4247 = vmul.f32 %v4246, %v4089
    %v4248 = vadd.f32 %v4234, %v4247
    %v4249 = vsel %vm780, %v3946, -inf
    %4250 = vmax.xlane.f32.xlu0 %v4249
    %v4251 = vpop.xlane.xlu0 %4250
    %v4252 = vsub.f32 %v3946, %v4251
    %v4253 = vmul.f32 %v4252, 1.442695
    %v4254 = vpow.pop %v4253
    %v4255 = vsel %vm780, %v4254, 0.0
    %4256 = vadd.xlane.f32.xlu0 %v4255
    %v4257 = vpop.xlane.xlu0 %4256
    %v4258 = vmul.f32 %v4257, 0.0625
    %v4259 = vrcp.pop %v4258
    %v4260 = vmul.f32 %v4254, %v4259
    %v4261 = vmul.f32 %v4260, %v4102
    %v4262 = vsel %vm780, %v3959, -inf
    %4263 = vmax.xlane.f32.xlu0 %v4262
    %v4264 = vpop.xlane.xlu0 %4263
    %v4265 = vsub.f32 %v3959, %v4264
    %v4266 = vmul.f32 %v4265, 1.442695
    %v4267 = vpow.pop %v4266
    %v4268 = vsel %vm780, %v4267, 0.0
    %4269 = vadd.xlane.f32.xlu0 %v4268
    %v4270 = vpop.xlane.xlu0 %4269
    %v4271 = vmul.f32 %v4270, 0.0625
    %v4272 = vrcp.pop %v4271
    %v4273 = vmul.f32 %v4267, %v4272
    %v4274 = vmul.f32 %v4273, %v4115
    %v4275 = vadd.f32 %v4261, %v4274
    %v4276 = vsel %vm780, %v3972, -inf
    %4277 = vmax.xlane.f32.xlu0 %v4276
    %v4278 = vpop.xlane.xlu0 %4277
    %v4279 = vsub.f32 %v3972, %v4278
    %v4280 = vmul.f32 %v4279, 1.442695
    %v4281 = vpow.pop %v4280
    %v4282 = vsel %vm780, %v4281, 0.0
    %4283 = vadd.xlane.f32.xlu0 %v4282
    %v4284 = vpop.xlane.xlu0 %4283
    %v4285 = vmul.f32 %v4284, 0.0625
    %v4286 = vrcp.pop %v4285
    %v4287 = vmul.f32 %v4281, %v4286
    %v4288 = vmul.f32 %v4287, %v4128
    %v4289 = vsel %vm780, %v3985, -inf
    %4290 = vmax.xlane.f32.xlu0 %v4289
    %v4291 = vpop.xlane.xlu0 %4290
    %v4292 = vsub.f32 %v3985, %v4291
    %v4293 = vmul.f32 %v4292, 1.442695
    %v4294 = vpow.pop %v4293
    %v4295 = vsel %vm780, %v4294, 0.0
    %4296 = vadd.xlane.f32.xlu0 %v4295
    %v4297 = vpop.xlane.xlu0 %4296
    %v4298 = vmul.f32 %v4297, 0.0625
    %v4299 = vrcp.pop %v4298
    %v4300 = vmul.f32 %v4294, %v4299
    %v4301 = vmul.f32 %v4300, %v4141
    %v4302 = vadd.f32 %v4288, %v4301
    %v4303 = vsel %vm780, %v3998, -inf
    %4304 = vmax.xlane.f32.xlu0 %v4303
    %v4305 = vpop.xlane.xlu0 %4304
    %v4306 = vsub.f32 %v3998, %v4305
    %v4307 = vmul.f32 %v4306, 1.442695
    %v4308 = vpow.pop %v4307
    %v4309 = vsel %vm780, %v4308, 0.0
    %4310 = vadd.xlane.f32.xlu0 %v4309
    %v4311 = vpop.xlane.xlu0 %4310
    %v4312 = vmul.f32 %v4311, 0.0625
    %v4313 = vrcp.pop %v4312
    %v4314 = vmul.f32 %v4308, %v4313
    %v4315 = vmul.f32 %v4314, %v4154
    %v4316 = vsel %vm780, %v4011, -inf
    %4317 = vmax.xlane.f32.xlu0 %v4316
    %v4318 = vpop.xlane.xlu0 %4317
    %v4319 = vsub.f32 %v4011, %v4318
    %v4320 = vmul.f32 %v4319, 1.442695
    %v4321 = vpow.pop %v4320
    %v4322 = vsel %vm780, %v4321, 0.0
    %4323 = vadd.xlane.f32.xlu0 %v4322
    %v4324 = vpop.xlane.xlu0 %4323
    %v4325 = vmul.f32 %v4324, 0.0625
    %v4326 = vrcp.pop %v4325
    %v4327 = vmul.f32 %v4321, %v4326
    %v4328 = vmul.f32 %v4327, %v4167
    %v4329 = vadd.f32 %v4315, %v4328
    %v4330 = vsel %vm780, %v4024, -inf
    %4331 = vmax.xlane.f32.xlu0 %v4330
    %v4332 = vpop.xlane.xlu0 %4331
    %v4333 = vsub.f32 %v4024, %v4332
    %v4334 = vmul.f32 %v4333, 1.442695
    %v4335 = vpow.pop %v4334
    %v4336 = vsel %vm780, %v4335, 0.0
    %4337 = vadd.xlane.f32.xlu0 %v4336
    %v4338 = vpop.xlane.xlu0 %4337
    %v4339 = vmul.f32 %v4338, 0.0625
    %v4340 = vrcp.pop %v4339
    %v4341 = vmul.f32 %v4335, %v4340
    %v4342 = vmul.f32 %v4341, %v4180
    %v4343 = vsel %vm780, %v4037, -inf
    %4344 = vmax.xlane.f32.xlu0 %v4343
    %v4345 = vpop.xlane.xlu0 %4344
    %v4346 = vsub.f32 %v4037, %v4345
    %v4347 = vmul.f32 %v4346, 1.442695
    %v4348 = vpow.pop %v4347
    %v4349 = vsel %vm780, %v4348, 0.0
    %4350 = vadd.xlane.f32.xlu0 %v4349
    %v4351 = vpop.xlane.xlu0 %4350
    %v4352 = vmul.f32 %v4351, 0.0625
    %v4353 = vrcp.pop %v4352
    %v4354 = vmul.f32 %v4348, %v4353
    %v4355 = vmul.f32 %v4354, %v4193
    %v4356 = vadd.f32 %v4342, %v4355
    %v4357 = vsel %vm780, %v4050, -inf
    %4358 = vmax.xlane.f32.xlu0 %v4357
    %v4359 = vpop.xlane.xlu0 %4358
    %v4360 = vsub.f32 %v4050, %v4359
    %v4361 = vmul.f32 %v4360, 1.442695
    %v4362 = vpow.pop %v4361
    %v4363 = vsel %vm780, %v4362, 0.0
    %4364 = vadd.xlane.f32.xlu0 %v4363
    %v4365 = vpop.xlane.xlu0 %4364
    %v4366 = vmul.f32 %v4365, 0.0625
    %v4367 = vrcp.pop %v4366
    %v4368 = vmul.f32 %v4362, %v4367
    %v4369 = vmul.f32 %v4368, %v4206
    %v4370 = vsel %vm780, %v4063, -inf
    %4371 = vmax.xlane.f32.xlu0 %v4370
    %v4372 = vpop.xlane.xlu0 %4371
    %v4373 = vsub.f32 %v4063, %v4372
    %v4374 = vmul.f32 %v4373, 1.442695
    %v4375 = vpow.pop %v4374
    %v4376 = vsel %vm780, %v4375, 0.0
    %4377 = vadd.xlane.f32.xlu0 %v4376
    %v4378 = vpop.xlane.xlu0 %4377
    %v4379 = vmul.f32 %v4378, 0.0625
    %v4380 = vrcp.pop %v4379
    %v4381 = vmul.f32 %v4375, %v4380
    %v4382 = vmul.f32 %v4381, %v4219
    %v4383 = vadd.f32 %v4369, %v4382
    %v4384 = vmax.f32 %v4302, 0.0
    %v4385 = vand.u32 2147483647, %v4302
    %v4386 = vsub.f32 0.0, %v4385
    %v4387 = vmul.f32 %v4386, 1.442695
    %v4388 = vpow.pop %v4387
    %v4389 = vadd.f32 %v4388, 1.0
    %v4390 = vlog2.pop %v4389
    %v4391 = vmul.f32 %v4390, 0.6931472
    %v4392 = vadd.f32 %v4384, %v4391
    %v4393 = vmul.f32 %v4248, %v4392
    %v4394 = vmax.f32 %v4383, 0.0
    %v4395 = vsub.f32 0.0, %v4394
    %v4396 = vmul.f32 %v4395, 1.442695
    %v4397 = vpow.pop %v4396
    %v4398 = vand.u32 2147483647, %v4356
    %vm4399 = vcmp.le.f32.partialorder %v4398, 0.7853982
    %vm4400 = vcmp.lt.s32.totalorder %v4356, 0
    %v4401 = vand.u32 %v4356, 2139095040
    %v4402 = vshrl.u32 %v4401, 23
    %v4403 = vsub.s32 %v4402, 127
    %v4404 = vand.u32 2147483647, %v4356
    %v4405 = vand.u32 %v4404, 8388607
    %v4406 = vor.u32 %v4405, 8388608
    %v4407 = vsub.s32 0, %v4406
    %v4408 = vadd.s32 %v4403, 1
    %vm4409 = vcmp.gt.s32.totalorder %v4408, 0
    %v4410 = vsel %vm4409, %v4408, 0
    %v4411 = vshrl.u32 %v4410, 5
    %v4412 = vand.u32 %v4410, 31
    %v4413 = vsub.s32 32, %v4412
    %v4414 = vshrl.u32 683565275, %v4413
    %v4415 = vshll.u32 683565275, %v4412
    %v4416 = vshrl.u32 2475754826, %v4413
    %v4417 = vor.u32 %v4415, %v4416
    %v4418 = vshll.u32 2475754826, %v4412
    %v4419 = vshrl.u32 2131351028, %v4413
    %v4420 = vor.u32 %v4418, %v4419
    %v4421 = vshll.u32 2131351028, %v4412
    %v4422 = vshrl.u32 2102212464, %v4413
    %v4423 = vor.u32 %v4421, %v4422
    %v4424 = vshll.u32 2102212464, %v4412
    %v4425 = vshrl.u32 920167782, %v4413
    %v4426 = vor.u32 %v4424, %v4425
    %v4427 = vshll.u32 920167782, %v4412
    %v4428 = vshrl.u32 1326507024, %v4413
    %v4429 = vor.u32 %v4427, %v4428
    %vm4430 = vcmp.lt.s32.totalorder %v4411, 1
    %vm4431 = vcmp.lt.s32.totalorder %v4411, 2
    %vm4432 = vcmp.lt.s32.totalorder %v4411, 3
    %vm4433 = vcmp.lt.s32.totalorder %v4411, 4
    %v4434 = vsel %vm4430, %v4414, %v4417
    %v4435 = vsel %vm4433, %v4423, 2102212464
    %v4436 = vsel %vm4432, %v4420, %v4435
    %v4437 = vsel %vm4431, %v4434, %v4436
    %v4438 = vsel %vm4430, %v4417, %v4420
    %v4439 = vsel %vm4433, %v4426, 920167782
    %v4440 = vsel %vm4432, %v4423, %v4439
    %v4441 = vsel %vm4431, %v4438, %v4440
    %v4442 = vsel %vm4430, %v4420, %v4423
    %v4443 = vsel %vm4433, %v4429, 1326507024
    %v4444 = vsel %vm4432, %v4426, %v4443
    %v4445 = vsel %vm4431, %v4442, %v4444
    %v4446 = vshll.u32 %v4406, 8
    %v4447 = vand.u32 %v4446, 65535
    %v4448 = vshrl.u32 %v4446, 16
    %v4449 = vand.u32 %v4445, 65535
    %v4450 = vshrl.u32 %v4445, 16
    %v4451 = vmul.u32 %v4447, %v4449
    %v4452 = vmul.u32 %v4447, %v4450
    %v4453 = vmul.u32 %v4448, %v4449
    %v4454 = vmul.u32 %v4448, %v4450
    %v4455 = vshll.u32 %v4452, 16
    %v4456 = vshrl.u32 %v4452, 16
    %v4457 = vshll.u32 %v4453, 16
    %v4458 = vshrl.u32 %v4453, 16
    %vm4459 = vc.u32 %v4451, %v4455
    %v4460 = vsel %vm4459, 1, 0
    %v4461 = vadd.s32 %v4451, %v4455
    %v4462 = vadd.s32 %v4454, %v4460
    %vm4463 = vc.u32 %v4461, %v4457
    %v4464 = vsel %vm4463, 1, 0
    %v4465 = vadd.s32 %v4461, %v4457
    %v4466 = vadd.s32 %v4462, %v4464
    %v4467 = vadd.s32 %v4466, %v4456
    %v4468 = vadd.s32 %v4467, %v4458
    %v4469 = vand.u32 %v4446, 65535
    %v4470 = vshrl.u32 %v4446, 16
    %v4471 = vand.u32 %v4441, 65535
    %v4472 = vshrl.u32 %v4441, 16
    %v4473 = vmul.u32 %v4469, %v4471
    %v4474 = vmul.u32 %v4469, %v4472
    %v4475 = vmul.u32 %v4470, %v4471
    %v4476 = vmul.u32 %v4470, %v4472
    %v4477 = vshll.u32 %v4474, 16
    %v4478 = vshrl.u32 %v4474, 16
    %v4479 = vshll.u32 %v4475, 16
    %v4480 = vshrl.u32 %v4475, 16
    %vm4481 = vc.u32 %v4473, %v4477
    %v4482 = vsel %vm4481, 1, 0
    %v4483 = vadd.s32 %v4473, %v4477
    %v4484 = vadd.s32 %v4476, %v4482
    %vm4485 = vc.u32 %v4483, %v4479
    %v4486 = vsel %vm4485, 1, 0
    %v4487 = vadd.s32 %v4483, %v4479
    %v4488 = vadd.s32 %v4484, %v4486
    %v4489 = vadd.s32 %v4488, %v4478
    %v4490 = vadd.s32 %v4489, %v4480
    %v4491 = vmul.u32 %v4446, %v4437
    %v4492 = vadd.s32 %v4468, %v4487
    %vm4493 = vc.u32 %v4468, %v4487
    %v4494 = vadd.s32 %v4490, 1
    %v4495 = vsel %vm4493, %v4494, %v4490
    %v4496 = vadd.s32 %v4491, %v4495
    %v4497 = vadd.s32 %v4496, 536870912
    %v4498 = vshrl.u32 %v4497, 30
    %v4499 = vshll.u32 %v4498, 30
    %v4500 = vsub.s32 %v4496, %v4499
    %vm4501 = vcmp.lt.s32.totalorder %v4500, 0
    %v4502 = vsub.s32 0, %v4500
    %v4503 = vsel %vm4501, %v4502, %v4500
    %v4504 = vclz %v4503
    %v4505 = vsub.s32 %v4504, 2
    %vm4506 = vcmp.gt.s32.totalorder 0, %v4505
    %v4507 = vsel %vm4506, 0, %v4505
    %v4508 = vsub.s32 32, %v4507
    %v4509 = vshll.u32 %v4500, %v4507
    %v4510 = vshrl.u32 %v4492, %v4508
    %v4511 = vor.u32 %v4509, %v4510
    %v4512 = vsub.s32 4294967266, %v4507
    %v4513 = vadd.s32 %v4512, 127
    %v4514 = vshll.u32 %v4513, 23
    %v4515 = vor.u32 4788187, %v4514
    %v4516 = vand.u32 2147483647, %v4515
    %v4518 = vcvt.s32.f32 %v4511
    %v4519 = vmul.f32 %v4518, %v4516
    %v4520 = vxor.u32 %v4519, 2147483648
    %v4521 = vsel %vm4400, %v4520, %v4519
    %v4522 = vsub.s32 4, %v4498
    %v4523 = vsel %vm4400, %v4522, %v4498
    %v4524 = vsel %vm4399, %v4356, %v4521
    %v4525 = vsel %vm4399, 0, %v4523
    %v4526 = vmul.f32 %v4524, %v4524
    %v4527 = vmul.f32 %v4526, -0.001358992
    %v4528 = vadd.f32 %v4527, 0.041655596
    %v4529 = vmul.f32 %v4526, %v4528
    %v4530 = vadd.f32 %v4529, -0.4999988
    %v4531 = vmul.f32 %v4526, %v4530
    %v4532 = vadd.f32 1.0, %v4531
    %v4533 = vmul.f32 %v4524, %v4524
    %v4534 = vmul.f32 %v4533, -0.00019511016
    %v4535 = vadd.f32 %v4534, 0.008332121
    %v4536 = vmul.f32 %v4533, %v4535
    %v4537 = vadd.f32 %v4536, -0.16666654
    %v4538 = vmul.f32 %v4533, %v4537
    %v4539 = vadd.f32 %v4538, 1.0
    %v4540 = vmul.f32 %v4539, %v4524
    %vm4541 = vweird.f32 %v4356
    %v4542 = vand.u32 %v4525, 3
    %vm4543 = vcmp.lt.s32.totalorder %v4542, 2
    %vm4544 = vcmp.eq.s32.totalorder %v4542, 0
    %v4545 = vxor.u32 %v4540, 2147483648
    %v4546 = vsel %vm4544, %v4532, %v4545
    %vm4547 = vcmp.eq.s32.totalorder %v4542, 2
    %v4548 = vxor.u32 %v4532, 2147483648
    %v4549 = vsel %vm4547, %v4548, %v4540
    %v4550 = vsel %vm4543, %v4546, %v4549
    %v4551 = vsel %vm4541, nan, %v4550
    %v4552 = vmul.f32 %v4397, %v4551
    %v4553 = vand.u32 2147483647, %v4356
    %vm4554 = vcmp.le.f32.partialorder %v4553, 0.7853982
    %vm4555 = vcmp.lt.s32.totalorder %v4356, 0
    %v4556 = vand.u32 %v4356, 2139095040
    %v4557 = vshrl.u32 %v4556, 23
    %v4558 = vsub.s32 %v4557, 127
    %v4559 = vand.u32 2147483647, %v4356
    %v4560 = vand.u32 %v4559, 8388607
    %v4561 = vor.u32 %v4560, 8388608
    %v4562 = vsub.s32 0, %v4561
    %v4563 = vadd.s32 %v4558, 1
    %vm4564 = vcmp.gt.s32.totalorder %v4563, 0
    %v4565 = vsel %vm4564, %v4563, 0
    %v4566 = vshrl.u32 %v4565, 5
    %v4567 = vand.u32 %v4565, 31
    %v4568 = vsub.s32 32, %v4567
    %v4569 = vshrl.u32 683565275, %v4568
    %v4570 = vshll.u32 683565275, %v4567
    %v4571 = vshrl.u32 2475754826, %v4568
    %v4572 = vor.u32 %v4570, %v4571
    %v4573 = vshll.u32 2475754826, %v4567
    %v4574 = vshrl.u32 2131351028, %v4568
    %v4575 = vor.u32 %v4573, %v4574
    %v4576 = vshll.u32 2131351028, %v4567
    %v4577 = vshrl.u32 2102212464, %v4568
    %v4578 = vor.u32 %v4576, %v4577
    %v4579 = vshll.u32 2102212464, %v4567
    %v4580 = vshrl.u32 920167782, %v4568
    %v4581 = vor.u32 %v4579, %v4580
    %v4582 = vshll.u32 920167782, %v4567
    %v4583 = vshrl.u32 1326507024, %v4568
    %v4584 = vor.u32 %v4582, %v4583
    %vm4585 = vcmp.lt.s32.totalorder %v4566, 1
    %vm4586 = vcmp.lt.s32.totalorder %v4566, 2
    %vm4587 = vcmp.lt.s32.totalorder %v4566, 3
    %vm4588 = vcmp.lt.s32.totalorder %v4566, 4
    %v4589 = vsel %vm4585, %v4569, %v4572
    %v4590 = vsel %vm4588, %v4578, 2102212464
    %v4591 = vsel %vm4587, %v4575, %v4590
    %v4592 = vsel %vm4586, %v4589, %v4591
    %v4593 = vsel %vm4585, %v4572, %v4575
    %v4594 = vsel %vm4588, %v4581, 920167782
    %v4595 = vsel %vm4587, %v4578, %v4594
    %v4596 = vsel %vm4586, %v4593, %v4595
    %v4597 = vsel %vm4585, %v4575, %v4578
    %v4598 = vsel %vm4588, %v4584, 1326507024
    %v4599 = vsel %vm4587, %v4581, %v4598
    %v4600 = vsel %vm4586, %v4597, %v4599
    %v4601 = vshll.u32 %v4561, 8
    %v4602 = vand.u32 %v4601, 65535
    %v4603 = vshrl.u32 %v4601, 16
    %v4604 = vand.u32 %v4600, 65535
    %v4605 = vshrl.u32 %v4600, 16
    %v4606 = vmul.u32 %v4602, %v4604
    %v4607 = vmul.u32 %v4602, %v4605
    %v4608 = vmul.u32 %v4603, %v4604
    %v4609 = vmul.u32 %v4603, %v4605
    %v4610 = vshll.u32 %v4607, 16
    %v4611 = vshrl.u32 %v4607, 16
    %v4612 = vshll.u32 %v4608, 16
    %v4613 = vshrl.u32 %v4608, 16
    %vm4614 = vc.u32 %v4606, %v4610
    %v4615 = vsel %vm4614, 1, 0
    %v4616 = vadd.s32 %v4606, %v4610
    %v4617 = vadd.s32 %v4609, %v4615
    %vm4618 = vc.u32 %v4616, %v4612
    %v4619 = vsel %vm4618, 1, 0
    %v4620 = vadd.s32 %v4616, %v4612
    %v4621 = vadd.s32 %v4617, %v4619
    %v4622 = vadd.s32 %v4621, %v4611
    %v4623 = vadd.s32 %v4622, %v4613
    %v4624 = vand.u32 %v4601, 65535
    %v4625 = vshrl.u32 %v4601, 16
    %v4626 = vand.u32 %v4596, 65535
    %v4627 = vshrl.u32 %v4596, 16
    %v4628 = vmul.u32 %v4624, %v4626
    %v4629 = vmul.u32 %v4624, %v4627
    %v4630 = vmul.u32 %v4625, %v4626
    %v4631 = vmul.u32 %v4625, %v4627
    %v4632 = vshll.u32 %v4629, 16
    %v4633 = vshrl.u32 %v4629, 16
    %v4634 = vshll.u32 %v4630, 16
    %v4635 = vshrl.u32 %v4630, 16
    %vm4636 = vc.u32 %v4628, %v4632
    %v4637 = vsel %vm4636, 1, 0
    %v4638 = vadd.s32 %v4628, %v4632
    %v4639 = vadd.s32 %v4631, %v4637
    %vm4640 = vc.u32 %v4638, %v4634
    %v4641 = vsel %vm4640, 1, 0
    %v4642 = vadd.s32 %v4638, %v4634
    %v4643 = vadd.s32 %v4639, %v4641
    %v4644 = vadd.s32 %v4643, %v4633
    %v4645 = vadd.s32 %v4644, %v4635
    %v4646 = vmul.u32 %v4601, %v4592
    %v4647 = vadd.s32 %v4623, %v4642
    %vm4648 = vc.u32 %v4623, %v4642
    %v4649 = vadd.s32 %v4645, 1
    %v4650 = vsel %vm4648, %v4649, %v4645
    %v4651 = vadd.s32 %v4646, %v4650
    %v4652 = vadd.s32 %v4651, 536870912
    %v4653 = vshrl.u32 %v4652, 30
    %v4654 = vshll.u32 %v4653, 30
    %v4655 = vsub.s32 %v4651, %v4654
    %vm4656 = vcmp.lt.s32.totalorder %v4655, 0
    %v4657 = vsub.s32 0, %v4655
    %v4658 = vsel %vm4656, %v4657, %v4655
    %v4659 = vclz %v4658
    %v4660 = vsub.s32 %v4659, 2
    %vm4661 = vcmp.gt.s32.totalorder 0, %v4660
    %v4662 = vsel %vm4661, 0, %v4660
    %v4663 = vsub.s32 32, %v4662
    %v4664 = vshll.u32 %v4655, %v4662
    %v4665 = vshrl.u32 %v4647, %v4663
    %v4666 = vor.u32 %v4664, %v4665
    %v4667 = vsub.s32 4294967266, %v4662
    %v4668 = vadd.s32 %v4667, 127
    %v4669 = vshll.u32 %v4668, 23
    %v4670 = vor.u32 4788187, %v4669
    %v4671 = vand.u32 2147483647, %v4670
    %v4673 = vcvt.s32.f32 %v4666
    %v4674 = vmul.f32 %v4673, %v4671
    %v4675 = vxor.u32 %v4674, 2147483648
    %v4676 = vsel %vm4555, %v4675, %v4674
    %v4677 = vsub.s32 4, %v4653
    %v4678 = vsel %vm4555, %v4677, %v4653
    %v4679 = vsel %vm4554, %v4356, %v4676
    %v4680 = vsel %vm4554, 0, %v4678
    %v4681 = vmul.f32 %v4679, %v4679
    %v4682 = vmul.f32 %v4681, -0.001358992
    %v4683 = vadd.f32 %v4682, 0.041655596
    %v4684 = vmul.f32 %v4681, %v4683
    %v4685 = vadd.f32 %v4684, -0.4999988
    %v4686 = vmul.f32 %v4681, %v4685
    %v4687 = vadd.f32 1.0, %v4686
    %v4688 = vmul.f32 %v4679, %v4679
    %v4689 = vmul.f32 %v4688, -0.00019511016
    %v4690 = vadd.f32 %v4689, 0.008332121
    %v4691 = vmul.f32 %v4688, %v4690
    %v4692 = vadd.f32 %v4691, -0.16666654
    %v4693 = vmul.f32 %v4688, %v4692
    %v4694 = vadd.f32 %v4693, 1.0
    %v4695 = vmul.f32 %v4694, %v4679
    %vm4696 = vweird.f32 %v4356
    %v4697 = vadd.s32 %v4680, 3
    %v4698 = vand.u32 %v4697, 3
    %vm4699 = vcmp.lt.s32.totalorder %v4698, 2
    %vm4700 = vcmp.eq.s32.totalorder %v4698, 0
    %v4701 = vxor.u32 %v4695, 2147483648
    %v4702 = vsel %vm4700, %v4687, %v4701
    %vm4703 = vcmp.eq.s32.totalorder %v4698, 2
    %v4704 = vxor.u32 %v4687, 2147483648
    %v4705 = vsel %vm4703, %v4704, %v4695
    %v4706 = vsel %vm4699, %v4702, %v4705
    %v4707 = vsel %vm4696, nan, %v4706
    %v4708 = vmul.f32 %v4397, %v4707
    %v4709 = vmul.f32 %v4552, %v3565
    %v4710 = vmul.f32 %v4708, %v3568
    %v4711 = vsub.f32 %v4709, %v4710
    %v4712 = vadd.f32 %v4711, %v4329
    %v4713 = vmul.f32 %v4552, %v3568
    %v4714 = vmul.f32 %v4708, %v3565
    %v4715 = vadd.f32 %v4713, %v4714
    %v4716 = vadd.f32 %v3569, %v4394
    %v4717 = vsub.f32 %v4716, 70.42879
    %v4718 = vmax.f32 %v4717, 0.0
    %v4719 = vadd.f32 %v3572, %v4718
    %v4720 = vand.u32 2147483647, %v4275
    %vm4721 = vcmp.le.f32.partialorder %v4720, 0.7853982
    %vm4722 = vcmp.lt.s32.totalorder %v4275, 0
    %v4723 = vand.u32 %v4275, 2139095040
    %v4724 = vshrl.u32 %v4723, 23
    %v4725 = vsub.s32 %v4724, 127
    %v4726 = vand.u32 2147483647, %v4275
    %v4727 = vand.u32 %v4726, 8388607
    %v4728 = vor.u32 %v4727, 8388608
    %v4729 = vsub.s32 0, %v4728
    %v4730 = vadd.s32 %v4725, 1
    %vm4731 = vcmp.gt.s32.totalorder %v4730, 0
    %v4732 = vsel %vm4731, %v4730, 0
    %v4733 = vshrl.u32 %v4732, 5
    %v4734 = vand.u32 %v4732, 31
    %v4735 = vsub.s32 32, %v4734
    %v4736 = vshrl.u32 683565275, %v4735
    %v4737 = vshll.u32 683565275, %v4734
    %v4738 = vshrl.u32 2475754826, %v4735
    %v4739 = vor.u32 %v4737, %v4738
    %v4740 = vshll.u32 2475754826, %v4734
    %v4741 = vshrl.u32 2131351028, %v4735
    %v4742 = vor.u32 %v4740, %v4741
    %v4743 = vshll.u32 2131351028, %v4734
    %v4744 = vshrl.u32 2102212464, %v4735
    %v4745 = vor.u32 %v4743, %v4744
    %v4746 = vshll.u32 2102212464, %v4734
    %v4747 = vshrl.u32 920167782, %v4735
    %v4748 = vor.u32 %v4746, %v4747
    %v4749 = vshll.u32 920167782, %v4734
    %v4750 = vshrl.u32 1326507024, %v4735
    %v4751 = vor.u32 %v4749, %v4750
    %vm4752 = vcmp.lt.s32.totalorder %v4733, 1
    %vm4753 = vcmp.lt.s32.totalorder %v4733, 2
    %vm4754 = vcmp.lt.s32.totalorder %v4733, 3
    %vm4755 = vcmp.lt.s32.totalorder %v4733, 4
    %v4756 = vsel %vm4752, %v4736, %v4739
    %v4757 = vsel %vm4755, %v4745, 2102212464
    %v4758 = vsel %vm4754, %v4742, %v4757
    %v4759 = vsel %vm4753, %v4756, %v4758
    %v4760 = vsel %vm4752, %v4739, %v4742
    %v4761 = vsel %vm4755, %v4748, 920167782
    %v4762 = vsel %vm4754, %v4745, %v4761
    %v4763 = vsel %vm4753, %v4760, %v4762
    %v4764 = vsel %vm4752, %v4742, %v4745
    %v4765 = vsel %vm4755, %v4751, 1326507024
    %v4766 = vsel %vm4754, %v4748, %v4765
    %v4767 = vsel %vm4753, %v4764, %v4766
    %v4768 = vshll.u32 %v4728, 8
    %v4769 = vand.u32 %v4768, 65535
    %v4770 = vshrl.u32 %v4768, 16
    %v4771 = vand.u32 %v4767, 65535
    %v4772 = vshrl.u32 %v4767, 16
    %v4773 = vmul.u32 %v4769, %v4771
    %v4774 = vmul.u32 %v4769, %v4772
    %v4775 = vmul.u32 %v4770, %v4771
    %v4776 = vmul.u32 %v4770, %v4772
    %v4777 = vshll.u32 %v4774, 16
    %v4778 = vshrl.u32 %v4774, 16
    %v4779 = vshll.u32 %v4775, 16
    %v4780 = vshrl.u32 %v4775, 16
    %vm4781 = vc.u32 %v4773, %v4777
    %v4782 = vsel %vm4781, 1, 0
    %v4783 = vadd.s32 %v4773, %v4777
    %v4784 = vadd.s32 %v4776, %v4782
    %vm4785 = vc.u32 %v4783, %v4779
    %v4786 = vsel %vm4785, 1, 0
    %v4787 = vadd.s32 %v4783, %v4779
    %v4788 = vadd.s32 %v4784, %v4786
    %v4789 = vadd.s32 %v4788, %v4778
    %v4790 = vadd.s32 %v4789, %v4780
    %v4791 = vand.u32 %v4768, 65535
    %v4792 = vshrl.u32 %v4768, 16
    %v4793 = vand.u32 %v4763, 65535
    %v4794 = vshrl.u32 %v4763, 16
    %v4795 = vmul.u32 %v4791, %v4793
    %v4796 = vmul.u32 %v4791, %v4794
    %v4797 = vmul.u32 %v4792, %v4793
    %v4798 = vmul.u32 %v4792, %v4794
    %v4799 = vshll.u32 %v4796, 16
    %v4800 = vshrl.u32 %v4796, 16
    %v4801 = vshll.u32 %v4797, 16
    %v4802 = vshrl.u32 %v4797, 16
    %vm4803 = vc.u32 %v4795, %v4799
    %v4804 = vsel %vm4803, 1, 0
    %v4805 = vadd.s32 %v4795, %v4799
    %v4806 = vadd.s32 %v4798, %v4804
    %vm4807 = vc.u32 %v4805, %v4801
    %v4808 = vsel %vm4807, 1, 0
    %v4809 = vadd.s32 %v4805, %v4801
    %v4810 = vadd.s32 %v4806, %v4808
    %v4811 = vadd.s32 %v4810, %v4800
    %v4812 = vadd.s32 %v4811, %v4802
    %v4813 = vmul.u32 %v4768, %v4759
    %v4814 = vadd.s32 %v4790, %v4809
    %vm4815 = vc.u32 %v4790, %v4809
    %v4816 = vadd.s32 %v4812, 1
    %v4817 = vsel %vm4815, %v4816, %v4812
    %v4818 = vadd.s32 %v4813, %v4817
    %v4819 = vadd.s32 %v4818, 536870912
    %v4820 = vshrl.u32 %v4819, 30
    %v4821 = vshll.u32 %v4820, 30
    %v4822 = vsub.s32 %v4818, %v4821
    %vm4823 = vcmp.lt.s32.totalorder %v4822, 0
    %v4824 = vsub.s32 0, %v4822
    %v4825 = vsel %vm4823, %v4824, %v4822
    %v4826 = vclz %v4825
    %v4827 = vsub.s32 %v4826, 2
    %vm4828 = vcmp.gt.s32.totalorder 0, %v4827
    %v4829 = vsel %vm4828, 0, %v4827
    %v4830 = vsub.s32 32, %v4829
    %v4831 = vshll.u32 %v4822, %v4829
    %v4832 = vshrl.u32 %v4814, %v4830
    %v4833 = vor.u32 %v4831, %v4832
    %v4834 = vsub.s32 4294967266, %v4829
    %v4835 = vadd.s32 %v4834, 127
    %v4836 = vshll.u32 %v4835, 23
    %v4837 = vor.u32 4788187, %v4836
    %v4838 = vand.u32 2147483647, %v4837
    %v4840 = vcvt.s32.f32 %v4833
    %v4841 = vmul.f32 %v4840, %v4838
    %v4842 = vxor.u32 %v4841, 2147483648
    %v4843 = vsel %vm4722, %v4842, %v4841
    %v4844 = vsub.s32 4, %v4820
    %v4845 = vsel %vm4722, %v4844, %v4820
    %v4846 = vsel %vm4721, %v4275, %v4843
    %v4847 = vsel %vm4721, 0, %v4845
    %v4848 = vmul.f32 %v4846, %v4846
    %v4849 = vmul.f32 %v4848, -0.001358992
    %v4850 = vadd.f32 %v4849, 0.041655596
    %v4851 = vmul.f32 %v4848, %v4850
    %v4852 = vadd.f32 %v4851, -0.4999988
    %v4853 = vmul.f32 %v4848, %v4852
    %v4854 = vadd.f32 1.0, %v4853
    %v4855 = vmul.f32 %v4846, %v4846
    %v4856 = vmul.f32 %v4855, -0.00019511016
    %v4857 = vadd.f32 %v4856, 0.008332121
    %v4858 = vmul.f32 %v4855, %v4857
    %v4859 = vadd.f32 %v4858, -0.16666654
    %v4860 = vmul.f32 %v4855, %v4859
    %v4861 = vadd.f32 %v4860, 1.0
    %v4862 = vmul.f32 %v4861, %v4846
    %vm4863 = vweird.f32 %v4275
    %v4864 = vand.u32 %v4847, 3
    %vm4865 = vcmp.lt.s32.totalorder %v4864, 2
    %vm4866 = vcmp.eq.s32.totalorder %v4864, 0
    %v4867 = vxor.u32 %v4862, 2147483648
    %v4868 = vsel %vm4866, %v4854, %v4867
    %vm4869 = vcmp.eq.s32.totalorder %v4864, 2
    %v4870 = vxor.u32 %v4854, 2147483648
    %v4871 = vsel %vm4869, %v4870, %v4862
    %v4872 = vsel %vm4865, %v4868, %v4871
    %v4873 = vsel %vm4863, nan, %v4872
    %v4874 = vmul.f32 %v4712, %v4873
    %v4875 = vand.u32 2147483647, %v4275
    %vm4876 = vcmp.le.f32.partialorder %v4875, 0.7853982
    %vm4877 = vcmp.lt.s32.totalorder %v4275, 0
    %v4878 = vand.u32 %v4275, 2139095040
    %v4879 = vshrl.u32 %v4878, 23
    %v4880 = vsub.s32 %v4879, 127
    %v4881 = vand.u32 2147483647, %v4275
    %v4882 = vand.u32 %v4881, 8388607
    %v4883 = vor.u32 %v4882, 8388608
    %v4884 = vsub.s32 0, %v4883
    %v4885 = vadd.s32 %v4880, 1
    %vm4886 = vcmp.gt.s32.totalorder %v4885, 0
    %v4887 = vsel %vm4886, %v4885, 0
    %v4888 = vshrl.u32 %v4887, 5
    %v4889 = vand.u32 %v4887, 31
    %v4890 = vsub.s32 32, %v4889
    %v4891 = vshrl.u32 683565275, %v4890
    %v4892 = vshll.u32 683565275, %v4889
    %v4893 = vshrl.u32 2475754826, %v4890
    %v4894 = vor.u32 %v4892, %v4893
    %v4895 = vshll.u32 2475754826, %v4889
    %v4896 = vshrl.u32 2131351028, %v4890
    %v4897 = vor.u32 %v4895, %v4896
    %v4898 = vshll.u32 2131351028, %v4889
    %v4899 = vshrl.u32 2102212464, %v4890
    %v4900 = vor.u32 %v4898, %v4899
    %v4901 = vshll.u32 2102212464, %v4889
    %v4902 = vshrl.u32 920167782, %v4890
    %v4903 = vor.u32 %v4901, %v4902
    %v4904 = vshll.u32 920167782, %v4889
    %v4905 = vshrl.u32 1326507024, %v4890
    %v4906 = vor.u32 %v4904, %v4905
    %vm4907 = vcmp.lt.s32.totalorder %v4888, 1
    %vm4908 = vcmp.lt.s32.totalorder %v4888, 2
    %vm4909 = vcmp.lt.s32.totalorder %v4888, 3
    %vm4910 = vcmp.lt.s32.totalorder %v4888, 4
    %v4911 = vsel %vm4907, %v4891, %v4894
    %v4912 = vsel %vm4910, %v4900, 2102212464
    %v4913 = vsel %vm4909, %v4897, %v4912
    %v4914 = vsel %vm4908, %v4911, %v4913
    %v4915 = vsel %vm4907, %v4894, %v4897
    %v4916 = vsel %vm4910, %v4903, 920167782
    %v4917 = vsel %vm4909, %v4900, %v4916
    %v4918 = vsel %vm4908, %v4915, %v4917
    %v4919 = vsel %vm4907, %v4897, %v4900
    %v4920 = vsel %vm4910, %v4906, 1326507024
    %v4921 = vsel %vm4909, %v4903, %v4920
    %v4922 = vsel %vm4908, %v4919, %v4921
    %v4923 = vshll.u32 %v4883, 8
    %v4924 = vand.u32 %v4923, 65535
    %v4925 = vshrl.u32 %v4923, 16
    %v4926 = vand.u32 %v4922, 65535
    %v4927 = vshrl.u32 %v4922, 16
    %v4928 = vmul.u32 %v4924, %v4926
    %v4929 = vmul.u32 %v4924, %v4927
    %v4930 = vmul.u32 %v4925, %v4926
    %v4931 = vmul.u32 %v4925, %v4927
    %v4932 = vshll.u32 %v4929, 16
    %v4933 = vshrl.u32 %v4929, 16
    %v4934 = vshll.u32 %v4930, 16
    %v4935 = vshrl.u32 %v4930, 16
    %vm4936 = vc.u32 %v4928, %v4932
    %v4937 = vsel %vm4936, 1, 0
    %v4938 = vadd.s32 %v4928, %v4932
    %v4939 = vadd.s32 %v4931, %v4937
    %vm4940 = vc.u32 %v4938, %v4934
    %v4941 = vsel %vm4940, 1, 0
    %v4942 = vadd.s32 %v4938, %v4934
    %v4943 = vadd.s32 %v4939, %v4941
    %v4944 = vadd.s32 %v4943, %v4933
    %v4945 = vadd.s32 %v4944, %v4935
    %v4946 = vand.u32 %v4923, 65535
    %v4947 = vshrl.u32 %v4923, 16
    %v4948 = vand.u32 %v4918, 65535
    %v4949 = vshrl.u32 %v4918, 16
    %v4950 = vmul.u32 %v4946, %v4948
    %v4951 = vmul.u32 %v4946, %v4949
    %v4952 = vmul.u32 %v4947, %v4948
    %v4953 = vmul.u32 %v4947, %v4949
    %v4954 = vshll.u32 %v4951, 16
    %v4955 = vshrl.u32 %v4951, 16
    %v4956 = vshll.u32 %v4952, 16
    %v4957 = vshrl.u32 %v4952, 16
    %vm4958 = vc.u32 %v4950, %v4954
    %v4959 = vsel %vm4958, 1, 0
    %v4960 = vadd.s32 %v4950, %v4954
    %v4961 = vadd.s32 %v4953, %v4959
    %vm4962 = vc.u32 %v4960, %v4956
    %v4963 = vsel %vm4962, 1, 0
    %v4964 = vadd.s32 %v4960, %v4956
    %v4965 = vadd.s32 %v4961, %v4963
    %v4966 = vadd.s32 %v4965, %v4955
    %v4967 = vadd.s32 %v4966, %v4957
    %v4968 = vmul.u32 %v4923, %v4914
    %v4969 = vadd.s32 %v4945, %v4964
    %vm4970 = vc.u32 %v4945, %v4964
    %v4971 = vadd.s32 %v4967, 1
    %v4972 = vsel %vm4970, %v4971, %v4967
    %v4973 = vadd.s32 %v4968, %v4972
    %v4974 = vadd.s32 %v4973, 536870912
    %v4975 = vshrl.u32 %v4974, 30
    %v4976 = vshll.u32 %v4975, 30
    %v4977 = vsub.s32 %v4973, %v4976
    %vm4978 = vcmp.lt.s32.totalorder %v4977, 0
    %v4979 = vsub.s32 0, %v4977
    %v4980 = vsel %vm4978, %v4979, %v4977
    %v4981 = vclz %v4980
    %v4982 = vsub.s32 %v4981, 2
    %vm4983 = vcmp.gt.s32.totalorder 0, %v4982
    %v4984 = vsel %vm4983, 0, %v4982
    %v4985 = vsub.s32 32, %v4984
    %v4986 = vshll.u32 %v4977, %v4984
    %v4987 = vshrl.u32 %v4969, %v4985
    %v4988 = vor.u32 %v4986, %v4987
    %v4989 = vsub.s32 4294967266, %v4984
    %v4990 = vadd.s32 %v4989, 127
    %v4991 = vshll.u32 %v4990, 23
    %v4992 = vor.u32 4788187, %v4991
    %v4993 = vand.u32 2147483647, %v4992
    %v4995 = vcvt.s32.f32 %v4988
    %v4996 = vmul.f32 %v4995, %v4993
    %v4997 = vxor.u32 %v4996, 2147483648
    %v4998 = vsel %vm4877, %v4997, %v4996
    %v4999 = vsub.s32 4, %v4975
    %v5000 = vsel %vm4877, %v4999, %v4975
    %v5001 = vsel %vm4876, %v4275, %v4998
    %v5002 = vsel %vm4876, 0, %v5000
    %v5003 = vmul.f32 %v5001, %v5001
    %v5004 = vmul.f32 %v5003, -0.001358992
    %v5005 = vadd.f32 %v5004, 0.041655596
    %v5006 = vmul.f32 %v5003, %v5005
    %v5007 = vadd.f32 %v5006, -0.4999988
    %v5008 = vmul.f32 %v5003, %v5007
    %v5009 = vadd.f32 1.0, %v5008
    %v5010 = vmul.f32 %v5001, %v5001
    %v5011 = vmul.f32 %v5010, -0.00019511016
    %v5012 = vadd.f32 %v5011, 0.008332121
    %v5013 = vmul.f32 %v5010, %v5012
    %v5014 = vadd.f32 %v5013, -0.16666654
    %v5015 = vmul.f32 %v5010, %v5014
    %v5016 = vadd.f32 %v5015, 1.0
    %v5017 = vmul.f32 %v5016, %v5001
    %vm5018 = vweird.f32 %v4275
    %v5019 = vadd.s32 %v5002, 3
    %v5020 = vand.u32 %v5019, 3
    %vm5021 = vcmp.lt.s32.totalorder %v5020, 2
    %vm5022 = vcmp.eq.s32.totalorder %v5020, 0
    %v5023 = vxor.u32 %v5017, 2147483648
    %v5024 = vsel %vm5022, %v5009, %v5023
    %vm5025 = vcmp.eq.s32.totalorder %v5020, 2
    %v5026 = vxor.u32 %v5009, 2147483648
    %v5027 = vsel %vm5025, %v5026, %v5017
    %v5028 = vsel %vm5021, %v5024, %v5027
    %v5029 = vsel %vm5018, nan, %v5028
    %v5030 = vmul.f32 %v4715, %v5029
    %v5031 = vsub.f32 %v4874, %v5030
    %v5032 = vmul.f32 %v5031, %v4393
    %v5033 = vpack.c.bf16 %v1591, %v1591
    %v5034 = vpack.c.bf16 %v2738, %v2738
    %v5035 = vpack.c.bf16 %v3885, %v3885
    %v5036 = vpack.c.bf16 %v5032, %v5032
    %v5037 = vld [vmem:[#allocation6] sm:$0xf]
    %v5038 = vld [vmem:[#allocation6 + $0x4] sm:$0xf]
    %v5039 = vld [vmem:[#allocation6 + $0x8] sm:$0xf]
    %v5040 = vld [vmem:[#allocation6 + $0xc] sm:$0xf]
    %v5041 = vld [vmem:[#allocation6 + $0x10] sm:$0xf]
    %v5042 = vld [vmem:[#allocation6 + $0x14] sm:$0xf]
    %v5043 = vld [vmem:[#allocation6 + $0x18] sm:$0xf]
    %v5044 = vld [vmem:[#allocation6 + $0x1c] sm:$0xf]
    %v5045 = vld [vmem:[#allocation6 + $0x20] sm:$0xf]
    %v5046 = vld [vmem:[#allocation6 + $0x24] sm:$0xf]
    %v5047 = vld [vmem:[#allocation6 + $0x28] sm:$0xf]
    %v5048 = vld [vmem:[#allocation6 + $0x2c] sm:$0xf]
    %v5049 = vld [vmem:[#allocation6 + $0x30] sm:$0xf]
    %v5050 = vld [vmem:[#allocation6 + $0x34] sm:$0xf]
    %v5051 = vld [vmem:[#allocation6 + $0x38] sm:$0xf]
    %v5052 = vld [vmem:[#allocation6 + $0x3c] sm:$0xf]
    %v5053 = vld [vmem:[#allocation6 + $0x40] sm:$0xf]
    %v5054 = vld [vmem:[#allocation6 + $0x44] sm:$0xf]
    %v5055 = vld [vmem:[#allocation6 + $0x48] sm:$0xf]
    %v5056 = vld [vmem:[#allocation6 + $0x4c] sm:$0xf]
    %v5057 = vld [vmem:[#allocation6 + $0x50] sm:$0xf]
    %v5058 = vld [vmem:[#allocation6 + $0x54] sm:$0xf]
    %v5059 = vld [vmem:[#allocation6 + $0x58] sm:$0xf]
    %v5060 = vld [vmem:[#allocation6 + $0x5c] sm:$0xf]
    %v5061 = vld [vmem:[#allocation6 + $0x60] sm:$0xf]
    %v5062 = vld [vmem:[#allocation6 + $0x64] sm:$0xf]
    %v5063 = vld [vmem:[#allocation6 + $0x68] sm:$0xf]
    %v5064 = vld [vmem:[#allocation6 + $0x6c] sm:$0xf]
    %v5065 = vld [vmem:[#allocation6 + $0x70] sm:$0xf]
    %v5066 = vld [vmem:[#allocation6 + $0x74] sm:$0xf]
    %v5067 = vld [vmem:[#allocation6 + $0x78] sm:$0xf]
    %v5068 = vld [vmem:[#allocation6 + $0x7c] sm:$0xf]
    %v5069 = vld [vmem:[#allocation6 + $0x80] sm:$0xf]
    %v5070 = vld [vmem:[#allocation6 + $0x84] sm:$0xf]
    %v5071 = vld [vmem:[#allocation6 + $0x88] sm:$0xf]
    %v5072 = vld [vmem:[#allocation6 + $0x8c] sm:$0xf]
    %v5073 = vld [vmem:[#allocation6 + $0x90] sm:$0xf]
    %v5074 = vld [vmem:[#allocation6 + $0x94] sm:$0xf]
    %v5075 = vld [vmem:[#allocation6 + $0x98] sm:$0xf]
    %v5076 = vld [vmem:[#allocation6 + $0x9c] sm:$0xf]
    %v5077 = vld [vmem:[#allocation6 + $0xa0] sm:$0xf]
    %v5078 = vld [vmem:[#allocation6 + $0xa4] sm:$0xf]
    %v5079 = vld [vmem:[#allocation6 + $0xa8] sm:$0xf]
    %v5080 = vld [vmem:[#allocation6 + $0xac] sm:$0xf]
    %v5081 = vld [vmem:[#allocation6 + $0xb0] sm:$0xf]
    %v5082 = vld [vmem:[#allocation6 + $0xb4] sm:$0xf]
    %v5083 = vld [vmem:[#allocation6 + $0xb8] sm:$0xf]
    %v5084 = vld [vmem:[#allocation6 + $0xbc] sm:$0xf]
    %v5085 = vld [vmem:[#allocation6 + $0xc0] sm:$0xf]
    %v5086 = vld [vmem:[#allocation6 + $0xc4] sm:$0xf]
    %v5087 = vld [vmem:[#allocation6 + $0xc8] sm:$0xf]
    %v5088 = vld [vmem:[#allocation6 + $0xcc] sm:$0xf]
    %v5089 = vld [vmem:[#allocation6 + $0xd0] sm:$0xf]
    %v5090 = vld [vmem:[#allocation6 + $0xd4] sm:$0xf]
    %v5091 = vld [vmem:[#allocation6 + $0xd8] sm:$0xf]
    %v5092 = vld [vmem:[#allocation6 + $0xdc] sm:$0xf]
    %v5093 = vld [vmem:[#allocation6 + $0xe0] sm:$0xf]
    %v5094 = vld [vmem:[#allocation6 + $0xe4] sm:$0xf]
    %v5095 = vld [vmem:[#allocation6 + $0xe8] sm:$0xf]
    %v5096 = vld [vmem:[#allocation6 + $0xec] sm:$0xf]
    %v5097 = vld [vmem:[#allocation6 + $0xf0] sm:$0xf]
    %v5098 = vld [vmem:[#allocation6 + $0xf4] sm:$0xf]
    %v5099 = vld [vmem:[#allocation6 + $0xf8] sm:$0xf]
    %v5100 = vld [vmem:[#allocation6 + $0xfc] sm:$0xf]
    %v5101 = vld [vmem:[%s7] sm:$0x1]
    %v5103 = vperm.slane %v5101, 0
    %v5169 = vunpack.c.l.b16 %v5037
    %v5170 = vunpack.c.l.b16 %v5038
    %v5171 = vunpack.c.l.b16 %v5039
    %v5172 = vunpack.c.l.b16 %v5040
    %v5173 = vunpack.c.l.b16 %v5041
    %v5174 = vunpack.c.l.b16 %v5042
    %v5175 = vunpack.c.l.b16 %v5043
    %v5176 = vunpack.c.l.b16 %v5044
    %v5177 = vunpack.c.l.b16 %v5045
    %v5178 = vunpack.c.l.b16 %v5046
    %v5179 = vunpack.c.l.b16 %v5047
    %v5180 = vunpack.c.l.b16 %v5048
    %v5181 = vunpack.c.l.b16 %v5049
    %v5182 = vunpack.c.l.b16 %v5050
    %v5183 = vunpack.c.l.b16 %v5051
    %v5184 = vunpack.c.l.b16 %v5052
    %v5185 = vunpack.c.l.b16 %v5053
    %v5186 = vunpack.c.l.b16 %v5054
    %v5187 = vunpack.c.l.b16 %v5055
    %v5188 = vunpack.c.l.b16 %v5056
    %v5189 = vunpack.c.l.b16 %v5057
    %v5190 = vunpack.c.l.b16 %v5058
    %v5191 = vunpack.c.l.b16 %v5059
    %v5192 = vunpack.c.l.b16 %v5060
    %v5193 = vunpack.c.l.b16 %v5061
    %v5194 = vunpack.c.l.b16 %v5062
    %v5195 = vunpack.c.l.b16 %v5063
    %v5196 = vunpack.c.l.b16 %v5064
    %v5197 = vunpack.c.l.b16 %v5065
    %v5198 = vunpack.c.l.b16 %v5066
    %v5199 = vunpack.c.l.b16 %v5067
    %v5200 = vunpack.c.l.b16 %v5068
    %v5201 = vunpack.c.l.b16 %v5069
    %v5202 = vunpack.c.l.b16 %v5070
    %v5203 = vunpack.c.l.b16 %v5071
    %v5204 = vunpack.c.l.b16 %v5072
    %v5205 = vunpack.c.l.b16 %v5073
    %v5206 = vunpack.c.l.b16 %v5074
    %v5207 = vunpack.c.l.b16 %v5075
    %v5208 = vunpack.c.l.b16 %v5076
    %v5209 = vunpack.c.l.b16 %v5077
    %v5210 = vunpack.c.l.b16 %v5078
    %v5211 = vunpack.c.l.b16 %v5079
    %v5212 = vunpack.c.l.b16 %v5080
    %v5213 = vunpack.c.l.b16 %v5081
    %v5214 = vunpack.c.l.b16 %v5082
    %v5215 = vunpack.c.l.b16 %v5083
    %v5216 = vunpack.c.l.b16 %v5084
    %v5217 = vunpack.c.l.b16 %v5085
    %v5218 = vunpack.c.l.b16 %v5086
    %v5219 = vunpack.c.l.b16 %v5087
    %v5220 = vunpack.c.l.b16 %v5088
    %v5221 = vunpack.c.l.b16 %v5089
    %v5222 = vunpack.c.l.b16 %v5090
    %v5223 = vunpack.c.l.b16 %v5091
    %v5224 = vunpack.c.l.b16 %v5092
    %v5225 = vunpack.c.l.b16 %v5093
    %v5226 = vunpack.c.l.b16 %v5094
    %v5227 = vunpack.c.l.b16 %v5095
    %v5228 = vunpack.c.l.b16 %v5096
    %v5229 = vunpack.c.l.b16 %v5097
    %v5230 = vunpack.c.l.b16 %v5098
    %v5231 = vunpack.c.l.b16 %v5099
    %v5232 = vunpack.c.l.b16 %v5100
    %v5233 = vpack.c.b16 %v5170, %v5169
    %v5234 = vpack.c.b16 %v5172, %v5171
    %v5235 = vpack.c.b16 %v5174, %v5173
    %v5236 = vpack.c.b16 %v5176, %v5175
    %v5237 = vpack.c.b16 %v5178, %v5177
    %v5238 = vpack.c.b16 %v5180, %v5179
    %v5239 = vpack.c.b16 %v5182, %v5181
    %v5240 = vpack.c.b16 %v5184, %v5183
    %v5241 = vpack.c.b16 %v5186, %v5185
    %v5242 = vpack.c.b16 %v5188, %v5187
    %v5243 = vpack.c.b16 %v5190, %v5189
    %v5244 = vpack.c.b16 %v5192, %v5191
    %v5245 = vpack.c.b16 %v5194, %v5193
    %v5246 = vpack.c.b16 %v5196, %v5195
    %v5247 = vpack.c.b16 %v5198, %v5197
    %v5248 = vpack.c.b16 %v5200, %v5199
    %v5249 = vpack.c.b16 %v5202, %v5201
    %v5250 = vpack.c.b16 %v5204, %v5203
    %v5251 = vpack.c.b16 %v5206, %v5205
    %v5252 = vpack.c.b16 %v5208, %v5207
    %v5253 = vpack.c.b16 %v5210, %v5209
    %v5254 = vpack.c.b16 %v5212, %v5211
    %v5255 = vpack.c.b16 %v5214, %v5213
    %v5256 = vpack.c.b16 %v5216, %v5215
    %v5257 = vpack.c.b16 %v5218, %v5217
    %v5258 = vpack.c.b16 %v5220, %v5219
    %v5259 = vpack.c.b16 %v5222, %v5221
    %v5260 = vpack.c.b16 %v5224, %v5223
    %v5261 = vpack.c.b16 %v5226, %v5225
    %v5262 = vpack.c.b16 %v5228, %v5227
    %v5263 = vpack.c.b16 %v5230, %v5229
    %v5264 = vpack.c.b16 %v5232, %v5231
    %5297 = vmatpush.bf16.msra.mxu0 %v5240
    %5298 = vmatpush.bf16.msra.mxu0 %v5239
    %5299 = vmatpush.bf16.msra.mxu0 %v5238
    %5300 = vmatpush.bf16.msra.mxu0 %v5237
    %5301 = vmatpush.bf16.msra.mxu0 %v5236
    %5302 = vmatpush.bf16.msra.mxu0 %v5235
    %5303 = vmatpush.bf16.msra.mxu0 %v5234
    %5304 = vmatpush.bf16.msra.mxu0 %v5233
    %5305 = vmatmul.bf16.gmra.mxu0 %v5033
    %v5306 = vpop.f32.mrf.mxu0
    %v5307 = vadd.f32 %v5103, %v5306
    %v5308 = vpop.f32.mrf.mxu0
    %5309 = vdwg.mxu0
    %5310 = vmatpush.bf16.msra.mxu0 %v5248
    %5311 = vmatpush.bf16.msra.mxu0 %v5247
    %5312 = vmatpush.bf16.msra.mxu0 %v5246
    %5313 = vmatpush.bf16.msra.mxu0 %v5245
    %5314 = vmatpush.bf16.msra.mxu0 %v5244
    %5315 = vmatpush.bf16.msra.mxu0 %v5243
    %5316 = vmatpush.bf16.msra.mxu0 %v5242
    %5317 = vmatpush.bf16.msra.mxu0 %v5241
    %5318 = vmatmul.bf16.gmra.mxu0 %v5034
    %v5319 = vpop.f32.mrf.mxu0
    %v5320 = vadd.f32 %v5307, %v5319
    %v5321 = vpop.f32.mrf.mxu0
    %5322 = vdwg.mxu0
    %5323 = vmatpush.bf16.msra.mxu0 %v5256
    %5324 = vmatpush.bf16.msra.mxu0 %v5255
    %5325 = vmatpush.bf16.msra.mxu0 %v5254
    %5326 = vmatpush.bf16.msra.mxu0 %v5253
    %5327 = vmatpush.bf16.msra.mxu0 %v5252
    %5328 = vmatpush.bf16.msra.mxu0 %v5251
    %5329 = vmatpush.bf16.msra.mxu0 %v5250
    %5330 = vmatpush.bf16.msra.mxu0 %v5249
    %5331 = vmatmul.bf16.gmra.mxu0 %v5035
    %v5332 = vpop.f32.mrf.mxu0
    %v5333 = vadd.f32 %v5320, %v5332
    %v5334 = vpop.f32.mrf.mxu0
    %5335 = vdwg.mxu0
    %5336 = vmatpush.bf16.msra.mxu0 %v5264
    %5337 = vmatpush.bf16.msra.mxu0 %v5263
    %5338 = vmatpush.bf16.msra.mxu0 %v5262
    %5339 = vmatpush.bf16.msra.mxu0 %v5261
    %5340 = vmatpush.bf16.msra.mxu0 %v5260
    %5341 = vmatpush.bf16.msra.mxu0 %v5259
    %5342 = vmatpush.bf16.msra.mxu0 %v5258
    %5343 = vmatpush.bf16.msra.mxu0 %v5257
    %5344 = vmatmul.bf16.gmra.mxu0 %v5036
    %v5345 = vpop.f32.mrf.mxu0
    %v5346 = vadd.f32 %v5333, %v5345
    %v5347 = vpop.f32.mrf.mxu0
    %5348 = vdwg.mxu0
    %5349 = vst [vmem:[%s8] sm:$0xf] %v5346
    %v5352 = vrot.slane %v4715, 4
    %v5353 = vsel %vm780, %v4712, %v5352
    %5355 = vst [vmem:[%s9] sm:$0xff] %v5353
    %5356 = vst [vmem:[%s10] sm:$0xf] %v4719
    // Predicated region
    $region46: #{apdu_memory_cell_forward.1} parent=1 // pred_check
      _
    $region47: #{apdu_memory_cell_forward.1} parent=1 // pred_check_branch
      %5358 = sbr.rel (0) target = $region49
    $region48: #{apdu_memory_cell_forward.1} parent=1 // pred_region
      _
    $region49: #{apdu_memory_cell_forward.1} parent=1 // pred_fallthru
      _
    // Predicated region
    $region50: #{apdu_memory_cell_forward.1} parent=1 // pred_check
      _
    $region51: #{apdu_memory_cell_forward.1} parent=1 // pred_check_branch
      %5360 = sbr.rel (0) target = $region53
    $region52: #{apdu_memory_cell_forward.1} parent=1 // pred_region
      _
    $region53: #{apdu_memory_cell_forward.1} parent=1 // pred_fallthru
      _
    // Predicated region
    $region54: #{apdu_memory_cell_forward.1} parent=1 // pred_check
      _
    $region55: #{apdu_memory_cell_forward.1} parent=1 // pred_check_branch
      %5362 = sbr.rel (0) target = $region57
    $region56: #{apdu_memory_cell_forward.1} parent=1 // pred_region
      _
    $region57: #{apdu_memory_cell_forward.1} parent=1 // pred_fallthru
      _
    // Predicated region
    $region58: #{apdu_memory_cell_forward.1} parent=1 // pred_check
      _
    $region59: #{apdu_memory_cell_forward.1} parent=1 // pred_check_branch
      %5364 = sbr.rel (0) target = $region61
    $region60: #{apdu_memory_cell_forward.1} parent=1 // pred_region
      _
    $region61: #{apdu_memory_cell_forward.1} parent=1 // pred_fallthru
      _
    // Predicated region
    $region62: #{apdu_memory_cell_forward.1} parent=1 // pred_check
      _
    $region63: #{apdu_memory_cell_forward.1} parent=1 // pred_check_branch
      %5366 = sbr.rel (0) target = $region65
    $region64: #{apdu_memory_cell_forward.1} parent=1 // pred_region
      _
    $region65: #{apdu_memory_cell_forward.1} parent=1 // pred_fallthru
      _
    // Predicated region
    $region66: #{apdu_memory_cell_forward.1} parent=1 // pred_check
      _
    $region67: #{apdu_memory_cell_forward.1} parent=1 // pred_check_branch
      %5368 = sbr.rel (0) target = $region69
    $region68: #{apdu_memory_cell_forward.1} parent=1 // pred_region
      _
    $region69: #{apdu_memory_cell_forward.1} parent=1 // pred_fallthru
      _
    %5369 = vsyncpa [#allocation3], 1
    %5370 = vsyncpa [#allocation5], 1

</llo_original>
